<compile_context>
chip_gen: v7x
topology: tpu7x:2x2x1
jax: 0.10.0
libtpu: 0.0.40
codegen_flags: <defaults>
</compile_context>

<pallas_src>
import functools

import jax
import jax.numpy as jnp
import numpy as np
from jax.experimental import pallas as pl
from jax.experimental.pallas import tpu as pltpu

NEG_SLOPE = 0.01          # nn.LeakyReLU default
NUM_RELATIONS = 2


def _leaky(x):
    return jnp.where(x > 0.0, x, NEG_SLOPE * x)


# ----------------------------------------------------------------------------
# tiling helper
# ----------------------------------------------------------------------------
def _pick_tile(n, target, multiple, min_tiles=1):
    """Largest t with t % multiple == 0 and n % t == 0, bounded by
    min(target, n // min_tiles).  Falls back to n (full-dim block, always
    legal) when no such divisor exists."""
    cap = min(target, n)
    if min_tiles > 1 and n >= min_tiles * multiple:
        cap = min(cap, n // min_tiles)
    t = (cap // multiple) * multiple
    while t >= multiple:
        if n % t == 0:
            return t
        t -= multiple
    return n


# ----------------------------------------------------------------------------
# fused input layers + fc1 kernel
# ----------------------------------------------------------------------------
def _input_fc1_kernel(x_ref, w_in_ref, b_in_ref, w_fc1_ref, b_fc1_ref, o_ref):
    """h = leaky(x_cat @ blockdiag(W_i) + b_in); y = leaky(h @ W_fc1 + b_fc1)."""
    h = jnp.dot(x_ref[...], w_in_ref[...], preferred_element_type=jnp.float32)
    h = _leaky(h + b_in_ref[...]).astype(jnp.bfloat16)
    y = jnp.dot(h, w_fc1_ref[...], preferred_element_type=jnp.float32)
    y = _leaky(y + b_fc1_ref[...])
    o_ref[...] = y.astype(o_ref.dtype)


def pallas_input_fc1(x_cat, w_in_bd, b_in, w_fc1, b_fc1, *, tile_m=None):
    n, d_in = x_cat.shape
    emb = w_fc1.shape[1]
    tm = tile_m if tile_m is not None else _pick_tile(n, 512, 16, min_tiles=2)
    return pl.pallas_call(
        _input_fc1_kernel,
        out_shape=jax.ShapeDtypeStruct((n, emb), jnp.bfloat16),
        grid_spec=pltpu.PrefetchScalarGridSpec(
            num_scalar_prefetch=0,
            grid=(n // tm,),
            in_specs=[
                pl.BlockSpec((tm, d_in), lambda i: (i, 0)),
                pl.BlockSpec((d_in, emb), lambda i: (0, 0)),
                pl.BlockSpec((1, emb), lambda i: (0, 0)),
                pl.BlockSpec((emb, emb), lambda i: (0, 0)),
                pl.BlockSpec((1, emb), lambda i: (0, 0)),
            ],
            out_specs=pl.BlockSpec((tm, emb), lambda i: (i, 0)),
        ),
        compiler_params=pltpu.CompilerParams(
            dimension_semantics=("parallel",),
            vmem_limit_bytes=32 * 1024 * 1024),
    )(x_cat, w_in_bd, b_in, w_fc1, b_fc1)


# ----------------------------------------------------------------------------
# RGCN kernel (mean aggregation, optional fused out1 Linear+LeakyReLU)
# ----------------------------------------------------------------------------
def _rgcn_kernel(x_root_ref, x_agg_ref, a_ref, inv_deg_ref,
                 w_root_ref, w_rel_ref, b_ref, *rest,
                 num_relations, tile_m, fuse_out):
    """Tiled RGCNConv with mean aggregation.

    Accumulates A_r(counts) @ x over the contraction (k) axis into one fp32
    scratch of shape (R*tm, D); at the last k step scales each relation's
    rows by the fp32 inverse in-degree, applies the unstacked weights as a
    vreg-aligned sum of matmuls, adds the bias, and (optionally) the fused
    out1 Linear + LeakyReLU before storing.
    """
    if fuse_out:
        w_out_ref, b_out_ref, o_ref, acc_ref = rest
    else:
        o_ref, acc_ref = rest

    k = pl.program_id(1)

    @pl.when(k == 0)
    def _():
        acc_ref[...] = jnp.zeros_like(acc_ref)

    # int8 counts -> bf16 (VPU cast after DMA), one stacked matmul: all
    # relations share the same RHS x block.
    a = a_ref[...].astype(jnp.bfloat16)                      # (R, tm, tk)
    x_k = x_agg_ref[...]                                     # (tk, D) bf16
    if tile_m % 16 == 0:
        a2 = a.reshape(num_relations * tile_m, a.shape[-1])  # (R*tm, tk)
        acc_ref[...] += jnp.dot(a2, x_k, preferred_element_type=jnp.float32)
    else:  # layout-safe fallback for odd tile sizes
        for r in range(num_relations):
            acc_ref[pl.ds(r * tile_m, tile_m), :] += jnp.dot(
                a[r], x_k, preferred_element_type=jnp.float32)

    @pl.when(k == pl.num_programs(1) - 1)
    def _():
        y = jnp.dot(x_root_ref[...], w_root_ref[...],
                    preferred_element_type=jnp.float32)
        for r in range(num_relations):
            h = acc_ref[pl.ds(r * tile_m, tile_m), :] * inv_deg_ref[r]
            y += jnp.dot(h.astype(jnp.bfloat16), w_rel_ref[r],
                         preferred_element_type=jnp.float32)
        y = y + b_ref[...]
        if fuse_out:
            y = jnp.dot(y.astype(jnp.bfloat16), w_out_ref[...],
                        preferred_element_type=jnp.float32) + b_out_ref[...]
            y = _leaky(y)
        o_ref[...] = y.astype(o_ref.dtype)


def pallas_rgcn(x, adj_cnt, inv_deg, w_root, w_rel, b, out1=None,
                *, tile_m=None, tile_k=None):
    """x: [N, D] bf16; adj_cnt: [R, N, N] int8 edge counts;
    inv_deg: [R, N, 1] fp32; w_root/w_rel/b bf16|fp32; out1=(W, b) fuses the
    following Linear + LeakyReLU into the epilogue."""
    n, d = x.shape
    num_rel = adj_cnt.shape[0]
    # int8 adjacency sublane wants multiples of 32; >= 2 row tiles for megacore
    tm = tile_m if tile_m is not None else _pick_tile(n, 1024, 32, min_tiles=2)
    tk = tile_k if tile_k is not None else _pick_tile(n, 1024, 128)
    fuse_out = out1 is not None

    in_specs = [
        pl.BlockSpec((tm, d), lambda i, k: (i, 0)),            # x rows (root)
        pl.BlockSpec((tk, d), lambda i, k: (k, 0)),            # x contraction
        pl.BlockSpec((num_rel, tm, tk), lambda i, k: (0, i, k)),  # int8 counts
        pl.BlockSpec((num_rel, tm, 1), lambda i, k: (0, i, 0)),   # fp32 1/deg
        pl.BlockSpec((d, d), lambda i, k: (0, 0)),             # W_root
        pl.BlockSpec((num_rel, d, d), lambda i, k: (0, 0, 0)),  # W_rel
        pl.BlockSpec((1, d), lambda i, k: (0, 0)),             # bias
    ]
    args = [x, x, adj_cnt, inv_deg, w_root, w_rel, b]
    if fuse_out:
        w_out, b_out = out1
        in_specs += [pl.BlockSpec((d, d), lambda i, k: (0, 0)),
                     pl.BlockSpec((1, d), lambda i, k: (0, 0))]
        args += [w_out, b_out]

    # explicit VMEM budget: double-buffered streams + fp32 accumulator, with
    # headroom; capped at 48 MiB so it stays safe on v7x's 64 MiB VMEM.
    budget = 2 * (num_rel * tm * tk                # int8 adjacency block
                  + tk * d * 2 + tm * d * 2        # bf16 x blocks
                  + num_rel * tm * 128 * 4)        # lane-padded 1/deg block
    budget += num_rel * tm * d * 4 + 4 * (1 << 20)
    vmem_limit = int(min(max(budget, 16 * (1 << 20)), 48 * (1 << 20)))

    return pl.pallas_call(
        functools.partial(_rgcn_kernel, num_relations=num_rel, tile_m=tm,
                          fuse_out=fuse_out),
        out_shape=jax.ShapeDtypeStruct((n, d), jnp.bfloat16),
        grid_spec=pltpu.PrefetchScalarGridSpec(
            num_scalar_prefetch=0,
            grid=(n // tm, n // tk),
            in_specs=in_specs,
            out_specs=pl.BlockSpec((tm, d), lambda i, k: (i, 0)),
            scratch_shapes=[pltpu.VMEM((num_rel * tm, d), jnp.float32)],
        ),
        compiler_params=pltpu.CompilerParams(
            dimension_semantics=("parallel", "arbitrary"),
            vmem_limit_bytes=vmem_limit),
    )(*args)


# ----------------------------------------------------------------------------
# parameters, adjacency construction, full forward
# ----------------------------------------------------------------------------
def init_params(key, input_dims, embedding_dim):
    l = len(input_dims)
    sub = embedding_dim // l
    keys = iter(jax.random.split(key, 16))

    def lin(k, d_in, d_out):
        kw, kb = jax.random.split(k)
        lim = 1.0 / np.sqrt(d_in)
        w = jax.random.uniform(kw, (d_in, d_out), jnp.float32, -lim, lim)
        b = jax.random.uniform(kb, (d_out,), jnp.float32, -lim, lim)
        return w, b

    def rgcn(k, d):
        k1, k2, k3 = jax.random.split(k, 3)
        w_rel = jax.random.normal(k1, (NUM_RELATIONS, d, d), jnp.float32) / np.sqrt(d)
        w_root = jax.random.normal(k2, (d, d), jnp.float32) / np.sqrt(d)
        b = jax.random.normal(k3, (d,), jnp.float32) * 0.01
        return {"w_rel": w_rel, "w_root": w_root, "b": b}

    return {
        "input_layers": [lin(next(keys), d, sub) for d in input_dims],
        "fc1": lin(next(keys), sub * l, embedding_dim),
        "rgcn1": rgcn(next(keys), embedding_dim),
        "rgcn2": rgcn(next(keys), embedding_dim),
        "out1": lin(next(keys), embedding_dim, embedding_dim),
        "out2": lin(next(keys), embedding_dim, 2),
    }


def prepare_params(raw):
    """One-time repack (hoisted off the per-forward path): bf16 weight casts,
    block-diagonal input weight, (1, D) fp32 biases."""
    bf = jnp.bfloat16
    in_ws = [w for (w, _) in raw["input_layers"]]
    in_bs = [b for (_, b) in raw["input_layers"]]
    # concat(x_i @ W_i) == concat(x_i) @ blockdiag(W_i)
    w_in_bd = jax.scipy.linalg.block_diag(*in_ws)
    p = {
        "w_in": w_in_bd.astype(bf),
        "b_in": jnp.concatenate(in_bs).reshape(1, -1).astype(jnp.float32),
        "w_fc1": raw["fc1"][0].astype(bf),
        "b_fc1": raw["fc1"][1].reshape(1, -1).astype(jnp.float32),
        "w_out1": raw["out1"][0].astype(bf),
        "b_out1": raw["out1"][1].reshape(1, -1).astype(jnp.float32),
        "w_out2": raw["out2"][0],
        "b_out2": raw["out2"][1],
    }
    for name in ("rgcn1", "rgcn2"):
        q = raw[name]
        p[name] = {"w_root": q["w_root"].astype(bf),
                   "w_rel": q["w_rel"].astype(bf),
                   "b": q["b"].reshape(1, -1).astype(jnp.float32)}
    return p


def build_adjacency(edge_index, edge_type, num_nodes):
    """Dense per-relation adjacency, built once per graph.

    adj_cnt[r, i, j] = #edges j->i of relation r  (exact, stored int8)
    inv_deg[r, i, 0] = 1 / max(1, in_degree_r(i)) (fp32, applied in-kernel)
    so that (adj_cnt[r] @ X) * inv_deg[r] is PyG RGCNConv's mean aggregation.
    """
    # TODO(synk): for large graphs (N >> few thousand) replace the dense
    # [R, N, N] adjacency with a CSR / edge-list segment-mean kernel driven by
    # scalar-prefetched offsets; int8 also assumes < 128 parallel edges/pair.
    src, dst = edge_index[0], edge_index[1]
    cnts, invs = [], []
    for r in range(NUM_RELATIONS):
        mask = (edge_type == r).astype(jnp.float32)
        a = jnp.zeros((num_nodes, num_nodes), jnp.float32).at[dst, src].add(mask)
        deg = jnp.sum(a, axis=1, keepdims=True)
        invs.append(1.0 / jnp.clip(deg, 1.0, None))
        cnts.append(a)
    adj_cnt = jnp.stack(cnts).astype(jnp.int8)
    inv_deg = jnp.stack(invs)                       # (R, N, 1) fp32
    return adj_cnt, inv_deg


def botrgcn_forward(params, inputs, adj_cnt, inv_deg):
    """params: prepared (prepare_params); adj_cnt/inv_deg: prebuilt graph."""
    x_cat = jnp.concatenate([x.astype(jnp.bfloat16) for x in inputs], axis=1)

    # fused: per-modality Linear+LeakyReLU (block-diag), concat, fc1 + LeakyReLU
    x = pallas_input_fc1(x_cat, params["w_in"], params["b_in"],
                         params["w_fc1"], params["b_fc1"])

    # rgcn1
    p = params["rgcn1"]
    x = pallas_rgcn(x, adj_cnt, inv_deg, p["w_root"], p["w_rel"], p["b"])

    # F.dropout: identity in eval mode (training=False).
    # TODO(synk): training-mode dropout via pltpu.prng_random_bits if needed.

    # rgcn2 with the out1 Linear+LeakyReLU fused into its epilogue
    p = params["rgcn2"]
    x = pallas_rgcn(x, adj_cnt, inv_deg, p["w_root"], p["w_rel"], p["b"],
                    out1=(params["w_out1"], params["b_out1"]))

    # final 64 -> 2 projection in plain JAX (2-lane Pallas output would force
    # masked stores and a launch for negligible work).
    return x.astype(jnp.float32) @ params["w_out2"] + params["b_out2"]


# ----------------------------------------------------------------------------
# pure-JAX reference (mirrors the bf16-operand / fp32-accumulate math)
# ----------------------------------------------------------------------------
def _ref_forward(params, inputs, adj_cnt, inv_deg):
    bf = jnp.bfloat16

    def mm(a, b):
        return jnp.dot(a.astype(bf), b.astype(bf),
                       preferred_element_type=jnp.float32)

    x_cat = jnp.concatenate([x.astype(bf) for x in inputs], axis=1)
    h = _leaky(mm(x_cat, params["w_in"]) + params["b_in"]).astype(bf)
    x = _leaky(mm(h, params["w_fc1"]) + params["b_fc1"]).astype(bf)

    def rgcn(x, p, out1=None):
        y = mm(x, p["w_root"])
        for r in range(NUM_RELATIONS):
            agg = mm(adj_cnt[r], x) * inv_deg[r]
            y = y + mm(agg, p["w_rel"][r])
        y = y + p["b"]
        if out1 is not None:
            w_o, b_o = out1
            y = _leaky(mm(y, w_o) + b_o)
        return y.astype(bf)

    x = rgcn(x, params["rgcn1"])
    x = rgcn(x, params["rgcn2"], out1=(params["w_out1"], params["b_out1"]))
    return x.astype(jnp.float32) @ params["w_out2"] + params["b_out2"]


if __name__ == "__main__":
    # small shapes consistent with the module: 2 node-feature modalities,
    # embedding_dim=64, 2 relations.  N chosen so the RGCN kernel exercises
    # 2 row tiles (megacore-shardable) and a full-N contraction block.
    N_NODES = 384
    N_EDGES = 2048
    INPUT_DIMS = [48, 32]
    EMB = 64

    key = jax.random.PRNGKey(0)
    k_par, k_x0, k_x1, k_src, k_dst, k_rel = jax.random.split(key, 6)

    raw_params = init_params(k_par, INPUT_DIMS, EMB)
    params = prepare_params(raw_params)            # hoisted one-time prep

    inputs = [
        jax.random.normal(k_x0, (N_NODES, INPUT_DIMS[0]), jnp.float32),
        jax.random.normal(k_x1, (N_NODES, INPUT_DIMS[1]), jnp.float32),
    ]
    edge_index = jnp.stack([
        jax.random.randint(k_src, (N_EDGES,), 0, N_NODES),
        jax.random.randint(k_dst, (N_EDGES,), 0, N_NODES),
    ])
    edge_type = jax.random.randint(k_rel, (N_EDGES,), 0, NUM_RELATIONS)

    # graph structures built once per graph (int8 counts + fp32 inverse degree)
    adj_cnt, inv_deg = build_adjacency(edge_index, edge_type, N_NODES)

    fwd = jax.jit(botrgcn_forward)
    out = jax.block_until_ready(fwd(params, inputs, adj_cnt, inv_deg))

    ref = _ref_forward(params, inputs, adj_cnt, inv_deg)
    np.testing.assert_allclose(np.asarray(out, np.float32),
                               np.asarray(ref, np.float32),
                               rtol=5e-2, atol=5e-2)
    assert out.shape == (N_NODES, 2)
    print("KERNEL_OK")
</pallas_src>

<mosaic_0001>
module attributes {stable_mosaic.version = 11 : i64} {
  func.func @_input_fc1_kernel(%arg0: i32, %arg1: memref<192x80xbf16, #tpu.memory_space<vmem>>, %arg2: memref<80x64xbf16, #tpu.memory_space<vmem>>, %arg3: memref<1x64xf32, #tpu.memory_space<vmem>>, %arg4: memref<64x64xbf16, #tpu.memory_space<vmem>>, %arg5: memref<1x64xf32, #tpu.memory_space<vmem>>, %arg6: memref<192x64xbf16, #tpu.memory_space<vmem>>) attributes {dimension_semantics = [#tpu.dimension_semantics<parallel>], iteration_bounds = array<i64: 2>, scalar_prefetch = 0 : i64, scratch_operands = 0 : i64, tpu.core_type = #tpu.core_type<tc>, window_params = [{transform_indices = @transform_0, window_bounds = array<i64: 192, 80>}, {pipeline_mode = #tpu.pipeline_mode<synchronous>, transform_indices = @transform_1, window_bounds = array<i64: 80, 64>}, {pipeline_mode = #tpu.pipeline_mode<synchronous>, transform_indices = @transform_2, window_bounds = array<i64: 1, 64>}, {pipeline_mode = #tpu.pipeline_mode<synchronous>, transform_indices = @transform_3, window_bounds = array<i64: 64, 64>}, {pipeline_mode = #tpu.pipeline_mode<synchronous>, transform_indices = @transform_4, window_bounds = array<i64: 1, 64>}, {transform_indices = @transform_5, window_bounds = array<i64: 192, 64>}]} {
    %c0 = arith.constant 0 : index
    %c0_0 = arith.constant 0 : index
    %0 = vector.load %arg1[%c0, %c0_0] : memref<192x80xbf16, #tpu.memory_space<vmem>>, vector<192x80xbf16>
    %c0_1 = arith.constant 0 : index
    %c0_2 = arith.constant 0 : index
    %1 = vector.load %arg2[%c0_1, %c0_2] : memref<80x64xbf16, #tpu.memory_space<vmem>>, vector<80x64xbf16>
    %cst = arith.constant dense<0.000000e+00> : vector<192x64xf32>
    %2 = tpu.matmul %0, %1, %cst {dimension_numbers = #tpu.dot_dimension_numbers<[1], [0], [0], [1], [0, 0, 1, 1], [], []>} : vector<192x80xbf16>, vector<80x64xbf16>, vector<192x64xf32> -> vector<192x64xf32>
    %c0_3 = arith.constant 0 : index
    %c0_4 = arith.constant 0 : index
    %3 = vector.load %arg3[%c0_3, %c0_4] : memref<1x64xf32, #tpu.memory_space<vmem>>, vector<1x64xf32>
    %4 = vector.broadcast %3 : vector<1x64xf32> to vector<192x64xf32>
    %5 = arith.addf %2, %4 : vector<192x64xf32>
    %cst_5 = arith.constant 0.000000e+00 : f32
    %6 = vector.broadcast %cst_5 : f32 to vector<192x64xf32>
    %7 = arith.cmpf ogt, %5, %6 : vector<192x64xf32>
    %cst_6 = arith.constant 0.00999999977 : f32
    %8 = vector.broadcast %cst_6 : f32 to vector<192x64xf32>
    %9 = arith.mulf %8, %5 : vector<192x64xf32>
    %10 = arith.select %7, %5, %9 : vector<192x64xi1>, vector<192x64xf32>
    %11 = arith.truncf %10 : vector<192x64xf32> to vector<192x64xbf16>
    %c0_7 = arith.constant 0 : index
    %c0_8 = arith.constant 0 : index
    %12 = vector.load %arg4[%c0_7, %c0_8] : memref<64x64xbf16, #tpu.memory_space<vmem>>, vector<64x64xbf16>
    %cst_9 = arith.constant dense<0.000000e+00> : vector<192x64xf32>
    %13 = tpu.matmul %11, %12, %cst_9 {dimension_numbers = #tpu.dot_dimension_numbers<[1], [0], [0], [1], [0, 0, 1, 1], [], []>} : vector<192x64xbf16>, vector<64x64xbf16>, vector<192x64xf32> -> vector<192x64xf32>
    %c0_10 = arith.constant 0 : index
    %c0_11 = arith.constant 0 : index
    %14 = vector.load %arg5[%c0_10, %c0_11] : memref<1x64xf32, #tpu.memory_space<vmem>>, vector<1x64xf32>
    %15 = vector.broadcast %14 : vector<1x64xf32> to vector<192x64xf32>
    %16 = arith.addf %13, %15 : vector<192x64xf32>
    %cst_12 = arith.constant 0.000000e+00 : f32
    %17 = vector.broadcast %cst_12 : f32 to vector<192x64xf32>
    %18 = arith.cmpf ogt, %16, %17 : vector<192x64xf32>
    %cst_13 = arith.constant 0.00999999977 : f32
    %19 = vector.broadcast %cst_13 : f32 to vector<192x64xf32>
    %20 = arith.mulf %19, %16 : vector<192x64xf32>
    %21 = arith.select %18, %16, %20 : vector<192x64xi1>, vector<192x64xf32>
    %22 = arith.truncf %21 : vector<192x64xf32> to vector<192x64xbf16>
    %c0_14 = arith.constant 0 : index
    %c0_15 = arith.constant 0 : index
    %23 = vector.load %arg6[%c0_14, %c0_15] : memref<192x64xbf16, #tpu.memory_space<vmem>>, vector<192x64xbf16>
    tpu.vector_store %arg6[%c0_14, %c0_15], %22 {strides = array<i32>} : memref<192x64xbf16, #tpu.memory_space<vmem>>, vector<192x64xbf16>,
    return
  }
  func.func @transform_0(%arg0: i32) -> (i32, i32) {
    %c0_i32 = arith.constant 0 : i32
    %c0_i32_0 = arith.constant 0 : i32
    return %arg0, %c0_i32 : i32, i32
  }
  func.func @transform_1(%arg0: i32) -> (i32, i32) {
    %c0_i32 = arith.constant 0 : i32
    %c0_i32_0 = arith.constant 0 : i32
    %c0_i32_1 = arith.constant 0 : i32
    return %c0_i32, %c0_i32_0 : i32, i32
  }
  func.func @transform_2(%arg0: i32) -> (i32, i32) {
    %c0_i32 = arith.constant 0 : i32
    %c0_i32_0 = arith.constant 0 : i32
    %c0_i32_1 = arith.constant 0 : i32
    return %c0_i32, %c0_i32_0 : i32, i32
  }
  func.func @transform_3(%arg0: i32) -> (i32, i32) {
    %c0_i32 = arith.constant 0 : i32
    %c0_i32_0 = arith.constant 0 : i32
    %c0_i32_1 = arith.constant 0 : i32
    return %c0_i32, %c0_i32_0 : i32, i32
  }
  func.func @transform_4(%arg0: i32) -> (i32, i32) {
    %c0_i32 = arith.constant 0 : i32
    %c0_i32_0 = arith.constant 0 : i32
    %c0_i32_1 = arith.constant 0 : i32
    return %c0_i32, %c0_i32_0 : i32, i32
  }
  func.func @transform_5(%arg0: i32) -> (i32, i32) {
    %c0_i32 = arith.constant 0 : i32
    %c0_i32_0 = arith.constant 0 : i32
    return %arg0, %c0_i32 : i32, i32
  }
}

module attributes {stable_mosaic.version = 11 : i64} {
  func.func @_rgcn_kernel(%arg0: i32, %arg1: i32, %arg2: memref<192x64xbf16, #tpu.memory_space<vmem>>, %arg3: memref<384x64xbf16, #tpu.memory_space<vmem>>, %arg4: memref<2x192x384xi8, #tpu.memory_space<vmem>>, %arg5: memref<2x192x1xf32, #tpu.memory_space<vmem>>, %arg6: memref<64x64xbf16, #tpu.memory_space<vmem>>, %arg7: memref<2x64x64xbf16, #tpu.memory_space<vmem>>, %arg8: memref<1x64xf32, #tpu.memory_space<vmem>>, %arg9: memref<192x64xbf16, #tpu.memory_space<vmem>>, %arg10: memref<384x64xf32, #tpu.memory_space<vmem>>) attributes {dimension_semantics = [#tpu.dimension_semantics<parallel>, #tpu.dimension_semantics<arbitrary>], iteration_bounds = array<i64: 2, 1>, scalar_prefetch = 0 : i64, scratch_operands = 1 : i64, tpu.core_type = #tpu.core_type<tc>, window_params = [{transform_indices = @transform_0, window_bounds = array<i64: 192, 64>}, {transform_indices = @transform_1, window_bounds = array<i64: 384, 64>}, {transform_indices = @transform_2, window_bounds = array<i64: 2, 192, 384>}, {transform_indices = @transform_3, window_bounds = array<i64: 2, 192, 1>}, {pipeline_mode = #tpu.pipeline_mode<synchronous>, transform_indices = @transform_4, window_bounds = array<i64: 64, 64>}, {pipeline_mode = #tpu.pipeline_mode<synchronous>, transform_indices = @transform_5, window_bounds = array<i64: 2, 64, 64>}, {pipeline_mode = #tpu.pipeline_mode<synchronous>, transform_indices = @transform_6, window_bounds = array<i64: 1, 64>}, {transform_indices = @transform_7, window_bounds = array<i64: 192, 64>}]} {
    %c0_i32 = arith.constant 0 : i32
    %0 = arith.cmpi eq, %arg1, %c0_i32 : i32
    %1 = arith.extui %0 : i1 to i32
    %c0_i32_0 = arith.constant 0 : i32
    %2 = arith.cmpi ne, %1, %c0_i32_0 : i32
    scf.if %2 {
      %cst_11 = arith.constant 0.000000e+00 : f32
      %14 = vector.broadcast %cst_11 : f32 to vector<384x64xf32>
      %c0_12 = arith.constant 0 : index
      %c0_13 = arith.constant 0 : index
      %15 = vector.load %arg10[%c0_12, %c0_13] : memref<384x64xf32, #tpu.memory_space<vmem>>, vector<384x64xf32>
      tpu.vector_store %arg10[%c0_12, %c0_13], %14 {strides = array<i32>} : memref<384x64xf32, #tpu.memory_space<vmem>>, vector<384x64xf32>,
    } else {
    }
    %c0 = arith.constant 0 : index
    %c0_1 = arith.constant 0 : index
    %c0_2 = arith.constant 0 : index
    %3 = vector.load %arg4[%c0, %c0_1, %c0_2] : memref<2x192x384xi8, #tpu.memory_space<vmem>>, vector<2x192x384xi8>
    %4 = arith.sitofp %3 : vector<2x192x384xi8> to vector<2x192x384xbf16>
    %c0_3 = arith.constant 0 : index
    %c0_4 = arith.constant 0 : index
    %5 = vector.load %arg3[%c0_3, %c0_4] : memref<384x64xbf16, #tpu.memory_space<vmem>>, vector<384x64xbf16>
    %6 = vector.shape_cast %4 : vector<2x192x384xbf16> to vector<384x384xbf16>
    %c0_5 = arith.constant 0 : index
    %c0_6 = arith.constant 0 : index
    %7 = vector.load %arg10[%c0_5, %c0_6] : memref<384x64xf32, #tpu.memory_space<vmem>>, vector<384x64xf32>
    %cst = arith.constant dense<0.000000e+00> : vector<384x64xf32>
    %8 = tpu.matmul %6, %5, %cst {dimension_numbers = #tpu.dot_dimension_numbers<[1], [0], [0], [1], [0, 0, 1, 1], [], []>} : vector<384x384xbf16>, vector<384x64xbf16>, vector<384x64xf32> -> vector<384x64xf32>
    %9 = arith.addf %7, %8 : vector<384x64xf32>
    %c0_7 = arith.constant 0 : index
    %c0_8 = arith.constant 0 : index
    %10 = vector.load %arg10[%c0_7, %c0_8] : memref<384x64xf32, #tpu.memory_space<vmem>>, vector<384x64xf32>
    tpu.vector_store %arg10[%c0_7, %c0_8], %9 {strides = array<i32>} : memref<384x64xf32, #tpu.memory_space<vmem>>, vector<384x64xf32>,
    %c0_i32_9 = arith.constant 0 : i32
    %11 = arith.cmpi eq, %arg1, %c0_i32_9 : i32
    %12 = arith.extui %11 : i1 to i32
    %c0_i32_10 = arith.constant 0 : i32
    %13 = arith.cmpi ne, %12, %c0_i32_10 : i32
    scf.if %13 {
      %c0_11 = arith.constant 0 : index
      %c0_12 = arith.constant 0 : index
      %14 = vector.load %arg2[%c0_11, %c0_12] : memref<192x64xbf16, #tpu.memory_space<vmem>>, vector<192x64xbf16>
      %c0_13 = arith.constant 0 : index
      %c0_14 = arith.constant 0 : index
      %15 = vector.load %arg6[%c0_13, %c0_14] : memref<64x64xbf16, #tpu.memory_space<vmem>>, vector<64x64xbf16>
      %cst_15 = arith.constant dense<0.000000e+00> : vector<192x64xf32>
      %16 = tpu.matmul %14, %15, %cst_15 {dimension_numbers = #tpu.dot_dimension_numbers<[1], [0], [0], [1], [0, 0, 1, 1], [], []>} : vector<192x64xbf16>, vector<64x64xbf16>, vector<192x64xf32> -> vector<192x64xf32>
      %c0_16 = arith.constant 0 : index
      %c0_17 = arith.constant 0 : index
      %17 = vector.load %arg10[%c0_16, %c0_17] : memref<384x64xf32, #tpu.memory_space<vmem>>, vector<192x64xf32>
      %c0_18 = arith.constant 0 : index
      %c0_19 = arith.constant 0 : index
      %c0_20 = arith.constant 0 : index
      %18 = vector.load %arg5[%c0_18, %c0_19, %c0_20] : memref<2x192x1xf32, #tpu.memory_space<vmem>>, vector<1x192x1xf32>
      %19 = vector.shape_cast %18 : vector<1x192x1xf32> to vector<192x1xf32>
      %20 = vector.broadcast %19 : vector<192x1xf32> to vector<192x64xf32>
      %21 = arith.mulf %17, %20 : vector<192x64xf32>
      %22 = arith.truncf %21 : vector<192x64xf32> to vector<192x64xbf16>
      %c0_21 = arith.constant 0 : index
      %c0_22 = arith.constant 0 : index
      %c0_23 = arith.constant 0 : index
      %23 = vector.load %arg7[%c0_21, %c0_22, %c0_23] : memref<2x64x64xbf16, #tpu.memory_space<vmem>>, vector<1x64x64xbf16>
      %24 = vector.shape_cast %23 : vector<1x64x64xbf16> to vector<64x64xbf16>
      %cst_24 = arith.constant dense<0.000000e+00> : vector<192x64xf32>
      %25 = tpu.matmul %22, %24, %cst_24 {dimension_numbers = #tpu.dot_dimension_numbers<[1], [0], [0], [1], [0, 0, 1, 1], [], []>} : vector<192x64xbf16>, vector<64x64xbf16>, vector<192x64xf32> -> vector<192x64xf32>
      %26 = arith.addf %16, %25 : vector<192x64xf32>
      %c192 = arith.constant 192 : index
      %c0_25 = arith.constant 0 : index
      %27 = vector.load %arg10[%c192, %c0_25] : memref<384x64xf32, #tpu.memory_space<vmem>>, vector<192x64xf32>
      %c1 = arith.constant 1 : index
      %c0_26 = arith.constant 0 : index
      %c0_27 = arith.constant 0 : index
      %28 = vector.load %arg5[%c1, %c0_26, %c0_27] : memref<2x192x1xf32, #tpu.memory_space<vmem>>, vector<1x192x1xf32>
      %29 = vector.shape_cast %28 : vector<1x192x1xf32> to vector<192x1xf32>
      %30 = vector.broadcast %29 : vector<192x1xf32> to vector<192x64xf32>
      %31 = arith.mulf %27, %30 : vector<192x64xf32>
      %32 = arith.truncf %31 : vector<192x64xf32> to vector<192x64xbf16>
      %c1_28 = arith.constant 1 : index
      %c0_29 = arith.constant 0 : index
      %c0_30 = arith.constant 0 : index
      %33 = vector.load %arg7[%c1_28, %c0_29, %c0_30] : memref<2x64x64xbf16, #tpu.memory_space<vmem>>, vector<1x64x64xbf16>
      %34 = vector.shape_cast %33 : vector<1x64x64xbf16> to vector<64x64xbf16>
      %cst_31 = arith.constant dense<0.000000e+00> : vector<192x64xf32>
      %35 = tpu.matmul %32, %34, %cst_31 {dimension_numbers = #tpu.dot_dimension_numbers<[1], [0], [0], [1], [0, 0, 1, 1], [], []>} : vector<192x64xbf16>, vector<64x64xbf16>, vector<192x64xf32> -> vector<192x64xf32>
      %36 = arith.addf %26, %35 : vector<192x64xf32>
      %c0_32 = arith.constant 0 : index
      %c0_33 = arith.constant 0 : index
      %37 = vector.load %arg8[%c0_32, %c0_33] : memref<1x64xf32, #tpu.memory_space<vmem>>, vector<1x64xf32>
      %38 = vector.broadcast %37 : vector<1x64xf32> to vector<192x64xf32>
      %39 = arith.addf %36, %38 : vector<192x64xf32>
      %40 = arith.truncf %39 : vector<192x64xf32> to vector<192x64xbf16>
      %c0_34 = arith.constant 0 : index
      %c0_35 = arith.constant 0 : index
      %41 = vector.load %arg9[%c0_34, %c0_35] : memref<192x64xbf16, #tpu.memory_space<vmem>>, vector<192x64xbf16>
      tpu.vector_store %arg9[%c0_34, %c0_35], %40 {strides = array<i32>} : memref<192x64xbf16, #tpu.memory_space<vmem>>, vector<192x64xbf16>,
    } else {
    }
    return
  }
  func.func @transform_0(%arg0: i32, %arg1: i32) -> (i32, i32) {
    %c0_i32 = arith.constant 0 : i32
    %c0_i32_0 = arith.constant 0 : i32
    return %arg0, %c0_i32 : i32, i32
  }
  func.func @transform_1(%arg0: i32, %arg1: i32) -> (i32, i32) {
    %c0_i32 = arith.constant 0 : i32
    %c0_i32_0 = arith.constant 0 : i32
    return %arg1, %c0_i32 : i32, i32
  }
  func.func @transform_2(%arg0: i32, %arg1: i32) -> (i32, i32, i32) {
    %c0_i32 = arith.constant 0 : i32
    %c0_i32_0 = arith.constant 0 : i32
    return %c0_i32, %arg0, %arg1 : i32, i32, i32
  }
  func.func @transform_3(%arg0: i32, %arg1: i32) -> (i32, i32, i32) {
    %c0_i32 = arith.constant 0 : i32
    %c0_i32_0 = arith.constant 0 : i32
    %c0_i32_1 = arith.constant 0 : i32
    return %c0_i32, %arg0, %c0_i32_0 : i32, i32, i32
  }
  func.func @transform_4(%arg0: i32, %arg1: i32) -> (i32, i32) {
    %c0_i32 = arith.constant 0 : i32
    %c0_i32_0 = arith.constant 0 : i32
    %c0_i32_1 = arith.constant 0 : i32
    return %c0_i32, %c0_i32_0 : i32, i32
  }
  func.func @transform_5(%arg0: i32, %arg1: i32) -> (i32, i32, i32) {
    %c0_i32 = arith.constant 0 : i32
    %c0_i32_0 = arith.constant 0 : i32
    %c0_i32_1 = arith.constant 0 : i32
    %c0_i32_2 = arith.constant 0 : i32
    return %c0_i32, %c0_i32_0, %c0_i32_1 : i32, i32, i32
  }
  func.func @transform_6(%arg0: i32, %arg1: i32) -> (i32, i32) {
    %c0_i32 = arith.constant 0 : i32
    %c0_i32_0 = arith.constant 0 : i32
    %c0_i32_1 = arith.constant 0 : i32
    return %c0_i32, %c0_i32_0 : i32, i32
  }
  func.func @transform_7(%arg0: i32, %arg1: i32) -> (i32, i32) {
    %c0_i32 = arith.constant 0 : i32
    %c0_i32_0 = arith.constant 0 : i32
    return %arg0, %c0_i32 : i32, i32
  }
}

module attributes {stable_mosaic.version = 11 : i64} {
  func.func @_rgcn_kernel(%arg0: i32, %arg1: i32, %arg2: memref<192x64xbf16, #tpu.memory_space<vmem>>, %arg3: memref<384x64xbf16, #tpu.memory_space<vmem>>, %arg4: memref<2x192x384xi8, #tpu.memory_space<vmem>>, %arg5: memref<2x192x1xf32, #tpu.memory_space<vmem>>, %arg6: memref<64x64xbf16, #tpu.memory_space<vmem>>, %arg7: memref<2x64x64xbf16, #tpu.memory_space<vmem>>, %arg8: memref<1x64xf32, #tpu.memory_space<vmem>>, %arg9: memref<64x64xbf16, #tpu.memory_space<vmem>>, %arg10: memref<1x64xf32, #tpu.memory_space<vmem>>, %arg11: memref<192x64xbf16, #tpu.memory_space<vmem>>, %arg12: memref<384x64xf32, #tpu.memory_space<vmem>>) attributes {dimension_semantics = [#tpu.dimension_semantics<parallel>, #tpu.dimension_semantics<arbitrary>], iteration_bounds = array<i64: 2, 1>, scalar_prefetch = 0 : i64, scratch_operands = 1 : i64, tpu.core_type = #tpu.core_type<tc>, window_params = [{transform_indices = @transform_0, window_bounds = array<i64: 192, 64>}, {transform_indices = @transform_1, window_bounds = array<i64: 384, 64>}, {transform_indices = @transform_2, window_bounds = array<i64: 2, 192, 384>}, {transform_indices = @transform_3, window_bounds = array<i64: 2, 192, 1>}, {pipeline_mode = #tpu.pipeline_mode<synchronous>, transform_indices = @transform_4, window_bounds = array<i64: 64, 64>}, {pipeline_mode = #tpu.pipeline_mode<synchronous>, transform_indices = @transform_5, window_bounds = array<i64: 2, 64, 64>}, {pipeline_mode = #tpu.pipeline_mode<synchronous>, transform_indices = @transform_6, window_bounds = array<i64: 1, 64>}, {pipeline_mode = #tpu.pipeline_mode<synchronous>, transform_indices = @transform_7, window_bounds = array<i64: 64, 64>}, {pipeline_mode = #tpu.pipeline_mode<synchronous>, transform_indices = @transform_8, window_bounds = array<i64: 1, 64>}, {transform_indices = @transform_9, window_bounds = array<i64: 192, 64>}]} {
    %c0_i32 = arith.constant 0 : i32
    %0 = arith.cmpi eq, %arg1, %c0_i32 : i32
    %1 = arith.extui %0 : i1 to i32
    %c0_i32_0 = arith.constant 0 : i32
    %2 = arith.cmpi ne, %1, %c0_i32_0 : i32
    scf.if %2 {
      %cst_11 = arith.constant 0.000000e+00 : f32
      %14 = vector.broadcast %cst_11 : f32 to vector<384x64xf32>
      %c0_12 = arith.constant 0 : index
      %c0_13 = arith.constant 0 : index
      %15 = vector.load %arg12[%c0_12, %c0_13] : memref<384x64xf32, #tpu.memory_space<vmem>>, vector<384x64xf32>
      tpu.vector_store %arg12[%c0_12, %c0_13], %14 {strides = array<i32>} : memref<384x64xf32, #tpu.memory_space<vmem>>, vector<384x64xf32>,
    } else {
    }
    %c0 = arith.constant 0 : index
    %c0_1 = arith.constant 0 : index
    %c0_2 = arith.constant 0 : index
    %3 = vector.load %arg4[%c0, %c0_1, %c0_2] : memref<2x192x384xi8, #tpu.memory_space<vmem>>, vector<2x192x384xi8>
    %4 = arith.sitofp %3 : vector<2x192x384xi8> to vector<2x192x384xbf16>
    %c0_3 = arith.constant 0 : index
    %c0_4 = arith.constant 0 : index
    %5 = vector.load %arg3[%c0_3, %c0_4] : memref<384x64xbf16, #tpu.memory_space<vmem>>, vector<384x64xbf16>
    %6 = vector.shape_cast %4 : vector<2x192x384xbf16> to vector<384x384xbf16>
    %c0_5 = arith.constant 0 : index
    %c0_6 = arith.constant 0 : index
    %7 = vector.load %arg12[%c0_5, %c0_6] : memref<384x64xf32, #tpu.memory_space<vmem>>, vector<384x64xf32>
    %cst = arith.constant dense<0.000000e+00> : vector<384x64xf32>
    %8 = tpu.matmul %6, %5, %cst {dimension_numbers = #tpu.dot_dimension_numbers<[1], [0], [0], [1], [0, 0, 1, 1], [], []>} : vector<384x384xbf16>, vector<384x64xbf16>, vector<384x64xf32> -> vector<384x64xf32>
    %9 = arith.addf %7, %8 : vector<384x64xf32>
    %c0_7 = arith.constant 0 : index
    %c0_8 = arith.constant 0 : index
    %10 = vector.load %arg12[%c0_7, %c0_8] : memref<384x64xf32, #tpu.memory_space<vmem>>, vector<384x64xf32>
    tpu.vector_store %arg12[%c0_7, %c0_8], %9 {strides = array<i32>} : memref<384x64xf32, #tpu.memory_space<vmem>>, vector<384x64xf32>,
    %c0_i32_9 = arith.constant 0 : i32
    %11 = arith.cmpi eq, %arg1, %c0_i32_9 : i32
    %12 = arith.extui %11 : i1 to i32
    %c0_i32_10 = arith.constant 0 : i32
    %13 = arith.cmpi ne, %12, %c0_i32_10 : i32
    scf.if %13 {
      %c0_11 = arith.constant 0 : index
      %c0_12 = arith.constant 0 : index
      %14 = vector.load %arg2[%c0_11, %c0_12] : memref<192x64xbf16, #tpu.memory_space<vmem>>, vector<192x64xbf16>
      %c0_13 = arith.constant 0 : index
      %c0_14 = arith.constant 0 : index
      %15 = vector.load %arg6[%c0_13, %c0_14] : memref<64x64xbf16, #tpu.memory_space<vmem>>, vector<64x64xbf16>
      %cst_15 = arith.constant dense<0.000000e+00> : vector<192x64xf32>
      %16 = tpu.matmul %14, %15, %cst_15 {dimension_numbers = #tpu.dot_dimension_numbers<[1], [0], [0], [1], [0, 0, 1, 1], [], []>} : vector<192x64xbf16>, vector<64x64xbf16>, vector<192x64xf32> -> vector<192x64xf32>
      %c0_16 = arith.constant 0 : index
      %c0_17 = arith.constant 0 : index
      %17 = vector.load %arg12[%c0_16, %c0_17] : memref<384x64xf32, #tpu.memory_space<vmem>>, vector<192x64xf32>
      %c0_18 = arith.constant 0 : index
      %c0_19 = arith.constant 0 : index
      %c0_20 = arith.constant 0 : index
      %18 = vector.load %arg5[%c0_18, %c0_19, %c0_20] : memref<2x192x1xf32, #tpu.memory_space<vmem>>, vector<1x192x1xf32>
      %19 = vector.shape_cast %18 : vector<1x192x1xf32> to vector<192x1xf32>
      %20 = vector.broadcast %19 : vector<192x1xf32> to vector<192x64xf32>
      %21 = arith.mulf %17, %20 : vector<192x64xf32>
      %22 = arith.truncf %21 : vector<192x64xf32> to vector<192x64xbf16>
      %c0_21 = arith.constant 0 : index
      %c0_22 = arith.constant 0 : index
      %c0_23 = arith.constant 0 : index
      %23 = vector.load %arg7[%c0_21, %c0_22, %c0_23] : memref<2x64x64xbf16, #tpu.memory_space<vmem>>, vector<1x64x64xbf16>
      %24 = vector.shape_cast %23 : vector<1x64x64xbf16> to vector<64x64xbf16>
      %cst_24 = arith.constant dense<0.000000e+00> : vector<192x64xf32>
      %25 = tpu.matmul %22, %24, %cst_24 {dimension_numbers = #tpu.dot_dimension_numbers<[1], [0], [0], [1], [0, 0, 1, 1], [], []>} : vector<192x64xbf16>, vector<64x64xbf16>, vector<192x64xf32> -> vector<192x64xf32>
      %26 = arith.addf %16, %25 : vector<192x64xf32>
      %c192 = arith.constant 192 : index
      %c0_25 = arith.constant 0 : index
      %27 = vector.load %arg12[%c192, %c0_25] : memref<384x64xf32, #tpu.memory_space<vmem>>, vector<192x64xf32>
      %c1 = arith.constant 1 : index
      %c0_26 = arith.constant 0 : index
      %c0_27 = arith.constant 0 : index
      %28 = vector.load %arg5[%c1, %c0_26, %c0_27] : memref<2x192x1xf32, #tpu.memory_space<vmem>>, vector<1x192x1xf32>
      %29 = vector.shape_cast %28 : vector<1x192x1xf32> to vector<192x1xf32>
      %30 = vector.broadcast %29 : vector<192x1xf32> to vector<192x64xf32>
      %31 = arith.mulf %27, %30 : vector<192x64xf32>
      %32 = arith.truncf %31 : vector<192x64xf32> to vector<192x64xbf16>
      %c1_28 = arith.constant 1 : index
      %c0_29 = arith.constant 0 : index
      %c0_30 = arith.constant 0 : index
      %33 = vector.load %arg7[%c1_28, %c0_29, %c0_30] : memref<2x64x64xbf16, #tpu.memory_space<vmem>>, vector<1x64x64xbf16>
      %34 = vector.shape_cast %33 : vector<1x64x64xbf16> to vector<64x64xbf16>
      %cst_31 = arith.constant dense<0.000000e+00> : vector<192x64xf32>
      %35 = tpu.matmul %32, %34, %cst_31 {dimension_numbers = #tpu.dot_dimension_numbers<[1], [0], [0], [1], [0, 0, 1, 1], [], []>} : vector<192x64xbf16>, vector<64x64xbf16>, vector<192x64xf32> -> vector<192x64xf32>
      %36 = arith.addf %26, %35 : vector<192x64xf32>
      %c0_32 = arith.constant 0 : index
      %c0_33 = arith.constant 0 : index
      %37 = vector.load %arg8[%c0_32, %c0_33] : memref<1x64xf32, #tpu.memory_space<vmem>>, vector<1x64xf32>
      %38 = vector.broadcast %37 : vector<1x64xf32> to vector<192x64xf32>
      %39 = arith.addf %36, %38 : vector<192x64xf32>
      %40 = arith.truncf %39 : vector<192x64xf32> to vector<192x64xbf16>
      %c0_34 = arith.constant 0 : index
      %c0_35 = arith.constant 0 : index
      %41 = vector.load %arg9[%c0_34, %c0_35] : memref<64x64xbf16, #tpu.memory_space<vmem>>, vector<64x64xbf16>
      %cst_36 = arith.constant dense<0.000000e+00> : vector<192x64xf32>
      %42 = tpu.matmul %40, %41, %cst_36 {dimension_numbers = #tpu.dot_dimension_numbers<[1], [0], [0], [1], [0, 0, 1, 1], [], []>} : vector<192x64xbf16>, vector<64x64xbf16>, vector<192x64xf32> -> vector<192x64xf32>
      %c0_37 = arith.constant 0 : index
      %c0_38 = arith.constant 0 : index
      %43 = vector.load %arg10[%c0_37, %c0_38] : memref<1x64xf32, #tpu.memory_space<vmem>>, vector<1x64xf32>
      %44 = vector.broadcast %43 : vector<1x64xf32> to vector<192x64xf32>
      %45 = arith.addf %42, %44 : vector<192x64xf32>
      %cst_39 = arith.constant 0.000000e+00 : f32
      %46 = vector.broadcast %cst_39 : f32 to vector<192x64xf32>
      %47 = arith.cmpf ogt, %45, %46 : vector<192x64xf32>
      %cst_40 = arith.constant 0.00999999977 : f32
      %48 = vector.broadcast %cst_40 : f32 to vector<192x64xf32>
      %49 = arith.mulf %48, %45 : vector<192x64xf32>
      %50 = arith.select %47, %45, %49 : vector<192x64xi1>, vector<192x64xf32>
      %51 = arith.truncf %50 : vector<192x64xf32> to vector<192x64xbf16>
      %c0_41 = arith.constant 0 : index
      %c0_42 = arith.constant 0 : index
      %52 = vector.load %arg11[%c0_41, %c0_42] : memref<192x64xbf16, #tpu.memory_space<vmem>>, vector<192x64xbf16>
      tpu.vector_store %arg11[%c0_41, %c0_42], %51 {strides = array<i32>} : memref<192x64xbf16, #tpu.memory_space<vmem>>, vector<192x64xbf16>,
    } else {
    }
    return
  }
  func.func @transform_0(%arg0: i32, %arg1: i32) -> (i32, i32) {
    %c0_i32 = arith.constant 0 : i32
    %c0_i32_0 = arith.constant 0 : i32
    return %arg0, %c0_i32 : i32, i32
  }
  func.func @transform_1(%arg0: i32, %arg1: i32) -> (i32, i32) {
    %c0_i32 = arith.constant 0 : i32
    %c0_i32_0 = arith.constant 0 : i32
    return %arg1, %c0_i32 : i32, i32
  }
  func.func @transform_2(%arg0: i32, %arg1: i32) -> (i32, i32, i32) {
    %c0_i32 = arith.constant 0 : i32
    %c0_i32_0 = arith.constant 0 : i32
    return %c0_i32, %arg0, %arg1 : i32, i32, i32
  }
  func.func @transform_3(%arg0: i32, %arg1: i32) -> (i32, i32, i32) {
    %c0_i32 = arith.constant 0 : i32
    %c0_i32_0 = arith.constant 0 : i32
    %c0_i32_1 = arith.constant 0 : i32
    return %c0_i32, %arg0, %c0_i32_0 : i32, i32, i32
  }
  func.func @transform_4(%arg0: i32, %arg1: i32) -> (i32, i32) {
    %c0_i32 = arith.constant 0 : i32
    %c0_i32_0 = arith.constant 0 : i32
    %c0_i32_1 = arith.constant 0 : i32
    return %c0_i32, %c0_i32_0 : i32, i32
  }
  func.func @transform_5(%arg0: i32, %arg1: i32) -> (i32, i32, i32) {
    %c0_i32 = arith.constant 0 : i32
    %c0_i32_0 = arith.constant 0 : i32
    %c0_i32_1 = arith.constant 0 : i32
    %c0_i32_2 = arith.constant 0 : i32
    return %c0_i32, %c0_i32_0, %c0_i32_1 : i32, i32, i32
  }
  func.func @transform_6(%arg0: i32, %arg1: i32) -> (i32, i32) {
    %c0_i32 = arith.constant 0 : i32
    %c0_i32_0 = arith.constant 0 : i32
    %c0_i32_1 = arith.constant 0 : i32
    return %c0_i32, %c0_i32_0 : i32, i32
  }
  func.func @transform_7(%arg0: i32, %arg1: i32) -> (i32, i32) {
    %c0_i32 = arith.constant 0 : i32
    %c0_i32_0 = arith.constant 0 : i32
    %c0_i32_1 = arith.constant 0 : i32
    return %c0_i32, %c0_i32_0 : i32, i32
  }
  func.func @transform_8(%arg0: i32, %arg1: i32) -> (i32, i32) {
    %c0_i32 = arith.constant 0 : i32
    %c0_i32_0 = arith.constant 0 : i32
    %c0_i32_1 = arith.constant 0 : i32
    return %c0_i32, %c0_i32_0 : i32, i32
  }
  func.func @transform_9(%arg0: i32, %arg1: i32) -> (i32, i32) {
    %c0_i32 = arith.constant 0 : i32
    %c0_i32_0 = arith.constant 0 : i32
    return %arg0, %c0_i32 : i32, i32
  }
}

</mosaic_0001>

<llo_original>
// kernel: botrgcn_forward.3
$region0: #{botrgcn_forward.3}
  #allocation0 [shape = 'u32[]', space=smem, size = 0x4, offset = 0x4, fixed_abs, tag = 'smem constant byte address 0x4 - core index']
  #allocation1 [shape = 'u32[144,128]{1,0:T(1,128)}', space=vmem, size = 0x12000, scoped, tag = 'internal scratch']
  %s0 = inlined_call_operand.vmem [shape: bf16[384,80], index: 0, kind: input, shape index: {}]
  %s1 = inlined_call_operand.vmem [shape: bf16[80,64], index: 1, kind: input, shape index: {}]
  %s2 = inlined_call_operand.vmem [shape: f32[1,64], index: 2, kind: input, shape index: {}]
  %s3 = inlined_call_operand.vmem [shape: bf16[64,64], index: 3, kind: input, shape index: {}]
  %s4 = inlined_call_operand.vmem [shape: f32[1,64], index: 4, kind: input, shape index: {}]
  %s5 = inlined_call_operand.vmem [shape: bf16[384,64], index: 5, kind: output, shape index: {}]
  %s6 = sld [smem:[#allocation0]]
  $region53: #{botrgcn_forward.3} parent=0
    _
  %s8 = ssub.s32 1, %s6
  %s9 = scalar_select 0, %s8, %s6
  loop: start=0, step=1, limit=4
  $region2: #{botrgcn_forward.3} parent=0 // loop_pre_header
    _
  $region3: #{botrgcn_forward.3} parent=0 // loop_header
    %s11 = sphi 0, %s15
    %p12 = scmp.ge.s32.totalorder %s11, 4
    %s21 = sphi 0, %s23
    %s24 = sphi 0, %s21
    %s25 = sphi 0, %s24
    %s41 = sphi 0, %s25
    %s45 = sphi 0, %s45
    %s47 = sphi 0, %s45
    %s48 = sphi 0, %s47
    %s62 = sphi 0, %s48
    %s66 = sphi 0, %s66
    %s68 = sphi 0, %s66
    %s69 = sphi 0, %s68
    %s83 = sphi 0, %s69
    %s87 = sphi 0, %s87
    %s89 = sphi 0, %s87
    %s90 = sphi 0, %s89
    %s104 = sphi 0, %s90
    %s108 = sphi 0, %s108
    %s110 = sphi 0, %s108
    %s111 = sphi 0, %s110
    %s125 = sphi 0, %s111
    %s131 = sphi 0, %s133
    %s134 = sphi 0, %s131
    %s135 = sphi 0, %s134
    %s151 = sphi 0, %s135
  $region4: #{botrgcn_forward.3} parent=0 // loop_header_branch
    %14 = sbr.rel (%p12) target = $region8
  $region5: #{botrgcn_forward.3} parent=0 // loop_body
    %s16 = ssub.s32 %s11, 1
    %s17 = ssub.s32 %s11, 2
    %s18 = sadd.s32 %s11, 1
    %s19 = ssub.s32 %s11, %s18
    %p20 = scmp.eq.s32.totalorder %s19, 0
    %s22 = sadd.s32 %s21, 1
    %s23 = scalar_select %p20, %s21, %s22
    %p26 = pneg %p20
    %p27 = scmp.eq.s32.totalorder %s11, 1
    %p28 = por %p26, %p27
    %p29 = scmp.ne.s32.totalorder %s21, %s24
    %p30 = scmp.eq.s32.totalorder %s11, 0
    %p31 = por %p29, %p30
    %p32 = scmp.ne.s32.totalorder %s21, %s24
    %p33 = scmp.eq.s32.totalorder %s16, 1
    %p34 = por %p32, %p33
    %p35 = scmp.ne.s32.totalorder %s24, %s25
    %p36 = scmp.eq.s32.totalorder %s16, 0
    %p37 = por %p35, %p36
    %p38 = scmp.ne.s32.totalorder %s24, %s25
    %p39 = scmp.eq.s32.totalorder %s17, 1
    %p40 = por %p38, %p39
    %p42 = scmp.ne.s32.totalorder %s25, %s41
    %p43 = scmp.eq.s32.totalorder %s17, 0
    %p44 = por %p42, %p43
    %s46 = sadd.s32 %s45, 1
    %p49 = scmp.eq.s32.totalorder %s11, 1
    %p50 = scmp.ne.s32.totalorder %s45, %s47
    %p51 = scmp.eq.s32.totalorder %s11, 0
    %p52 = por %p50, %p51
    %p53 = scmp.ne.s32.totalorder %s45, %s47
    %p54 = scmp.eq.s32.totalorder %s16, 1
    %p55 = por %p53, %p54
    %p56 = scmp.ne.s32.totalorder %s47, %s48
    %p57 = scmp.eq.s32.totalorder %s16, 0
    %p58 = por %p56, %p57
    %p59 = scmp.ne.s32.totalorder %s47, %s48
    %p60 = scmp.eq.s32.totalorder %s17, 1
    %p61 = por %p59, %p60
    %p63 = scmp.ne.s32.totalorder %s48, %s62
    %p64 = scmp.eq.s32.totalorder %s17, 0
    %p65 = por %p63, %p64
    %s67 = sadd.s32 %s66, 1
    %p70 = scmp.eq.s32.totalorder %s11, 1
    %p71 = scmp.ne.s32.totalorder %s66, %s68
    %p72 = scmp.eq.s32.totalorder %s11, 0
    %p73 = por %p71, %p72
    %p74 = scmp.ne.s32.totalorder %s66, %s68
    %p75 = scmp.eq.s32.totalorder %s16, 1
    %p76 = por %p74, %p75
    %p77 = scmp.ne.s32.totalorder %s68, %s69
    %p78 = scmp.eq.s32.totalorder %s16, 0
    %p79 = por %p77, %p78
    %p80 = scmp.ne.s32.totalorder %s68, %s69
    %p81 = scmp.eq.s32.totalorder %s17, 1
    %p82 = por %p80, %p81
    %p84 = scmp.ne.s32.totalorder %s69, %s83
    %p85 = scmp.eq.s32.totalorder %s17, 0
    %p86 = por %p84, %p85
    %s88 = sadd.s32 %s87, 1
    %p91 = scmp.eq.s32.totalorder %s11, 1
    %p92 = scmp.ne.s32.totalorder %s87, %s89
    %p93 = scmp.eq.s32.totalorder %s11, 0
    %p94 = por %p92, %p93
    %p95 = scmp.ne.s32.totalorder %s87, %s89
    %p96 = scmp.eq.s32.totalorder %s16, 1
    %p97 = por %p95, %p96
    %p98 = scmp.ne.s32.totalorder %s89, %s90
    %p99 = scmp.eq.s32.totalorder %s16, 0
    %p100 = por %p98, %p99
    %p101 = scmp.ne.s32.totalorder %s89, %s90
    %p102 = scmp.eq.s32.totalorder %s17, 1
    %p103 = por %p101, %p102
    %p105 = scmp.ne.s32.totalorder %s90, %s104
    %p106 = scmp.eq.s32.totalorder %s17, 0
    %p107 = por %p105, %p106
    %s109 = sadd.s32 %s108, 1
    %p112 = scmp.eq.s32.totalorder %s11, 1
    %p113 = scmp.ne.s32.totalorder %s108, %s110
    %p114 = scmp.eq.s32.totalorder %s11, 0
    %p115 = por %p113, %p114
    %p116 = scmp.ne.s32.totalorder %s108, %s110
    %p117 = scmp.eq.s32.totalorder %s16, 1
    %p118 = por %p116, %p117
    %p119 = scmp.ne.s32.totalorder %s110, %s111
    %p120 = scmp.eq.s32.totalorder %s16, 0
    %p121 = por %p119, %p120
    %p122 = scmp.ne.s32.totalorder %s110, %s111
    %p123 = scmp.eq.s32.totalorder %s17, 1
    %p124 = por %p122, %p123
    %p126 = scmp.ne.s32.totalorder %s111, %s125
    %p127 = scmp.eq.s32.totalorder %s17, 0
    %p128 = por %p126, %p127
    %s129 = ssub.s32 %s11, %s18
    %p130 = scmp.eq.s32.totalorder %s129, 0
    %s132 = sadd.s32 %s131, 1
    %s133 = scalar_select %p130, %s131, %s132
    %p136 = pneg %p130
    %p137 = scmp.eq.s32.totalorder %s11, 1
    %p138 = por %p136, %p137
    %p139 = scmp.ne.s32.totalorder %s131, %s134
    %p140 = scmp.eq.s32.totalorder %s11, 0
    %p141 = por %p139, %p140
    %p142 = scmp.ne.s32.totalorder %s131, %s134
    %p143 = scmp.eq.s32.totalorder %s16, 1
    %p144 = por %p142, %p143
    %p145 = scmp.ne.s32.totalorder %s134, %s135
    %p146 = scmp.eq.s32.totalorder %s16, 0
    %p147 = por %p145, %p146
    %p148 = scmp.ne.s32.totalorder %s134, %s135
    %p149 = scmp.eq.s32.totalorder %s17, 1
    %p150 = por %p148, %p149
    %p152 = scmp.ne.s32.totalorder %s135, %s151
    %p153 = scmp.eq.s32.totalorder %s17, 0
    %p154 = por %p152, %p153
    %p155 = scmp.le.s32.totalorder 1, %s11
    %p156 = scmp.lt.s32.totalorder %s11, 3
    %p157 = pnand %p155, %p156
    %p158 = pneg %p157
    // Predicated region
    $region9: #{botrgcn_forward.3} parent=5 // pred_check
      _
    $region10: #{botrgcn_forward.3} parent=5 // pred_check_branch
      %160 = sbr.rel (%p157) target = $region12
    $region11: #{botrgcn_forward.3} parent=5 // pred_region
      %s161 = ssub.s32 %s11, 1
      // Predicated region
      $region13: #{botrgcn_forward.3} parent=11 // pred_check
        %p162 = pneg %p58
      $region14: #{botrgcn_forward.3} parent=11 // pred_check_branch
        %164 = sbr.rel (%p162) target = $region16
      $region15: #{botrgcn_forward.3} parent=11 // pred_region
        _
      $region16: #{botrgcn_forward.3} parent=11 // pred_fallthru
        _
      // Predicated region
      $region17: #{botrgcn_forward.3} parent=11 // pred_check
        %p165 = pneg %p79
      $region18: #{botrgcn_forward.3} parent=11 // pred_check_branch
        %167 = sbr.rel (%p165) target = $region20
      $region19: #{botrgcn_forward.3} parent=11 // pred_region
        _
      $region20: #{botrgcn_forward.3} parent=11 // pred_fallthru
        _
      // Predicated region
      $region21: #{botrgcn_forward.3} parent=11 // pred_check
        %p168 = pneg %p100
      $region22: #{botrgcn_forward.3} parent=11 // pred_check_branch
        %170 = sbr.rel (%p168) target = $region24
      $region23: #{botrgcn_forward.3} parent=11 // pred_region
        _
      $region24: #{botrgcn_forward.3} parent=11 // pred_fallthru
        _
      // Predicated region
      $region25: #{botrgcn_forward.3} parent=11 // pred_check
        %p171 = pneg %p121
      $region26: #{botrgcn_forward.3} parent=11 // pred_check_branch
        %173 = sbr.rel (%p171) target = $region28
      $region27: #{botrgcn_forward.3} parent=11 // pred_region
        _
      $region28: #{botrgcn_forward.3} parent=11 // pred_fallthru
        _
    $region12: #{botrgcn_forward.3} parent=5 // pred_fallthru
      _
    %p174 = scmp.lt.s32.totalorder %s11, 2
    // Predicated region
    $region29: #{botrgcn_forward.3} parent=5 // pred_check
      %p175 = pneg %p174
    $region30: #{botrgcn_forward.3} parent=5 // pred_check_branch
      %177 = sbr.rel (%p175) target = $region32
    $region31: #{botrgcn_forward.3} parent=5 // pred_region
      // Predicated region
      $region33: #{botrgcn_forward.3} parent=31 // pred_check
        %p178 = pneg %p31
      $region34: #{botrgcn_forward.3} parent=31 // pred_check_branch
        %180 = sbr.rel (%p178) target = $region36
      $region35: #{botrgcn_forward.3} parent=31 // pred_region
        %s181 = smul.u32 24, %s11
        %p182 = scmp.lt.s32.totalorder %s181, 47
        %s183 = scalar_select %p182, %s181, 47
        %s184 = smul.addr %s183, 4
        %s185 = scalar_lea.vmem %s0, %s184
        %s186 = smul.u32 24, %s11
      $region36: #{botrgcn_forward.3} parent=31 // pred_fallthru
        _
    $region32: #{botrgcn_forward.3} parent=5 // pred_fallthru
      _
    %p187 = scmp.le.s32.totalorder 1, %s11
    %p188 = scmp.lt.s32.totalorder %s11, 3
    %p189 = pnand %p187, %p188
    %p190 = pneg %p189
    // Predicated region
    $region37: #{botrgcn_forward.3} parent=5 // pred_check
      _
    $region38: #{botrgcn_forward.3} parent=5 // pred_check_branch
      %192 = sbr.rel (%p189) target = $region40
    $region39: #{botrgcn_forward.3} parent=5 // pred_region
      %s193 = ssub.s32 %s11, 1
      %s194 = smul.u32 24, %s16
      %p195 = scmp.lt.s32.totalorder %s194, 47
      %s196 = scalar_select %p195, %s194, 47
      %s197 = smul.addr %s196, 4
      %s198 = scalar_lea.vmem %s0, %s197
      %p199 = pneg %p37
      %p200 = pneg %p34
      %p201 = pneg %p58
      %p202 = pneg %p55
      %p203 = pneg %p79
      %p204 = pneg %p76
      %p205 = pneg %p100
      %p206 = pneg %p97
      %p207 = pneg %p121
      %p208 = pneg %p118
      %p209 = pneg %p147
      %p210 = pneg %p144
      %s211 = smul.u32 24, %s16
      %p212 = scmp.lt.s32.totalorder %s211, 47
      %s213 = scalar_select %p212, %s211, 47
      %s214 = smul.addr %s213, 4
      %s215 = scalar_lea.vmem %s5, %s214
      %s216 = smul.u32 24, %s16
      %p217 = scmp.lt.s32.totalorder %s216, 47
      %s218 = scalar_select %p217, %s216, 47
      %s219 = smul.addr %s218, 4
      %s220 = scalar_lea.vmem %s0, %s219
      %s221 = smul.u32 24, %s16
      %s222 = smul.u32 24, %s16
      %p223 = scmp.lt.s32.totalorder %s222, 47
      %s224 = scalar_select %p223, %s222, 47
      %s225 = smul.addr %s224, 4
      %s226 = scalar_lea.vmem %s5, %s225
      %s227 = smul.u32 24, %s16
      %v229 = vld [vmem:[%s220] sm:$0xf]
      %v230 = vld [vmem:[%s220 + $0x4] sm:$0xf]
      %v231 = vld [vmem:[%s220 + $0x8] sm:$0xf]
      %v232 = vld [vmem:[%s220 + $0xc] sm:$0xf]
      %v233 = vld [vmem:[%s220 + $0x10] sm:$0xf]
      %v234 = vld [vmem:[%s220 + $0x14] sm:$0xf]
      %v235 = vld [vmem:[%s220 + $0x18] sm:$0xf]
      %v236 = vld [vmem:[%s220 + $0x1c] sm:$0xf]
      %v237 = vld [vmem:[%s220 + $0x20] sm:$0xf]
      %v238 = vld [vmem:[%s220 + $0x24] sm:$0xf]
      %v239 = vld [vmem:[%s220 + $0x28] sm:$0xf]
      %v240 = vld [vmem:[%s220 + $0x2c] sm:$0xf]
      %v241 = vld [vmem:[%s220 + $0x30] sm:$0xf]
      %v242 = vld [vmem:[%s220 + $0x34] sm:$0xf]
      %v243 = vld [vmem:[%s220 + $0x38] sm:$0xf]
      %v244 = vld [vmem:[%s220 + $0x3c] sm:$0xf]
      %v245 = vld [vmem:[%s220 + $0x40] sm:$0xf]
      %v246 = vld [vmem:[%s220 + $0x44] sm:$0xf]
      %v247 = vld [vmem:[%s220 + $0x48] sm:$0xf]
      %v248 = vld [vmem:[%s220 + $0x4c] sm:$0xf]
      %v249 = vld [vmem:[%s220 + $0x50] sm:$0xf]
      %v250 = vld [vmem:[%s220 + $0x54] sm:$0xf]
      %v251 = vld [vmem:[%s220 + $0x58] sm:$0xf]
      %v252 = vld [vmem:[%s220 + $0x5c] sm:$0xf]
      %v253 = vld [vmem:[%s1] sm:$0xf]
      %v254 = vld [vmem:[%s1 + $0x4] sm:$0xf]
      %v255 = vld [vmem:[%s1 + $0x8] sm:$0xf]
      %v256 = vld [vmem:[%s1 + $0xc] sm:$0xf]
      %v257 = vld [vmem:[%s1 + $0x10] sm:$0xf]
      %v258 = vld [vmem:[%s1 + $0x14] sm:$0xf]
      %v259 = vld [vmem:[%s1 + $0x18] sm:$0xf]
      %v260 = vld [vmem:[%s1 + $0x1c] sm:$0xf]
      %v261 = vld [vmem:[%s1 + $0x20] sm:$0xf]
      %v262 = vld [vmem:[%s1 + $0x24] sm:$0xf]
      %v263 = vld [vmem:[%s2] sm:$0x1]
      %v265 = vlaneseq
      %v266 = vshrl.u32 %v265, 7
      %v267 = vsub.s32 0, %v266
      %v268 = vrot.slane %v263, %v267
      %v294 = vunpack.c.l.b16 %v229
      %v295 = vunpack.c.l.b16 %v230
      %v296 = vunpack.c.l.b16 %v231
      %v297 = vunpack.c.l.b16 %v232
      %v298 = vunpack.c.l.b16 %v233
      %v299 = vunpack.c.l.b16 %v234
      %v300 = vunpack.c.l.b16 %v235
      %v301 = vunpack.c.l.b16 %v236
      %v302 = vunpack.c.l.b16 %v237
      %v303 = vunpack.c.l.b16 %v238
      %v304 = vunpack.c.l.b16 %v239
      %v305 = vunpack.c.l.b16 %v240
      %v306 = vunpack.c.l.b16 %v241
      %v307 = vunpack.c.l.b16 %v242
      %v308 = vunpack.c.l.b16 %v243
      %v309 = vunpack.c.l.b16 %v244
      %v310 = vunpack.c.l.b16 %v245
      %v311 = vunpack.c.l.b16 %v246
      %v312 = vunpack.c.l.b16 %v247
      %v313 = vunpack.c.l.b16 %v248
      %v314 = vunpack.c.l.b16 %v249
      %v315 = vunpack.c.l.b16 %v250
      %v316 = vunpack.c.l.b16 %v251
      %v317 = vunpack.c.l.b16 %v252
      %v318 = vpack.c.b16 %v295, %v294
      %v319 = vpack.c.b16 %v297, %v296
      %v320 = vpack.c.b16 %v299, %v298
      %v321 = vpack.c.b16 %v301, %v300
      %v322 = vpack.c.b16 %v303, %v302
      %v323 = vpack.c.b16 %v305, %v304
      %v324 = vpack.c.b16 %v307, %v306
      %v325 = vpack.c.b16 %v309, %v308
      %v326 = vpack.c.b16 %v311, %v310
      %v327 = vpack.c.b16 %v313, %v312
      %v328 = vpack.c.b16 %v315, %v314
      %v329 = vpack.c.b16 %v317, %v316
      %v340 = vunpack.c.l.b16 %v253
      %v341 = vunpack.c.l.b16 %v254
      %v342 = vunpack.c.l.b16 %v255
      %v343 = vunpack.c.l.b16 %v256
      %v344 = vunpack.c.l.b16 %v257
      %v345 = vunpack.c.l.b16 %v258
      %v346 = vunpack.c.l.b16 %v259
      %v347 = vunpack.c.l.b16 %v260
      %v348 = vunpack.c.l.b16 %v261
      %v349 = vunpack.c.l.b16 %v262
      %v350 = vpack.c.b16 %v341, %v340
      %v351 = vpack.c.b16 %v343, %v342
      %v352 = vpack.c.b16 %v345, %v344
      %v353 = vpack.c.b16 %v347, %v346
      %v354 = vpack.c.b16 %v349, %v348
      %vm360 = vcmask 654336
      %v362 = vsel %vm360, %v318, 0
      %v365 = vsel %vm360, %v319, 0
      %v368 = vsel %vm360, %v320, 0
      %v371 = vsel %vm360, %v321, 0
      %v374 = vsel %vm360, %v322, 0
      %v377 = vsel %vm360, %v323, 0
      %v380 = vsel %vm360, %v324, 0
      %v383 = vsel %vm360, %v325, 0
      %v386 = vsel %vm360, %v326, 0
      %v389 = vsel %vm360, %v327, 0
      %v392 = vsel %vm360, %v328, 0
      %v395 = vsel %vm360, %v329, 0
      %397 = vmatprep.subr.bf16.mxu0 0
      %398 = vmatpush1.bf16.msra.mxu0 %v350
      %399 = vmatprep.subr.bf16.mxu0 0
      %400 = vmatpush1.bf16.msra.mxu0 %v351
      %401 = vmatprep.subr.bf16.mxu0 0
      %402 = vmatpush1.bf16.msra.mxu0 %v352
      %403 = vmatprep.subr.bf16.mxu0 0
      %404 = vmatpush1.bf16.msra.mxu0 %v353
      %405 = vmatprep.subr.bf16.mxu0 0
      %406 = vmatpush1.bf16.msra.mxu0 %v354
      %407 = vmatprep.subr.bf16.mxu0 0
      %408 = vmatpush1.bf16.msra.mxu0 0
      %409 = vmatprep.subr.bf16.mxu0 0
      %410 = vmatpush1.bf16.msra.mxu0 0
      %411 = vmatprep.subr.bf16.mxu0 0
      %412 = vmatpush1.bf16.msra.mxu0 0
      %413 = vmatprep.subr.bf16.mxu0 0
      %414 = vmatpush1.bf16.msra.mxu0 0
      %415 = vmatprep.subr.bf16.mxu0 0
      %416 = vmatpush1.bf16.msra.mxu0 0
      %417 = vmatprep.subr.bf16.mxu0 0
      %418 = vmatpush1.bf16.msra.mxu0 0
      %419 = vmatprep.subr.bf16.mxu0 0
      %420 = vmatpush1.bf16.msra.mxu0 0
      %421 = vmatprep.subr.bf16.mxu0 0
      %422 = vmatpush1.bf16.msra.mxu0 0
      %423 = vmatprep.subr.bf16.mxu0 0
      %424 = vmatpush1.bf16.msra.mxu0 0
      %425 = vmatprep.subr.bf16.mxu0 0
      %426 = vmatpush1.bf16.msra.mxu0 0
      %427 = vmatprep.subr.bf16.mxu0 0
      %428 = vmatpush1.bf16.msra.mxu0 0
      %429 = vmatprep.mubr.bf16.mxu0 0
      %430 = vmatmul.mubr.bf16.gmra.mrb[0].mxu0 %v362
      %v431 = vpop.f32.mrb[0].mxu0
      %v432 = vadd.f32 %v268, %v431
      %v433 = vpop.f32.mrb[0].mxu0
      %v434 = vpop.f32.mrb[0].mxu0
      %v435 = vadd.f32 %v268, %v434
      %v436 = vpop.f32.mrb[0].mxu0
      %437 = vmatprep.mubr.bf16.mxu0 0
      %438 = vmatmul.mubr.bf16.gmra.mrb[0].mxu0 %v365
      %v439 = vpop.f32.mrb[0].mxu0
      %v440 = vadd.f32 %v268, %v439
      %v441 = vpop.f32.mrb[0].mxu0
      %v442 = vpop.f32.mrb[0].mxu0
      %v443 = vadd.f32 %v268, %v442
      %v444 = vpop.f32.mrb[0].mxu0
      %445 = vmatprep.mubr.bf16.mxu0 0
      %446 = vmatmul.mubr.bf16.gmra.mrb[0].mxu0 %v368
      %v447 = vpop.f32.mrb[0].mxu0
      %v448 = vadd.f32 %v268, %v447
      %v449 = vpop.f32.mrb[0].mxu0
      %v450 = vpop.f32.mrb[0].mxu0
      %v451 = vadd.f32 %v268, %v450
      %v452 = vpop.f32.mrb[0].mxu0
      %453 = vmatprep.mubr.bf16.mxu0 0
      %454 = vmatmul.mubr.bf16.gmra.mrb[0].mxu0 %v371
      %v455 = vpop.f32.mrb[0].mxu0
      %v456 = vadd.f32 %v268, %v455
      %v457 = vpop.f32.mrb[0].mxu0
      %v458 = vpop.f32.mrb[0].mxu0
      %v459 = vadd.f32 %v268, %v458
      %v460 = vpop.f32.mrb[0].mxu0
      %461 = vmatprep.mubr.bf16.mxu0 0
      %462 = vmatmul.mubr.bf16.gmra.mrb[0].mxu0 %v374
      %v463 = vpop.f32.mrb[0].mxu0
      %v464 = vadd.f32 %v268, %v463
      %v465 = vpop.f32.mrb[0].mxu0
      %v466 = vpop.f32.mrb[0].mxu0
      %v467 = vadd.f32 %v268, %v466
      %v468 = vpop.f32.mrb[0].mxu0
      %469 = vmatprep.mubr.bf16.mxu0 0
      %470 = vmatmul.mubr.bf16.gmra.mrb[0].mxu0 %v377
      %v471 = vpop.f32.mrb[0].mxu0
      %v472 = vadd.f32 %v268, %v471
      %v473 = vpop.f32.mrb[0].mxu0
      %v474 = vpop.f32.mrb[0].mxu0
      %v475 = vadd.f32 %v268, %v474
      %v476 = vpop.f32.mrb[0].mxu0
      %477 = vmatprep.mubr.bf16.mxu0 0
      %478 = vmatmul.mubr.bf16.gmra.mrb[0].mxu0 %v380
      %v479 = vpop.f32.mrb[0].mxu0
      %v480 = vadd.f32 %v268, %v479
      %v481 = vpop.f32.mrb[0].mxu0
      %v482 = vpop.f32.mrb[0].mxu0
      %v483 = vadd.f32 %v268, %v482
      %v484 = vpop.f32.mrb[0].mxu0
      %485 = vmatprep.mubr.bf16.mxu0 0
      %486 = vmatmul.mubr.bf16.gmra.mrb[0].mxu0 %v383
      %v487 = vpop.f32.mrb[0].mxu0
      %v488 = vadd.f32 %v268, %v487
      %v489 = vpop.f32.mrb[0].mxu0
      %v490 = vpop.f32.mrb[0].mxu0
      %v491 = vadd.f32 %v268, %v490
      %v492 = vpop.f32.mrb[0].mxu0
      %493 = vmatprep.mubr.bf16.mxu0 0
      %494 = vmatmul.mubr.bf16.gmra.mrb[0].mxu0 %v386
      %v495 = vpop.f32.mrb[0].mxu0
      %v496 = vadd.f32 %v268, %v495
      %v497 = vpop.f32.mrb[0].mxu0
      %v498 = vpop.f32.mrb[0].mxu0
      %v499 = vadd.f32 %v268, %v498
      %v500 = vpop.f32.mrb[0].mxu0
      %501 = vmatprep.mubr.bf16.mxu0 0
      %502 = vmatmul.mubr.bf16.gmra.mrb[0].mxu0 %v389
      %v503 = vpop.f32.mrb[0].mxu0
      %v504 = vadd.f32 %v268, %v503
      %v505 = vpop.f32.mrb[0].mxu0
      %v506 = vpop.f32.mrb[0].mxu0
      %v507 = vadd.f32 %v268, %v506
      %v508 = vpop.f32.mrb[0].mxu0
      %509 = vmatprep.mubr.bf16.mxu0 0
      %510 = vmatmul.mubr.bf16.gmra.mrb[0].mxu0 %v392
      %v511 = vpop.f32.mrb[0].mxu0
      %v512 = vadd.f32 %v268, %v511
      %v513 = vpop.f32.mrb[0].mxu0
      %v514 = vpop.f32.mrb[0].mxu0
      %v515 = vadd.f32 %v268, %v514
      %v516 = vpop.f32.mrb[0].mxu0
      %517 = vmatprep.mubr.bf16.mxu0 0
      %518 = vmatmul.mubr.bf16.gmra.mrb[0].mxu0 %v395
      %v519 = vpop.f32.mrb[0].mxu0
      %v520 = vadd.f32 %v268, %v519
      %v521 = vpop.f32.mrb[0].mxu0
      %v522 = vpop.f32.mrb[0].mxu0
      %v523 = vadd.f32 %v268, %v522
      %v524 = vpop.f32.mrb[0].mxu0
      %525 = vdwg.mxu0
      %vm526 = vcmp.gt.f32.partialorder %v432, 0.0
      %vm527 = vcmp.gt.f32.partialorder %v435, 0.0
      %vm528 = vcmp.gt.f32.partialorder %v440, 0.0
      %vm529 = vcmp.gt.f32.partialorder %v443, 0.0
      %vm530 = vcmp.gt.f32.partialorder %v448, 0.0
      %vm531 = vcmp.gt.f32.partialorder %v451, 0.0
      %vm532 = vcmp.gt.f32.partialorder %v456, 0.0
      %vm533 = vcmp.gt.f32.partialorder %v459, 0.0
      %vm534 = vcmp.gt.f32.partialorder %v464, 0.0
      %vm535 = vcmp.gt.f32.partialorder %v467, 0.0
      %vm536 = vcmp.gt.f32.partialorder %v472, 0.0
      %vm537 = vcmp.gt.f32.partialorder %v475, 0.0
      %vm538 = vcmp.gt.f32.partialorder %v480, 0.0
      %vm539 = vcmp.gt.f32.partialorder %v483, 0.0
      %vm540 = vcmp.gt.f32.partialorder %v488, 0.0
      %vm541 = vcmp.gt.f32.partialorder %v491, 0.0
      %vm542 = vcmp.gt.f32.partialorder %v496, 0.0
      %vm543 = vcmp.gt.f32.partialorder %v499, 0.0
      %vm544 = vcmp.gt.f32.partialorder %v504, 0.0
      %vm545 = vcmp.gt.f32.partialorder %v507, 0.0
      %vm546 = vcmp.gt.f32.partialorder %v512, 0.0
      %vm547 = vcmp.gt.f32.partialorder %v515, 0.0
      %vm548 = vcmp.gt.f32.partialorder %v520, 0.0
      %vm549 = vcmp.gt.f32.partialorder %v523, 0.0
      %v550 = vmul.f32 %v432, 0.01
      %v551 = vmul.f32 %v435, 0.01
      %v552 = vmul.f32 %v440, 0.01
      %v553 = vmul.f32 %v443, 0.01
      %v554 = vmul.f32 %v448, 0.01
      %v555 = vmul.f32 %v451, 0.01
      %v556 = vmul.f32 %v456, 0.01
      %v557 = vmul.f32 %v459, 0.01
      %v558 = vmul.f32 %v464, 0.01
      %v559 = vmul.f32 %v467, 0.01
      %v560 = vmul.f32 %v472, 0.01
      %v561 = vmul.f32 %v475, 0.01
      %v562 = vmul.f32 %v480, 0.01
      %v563 = vmul.f32 %v483, 0.01
      %v564 = vmul.f32 %v488, 0.01
      %v565 = vmul.f32 %v491, 0.01
      %v566 = vmul.f32 %v496, 0.01
      %v567 = vmul.f32 %v499, 0.01
      %v568 = vmul.f32 %v504, 0.01
      %v569 = vmul.f32 %v507, 0.01
      %v570 = vmul.f32 %v512, 0.01
      %v571 = vmul.f32 %v515, 0.01
      %v572 = vmul.f32 %v520, 0.01
      %v573 = vmul.f32 %v523, 0.01
      %v574 = vsel %vm526, %v432, %v550
      %v575 = vsel %vm527, %v435, %v551
      %v576 = vsel %vm528, %v440, %v552
      %v577 = vsel %vm529, %v443, %v553
      %v578 = vsel %vm530, %v448, %v554
      %v579 = vsel %vm531, %v451, %v555
      %v580 = vsel %vm532, %v456, %v556
      %v581 = vsel %vm533, %v459, %v557
      %v582 = vsel %vm534, %v464, %v558
      %v583 = vsel %vm535, %v467, %v559
      %v584 = vsel %vm536, %v472, %v560
      %v585 = vsel %vm537, %v475, %v561
      %v586 = vsel %vm538, %v480, %v562
      %v587 = vsel %vm539, %v483, %v563
      %v588 = vsel %vm540, %v488, %v564
      %v589 = vsel %vm541, %v491, %v565
      %v590 = vsel %vm542, %v496, %v566
      %v591 = vsel %vm543, %v499, %v567
      %v592 = vsel %vm544, %v504, %v568
      %v593 = vsel %vm545, %v507, %v569
      %v594 = vsel %vm546, %v512, %v570
      %v595 = vsel %vm547, %v515, %v571
      %v596 = vsel %vm548, %v520, %v572
      %v597 = vsel %vm549, %v523, %v573
      %v598 = vpack.c.bf16 %v575, %v574
      %v599 = vpack.c.bf16 %v577, %v576
      %v600 = vpack.c.bf16 %v579, %v578
      %v601 = vpack.c.bf16 %v581, %v580
      %v602 = vpack.c.bf16 %v583, %v582
      %v603 = vpack.c.bf16 %v585, %v584
      %v604 = vpack.c.bf16 %v587, %v586
      %v605 = vpack.c.bf16 %v589, %v588
      %v606 = vpack.c.bf16 %v591, %v590
      %v607 = vpack.c.bf16 %v593, %v592
      %v608 = vpack.c.bf16 %v595, %v594
      %v609 = vpack.c.bf16 %v597, %v596
      %v610 = vld [vmem:[%s3] sm:$0xf]
      %v611 = vld [vmem:[%s3 + $0x4] sm:$0xf]
      %v612 = vld [vmem:[%s3 + $0x8] sm:$0xf]
      %v613 = vld [vmem:[%s3 + $0xc] sm:$0xf]
      %v614 = vld [vmem:[%s3 + $0x10] sm:$0xf]
      %v615 = vld [vmem:[%s3 + $0x14] sm:$0xf]
      %v616 = vld [vmem:[%s3 + $0x18] sm:$0xf]
      %v617 = vld [vmem:[%s3 + $0x1c] sm:$0xf]
      %v618 = vld [vmem:[%s4] sm:$0x1]
      %v620 = vlaneseq
      %v621 = vshrl.u32 %v620, 7
      %v622 = vsub.s32 0, %v621
      %v623 = vrot.slane %v618, %v622
      %v633 = vunpack.c.l.b16 %v610
      %v634 = vunpack.c.l.b16 %v611
      %v635 = vunpack.c.l.b16 %v612
      %v636 = vunpack.c.l.b16 %v613
      %v637 = vunpack.c.l.b16 %v614
      %v638 = vunpack.c.l.b16 %v615
      %v639 = vunpack.c.l.b16 %v616
      %v640 = vunpack.c.l.b16 %v617
      %v641 = vpack.c.b16 %v634, %v633
      %v642 = vpack.c.b16 %v636, %v635
      %v643 = vpack.c.b16 %v638, %v637
      %v644 = vpack.c.b16 %v640, %v639
      %vm649 = vcmask 523264
      %v651 = vsel %vm649, %v598, 0
      %v654 = vsel %vm649, %v599, 0
      %v657 = vsel %vm649, %v600, 0
      %v660 = vsel %vm649, %v601, 0
      %v663 = vsel %vm649, %v602, 0
      %v666 = vsel %vm649, %v603, 0
      %v669 = vsel %vm649, %v604, 0
      %v672 = vsel %vm649, %v605, 0
      %v675 = vsel %vm649, %v606, 0
      %v678 = vsel %vm649, %v607, 0
      %v681 = vsel %vm649, %v608, 0
      %v684 = vsel %vm649, %v609, 0
      %686 = vmatprep.subr.bf16.mxu0 0
      %687 = vmatpush1.bf16.msra.mxu0 %v641
      %688 = vmatprep.subr.bf16.mxu0 0
      %689 = vmatpush1.bf16.msra.mxu0 %v642
      %690 = vmatprep.subr.bf16.mxu0 0
      %691 = vmatpush1.bf16.msra.mxu0 %v643
      %692 = vmatprep.subr.bf16.mxu0 0
      %693 = vmatpush1.bf16.msra.mxu0 %v644
      %694 = vmatprep.subr.bf16.mxu0 0
      %695 = vmatpush1.bf16.msra.mxu0 0
      %696 = vmatprep.subr.bf16.mxu0 0
      %697 = vmatpush1.bf16.msra.mxu0 0
      %698 = vmatprep.subr.bf16.mxu0 0
      %699 = vmatpush1.bf16.msra.mxu0 0
      %700 = vmatprep.subr.bf16.mxu0 0
      %701 = vmatpush1.bf16.msra.mxu0 0
      %702 = vmatprep.subr.bf16.mxu0 0
      %703 = vmatpush1.bf16.msra.mxu0 0
      %704 = vmatprep.subr.bf16.mxu0 0
      %705 = vmatpush1.bf16.msra.mxu0 0
      %706 = vmatprep.subr.bf16.mxu0 0
      %707 = vmatpush1.bf16.msra.mxu0 0
      %708 = vmatprep.subr.bf16.mxu0 0
      %709 = vmatpush1.bf16.msra.mxu0 0
      %710 = vmatprep.subr.bf16.mxu0 0
      %711 = vmatpush1.bf16.msra.mxu0 0
      %712 = vmatprep.subr.bf16.mxu0 0
      %713 = vmatpush1.bf16.msra.mxu0 0
      %714 = vmatprep.subr.bf16.mxu0 0
      %715 = vmatpush1.bf16.msra.mxu0 0
      %716 = vmatprep.subr.bf16.mxu0 0
      %717 = vmatpush1.bf16.msra.mxu0 0
      %718 = vmatprep.mubr.bf16.mxu0 0
      %719 = vmatmul.mubr.bf16.gmra.mrb[0].mxu0 %v651
      %v720 = vpop.f32.mrb[0].mxu0
      %v721 = vadd.f32 %v623, %v720
      %v722 = vpop.f32.mrb[0].mxu0
      %v723 = vpop.f32.mrb[0].mxu0
      %v724 = vadd.f32 %v623, %v723
      %v725 = vpop.f32.mrb[0].mxu0
      %726 = vmatprep.mubr.bf16.mxu0 0
      %727 = vmatmul.mubr.bf16.gmra.mrb[0].mxu0 %v654
      %v728 = vpop.f32.mrb[0].mxu0
      %v729 = vadd.f32 %v623, %v728
      %v730 = vpop.f32.mrb[0].mxu0
      %v731 = vpop.f32.mrb[0].mxu0
      %v732 = vadd.f32 %v623, %v731
      %v733 = vpop.f32.mrb[0].mxu0
      %734 = vmatprep.mubr.bf16.mxu0 0
      %735 = vmatmul.mubr.bf16.gmra.mrb[0].mxu0 %v657
      %v736 = vpop.f32.mrb[0].mxu0
      %v737 = vadd.f32 %v623, %v736
      %v738 = vpop.f32.mrb[0].mxu0
      %v739 = vpop.f32.mrb[0].mxu0
      %v740 = vadd.f32 %v623, %v739
      %v741 = vpop.f32.mrb[0].mxu0
      %742 = vmatprep.mubr.bf16.mxu0 0
      %743 = vmatmul.mubr.bf16.gmra.mrb[0].mxu0 %v660
      %v744 = vpop.f32.mrb[0].mxu0
      %v745 = vadd.f32 %v623, %v744
      %v746 = vpop.f32.mrb[0].mxu0
      %v747 = vpop.f32.mrb[0].mxu0
      %v748 = vadd.f32 %v623, %v747
      %v749 = vpop.f32.mrb[0].mxu0
      %750 = vmatprep.mubr.bf16.mxu0 0
      %751 = vmatmul.mubr.bf16.gmra.mrb[0].mxu0 %v663
      %v752 = vpop.f32.mrb[0].mxu0
      %v753 = vadd.f32 %v623, %v752
      %v754 = vpop.f32.mrb[0].mxu0
      %v755 = vpop.f32.mrb[0].mxu0
      %v756 = vadd.f32 %v623, %v755
      %v757 = vpop.f32.mrb[0].mxu0
      %758 = vmatprep.mubr.bf16.mxu0 0
      %759 = vmatmul.mubr.bf16.gmra.mrb[0].mxu0 %v666
      %v760 = vpop.f32.mrb[0].mxu0
      %v761 = vadd.f32 %v623, %v760
      %v762 = vpop.f32.mrb[0].mxu0
      %v763 = vpop.f32.mrb[0].mxu0
      %v764 = vadd.f32 %v623, %v763
      %v765 = vpop.f32.mrb[0].mxu0
      %766 = vmatprep.mubr.bf16.mxu0 0
      %767 = vmatmul.mubr.bf16.gmra.mrb[0].mxu0 %v669
      %v768 = vpop.f32.mrb[0].mxu0
      %v769 = vadd.f32 %v623, %v768
      %v770 = vpop.f32.mrb[0].mxu0
      %v771 = vpop.f32.mrb[0].mxu0
      %v772 = vadd.f32 %v623, %v771
      %v773 = vpop.f32.mrb[0].mxu0
      %774 = vmatprep.mubr.bf16.mxu0 0
      %775 = vmatmul.mubr.bf16.gmra.mrb[0].mxu0 %v672
      %v776 = vpop.f32.mrb[0].mxu0
      %v777 = vadd.f32 %v623, %v776
      %v778 = vpop.f32.mrb[0].mxu0
      %v779 = vpop.f32.mrb[0].mxu0
      %v780 = vadd.f32 %v623, %v779
      %v781 = vpop.f32.mrb[0].mxu0
      %782 = vmatprep.mubr.bf16.mxu0 0
      %783 = vmatmul.mubr.bf16.gmra.mrb[0].mxu0 %v675
      %v784 = vpop.f32.mrb[0].mxu0
      %v785 = vadd.f32 %v623, %v784
      %v786 = vpop.f32.mrb[0].mxu0
      %v787 = vpop.f32.mrb[0].mxu0
      %v788 = vadd.f32 %v623, %v787
      %v789 = vpop.f32.mrb[0].mxu0
      %790 = vmatprep.mubr.bf16.mxu0 0
      %791 = vmatmul.mubr.bf16.gmra.mrb[0].mxu0 %v678
      %v792 = vpop.f32.mrb[0].mxu0
      %v793 = vadd.f32 %v623, %v792
      %v794 = vpop.f32.mrb[0].mxu0
      %v795 = vpop.f32.mrb[0].mxu0
      %v796 = vadd.f32 %v623, %v795
      %v797 = vpop.f32.mrb[0].mxu0
      %798 = vmatprep.mubr.bf16.mxu0 0
      %799 = vmatmul.mubr.bf16.gmra.mrb[0].mxu0 %v681
      %v800 = vpop.f32.mrb[0].mxu0
      %v801 = vadd.f32 %v623, %v800
      %v802 = vpop.f32.mrb[0].mxu0
      %v803 = vpop.f32.mrb[0].mxu0
      %v804 = vadd.f32 %v623, %v803
      %v805 = vpop.f32.mrb[0].mxu0
      %806 = vmatprep.mubr.bf16.mxu0 0
      %807 = vmatmul.mubr.bf16.gmra.mrb[0].mxu0 %v684
      %v808 = vpop.f32.mrb[0].mxu0
      %v809 = vadd.f32 %v623, %v808
      %v810 = vpop.f32.mrb[0].mxu0
      %v811 = vpop.f32.mrb[0].mxu0
      %v812 = vadd.f32 %v623, %v811
      %v813 = vpop.f32.mrb[0].mxu0
      %814 = vdwg.mxu0
      %vm815 = vcmp.gt.f32.partialorder %v721, 0.0
      %vm816 = vcmp.gt.f32.partialorder %v724, 0.0
      %vm817 = vcmp.gt.f32.partialorder %v729, 0.0
      %vm818 = vcmp.gt.f32.partialorder %v732, 0.0
      %vm819 = vcmp.gt.f32.partialorder %v737, 0.0
      %vm820 = vcmp.gt.f32.partialorder %v740, 0.0
      %vm821 = vcmp.gt.f32.partialorder %v745, 0.0
      %vm822 = vcmp.gt.f32.partialorder %v748, 0.0
      %vm823 = vcmp.gt.f32.partialorder %v753, 0.0
      %vm824 = vcmp.gt.f32.partialorder %v756, 0.0
      %vm825 = vcmp.gt.f32.partialorder %v761, 0.0
      %vm826 = vcmp.gt.f32.partialorder %v764, 0.0
      %vm827 = vcmp.gt.f32.partialorder %v769, 0.0
      %vm828 = vcmp.gt.f32.partialorder %v772, 0.0
      %vm829 = vcmp.gt.f32.partialorder %v777, 0.0
      %vm830 = vcmp.gt.f32.partialorder %v780, 0.0
      %vm831 = vcmp.gt.f32.partialorder %v785, 0.0
      %vm832 = vcmp.gt.f32.partialorder %v788, 0.0
      %vm833 = vcmp.gt.f32.partialorder %v793, 0.0
      %vm834 = vcmp.gt.f32.partialorder %v796, 0.0
      %vm835 = vcmp.gt.f32.partialorder %v801, 0.0
      %vm836 = vcmp.gt.f32.partialorder %v804, 0.0
      %vm837 = vcmp.gt.f32.partialorder %v809, 0.0
      %vm838 = vcmp.gt.f32.partialorder %v812, 0.0
      %v839 = vmul.f32 %v721, 0.01
      %v840 = vmul.f32 %v724, 0.01
      %v841 = vmul.f32 %v729, 0.01
      %v842 = vmul.f32 %v732, 0.01
      %v843 = vmul.f32 %v737, 0.01
      %v844 = vmul.f32 %v740, 0.01
      %v845 = vmul.f32 %v745, 0.01
      %v846 = vmul.f32 %v748, 0.01
      %v847 = vmul.f32 %v753, 0.01
      %v848 = vmul.f32 %v756, 0.01
      %v849 = vmul.f32 %v761, 0.01
      %v850 = vmul.f32 %v764, 0.01
      %v851 = vmul.f32 %v769, 0.01
      %v852 = vmul.f32 %v772, 0.01
      %v853 = vmul.f32 %v777, 0.01
      %v854 = vmul.f32 %v780, 0.01
      %v855 = vmul.f32 %v785, 0.01
      %v856 = vmul.f32 %v788, 0.01
      %v857 = vmul.f32 %v793, 0.01
      %v858 = vmul.f32 %v796, 0.01
      %v859 = vmul.f32 %v801, 0.01
      %v860 = vmul.f32 %v804, 0.01
      %v861 = vmul.f32 %v809, 0.01
      %v862 = vmul.f32 %v812, 0.01
      %v863 = vsel %vm815, %v721, %v839
      %v864 = vsel %vm816, %v724, %v840
      %v865 = vsel %vm817, %v729, %v841
      %v866 = vsel %vm818, %v732, %v842
      %v867 = vsel %vm819, %v737, %v843
      %v868 = vsel %vm820, %v740, %v844
      %v869 = vsel %vm821, %v745, %v845
      %v870 = vsel %vm822, %v748, %v846
      %v871 = vsel %vm823, %v753, %v847
      %v872 = vsel %vm824, %v756, %v848
      %v873 = vsel %vm825, %v761, %v849
      %v874 = vsel %vm826, %v764, %v850
      %v875 = vsel %vm827, %v769, %v851
      %v876 = vsel %vm828, %v772, %v852
      %v877 = vsel %vm829, %v777, %v853
      %v878 = vsel %vm830, %v780, %v854
      %v879 = vsel %vm831, %v785, %v855
      %v880 = vsel %vm832, %v788, %v856
      %v881 = vsel %vm833, %v793, %v857
      %v882 = vsel %vm834, %v796, %v858
      %v883 = vsel %vm835, %v801, %v859
      %v884 = vsel %vm836, %v804, %v860
      %v885 = vsel %vm837, %v809, %v861
      %v886 = vsel %vm838, %v812, %v862
      %v887 = vpack.c.bf16 %v864, %v863
      %v888 = vpack.c.bf16 %v866, %v865
      %v889 = vpack.c.bf16 %v868, %v867
      %v890 = vpack.c.bf16 %v870, %v869
      %v891 = vpack.c.bf16 %v872, %v871
      %v892 = vpack.c.bf16 %v874, %v873
      %v893 = vpack.c.bf16 %v876, %v875
      %v894 = vpack.c.bf16 %v878, %v877
      %v895 = vpack.c.bf16 %v880, %v879
      %v896 = vpack.c.bf16 %v882, %v881
      %v897 = vpack.c.bf16 %v884, %v883
      %v898 = vpack.c.bf16 %v886, %v885
      %v911 = vunpack.c.l.b16 %v887
      %v912 = vunpack.c.h.b16 %v887
      %v913 = vunpack.c.l.b16 %v888
      %v914 = vunpack.c.h.b16 %v888
      %v915 = vunpack.c.l.b16 %v889
      %v916 = vunpack.c.h.b16 %v889
      %v917 = vunpack.c.l.b16 %v890
      %v918 = vunpack.c.h.b16 %v890
      %v919 = vunpack.c.l.b16 %v891
      %v920 = vunpack.c.h.b16 %v891
      %v921 = vunpack.c.l.b16 %v892
      %v922 = vunpack.c.h.b16 %v892
      %v923 = vunpack.c.l.b16 %v893
      %v924 = vunpack.c.h.b16 %v893
      %v925 = vunpack.c.l.b16 %v894
      %v926 = vunpack.c.h.b16 %v894
      %v927 = vunpack.c.l.b16 %v895
      %v928 = vunpack.c.h.b16 %v895
      %v929 = vunpack.c.l.b16 %v896
      %v930 = vunpack.c.h.b16 %v896
      %v931 = vunpack.c.l.b16 %v897
      %v932 = vunpack.c.h.b16 %v897
      %v933 = vunpack.c.l.b16 %v898
      %v934 = vunpack.c.h.b16 %v898
      %v935 = vpack.c.b16 %v911, %v911
      %v936 = vpack.c.b16 %v912, %v912
      %v937 = vpack.c.b16 %v913, %v913
      %v938 = vpack.c.b16 %v914, %v914
      %v939 = vpack.c.b16 %v915, %v915
      %v940 = vpack.c.b16 %v916, %v916
      %v941 = vpack.c.b16 %v917, %v917
      %v942 = vpack.c.b16 %v918, %v918
      %v943 = vpack.c.b16 %v919, %v919
      %v944 = vpack.c.b16 %v920, %v920
      %v945 = vpack.c.b16 %v921, %v921
      %v946 = vpack.c.b16 %v922, %v922
      %v947 = vpack.c.b16 %v923, %v923
      %v948 = vpack.c.b16 %v924, %v924
      %v949 = vpack.c.b16 %v925, %v925
      %v950 = vpack.c.b16 %v926, %v926
      %v951 = vpack.c.b16 %v927, %v927
      %v952 = vpack.c.b16 %v928, %v928
      %v953 = vpack.c.b16 %v929, %v929
      %v954 = vpack.c.b16 %v930, %v930
      %v955 = vpack.c.b16 %v931, %v931
      %v956 = vpack.c.b16 %v932, %v932
      %v957 = vpack.c.b16 %v933, %v933
      %v958 = vpack.c.b16 %v934, %v934
      %vm983 = vcmask 519168
      %984 = vst.msk [vmem:[%s226] sm:$0xf] %vm983, %v935
      %985 = vst.msk [vmem:[%s226 + $0x4] sm:$0xf] %vm983, %v936
      %986 = vst.msk [vmem:[%s226 + $0x8] sm:$0xf] %vm983, %v937
      %987 = vst.msk [vmem:[%s226 + $0xc] sm:$0xf] %vm983, %v938
      %988 = vst.msk [vmem:[%s226 + $0x10] sm:$0xf] %vm983, %v939
      %989 = vst.msk [vmem:[%s226 + $0x14] sm:$0xf] %vm983, %v940
      %990 = vst.msk [vmem:[%s226 + $0x18] sm:$0xf] %vm983, %v941
      %991 = vst.msk [vmem:[%s226 + $0x1c] sm:$0xf] %vm983, %v942
      %992 = vst.msk [vmem:[%s226 + $0x20] sm:$0xf] %vm983, %v943
      %993 = vst.msk [vmem:[%s226 + $0x24] sm:$0xf] %vm983, %v944
      %994 = vst.msk [vmem:[%s226 + $0x28] sm:$0xf] %vm983, %v945
      %995 = vst.msk [vmem:[%s226 + $0x2c] sm:$0xf] %vm983, %v946
      %996 = vst.msk [vmem:[%s226 + $0x30] sm:$0xf] %vm983, %v947
      %997 = vst.msk [vmem:[%s226 + $0x34] sm:$0xf] %vm983, %v948
      %998 = vst.msk [vmem:[%s226 + $0x38] sm:$0xf] %vm983, %v949
      %999 = vst.msk [vmem:[%s226 + $0x3c] sm:$0xf] %vm983, %v950
      %1000 = vst.msk [vmem:[%s226 + $0x40] sm:$0xf] %vm983, %v951
      %1001 = vst.msk [vmem:[%s226 + $0x44] sm:$0xf] %vm983, %v952
      %1002 = vst.msk [vmem:[%s226 + $0x48] sm:$0xf] %vm983, %v953
      %1003 = vst.msk [vmem:[%s226 + $0x4c] sm:$0xf] %vm983, %v954
      %1004 = vst.msk [vmem:[%s226 + $0x50] sm:$0xf] %vm983, %v955
      %1005 = vst.msk [vmem:[%s226 + $0x54] sm:$0xf] %vm983, %v956
      %1006 = vst.msk [vmem:[%s226 + $0x58] sm:$0xf] %vm983, %v957
      %1007 = vst.msk [vmem:[%s226 + $0x5c] sm:$0xf] %vm983, %v958
      %s1008 = smul.u32 24, %s16
      %p1009 = scmp.lt.s32.totalorder %s1008, 47
      %s1010 = scalar_select %p1009, %s1008, 47
      %s1011 = smul.addr %s1010, 4
      %s1012 = scalar_lea.vmem %s5, %s1011
      // Predicated region
      $region41: #{botrgcn_forward.3} parent=39 // pred_check
        %p1013 = pneg %p144
      $region42: #{botrgcn_forward.3} parent=39 // pred_check_branch
        %1015 = sbr.rel (%p1013) target = $region44
      $region43: #{botrgcn_forward.3} parent=39 // pred_region
        %s1016 = smul.u32 24, %s16
      $region44: #{botrgcn_forward.3} parent=39 // pred_fallthru
        _
    $region40: #{botrgcn_forward.3} parent=5 // pred_fallthru
      _
    %p1017 = scmp.le.s32.totalorder 2, %s11
    // Predicated region
    $region45: #{botrgcn_forward.3} parent=5 // pred_check
      %p1018 = pneg %p1017
    $region46: #{botrgcn_forward.3} parent=5 // pred_check_branch
      %1020 = sbr.rel (%p1018) target = $region48
    $region47: #{botrgcn_forward.3} parent=5 // pred_region
      %s1021 = ssub.s32 %s11, 2
      // Predicated region
      $region49: #{botrgcn_forward.3} parent=47 // pred_check
        %p1022 = pneg %p150
      $region50: #{botrgcn_forward.3} parent=47 // pred_check_branch
        %1024 = sbr.rel (%p1022) target = $region52
      $region51: #{botrgcn_forward.3} parent=47 // pred_region
        %s1025 = smul.u32 24, %s17
        %p1026 = scmp.lt.s32.totalorder %s1025, 47
        %s1027 = scalar_select %p1026, %s1025, 47
        %s1028 = smul.addr %s1027, 4
        %s1029 = scalar_lea.vmem %s5, %s1028
      $region52: #{botrgcn_forward.3} parent=47 // pred_fallthru
        _
    $region48: #{botrgcn_forward.3} parent=5 // pred_fallthru
      _
  $region6: #{botrgcn_forward.3} parent=0 // loop_footer
    %s15 = sadd.s32 1, %s11
  $region7: #{botrgcn_forward.3} parent=0 // loop_footer_branch
    %10 = sbr.rel target = $region3
  $region8: #{botrgcn_forward.3} parent=0 // loop_exit
    _

// kernel: botrgcn_forward.4
$region0: #{botrgcn_forward.4}
  #allocation0 [shape = 'u32[]', space=smem, size = 0x4, offset = 0x4, fixed_abs, tag = 'smem constant byte address 0x4 - core index']
  #allocation1 [shape = 'u32[144,128]{1,0:T(1,128)}', space=vmem, size = 0x12000, scoped, tag = 'internal scratch']
  #allocation2 [shape = 'f32[384,64]{1,0:T(8,128)}', space=vmem, size = 0x30000, scoped, tag = 'scratch operand']
  %s0 = inlined_call_operand.vmem [shape: bf16[384,64], index: 0, kind: input, shape index: {}, may-alias: {0,1}]
  %s1 = inlined_call_operand.vmem [shape: bf16[384,64], index: 1, kind: input, shape index: {}, may-alias: {0,1}]
  %s2 = inlined_call_operand.vmem [shape: s8[2,384,384], index: 2, kind: input, shape index: {}]
  %s3 = inlined_call_operand.vmem [shape: f32[2,384,1], index: 3, kind: input, shape index: {}]
  %s4 = inlined_call_operand.vmem [shape: bf16[64,64], index: 4, kind: input, shape index: {}]
  %s5 = inlined_call_operand.vmem [shape: bf16[2,64,64], index: 5, kind: input, shape index: {}]
  %s6 = inlined_call_operand.vmem [shape: f32[1,64], index: 6, kind: input, shape index: {}]
  %s7 = inlined_call_operand.vmem [shape: bf16[384,64], index: 7, kind: output, shape index: {}]
  %s8 = sld [smem:[#allocation0]]
  $region130: #{botrgcn_forward.4} parent=0
    _
  %s10 = ssub.s32 1, %s8
  %s11 = scalar_select 0, %s10, %s8
  $region1: #{botrgcn_forward.4} parent=0
    #allocation3 [shape = 'u8[294912]{0}', space=vmem, size = 0x48000, scoped, tag = 'input window, operand 2']
    #allocation4 [shape = 'u8[393216]{0}', space=vmem, size = 0x60000, scoped, tag = 'input window, operand 3']
    loop: start=0, step=1, limit=4
    $region2: #{botrgcn_forward.4} parent=1 // loop_pre_header
      _
    $region3: #{botrgcn_forward.4} parent=1 // loop_header
      %s13 = sphi 0, %s17
      %p14 = scmp.ge.s32.totalorder %s13, 4
      %s20 = sphi 0, %s32
      %s21 = sphi 0, %s28
      %s22 = sphi 0, %s20
      %s23 = sphi 0, %s21
      %s24 = sphi 0, %s22
      %s25 = sphi 0, %s23
      %s35 = sphi 0, %s37
      %s38 = sphi 0, %s35
      %s39 = sphi 0, %s38
      %s55 = sphi 0, %s39
      %s61 = sphi 0, %s63
      %s64 = sphi 0, %s61
      %s65 = sphi 0, %s64
      %s81 = sphi 0, %s65
      %s89 = sphi 0, %s91
      %s92 = sphi 0, %s89
      %s93 = sphi 0, %s92
      %s109 = sphi 0, %s93
      %s115 = sphi 0, %s117
      %s118 = sphi 0, %s115
      %s119 = sphi 0, %s118
      %s135 = sphi 0, %s119
      %s139 = sphi 0, %s139
      %s141 = sphi 0, %s139
      %s142 = sphi 0, %s141
      %s156 = sphi 0, %s142
      %s160 = sphi 0, %s160
      %s162 = sphi 0, %s160
      %s163 = sphi 0, %s162
      %s177 = sphi 0, %s163
      %s181 = sphi 0, %s181
      %s183 = sphi 0, %s181
      %s184 = sphi 0, %s183
      %s198 = sphi 0, %s184
      %s204 = sphi 0, %s206
      %s207 = sphi 0, %s204
      %s208 = sphi 0, %s207
      %s224 = sphi 0, %s208
    $region4: #{botrgcn_forward.4} parent=1 // loop_header_branch
      %16 = sbr.rel (%p14) target = $region8
    $region5: #{botrgcn_forward.4} parent=1 // loop_body
      %s18 = ssub.s32 %s13, 1
      %s19 = ssub.s32 %s13, 2
      %s26 = sadd.s32 1, %s21
      %p27 = scmp.ge.s32.totalorder %s26, 1
      %s28 = scalar_select %p27, 0, %s26
      %s29 = sadd.s32 1, %s20
      %s30 = scalar_select %p27, %s29, %s20
      %p31 = scmp.ge.s32.totalorder %s30, 2
      %s32 = scalar_select %p31, 0, %s30
      %s33 = ssub.s32 %s20, %s32
      %p34 = scmp.eq.s32.totalorder %s33, 0
      %s36 = sadd.s32 %s35, 1
      %s37 = scalar_select %p34, %s35, %s36
      %p40 = pneg %p34
      %p41 = scmp.eq.s32.totalorder %s13, 1
      %p42 = por %p40, %p41
      %p43 = scmp.ne.s32.totalorder %s35, %s38
      %p44 = scmp.eq.s32.totalorder %s13, 0
      %p45 = por %p43, %p44
      %p46 = scmp.ne.s32.totalorder %s35, %s38
      %p47 = scmp.eq.s32.totalorder %s18, 1
      %p48 = por %p46, %p47
      %p49 = scmp.ne.s32.totalorder %s38, %s39
      %p50 = scmp.eq.s32.totalorder %s18, 0
      %p51 = por %p49, %p50
      %p52 = scmp.ne.s32.totalorder %s38, %s39
      %p53 = scmp.eq.s32.totalorder %s19, 1
      %p54 = por %p52, %p53
      %p56 = scmp.ne.s32.totalorder %s39, %s55
      %p57 = scmp.eq.s32.totalorder %s19, 0
      %p58 = por %p56, %p57
      %s59 = ssub.s32 %s21, %s28
      %p60 = scmp.eq.s32.totalorder %s59, 0
      %s62 = sadd.s32 %s61, 1
      %s63 = scalar_select %p60, %s61, %s62
      %p66 = pneg %p60
      %p67 = scmp.eq.s32.totalorder %s13, 1
      %p68 = por %p66, %p67
      %p69 = scmp.ne.s32.totalorder %s61, %s64
      %p70 = scmp.eq.s32.totalorder %s13, 0
      %p71 = por %p69, %p70
      %p72 = scmp.ne.s32.totalorder %s61, %s64
      %p73 = scmp.eq.s32.totalorder %s18, 1
      %p74 = por %p72, %p73
      %p75 = scmp.ne.s32.totalorder %s64, %s65
      %p76 = scmp.eq.s32.totalorder %s18, 0
      %p77 = por %p75, %p76
      %p78 = scmp.ne.s32.totalorder %s64, %s65
      %p79 = scmp.eq.s32.totalorder %s19, 1
      %p80 = por %p78, %p79
      %p82 = scmp.ne.s32.totalorder %s65, %s81
      %p83 = scmp.eq.s32.totalorder %s19, 0
      %p84 = por %p82, %p83
      %s85 = ssub.s32 %s20, %s32
      %s86 = ssub.s32 %s21, %s28
      %s87 = sor.u32 %s85, %s86
      %p88 = scmp.eq.s32.totalorder %s87, 0
      %s90 = sadd.s32 %s89, 1
      %s91 = scalar_select %p88, %s89, %s90
      %p94 = pneg %p88
      %p95 = scmp.eq.s32.totalorder %s13, 1
      %p96 = por %p94, %p95
      %p97 = scmp.ne.s32.totalorder %s89, %s92
      %p98 = scmp.eq.s32.totalorder %s13, 0
      %p99 = por %p97, %p98
      %p100 = scmp.ne.s32.totalorder %s89, %s92
      %p101 = scmp.eq.s32.totalorder %s18, 1
      %p102 = por %p100, %p101
      %p103 = scmp.ne.s32.totalorder %s92, %s93
      %p104 = scmp.eq.s32.totalorder %s18, 0
      %p105 = por %p103, %p104
      %p106 = scmp.ne.s32.totalorder %s92, %s93
      %p107 = scmp.eq.s32.totalorder %s19, 1
      %p108 = por %p106, %p107
      %p110 = scmp.ne.s32.totalorder %s93, %s109
      %p111 = scmp.eq.s32.totalorder %s19, 0
      %p112 = por %p110, %p111
      %s113 = ssub.s32 %s20, %s32
      %p114 = scmp.eq.s32.totalorder %s113, 0
      %s116 = sadd.s32 %s115, 1
      %s117 = scalar_select %p114, %s115, %s116
      %p120 = pneg %p114
      %p121 = scmp.eq.s32.totalorder %s13, 1
      %p122 = por %p120, %p121
      %p123 = scmp.ne.s32.totalorder %s115, %s118
      %p124 = scmp.eq.s32.totalorder %s13, 0
      %p125 = por %p123, %p124
      %p126 = scmp.ne.s32.totalorder %s115, %s118
      %p127 = scmp.eq.s32.totalorder %s18, 1
      %p128 = por %p126, %p127
      %p129 = scmp.ne.s32.totalorder %s118, %s119
      %p130 = scmp.eq.s32.totalorder %s18, 0
      %p131 = por %p129, %p130
      %p132 = scmp.ne.s32.totalorder %s118, %s119
      %p133 = scmp.eq.s32.totalorder %s19, 1
      %p134 = por %p132, %p133
      %p136 = scmp.ne.s32.totalorder %s119, %s135
      %p137 = scmp.eq.s32.totalorder %s19, 0
      %p138 = por %p136, %p137
      %s140 = sadd.s32 %s139, 1
      %p143 = scmp.eq.s32.totalorder %s13, 1
      %p144 = scmp.ne.s32.totalorder %s139, %s141
      %p145 = scmp.eq.s32.totalorder %s13, 0
      %p146 = por %p144, %p145
      %p147 = scmp.ne.s32.totalorder %s139, %s141
      %p148 = scmp.eq.s32.totalorder %s18, 1
      %p149 = por %p147, %p148
      %p150 = scmp.ne.s32.totalorder %s141, %s142
      %p151 = scmp.eq.s32.totalorder %s18, 0
      %p152 = por %p150, %p151
      %p153 = scmp.ne.s32.totalorder %s141, %s142
      %p154 = scmp.eq.s32.totalorder %s19, 1
      %p155 = por %p153, %p154
      %p157 = scmp.ne.s32.totalorder %s142, %s156
      %p158 = scmp.eq.s32.totalorder %s19, 0
      %p159 = por %p157, %p158
      %s161 = sadd.s32 %s160, 1
      %p164 = scmp.eq.s32.totalorder %s13, 1
      %p165 = scmp.ne.s32.totalorder %s160, %s162
      %p166 = scmp.eq.s32.totalorder %s13, 0
      %p167 = por %p165, %p166
      %p168 = scmp.ne.s32.totalorder %s160, %s162
      %p169 = scmp.eq.s32.totalorder %s18, 1
      %p170 = por %p168, %p169
      %p171 = scmp.ne.s32.totalorder %s162, %s163
      %p172 = scmp.eq.s32.totalorder %s18, 0
      %p173 = por %p171, %p172
      %p174 = scmp.ne.s32.totalorder %s162, %s163
      %p175 = scmp.eq.s32.totalorder %s19, 1
      %p176 = por %p174, %p175
      %p178 = scmp.ne.s32.totalorder %s163, %s177
      %p179 = scmp.eq.s32.totalorder %s19, 0
      %p180 = por %p178, %p179
      %s182 = sadd.s32 %s181, 1
      %p185 = scmp.eq.s32.totalorder %s13, 1
      %p186 = scmp.ne.s32.totalorder %s181, %s183
      %p187 = scmp.eq.s32.totalorder %s13, 0
      %p188 = por %p186, %p187
      %p189 = scmp.ne.s32.totalorder %s181, %s183
      %p190 = scmp.eq.s32.totalorder %s18, 1
      %p191 = por %p189, %p190
      %p192 = scmp.ne.s32.totalorder %s183, %s184
      %p193 = scmp.eq.s32.totalorder %s18, 0
      %p194 = por %p192, %p193
      %p195 = scmp.ne.s32.totalorder %s183, %s184
      %p196 = scmp.eq.s32.totalorder %s19, 1
      %p197 = por %p195, %p196
      %p199 = scmp.ne.s32.totalorder %s184, %s198
      %p200 = scmp.eq.s32.totalorder %s19, 0
      %p201 = por %p199, %p200
      %s202 = ssub.s32 %s20, %s32
      %p203 = scmp.eq.s32.totalorder %s202, 0
      %s205 = sadd.s32 %s204, 1
      %s206 = scalar_select %p203, %s204, %s205
      %p209 = pneg %p203
      %p210 = scmp.eq.s32.totalorder %s13, 1
      %p211 = por %p209, %p210
      %p212 = scmp.ne.s32.totalorder %s204, %s207
      %p213 = scmp.eq.s32.totalorder %s13, 0
      %p214 = por %p212, %p213
      %p215 = scmp.ne.s32.totalorder %s204, %s207
      %p216 = scmp.eq.s32.totalorder %s18, 1
      %p217 = por %p215, %p216
      %p218 = scmp.ne.s32.totalorder %s207, %s208
      %p219 = scmp.eq.s32.totalorder %s18, 0
      %p220 = por %p218, %p219
      %p221 = scmp.ne.s32.totalorder %s207, %s208
      %p222 = scmp.eq.s32.totalorder %s19, 1
      %p223 = por %p221, %p222
      %p225 = scmp.ne.s32.totalorder %s208, %s224
      %p226 = scmp.eq.s32.totalorder %s19, 0
      %p227 = por %p225, %p226
      %p228 = scmp.le.s32.totalorder 1, %s13
      %p229 = scmp.lt.s32.totalorder %s13, 3
      %p230 = pnand %p228, %p229
      %p231 = pneg %p230
      // Predicated region
      $region9: #{botrgcn_forward.4} parent=5 // pred_check
        _
      $region10: #{botrgcn_forward.4} parent=5 // pred_check_branch
        %233 = sbr.rel (%p230) target = $region12
      $region11: #{botrgcn_forward.4} parent=5 // pred_region
        %s234 = ssub.s32 %s13, 1
        // Predicated region
        $region13: #{botrgcn_forward.4} parent=11 // pred_check
          %p235 = pneg %p77
        $region14: #{botrgcn_forward.4} parent=11 // pred_check_branch
          %237 = sbr.rel (%p235) target = $region16
        $region15: #{botrgcn_forward.4} parent=11 // pred_region
          %s238 = smul.u32 48, %s23
          %p239 = scmp.lt.s32.totalorder %s238, 47
          %s240 = scalar_select %p239, %s238, 47
          %s241 = smul.addr %s240, 4
          %s242 = scalar_lea.vmem %s1, %s241
          %s243 = smul.u32 48, %s23
        $region16: #{botrgcn_forward.4} parent=11 // pred_fallthru
          _
        // Predicated region
        $region17: #{botrgcn_forward.4} parent=11 // pred_check
          %p244 = pneg %p152
        $region18: #{botrgcn_forward.4} parent=11 // pred_check_branch
          %246 = sbr.rel (%p244) target = $region20
        $region19: #{botrgcn_forward.4} parent=11 // pred_region
          _
        $region20: #{botrgcn_forward.4} parent=11 // pred_fallthru
          _
        // Predicated region
        $region21: #{botrgcn_forward.4} parent=11 // pred_check
          %p247 = pneg %p173
        $region22: #{botrgcn_forward.4} parent=11 // pred_check_branch
          %249 = sbr.rel (%p247) target = $region24
        $region23: #{botrgcn_forward.4} parent=11 // pred_region
          _
        $region24: #{botrgcn_forward.4} parent=11 // pred_fallthru
          _
        // Predicated region
        $region25: #{botrgcn_forward.4} parent=11 // pred_check
          %p250 = pneg %p194
        $region26: #{botrgcn_forward.4} parent=11 // pred_check_branch
          %252 = sbr.rel (%p250) target = $region28
        $region27: #{botrgcn_forward.4} parent=11 // pred_region
          _
        $region28: #{botrgcn_forward.4} parent=11 // pred_fallthru
          _
      $region12: #{botrgcn_forward.4} parent=5 // pred_fallthru
        _
      %p253 = scmp.lt.s32.totalorder %s13, 2
      // Predicated region
      $region29: #{botrgcn_forward.4} parent=5 // pred_check
        %p254 = pneg %p253
      $region30: #{botrgcn_forward.4} parent=5 // pred_check_branch
        %256 = sbr.rel (%p254) target = $region32
      $region31: #{botrgcn_forward.4} parent=5 // pred_region
        // Predicated region
        $region33: #{botrgcn_forward.4} parent=31 // pred_check
          %p257 = pneg %p45
        $region34: #{botrgcn_forward.4} parent=31 // pred_check_branch
          %259 = sbr.rel (%p257) target = $region36
        $region35: #{botrgcn_forward.4} parent=31 // pred_region
          %s260 = smul.u32 24, %s20
          %p261 = scmp.lt.s32.totalorder %s260, 47
          %s262 = scalar_select %p261, %s260, 47
          %s263 = smul.addr %s262, 4
          %s264 = scalar_lea.vmem %s0, %s263
          %s265 = smul.u32 24, %s20
        $region36: #{botrgcn_forward.4} parent=31 // pred_fallthru
          _
        // Predicated region
        $region37: #{botrgcn_forward.4} parent=31 // pred_check
          %p266 = pneg %p99
        $region38: #{botrgcn_forward.4} parent=31 // pred_check_branch
          %268 = sbr.rel (%p266) target = $region40
        $region39: #{botrgcn_forward.4} parent=31 // pred_region
          %s269 = sand.u32 %s89, 1
          %s270 = sand.u32 %s89, 1
          %s271 = smul.addr %s270, 288
          %s272 = scalar_lea.vmem [#allocation3], %s271
          %s273 = smul.u32 6, %s20
          %s274 = smul.u32 3, %s21
          %s275 = smul.addr %s273, 3
          %s276 = sadd.s32 %s274, %s275
          %s277 = smul.addr %s276, 8
          %s278 = scalar_lea.vmem %s2, %s277
          // Predicated region
          $region41: #{botrgcn_forward.4} parent=39 // pred_check
            _
          $region42: #{botrgcn_forward.4} parent=39 // pred_check_branch
            %280 = sbr.rel (0) target = $region44
          $region43: #{botrgcn_forward.4} parent=39 // pred_region
            // Predicated region
            $region45: #{botrgcn_forward.4} parent=43 // pred_check
              _
            $region46: #{botrgcn_forward.4} parent=43 // pred_check_branch
              %282 = sbr.rel (0) target = $region48
            $region47: #{botrgcn_forward.4} parent=43 // pred_region
              loop: start=0, step=1, limit=1
              $region49: #{botrgcn_forward.4} parent=47 // loop_pre_header
                _
              $region50: #{botrgcn_forward.4} parent=47 // loop_header
                %s284 = sphi 0, %s288
                %p285 = scmp.ge.s32.totalorder %s284, 1
                %s289 = sphi %s278, %s278
                %s290 = sphi %s272, %s272
              $region51: #{botrgcn_forward.4} parent=47 // loop_header_branch
                %287 = sbr.rel (%p285) target = $region55
              $region52: #{botrgcn_forward.4} parent=47 // loop_body
                %v291 = vld [vmem:[%s289] sm:$0xff]
                %292 = vst [vmem:[%s290] sm:$0xff] %v291
                %v293 = vld [vmem:[%s289 + $0x8] sm:$0xff]
                %294 = vst [vmem:[%s290 + $0x8] sm:$0xff] %v293
                %v295 = vld [vmem:[%s289 + $0x10] sm:$0xff]
                %296 = vst [vmem:[%s290 + $0x10] sm:$0xff] %v295
                %v297 = vld [vmem:[%s289 + $0x18] sm:$0xff]
                %298 = vst [vmem:[%s290 + $0x18] sm:$0xff] %v297
                %v299 = vld [vmem:[%s289 + $0x20] sm:$0xff]
                %300 = vst [vmem:[%s290 + $0x20] sm:$0xff] %v299
                %v301 = vld [vmem:[%s289 + $0x28] sm:$0xff]
                %302 = vst [vmem:[%s290 + $0x28] sm:$0xff] %v301
                %v303 = vld [vmem:[%s289 + $0x30] sm:$0xff]
                %304 = vst [vmem:[%s290 + $0x30] sm:$0xff] %v303
                %v305 = vld [vmem:[%s289 + $0x38] sm:$0xff]
                %306 = vst [vmem:[%s290 + $0x38] sm:$0xff] %v305
                %v307 = vld [vmem:[%s289 + $0x40] sm:$0xff]
                %308 = vst [vmem:[%s290 + $0x40] sm:$0xff] %v307
                %v309 = vld [vmem:[%s289 + $0x48] sm:$0xff]
                %310 = vst [vmem:[%s290 + $0x48] sm:$0xff] %v309
                %v311 = vld [vmem:[%s289 + $0x50] sm:$0xff]
                %312 = vst [vmem:[%s290 + $0x50] sm:$0xff] %v311
                %v313 = vld [vmem:[%s289 + $0x58] sm:$0xff]
                %314 = vst [vmem:[%s290 + $0x58] sm:$0xff] %v313
                %v315 = vld [vmem:[%s289 + $0x60] sm:$0xff]
                %316 = vst [vmem:[%s290 + $0x60] sm:$0xff] %v315
                %v317 = vld [vmem:[%s289 + $0x68] sm:$0xff]
                %318 = vst [vmem:[%s290 + $0x68] sm:$0xff] %v317
                %v319 = vld [vmem:[%s289 + $0x70] sm:$0xff]
                %320 = vst [vmem:[%s290 + $0x70] sm:$0xff] %v319
                %v321 = vld [vmem:[%s289 + $0x78] sm:$0xff]
                %322 = vst [vmem:[%s290 + $0x78] sm:$0xff] %v321
                %v323 = vld [vmem:[%s289 + $0x80] sm:$0xff]
                %324 = vst [vmem:[%s290 + $0x80] sm:$0xff] %v323
                %v325 = vld [vmem:[%s289 + $0x88] sm:$0xff]
                %326 = vst [vmem:[%s290 + $0x88] sm:$0xff] %v325
                %v327 = vld [vmem:[%s289 + $0x120] sm:$0xff]
                %328 = vst [vmem:[%s290 + $0x90] sm:$0xff] %v327
                %v329 = vld [vmem:[%s289 + $0x128] sm:$0xff]
                %330 = vst [vmem:[%s290 + $0x98] sm:$0xff] %v329
                %v331 = vld [vmem:[%s289 + $0x130] sm:$0xff]
                %332 = vst [vmem:[%s290 + $0xa0] sm:$0xff] %v331
                %v333 = vld [vmem:[%s289 + $0x138] sm:$0xff]
                %334 = vst [vmem:[%s290 + $0xa8] sm:$0xff] %v333
                %v335 = vld [vmem:[%s289 + $0x140] sm:$0xff]
                %336 = vst [vmem:[%s290 + $0xb0] sm:$0xff] %v335
                %v337 = vld [vmem:[%s289 + $0x148] sm:$0xff]
                %338 = vst [vmem:[%s290 + $0xb8] sm:$0xff] %v337
                %v339 = vld [vmem:[%s289 + $0x150] sm:$0xff]
                %340 = vst [vmem:[%s290 + $0xc0] sm:$0xff] %v339
                %v341 = vld [vmem:[%s289 + $0x158] sm:$0xff]
                %342 = vst [vmem:[%s290 + $0xc8] sm:$0xff] %v341
                %v343 = vld [vmem:[%s289 + $0x160] sm:$0xff]
                %344 = vst [vmem:[%s290 + $0xd0] sm:$0xff] %v343
                %v345 = vld [vmem:[%s289 + $0x168] sm:$0xff]
                %346 = vst [vmem:[%s290 + $0xd8] sm:$0xff] %v345
                %v347 = vld [vmem:[%s289 + $0x170] sm:$0xff]
                %348 = vst [vmem:[%s290 + $0xe0] sm:$0xff] %v347
                %v349 = vld [vmem:[%s289 + $0x178] sm:$0xff]
                %350 = vst [vmem:[%s290 + $0xe8] sm:$0xff] %v349
                %v351 = vld [vmem:[%s289 + $0x180] sm:$0xff]
                %352 = vst [vmem:[%s290 + $0xf0] sm:$0xff] %v351
                %v353 = vld [vmem:[%s289 + $0x188] sm:$0xff]
                %354 = vst [vmem:[%s290 + $0xf8] sm:$0xff] %v353
                %v355 = vld [vmem:[%s289 + $0x190] sm:$0xff]
                %356 = vst [vmem:[%s290 + $0x100] sm:$0xff] %v355
                %v357 = vld [vmem:[%s289 + $0x198] sm:$0xff]
                %358 = vst [vmem:[%s290 + $0x108] sm:$0xff] %v357
                %v359 = vld [vmem:[%s289 + $0x1a0] sm:$0xff]
                %360 = vst [vmem:[%s290 + $0x110] sm:$0xff] %v359
                %v361 = vld [vmem:[%s289 + $0x1a8] sm:$0xff]
                %362 = vst [vmem:[%s290 + $0x118] sm:$0xff] %v361
              $region53: #{botrgcn_forward.4} parent=47 // loop_footer
                %s288 = sadd.s32 1, %s284
              $region54: #{botrgcn_forward.4} parent=47 // loop_footer_branch
                %283 = sbr.rel target = $region50
              $region55: #{botrgcn_forward.4} parent=47 // loop_exit
                _
            $region48: #{botrgcn_forward.4} parent=43 // pred_fallthru
              _
            // Predicated region
            $region56: #{botrgcn_forward.4} parent=43 // pred_check
              _
            $region57: #{botrgcn_forward.4} parent=43 // pred_check_branch
              %364 = sbr.rel target = $region59
            $region58: #{botrgcn_forward.4} parent=43 // pred_region
              _
            $region59: #{botrgcn_forward.4} parent=43 // pred_fallthru
              _
          $region44: #{botrgcn_forward.4} parent=39 // pred_fallthru
            _
          %365 = vnop
        $region40: #{botrgcn_forward.4} parent=31 // pred_fallthru
          _
        // Predicated region
        $region60: #{botrgcn_forward.4} parent=31 // pred_check
          %p366 = pneg %p125
        $region61: #{botrgcn_forward.4} parent=31 // pred_check_branch
          %368 = sbr.rel (%p366) target = $region63
        $region62: #{botrgcn_forward.4} parent=31 // pred_region
          %s369 = sand.u32 %s115, 1
          %s370 = sand.u32 %s115, 1
          %s371 = smul.addr %s370, 384
          %s372 = scalar_lea.vmem [#allocation4], %s371
          %s373 = smul.u32 24, %s20
          %s374 = smul.addr %s373, 8
          %s375 = scalar_lea.vmem %s3, %s374
          // Predicated region
          $region64: #{botrgcn_forward.4} parent=62 // pred_check
            _
          $region65: #{botrgcn_forward.4} parent=62 // pred_check_branch
            %377 = sbr.rel (0) target = $region67
          $region66: #{botrgcn_forward.4} parent=62 // pred_region
            // Predicated region
            $region68: #{botrgcn_forward.4} parent=66 // pred_check
              _
            $region69: #{botrgcn_forward.4} parent=66 // pred_check_branch
              %379 = sbr.rel (0) target = $region71
            $region70: #{botrgcn_forward.4} parent=66 // pred_region
              // Predicated region
              $region83: #{botrgcn_forward.4} parent=70 // pred_check
                _
              $region84: #{botrgcn_forward.4} parent=70 // pred_check_branch
                %488 = sbr.rel (0) target = $region86
              $region85: #{botrgcn_forward.4} parent=70 // pred_region
                loop: start=0, step=1, limit=1
                $region87: #{botrgcn_forward.4} parent=85 // loop_pre_header
                  _
                $region88: #{botrgcn_forward.4} parent=85 // loop_header
                  %s490 = sphi 0, %s494
                  %p491 = scmp.ge.s32.totalorder %s490, 1
                  %s495 = sphi %s375, %s375
                  %s496 = sphi %s372, %s372
                $region89: #{botrgcn_forward.4} parent=85 // loop_header_branch
                  %493 = sbr.rel (%p491) target = $region93
                $region90: #{botrgcn_forward.4} parent=85 // loop_body
                  %v497 = vld [vmem:[%s495] sm:$0xff]
                  %498 = vst [vmem:[%s496] sm:$0xff] %v497
                  %v499 = vld [vmem:[%s495 + $0x8] sm:$0xff]
                  %500 = vst [vmem:[%s496 + $0x8] sm:$0xff] %v499
                  %v501 = vld [vmem:[%s495 + $0x10] sm:$0xff]
                  %502 = vst [vmem:[%s496 + $0x10] sm:$0xff] %v501
                  %v503 = vld [vmem:[%s495 + $0x18] sm:$0xff]
                  %504 = vst [vmem:[%s496 + $0x18] sm:$0xff] %v503
                  %v505 = vld [vmem:[%s495 + $0x20] sm:$0xff]
                  %506 = vst [vmem:[%s496 + $0x20] sm:$0xff] %v505
                  %v507 = vld [vmem:[%s495 + $0x28] sm:$0xff]
                  %508 = vst [vmem:[%s496 + $0x28] sm:$0xff] %v507
                  %v509 = vld [vmem:[%s495 + $0x30] sm:$0xff]
                  %510 = vst [vmem:[%s496 + $0x30] sm:$0xff] %v509
                  %v511 = vld [vmem:[%s495 + $0x38] sm:$0xff]
                  %512 = vst [vmem:[%s496 + $0x38] sm:$0xff] %v511
                  %v513 = vld [vmem:[%s495 + $0x40] sm:$0xff]
                  %514 = vst [vmem:[%s496 + $0x40] sm:$0xff] %v513
                  %v515 = vld [vmem:[%s495 + $0x48] sm:$0xff]
                  %516 = vst [vmem:[%s496 + $0x48] sm:$0xff] %v515
                  %v517 = vld [vmem:[%s495 + $0x50] sm:$0xff]
                  %518 = vst [vmem:[%s496 + $0x50] sm:$0xff] %v517
                  %v519 = vld [vmem:[%s495 + $0x58] sm:$0xff]
                  %520 = vst [vmem:[%s496 + $0x58] sm:$0xff] %v519
                  %v521 = vld [vmem:[%s495 + $0x60] sm:$0xff]
                  %522 = vst [vmem:[%s496 + $0x60] sm:$0xff] %v521
                  %v523 = vld [vmem:[%s495 + $0x68] sm:$0xff]
                  %524 = vst [vmem:[%s496 + $0x68] sm:$0xff] %v523
                  %v525 = vld [vmem:[%s495 + $0x70] sm:$0xff]
                  %526 = vst [vmem:[%s496 + $0x70] sm:$0xff] %v525
                  %v527 = vld [vmem:[%s495 + $0x78] sm:$0xff]
                  %528 = vst [vmem:[%s496 + $0x78] sm:$0xff] %v527
                  %v529 = vld [vmem:[%s495 + $0x80] sm:$0xff]
                  %530 = vst [vmem:[%s496 + $0x80] sm:$0xff] %v529
                  %v531 = vld [vmem:[%s495 + $0x88] sm:$0xff]
                  %532 = vst [vmem:[%s496 + $0x88] sm:$0xff] %v531
                  %v533 = vld [vmem:[%s495 + $0x90] sm:$0xff]
                  %534 = vst [vmem:[%s496 + $0x90] sm:$0xff] %v533
                  %v535 = vld [vmem:[%s495 + $0x98] sm:$0xff]
                  %536 = vst [vmem:[%s496 + $0x98] sm:$0xff] %v535
                  %v537 = vld [vmem:[%s495 + $0xa0] sm:$0xff]
                  %538 = vst [vmem:[%s496 + $0xa0] sm:$0xff] %v537
                  %v539 = vld [vmem:[%s495 + $0xa8] sm:$0xff]
                  %540 = vst [vmem:[%s496 + $0xa8] sm:$0xff] %v539
                  %v541 = vld [vmem:[%s495 + $0xb0] sm:$0xff]
                  %542 = vst [vmem:[%s496 + $0xb0] sm:$0xff] %v541
                  %v543 = vld [vmem:[%s495 + $0xb8] sm:$0xff]
                  %544 = vst [vmem:[%s496 + $0xb8] sm:$0xff] %v543
                  %v545 = vld [vmem:[%s495 + $0x180] sm:$0xff]
                  %546 = vst [vmem:[%s496 + $0xc0] sm:$0xff] %v545
                  %v547 = vld [vmem:[%s495 + $0x188] sm:$0xff]
                  %548 = vst [vmem:[%s496 + $0xc8] sm:$0xff] %v547
                  %v549 = vld [vmem:[%s495 + $0x190] sm:$0xff]
                  %550 = vst [vmem:[%s496 + $0xd0] sm:$0xff] %v549
                  %v551 = vld [vmem:[%s495 + $0x198] sm:$0xff]
                  %552 = vst [vmem:[%s496 + $0xd8] sm:$0xff] %v551
                  %v553 = vld [vmem:[%s495 + $0x1a0] sm:$0xff]
                  %554 = vst [vmem:[%s496 + $0xe0] sm:$0xff] %v553
                  %v555 = vld [vmem:[%s495 + $0x1a8] sm:$0xff]
                  %556 = vst [vmem:[%s496 + $0xe8] sm:$0xff] %v555
                  %v557 = vld [vmem:[%s495 + $0x1b0] sm:$0xff]
                  %558 = vst [vmem:[%s496 + $0xf0] sm:$0xff] %v557
                  %v559 = vld [vmem:[%s495 + $0x1b8] sm:$0xff]
                  %560 = vst [vmem:[%s496 + $0xf8] sm:$0xff] %v559
                  %v561 = vld [vmem:[%s495 + $0x1c0] sm:$0xff]
                  %562 = vst [vmem:[%s496 + $0x100] sm:$0xff] %v561
                  %v563 = vld [vmem:[%s495 + $0x1c8] sm:$0xff]
                  %564 = vst [vmem:[%s496 + $0x108] sm:$0xff] %v563
                  %v565 = vld [vmem:[%s495 + $0x1d0] sm:$0xff]
                  %566 = vst [vmem:[%s496 + $0x110] sm:$0xff] %v565
                  %v567 = vld [vmem:[%s495 + $0x1d8] sm:$0xff]
                  %568 = vst [vmem:[%s496 + $0x118] sm:$0xff] %v567
                  %v569 = vld [vmem:[%s495 + $0x1e0] sm:$0xff]
                  %570 = vst [vmem:[%s496 + $0x120] sm:$0xff] %v569
                  %v571 = vld [vmem:[%s495 + $0x1e8] sm:$0xff]
                  %572 = vst [vmem:[%s496 + $0x128] sm:$0xff] %v571
                  %v573 = vld [vmem:[%s495 + $0x1f0] sm:$0xff]
                  %574 = vst [vmem:[%s496 + $0x130] sm:$0xff] %v573
                  %v575 = vld [vmem:[%s495 + $0x1f8] sm:$0xff]
                  %576 = vst [vmem:[%s496 + $0x138] sm:$0xff] %v575
                  %v577 = vld [vmem:[%s495 + $0x200] sm:$0xff]
                  %578 = vst [vmem:[%s496 + $0x140] sm:$0xff] %v577
                  %v579 = vld [vmem:[%s495 + $0x208] sm:$0xff]
                  %580 = vst [vmem:[%s496 + $0x148] sm:$0xff] %v579
                  %v581 = vld [vmem:[%s495 + $0x210] sm:$0xff]
                  %582 = vst [vmem:[%s496 + $0x150] sm:$0xff] %v581
                  %v583 = vld [vmem:[%s495 + $0x218] sm:$0xff]
                  %584 = vst [vmem:[%s496 + $0x158] sm:$0xff] %v583
                  %v585 = vld [vmem:[%s495 + $0x220] sm:$0xff]
                  %586 = vst [vmem:[%s496 + $0x160] sm:$0xff] %v585
                  %v587 = vld [vmem:[%s495 + $0x228] sm:$0xff]
                  %588 = vst [vmem:[%s496 + $0x168] sm:$0xff] %v587
                  %v589 = vld [vmem:[%s495 + $0x230] sm:$0xff]
                  %590 = vst [vmem:[%s496 + $0x170] sm:$0xff] %v589
                  %v591 = vld [vmem:[%s495 + $0x238] sm:$0xff]
                  %592 = vst [vmem:[%s496 + $0x178] sm:$0xff] %v591
                $region91: #{botrgcn_forward.4} parent=85 // loop_footer
                  %s494 = sadd.s32 1, %s490
                $region92: #{botrgcn_forward.4} parent=85 // loop_footer_branch
                  %489 = sbr.rel target = $region88
                $region93: #{botrgcn_forward.4} parent=85 // loop_exit
                  _
              $region86: #{botrgcn_forward.4} parent=70 // pred_fallthru
                _
              // Predicated region
              $region94: #{botrgcn_forward.4} parent=70 // pred_check
                _
              $region95: #{botrgcn_forward.4} parent=70 // pred_check_branch
                %594 = sbr.rel target = $region97
              $region96: #{botrgcn_forward.4} parent=70 // pred_region
                _
              $region97: #{botrgcn_forward.4} parent=70 // pred_fallthru
                _
            $region71: #{botrgcn_forward.4} parent=66 // pred_fallthru
              _
            // Predicated region
            $region72: #{botrgcn_forward.4} parent=66 // pred_check
              _
            $region73: #{botrgcn_forward.4} parent=66 // pred_check_branch
              %381 = sbr.rel target = $region75
            $region74: #{botrgcn_forward.4} parent=66 // pred_region
              loop: start=0, step=1, limit=1
              $region76: #{botrgcn_forward.4} parent=74 // loop_pre_header
                _
              $region77: #{botrgcn_forward.4} parent=74 // loop_header
                %s384 = sphi 0, %s388
                %p385 = scmp.ge.s32.totalorder %s384, 1
                %s389 = sphi %s375, %s375
                %s390 = sphi %s372, %s372
              $region78: #{botrgcn_forward.4} parent=74 // loop_header_branch
                %387 = sbr.rel (%p385) target = $region82
              $region79: #{botrgcn_forward.4} parent=74 // loop_body
                %v391 = vld [vmem:[%s389] sm:$0xff]
                %392 = vst [vmem:[%s390] sm:$0xff] %v391
                %v393 = vld [vmem:[%s389 + $0x8] sm:$0xff]
                %394 = vst [vmem:[%s390 + $0x8] sm:$0xff] %v393
                %v395 = vld [vmem:[%s389 + $0x10] sm:$0xff]
                %396 = vst [vmem:[%s390 + $0x10] sm:$0xff] %v395
                %v397 = vld [vmem:[%s389 + $0x18] sm:$0xff]
                %398 = vst [vmem:[%s390 + $0x18] sm:$0xff] %v397
                %v399 = vld [vmem:[%s389 + $0x20] sm:$0xff]
                %400 = vst [vmem:[%s390 + $0x20] sm:$0xff] %v399
                %v401 = vld [vmem:[%s389 + $0x28] sm:$0xff]
                %402 = vst [vmem:[%s390 + $0x28] sm:$0xff] %v401
                %v403 = vld [vmem:[%s389 + $0x30] sm:$0xff]
                %404 = vst [vmem:[%s390 + $0x30] sm:$0xff] %v403
                %v405 = vld [vmem:[%s389 + $0x38] sm:$0xff]
                %406 = vst [vmem:[%s390 + $0x38] sm:$0xff] %v405
                %v407 = vld [vmem:[%s389 + $0x40] sm:$0xff]
                %408 = vst [vmem:[%s390 + $0x40] sm:$0xff] %v407
                %v409 = vld [vmem:[%s389 + $0x48] sm:$0xff]
                %410 = vst [vmem:[%s390 + $0x48] sm:$0xff] %v409
                %v411 = vld [vmem:[%s389 + $0x50] sm:$0xff]
                %412 = vst [vmem:[%s390 + $0x50] sm:$0xff] %v411
                %v413 = vld [vmem:[%s389 + $0x58] sm:$0xff]
                %414 = vst [vmem:[%s390 + $0x58] sm:$0xff] %v413
                %v415 = vld [vmem:[%s389 + $0x60] sm:$0xff]
                %416 = vst [vmem:[%s390 + $0x60] sm:$0xff] %v415
                %v417 = vld [vmem:[%s389 + $0x68] sm:$0xff]
                %418 = vst [vmem:[%s390 + $0x68] sm:$0xff] %v417
                %v419 = vld [vmem:[%s389 + $0x70] sm:$0xff]
                %420 = vst [vmem:[%s390 + $0x70] sm:$0xff] %v419
                %v421 = vld [vmem:[%s389 + $0x78] sm:$0xff]
                %422 = vst [vmem:[%s390 + $0x78] sm:$0xff] %v421
                %v423 = vld [vmem:[%s389 + $0x80] sm:$0xff]
                %424 = vst [vmem:[%s390 + $0x80] sm:$0xff] %v423
                %v425 = vld [vmem:[%s389 + $0x88] sm:$0xff]
                %426 = vst [vmem:[%s390 + $0x88] sm:$0xff] %v425
                %v427 = vld [vmem:[%s389 + $0x90] sm:$0xff]
                %428 = vst [vmem:[%s390 + $0x90] sm:$0xff] %v427
                %v429 = vld [vmem:[%s389 + $0x98] sm:$0xff]
                %430 = vst [vmem:[%s390 + $0x98] sm:$0xff] %v429
                %v431 = vld [vmem:[%s389 + $0xa0] sm:$0xff]
                %432 = vst [vmem:[%s390 + $0xa0] sm:$0xff] %v431
                %v433 = vld [vmem:[%s389 + $0xa8] sm:$0xff]
                %434 = vst [vmem:[%s390 + $0xa8] sm:$0xff] %v433
                %v435 = vld [vmem:[%s389 + $0xb0] sm:$0xff]
                %436 = vst [vmem:[%s390 + $0xb0] sm:$0xff] %v435
                %v437 = vld [vmem:[%s389 + $0xb8] sm:$0xff]
                %438 = vst [vmem:[%s390 + $0xb8] sm:$0xff] %v437
                %v439 = vld [vmem:[%s389 + $0x180] sm:$0xff]
                %440 = vst [vmem:[%s390 + $0xc0] sm:$0xff] %v439
                %v441 = vld [vmem:[%s389 + $0x188] sm:$0xff]
                %442 = vst [vmem:[%s390 + $0xc8] sm:$0xff] %v441
                %v443 = vld [vmem:[%s389 + $0x190] sm:$0xff]
                %444 = vst [vmem:[%s390 + $0xd0] sm:$0xff] %v443
                %v445 = vld [vmem:[%s389 + $0x198] sm:$0xff]
                %446 = vst [vmem:[%s390 + $0xd8] sm:$0xff] %v445
                %v447 = vld [vmem:[%s389 + $0x1a0] sm:$0xff]
                %448 = vst [vmem:[%s390 + $0xe0] sm:$0xff] %v447
                %v449 = vld [vmem:[%s389 + $0x1a8] sm:$0xff]
                %450 = vst [vmem:[%s390 + $0xe8] sm:$0xff] %v449
                %v451 = vld [vmem:[%s389 + $0x1b0] sm:$0xff]
                %452 = vst [vmem:[%s390 + $0xf0] sm:$0xff] %v451
                %v453 = vld [vmem:[%s389 + $0x1b8] sm:$0xff]
                %454 = vst [vmem:[%s390 + $0xf8] sm:$0xff] %v453
                %v455 = vld [vmem:[%s389 + $0x1c0] sm:$0xff]
                %456 = vst [vmem:[%s390 + $0x100] sm:$0xff] %v455
                %v457 = vld [vmem:[%s389 + $0x1c8] sm:$0xff]
                %458 = vst [vmem:[%s390 + $0x108] sm:$0xff] %v457
                %v459 = vld [vmem:[%s389 + $0x1d0] sm:$0xff]
                %460 = vst [vmem:[%s390 + $0x110] sm:$0xff] %v459
                %v461 = vld [vmem:[%s389 + $0x1d8] sm:$0xff]
                %462 = vst [vmem:[%s390 + $0x118] sm:$0xff] %v461
                %v463 = vld [vmem:[%s389 + $0x1e0] sm:$0xff]
                %464 = vst [vmem:[%s390 + $0x120] sm:$0xff] %v463
                %v465 = vld [vmem:[%s389 + $0x1e8] sm:$0xff]
                %466 = vst [vmem:[%s390 + $0x128] sm:$0xff] %v465
                %v467 = vld [vmem:[%s389 + $0x1f0] sm:$0xff]
                %468 = vst [vmem:[%s390 + $0x130] sm:$0xff] %v467
                %v469 = vld [vmem:[%s389 + $0x1f8] sm:$0xff]
                %470 = vst [vmem:[%s390 + $0x138] sm:$0xff] %v469
                %v471 = vld [vmem:[%s389 + $0x200] sm:$0xff]
                %472 = vst [vmem:[%s390 + $0x140] sm:$0xff] %v471
                %v473 = vld [vmem:[%s389 + $0x208] sm:$0xff]
                %474 = vst [vmem:[%s390 + $0x148] sm:$0xff] %v473
                %v475 = vld [vmem:[%s389 + $0x210] sm:$0xff]
                %476 = vst [vmem:[%s390 + $0x150] sm:$0xff] %v475
                %v477 = vld [vmem:[%s389 + $0x218] sm:$0xff]
                %478 = vst [vmem:[%s390 + $0x158] sm:$0xff] %v477
                %v479 = vld [vmem:[%s389 + $0x220] sm:$0xff]
                %480 = vst [vmem:[%s390 + $0x160] sm:$0xff] %v479
                %v481 = vld [vmem:[%s389 + $0x228] sm:$0xff]
                %482 = vst [vmem:[%s390 + $0x168] sm:$0xff] %v481
                %v483 = vld [vmem:[%s389 + $0x230] sm:$0xff]
                %484 = vst [vmem:[%s390 + $0x170] sm:$0xff] %v483
                %v485 = vld [vmem:[%s389 + $0x238] sm:$0xff]
                %486 = vst [vmem:[%s390 + $0x178] sm:$0xff] %v485
              $region80: #{botrgcn_forward.4} parent=74 // loop_footer
                %s388 = sadd.s32 1, %s384
              $region81: #{botrgcn_forward.4} parent=74 // loop_footer_branch
                %383 = sbr.rel target = $region77
              $region82: #{botrgcn_forward.4} parent=74 // loop_exit
                _
            $region75: #{botrgcn_forward.4} parent=66 // pred_fallthru
              _
          $region67: #{botrgcn_forward.4} parent=62 // pred_fallthru
            _
          %595 = vnop
        $region63: #{botrgcn_forward.4} parent=31 // pred_fallthru
          _
      $region32: #{botrgcn_forward.4} parent=5 // pred_fallthru
        _
      %p596 = scmp.le.s32.totalorder 1, %s13
      %p597 = scmp.lt.s32.totalorder %s13, 3
      %p598 = pnand %p596, %p597
      %p599 = pneg %p598
      // Predicated region
      $region98: #{botrgcn_forward.4} parent=5 // pred_check
        _
      $region99: #{botrgcn_forward.4} parent=5 // pred_check_branch
        %601 = sbr.rel (%p598) target = $region101
      $region100: #{botrgcn_forward.4} parent=5 // pred_region
        %s602 = ssub.s32 %s13, 1
        %s603 = sand.u32 %s92, 1
        %s604 = sand.u32 %s92, 1
        %s605 = smul.addr %s604, 288
        %s606 = scalar_lea.vmem [#allocation3], %s605
        // Predicated region
        $region102: #{botrgcn_forward.4} parent=100 // pred_check
          %p607 = pneg %p105
        $region103: #{botrgcn_forward.4} parent=100 // pred_check_branch
          %609 = sbr.rel (%p607) target = $region105
        $region104: #{botrgcn_forward.4} parent=100 // pred_region
          _
        $region105: #{botrgcn_forward.4} parent=100 // pred_fallthru
          _
        %s610 = sand.u32 %s118, 1
        %s611 = sand.u32 %s118, 1
        %s612 = smul.addr %s611, 384
        %s613 = scalar_lea.vmem [#allocation4], %s612
        // Predicated region
        $region106: #{botrgcn_forward.4} parent=100 // pred_check
          %p614 = pneg %p131
        $region107: #{botrgcn_forward.4} parent=100 // pred_check_branch
          %616 = sbr.rel (%p614) target = $region109
        $region108: #{botrgcn_forward.4} parent=100 // pred_region
          _
        $region109: #{botrgcn_forward.4} parent=100 // pred_fallthru
          _
        %s617 = smul.u32 24, %s22
        %p618 = scmp.lt.s32.totalorder %s617, 47
        %s619 = scalar_select %p618, %s617, 47
        %s620 = smul.addr %s619, 4
        %s621 = scalar_lea.vmem %s0, %s620
        %p622 = pneg %p51
        %p623 = pneg %p48
        %s624 = smul.u32 48, %s23
        %p625 = scmp.lt.s32.totalorder %s624, 47
        %s626 = scalar_select %p625, %s624, 47
        %s627 = smul.addr %s626, 4
        %s628 = scalar_lea.vmem %s1, %s627
        %p629 = pneg %p77
        %p630 = pneg %p74
        %s631 = sand.u32 %s92, 1
        %s632 = sand.u32 %s92, 1
        %s633 = smul.addr %s632, 288
        %s634 = scalar_lea.vmem [#allocation3], %s633
        %p635 = pneg %p105
        %p636 = pneg %p102
        %s637 = sand.u32 %s118, 1
        %s638 = sand.u32 %s118, 1
        %s639 = smul.addr %s638, 384
        %s640 = scalar_lea.vmem [#allocation4], %s639
        %p641 = pneg %p131
        %p642 = pneg %p128
        %p643 = pneg %p152
        %p644 = pneg %p149
        %p645 = pneg %p173
        %p646 = pneg %p170
        %p647 = pneg %p194
        %p648 = pneg %p191
        %p649 = pneg %p220
        %p650 = pneg %p217
        %s651 = smul.u32 24, %s22
        %p652 = scmp.lt.s32.totalorder %s651, 47
        %s653 = scalar_select %p652, %s651, 47
        %s654 = smul.addr %s653, 4
        %s655 = scalar_lea.vmem %s7, %s654
        %s656 = smul.u32 24, %s22
        %p657 = scmp.lt.s32.totalorder %s656, 47
        %s658 = scalar_select %p657, %s656, 47
        %s659 = smul.addr %s658, 4
        %s660 = scalar_lea.vmem %s0, %s659
        %s661 = smul.u32 24, %s22
        %s662 = smul.u32 48, %s23
        %p663 = scmp.lt.s32.totalorder %s662, 47
        %s664 = scalar_select %p663, %s662, 47
        %s665 = smul.addr %s664, 4
        %s666 = scalar_lea.vmem %s1, %s665
        %s667 = smul.u32 48, %s23
        %s668 = smul.u32 6, %s22
        %s669 = smul.u32 3, %s23
        %s670 = smul.u32 24, %s22
        %s671 = smul.u32 24, %s22
        %p672 = scmp.lt.s32.totalorder %s671, 47
        %s673 = scalar_select %p672, %s671, 47
        %s674 = smul.addr %s673, 4
        %s675 = scalar_lea.vmem %s7, %s674
        %s676 = smul.u32 24, %s22
        %p678 = scmp.eq.s32.totalorder %s23, 0
        // Predicated region
        $region110: #{botrgcn_forward.4} parent=100 // pred_check
          %p679 = pneg %p678
        $region111: #{botrgcn_forward.4} parent=100 // pred_check_branch
          %681 = sbr.rel (%p679) target = $region113
        $region112: #{botrgcn_forward.4} parent=100 // pred_region
          %vm682 = vcmask 523264
          %683 = vst.msk [vmem:[#allocation2] sm:$0xff] %vm682, 0.0
          %684 = vst.msk [vmem:[#allocation2 + $0x8] sm:$0xff] %vm682, 0.0
          %685 = vst.msk [vmem:[#allocation2 + $0x10] sm:$0xff] %vm682, 0.0
          %686 = vst.msk [vmem:[#allocation2 + $0x18] sm:$0xff] %vm682, 0.0
          %687 = vst.msk [vmem:[#allocation2 + $0x20] sm:$0xff] %vm682, 0.0
          %688 = vst.msk [vmem:[#allocation2 + $0x28] sm:$0xff] %vm682, 0.0
          %689 = vst.msk [vmem:[#allocation2 + $0x30] sm:$0xff] %vm682, 0.0
          %690 = vst.msk [vmem:[#allocation2 + $0x38] sm:$0xff] %vm682, 0.0
          %691 = vst.msk [vmem:[#allocation2 + $0x40] sm:$0xff] %vm682, 0.0
          %692 = vst.msk [vmem:[#allocation2 + $0x48] sm:$0xff] %vm682, 0.0
          %693 = vst.msk [vmem:[#allocation2 + $0x50] sm:$0xff] %vm682, 0.0
          %694 = vst.msk [vmem:[#allocation2 + $0x58] sm:$0xff] %vm682, 0.0
          %695 = vst.msk [vmem:[#allocation2 + $0x60] sm:$0xff] %vm682, 0.0
          %696 = vst.msk [vmem:[#allocation2 + $0x68] sm:$0xff] %vm682, 0.0
          %697 = vst.msk [vmem:[#allocation2 + $0x70] sm:$0xff] %vm682, 0.0
          %698 = vst.msk [vmem:[#allocation2 + $0x78] sm:$0xff] %vm682, 0.0
          %699 = vst.msk [vmem:[#allocation2 + $0x80] sm:$0xff] %vm682, 0.0
          %700 = vst.msk [vmem:[#allocation2 + $0x88] sm:$0xff] %vm682, 0.0
          %701 = vst.msk [vmem:[#allocation2 + $0x90] sm:$0xff] %vm682, 0.0
          %702 = vst.msk [vmem:[#allocation2 + $0x98] sm:$0xff] %vm682, 0.0
          %703 = vst.msk [vmem:[#allocation2 + $0xa0] sm:$0xff] %vm682, 0.0
          %704 = vst.msk [vmem:[#allocation2 + $0xa8] sm:$0xff] %vm682, 0.0
          %705 = vst.msk [vmem:[#allocation2 + $0xb0] sm:$0xff] %vm682, 0.0
          %706 = vst.msk [vmem:[#allocation2 + $0xb8] sm:$0xff] %vm682, 0.0
          %707 = vst.msk [vmem:[#allocation2 + $0xc0] sm:$0xff] %vm682, 0.0
          %708 = vst.msk [vmem:[#allocation2 + $0xc8] sm:$0xff] %vm682, 0.0
          %709 = vst.msk [vmem:[#allocation2 + $0xd0] sm:$0xff] %vm682, 0.0
          %710 = vst.msk [vmem:[#allocation2 + $0xd8] sm:$0xff] %vm682, 0.0
          %711 = vst.msk [vmem:[#allocation2 + $0xe0] sm:$0xff] %vm682, 0.0
          %712 = vst.msk [vmem:[#allocation2 + $0xe8] sm:$0xff] %vm682, 0.0
          %713 = vst.msk [vmem:[#allocation2 + $0xf0] sm:$0xff] %vm682, 0.0
          %714 = vst.msk [vmem:[#allocation2 + $0xf8] sm:$0xff] %vm682, 0.0
          %715 = vst.msk [vmem:[#allocation2 + $0x100] sm:$0xff] %vm682, 0.0
          %716 = vst.msk [vmem:[#allocation2 + $0x108] sm:$0xff] %vm682, 0.0
          %717 = vst.msk [vmem:[#allocation2 + $0x110] sm:$0xff] %vm682, 0.0
          %718 = vst.msk [vmem:[#allocation2 + $0x118] sm:$0xff] %vm682, 0.0
          %719 = vst.msk [vmem:[#allocation2 + $0x120] sm:$0xff] %vm682, 0.0
          %720 = vst.msk [vmem:[#allocation2 + $0x128] sm:$0xff] %vm682, 0.0
          %721 = vst.msk [vmem:[#allocation2 + $0x130] sm:$0xff] %vm682, 0.0
          %722 = vst.msk [vmem:[#allocation2 + $0x138] sm:$0xff] %vm682, 0.0
          %723 = vst.msk [vmem:[#allocation2 + $0x140] sm:$0xff] %vm682, 0.0
          %724 = vst.msk [vmem:[#allocation2 + $0x148] sm:$0xff] %vm682, 0.0
          %725 = vst.msk [vmem:[#allocation2 + $0x150] sm:$0xff] %vm682, 0.0
          %726 = vst.msk [vmem:[#allocation2 + $0x158] sm:$0xff] %vm682, 0.0
          %727 = vst.msk [vmem:[#allocation2 + $0x160] sm:$0xff] %vm682, 0.0
          %728 = vst.msk [vmem:[#allocation2 + $0x168] sm:$0xff] %vm682, 0.0
          %729 = vst.msk [vmem:[#allocation2 + $0x170] sm:$0xff] %vm682, 0.0
          %730 = vst.msk [vmem:[#allocation2 + $0x178] sm:$0xff] %vm682, 0.0
        $region113: #{botrgcn_forward.4} parent=100 // pred_fallthru
          _
        %v731 = vld [vmem:[%s606] sm:$0xff]
        %v732 = vld [vmem:[%s606 + $0x8] sm:$0xff]
        %v733 = vld [vmem:[%s606 + $0x10] sm:$0xff]
        %v734 = vld [vmem:[%s606 + $0x18] sm:$0xff]
        %v735 = vld [vmem:[%s606 + $0x20] sm:$0xff]
        %v736 = vld [vmem:[%s606 + $0x28] sm:$0xff]
        %v737 = vld [vmem:[%s606 + $0x30] sm:$0xff]
        %v738 = vld [vmem:[%s606 + $0x38] sm:$0xff]
        %v739 = vld [vmem:[%s606 + $0x40] sm:$0xff]
        %v740 = vld [vmem:[%s606 + $0x48] sm:$0xff]
        %v741 = vld [vmem:[%s606 + $0x50] sm:$0xff]
        %v742 = vld [vmem:[%s606 + $0x58] sm:$0xff]
        %v743 = vld [vmem:[%s606 + $0x60] sm:$0xff]
        %v744 = vld [vmem:[%s606 + $0x68] sm:$0xff]
        %v745 = vld [vmem:[%s606 + $0x70] sm:$0xff]
        %v746 = vld [vmem:[%s606 + $0x78] sm:$0xff]
        %v747 = vld [vmem:[%s606 + $0x80] sm:$0xff]
        %v748 = vld [vmem:[%s606 + $0x88] sm:$0xff]
        %v749 = vld [vmem:[%s606 + $0x90] sm:$0xff]
        %v750 = vld [vmem:[%s606 + $0x98] sm:$0xff]
        %v751 = vld [vmem:[%s606 + $0xa0] sm:$0xff]
        %v752 = vld [vmem:[%s606 + $0xa8] sm:$0xff]
        %v753 = vld [vmem:[%s606 + $0xb0] sm:$0xff]
        %v754 = vld [vmem:[%s606 + $0xb8] sm:$0xff]
        %v755 = vld [vmem:[%s606 + $0xc0] sm:$0xff]
        %v756 = vld [vmem:[%s606 + $0xc8] sm:$0xff]
        %v757 = vld [vmem:[%s606 + $0xd0] sm:$0xff]
        %v758 = vld [vmem:[%s606 + $0xd8] sm:$0xff]
        %v759 = vld [vmem:[%s606 + $0xe0] sm:$0xff]
        %v760 = vld [vmem:[%s606 + $0xe8] sm:$0xff]
        %v761 = vld [vmem:[%s606 + $0xf0] sm:$0xff]
        %v762 = vld [vmem:[%s606 + $0xf8] sm:$0xff]
        %v763 = vld [vmem:[%s606 + $0x100] sm:$0xff]
        %v764 = vld [vmem:[%s606 + $0x108] sm:$0xff]
        %v765 = vld [vmem:[%s606 + $0x110] sm:$0xff]
        %v766 = vld [vmem:[%s606 + $0x118] sm:$0xff]
        %v767 = vunpack.c.l.s8.bf16 %v731
        %v768 = vunpack.c.l.s8.bf16 %v732
        %v769 = vunpack.c.l.s8.bf16 %v733
        %v770 = vunpack.c.h.s8.bf16 %v731
        %v771 = vunpack.c.h.s8.bf16 %v732
        %v772 = vunpack.c.h.s8.bf16 %v733
        %v773 = vunpack.c.l.s8.bf16 %v734
        %v774 = vunpack.c.l.s8.bf16 %v735
        %v775 = vunpack.c.l.s8.bf16 %v736
        %v776 = vunpack.c.h.s8.bf16 %v734
        %v777 = vunpack.c.h.s8.bf16 %v735
        %v778 = vunpack.c.h.s8.bf16 %v736
        %v779 = vunpack.c.l.s8.bf16 %v737
        %v780 = vunpack.c.l.s8.bf16 %v738
        %v781 = vunpack.c.l.s8.bf16 %v739
        %v782 = vunpack.c.h.s8.bf16 %v737
        %v783 = vunpack.c.h.s8.bf16 %v738
        %v784 = vunpack.c.h.s8.bf16 %v739
        %v785 = vunpack.c.l.s8.bf16 %v740
        %v786 = vunpack.c.l.s8.bf16 %v741
        %v787 = vunpack.c.l.s8.bf16 %v742
        %v788 = vunpack.c.h.s8.bf16 %v740
        %v789 = vunpack.c.h.s8.bf16 %v741
        %v790 = vunpack.c.h.s8.bf16 %v742
        %v791 = vunpack.c.l.s8.bf16 %v743
        %v792 = vunpack.c.l.s8.bf16 %v744
        %v793 = vunpack.c.l.s8.bf16 %v745
        %v794 = vunpack.c.h.s8.bf16 %v743
        %v795 = vunpack.c.h.s8.bf16 %v744
        %v796 = vunpack.c.h.s8.bf16 %v745
        %v797 = vunpack.c.l.s8.bf16 %v746
        %v798 = vunpack.c.l.s8.bf16 %v747
        %v799 = vunpack.c.l.s8.bf16 %v748
        %v800 = vunpack.c.h.s8.bf16 %v746
        %v801 = vunpack.c.h.s8.bf16 %v747
        %v802 = vunpack.c.h.s8.bf16 %v748
        %v803 = vunpack.c.l.s8.bf16 %v749
        %v804 = vunpack.c.l.s8.bf16 %v750
        %v805 = vunpack.c.l.s8.bf16 %v751
        %v806 = vunpack.c.h.s8.bf16 %v749
        %v807 = vunpack.c.h.s8.bf16 %v750
        %v808 = vunpack.c.h.s8.bf16 %v751
        %v809 = vunpack.c.l.s8.bf16 %v752
        %v810 = vunpack.c.l.s8.bf16 %v753
        %v811 = vunpack.c.l.s8.bf16 %v754
        %v812 = vunpack.c.h.s8.bf16 %v752
        %v813 = vunpack.c.h.s8.bf16 %v753
        %v814 = vunpack.c.h.s8.bf16 %v754
        %v815 = vunpack.c.l.s8.bf16 %v755
        %v816 = vunpack.c.l.s8.bf16 %v756
        %v817 = vunpack.c.l.s8.bf16 %v757
        %v818 = vunpack.c.h.s8.bf16 %v755
        %v819 = vunpack.c.h.s8.bf16 %v756
        %v820 = vunpack.c.h.s8.bf16 %v757
        %v821 = vunpack.c.l.s8.bf16 %v758
        %v822 = vunpack.c.l.s8.bf16 %v759
        %v823 = vunpack.c.l.s8.bf16 %v760
        %v824 = vunpack.c.h.s8.bf16 %v758
        %v825 = vunpack.c.h.s8.bf16 %v759
        %v826 = vunpack.c.h.s8.bf16 %v760
        %v827 = vunpack.c.l.s8.bf16 %v761
        %v828 = vunpack.c.l.s8.bf16 %v762
        %v829 = vunpack.c.l.s8.bf16 %v763
        %v830 = vunpack.c.h.s8.bf16 %v761
        %v831 = vunpack.c.h.s8.bf16 %v762
        %v832 = vunpack.c.h.s8.bf16 %v763
        %v833 = vunpack.c.l.s8.bf16 %v764
        %v834 = vunpack.c.l.s8.bf16 %v765
        %v835 = vunpack.c.l.s8.bf16 %v766
        %v836 = vunpack.c.h.s8.bf16 %v764
        %v837 = vunpack.c.h.s8.bf16 %v765
        %v838 = vunpack.c.h.s8.bf16 %v766
        %v839 = vld [vmem:[%s666] sm:$0xf]
        %v840 = vld [vmem:[%s666 + $0x4] sm:$0xf]
        %v841 = vld [vmem:[%s666 + $0x8] sm:$0xf]
        %v842 = vld [vmem:[%s666 + $0xc] sm:$0xf]
        %v843 = vld [vmem:[%s666 + $0x10] sm:$0xf]
        %v844 = vld [vmem:[%s666 + $0x14] sm:$0xf]
        %v845 = vld [vmem:[%s666 + $0x18] sm:$0xf]
        %v846 = vld [vmem:[%s666 + $0x1c] sm:$0xf]
        %v847 = vld [vmem:[%s666 + $0x20] sm:$0xf]
        %v848 = vld [vmem:[%s666 + $0x24] sm:$0xf]
        %v849 = vld [vmem:[%s666 + $0x28] sm:$0xf]
        %v850 = vld [vmem:[%s666 + $0x2c] sm:$0xf]
        %v851 = vld [vmem:[%s666 + $0x30] sm:$0xf]
        %v852 = vld [vmem:[%s666 + $0x34] sm:$0xf]
        %v853 = vld [vmem:[%s666 + $0x38] sm:$0xf]
        %v854 = vld [vmem:[%s666 + $0x3c] sm:$0xf]
        %v855 = vld [vmem:[%s666 + $0x40] sm:$0xf]
        %v856 = vld [vmem:[%s666 + $0x44] sm:$0xf]
        %v857 = vld [vmem:[%s666 + $0x48] sm:$0xf]
        %v858 = vld [vmem:[%s666 + $0x4c] sm:$0xf]
        %v859 = vld [vmem:[%s666 + $0x50] sm:$0xf]
        %v860 = vld [vmem:[%s666 + $0x54] sm:$0xf]
        %v861 = vld [vmem:[%s666 + $0x58] sm:$0xf]
        %v862 = vld [vmem:[%s666 + $0x5c] sm:$0xf]
        %v863 = vld [vmem:[%s666 + $0x60] sm:$0xf]
        %v864 = vld [vmem:[%s666 + $0x64] sm:$0xf]
        %v865 = vld [vmem:[%s666 + $0x68] sm:$0xf]
        %v866 = vld [vmem:[%s666 + $0x6c] sm:$0xf]
        %v867 = vld [vmem:[%s666 + $0x70] sm:$0xf]
        %v868 = vld [vmem:[%s666 + $0x74] sm:$0xf]
        %v869 = vld [vmem:[%s666 + $0x78] sm:$0xf]
        %v870 = vld [vmem:[%s666 + $0x7c] sm:$0xf]
        %v871 = vld [vmem:[%s666 + $0x80] sm:$0xf]
        %v872 = vld [vmem:[%s666 + $0x84] sm:$0xf]
        %v873 = vld [vmem:[%s666 + $0x88] sm:$0xf]
        %v874 = vld [vmem:[%s666 + $0x8c] sm:$0xf]
        %v875 = vld [vmem:[%s666 + $0x90] sm:$0xf]
        %v876 = vld [vmem:[%s666 + $0x94] sm:$0xf]
        %v877 = vld [vmem:[%s666 + $0x98] sm:$0xf]
        %v878 = vld [vmem:[%s666 + $0x9c] sm:$0xf]
        %v879 = vld [vmem:[%s666 + $0xa0] sm:$0xf]
        %v880 = vld [vmem:[%s666 + $0xa4] sm:$0xf]
        %v881 = vld [vmem:[%s666 + $0xa8] sm:$0xf]
        %v882 = vld [vmem:[%s666 + $0xac] sm:$0xf]
        %v883 = vld [vmem:[%s666 + $0xb0] sm:$0xf]
        %v884 = vld [vmem:[%s666 + $0xb4] sm:$0xf]
        %v885 = vld [vmem:[%s666 + $0xb8] sm:$0xf]
        %v886 = vld [vmem:[%s666 + $0xbc] sm:$0xf]
        %v887 = vld [vmem:[#allocation2] sm:$0xff]
        %v888 = vld [vmem:[#allocation2 + $0x8] sm:$0xff]
        %v889 = vld [vmem:[#allocation2 + $0x10] sm:$0xff]
        %v890 = vld [vmem:[#allocation2 + $0x18] sm:$0xff]
        %v891 = vld [vmem:[#allocation2 + $0x20] sm:$0xff]
        %v892 = vld [vmem:[#allocation2 + $0x28] sm:$0xff]
        %v893 = vld [vmem:[#allocation2 + $0x30] sm:$0xff]
        %v894 = vld [vmem:[#allocation2 + $0x38] sm:$0xff]
        %v895 = vld [vmem:[#allocation2 + $0x40] sm:$0xff]
        %v896 = vld [vmem:[#allocation2 + $0x48] sm:$0xff]
        %v897 = vld [vmem:[#allocation2 + $0x50] sm:$0xff]
        %v898 = vld [vmem:[#allocation2 + $0x58] sm:$0xff]
        %v899 = vld [vmem:[#allocation2 + $0x60] sm:$0xff]
        %v900 = vld [vmem:[#allocation2 + $0x68] sm:$0xff]
        %v901 = vld [vmem:[#allocation2 + $0x70] sm:$0xff]
        %v902 = vld [vmem:[#allocation2 + $0x78] sm:$0xff]
        %v903 = vld [vmem:[#allocation2 + $0x80] sm:$0xff]
        %v904 = vld [vmem:[#allocation2 + $0x88] sm:$0xff]
        %v905 = vld [vmem:[#allocation2 + $0x90] sm:$0xff]
        %v906 = vld [vmem:[#allocation2 + $0x98] sm:$0xff]
        %v907 = vld [vmem:[#allocation2 + $0xa0] sm:$0xff]
        %v908 = vld [vmem:[#allocation2 + $0xa8] sm:$0xff]
        %v909 = vld [vmem:[#allocation2 + $0xb0] sm:$0xff]
        %v910 = vld [vmem:[#allocation2 + $0xb8] sm:$0xff]
        %v911 = vld [vmem:[#allocation2 + $0xc0] sm:$0xff]
        %v912 = vld [vmem:[#allocation2 + $0xc8] sm:$0xff]
        %v913 = vld [vmem:[#allocation2 + $0xd0] sm:$0xff]
        %v914 = vld [vmem:[#allocation2 + $0xd8] sm:$0xff]
        %v915 = vld [vmem:[#allocation2 + $0xe0] sm:$0xff]
        %v916 = vld [vmem:[#allocation2 + $0xe8] sm:$0xff]
        %v917 = vld [vmem:[#allocation2 + $0xf0] sm:$0xff]
        %v918 = vld [vmem:[#allocation2 + $0xf8] sm:$0xff]
        %v919 = vld [vmem:[#allocation2 + $0x100] sm:$0xff]
        %v920 = vld [vmem:[#allocation2 + $0x108] sm:$0xff]
        %v921 = vld [vmem:[#allocation2 + $0x110] sm:$0xff]
        %v922 = vld [vmem:[#allocation2 + $0x118] sm:$0xff]
        %v923 = vld [vmem:[#allocation2 + $0x120] sm:$0xff]
        %v924 = vld [vmem:[#allocation2 + $0x128] sm:$0xff]
        %v925 = vld [vmem:[#allocation2 + $0x130] sm:$0xff]
        %v926 = vld [vmem:[#allocation2 + $0x138] sm:$0xff]
        %v927 = vld [vmem:[#allocation2 + $0x140] sm:$0xff]
        %v928 = vld [vmem:[#allocation2 + $0x148] sm:$0xff]
        %v929 = vld [vmem:[#allocation2 + $0x150] sm:$0xff]
        %v930 = vld [vmem:[#allocation2 + $0x158] sm:$0xff]
        %v931 = vld [vmem:[#allocation2 + $0x160] sm:$0xff]
        %v932 = vld [vmem:[#allocation2 + $0x168] sm:$0xff]
        %v933 = vld [vmem:[#allocation2 + $0x170] sm:$0xff]
        %v934 = vld [vmem:[#allocation2 + $0x178] sm:$0xff]
        %v983 = vunpack.c.l.b16 %v839
        %v984 = vunpack.c.l.b16 %v840
        %v985 = vunpack.c.l.b16 %v841
        %v986 = vunpack.c.l.b16 %v842
        %v987 = vunpack.c.l.b16 %v843
        %v988 = vunpack.c.l.b16 %v844
        %v989 = vunpack.c.l.b16 %v845
        %v990 = vunpack.c.l.b16 %v846
        %v991 = vunpack.c.l.b16 %v847
        %v992 = vunpack.c.l.b16 %v848
        %v993 = vunpack.c.l.b16 %v849
        %v994 = vunpack.c.l.b16 %v850
        %v995 = vunpack.c.l.b16 %v851
        %v996 = vunpack.c.l.b16 %v852
        %v997 = vunpack.c.l.b16 %v853
        %v998 = vunpack.c.l.b16 %v854
        %v999 = vunpack.c.l.b16 %v855
        %v1000 = vunpack.c.l.b16 %v856
        %v1001 = vunpack.c.l.b16 %v857
        %v1002 = vunpack.c.l.b16 %v858
        %v1003 = vunpack.c.l.b16 %v859
        %v1004 = vunpack.c.l.b16 %v860
        %v1005 = vunpack.c.l.b16 %v861
        %v1006 = vunpack.c.l.b16 %v862
        %v1007 = vunpack.c.l.b16 %v863
        %v1008 = vunpack.c.l.b16 %v864
        %v1009 = vunpack.c.l.b16 %v865
        %v1010 = vunpack.c.l.b16 %v866
        %v1011 = vunpack.c.l.b16 %v867
        %v1012 = vunpack.c.l.b16 %v868
        %v1013 = vunpack.c.l.b16 %v869
        %v1014 = vunpack.c.l.b16 %v870
        %v1015 = vunpack.c.l.b16 %v871
        %v1016 = vunpack.c.l.b16 %v872
        %v1017 = vunpack.c.l.b16 %v873
        %v1018 = vunpack.c.l.b16 %v874
        %v1019 = vunpack.c.l.b16 %v875
        %v1020 = vunpack.c.l.b16 %v876
        %v1021 = vunpack.c.l.b16 %v877
        %v1022 = vunpack.c.l.b16 %v878
        %v1023 = vunpack.c.l.b16 %v879
        %v1024 = vunpack.c.l.b16 %v880
        %v1025 = vunpack.c.l.b16 %v881
        %v1026 = vunpack.c.l.b16 %v882
        %v1027 = vunpack.c.l.b16 %v883
        %v1028 = vunpack.c.l.b16 %v884
        %v1029 = vunpack.c.l.b16 %v885
        %v1030 = vunpack.c.l.b16 %v886
        %v1031 = vpack.c.b16 %v984, %v983
        %v1032 = vpack.c.b16 %v986, %v985
        %v1033 = vpack.c.b16 %v988, %v987
        %v1034 = vpack.c.b16 %v990, %v989
        %v1035 = vpack.c.b16 %v992, %v991
        %v1036 = vpack.c.b16 %v994, %v993
        %v1037 = vpack.c.b16 %v996, %v995
        %v1038 = vpack.c.b16 %v998, %v997
        %v1039 = vpack.c.b16 %v1000, %v999
        %v1040 = vpack.c.b16 %v1002, %v1001
        %v1041 = vpack.c.b16 %v1004, %v1003
        %v1042 = vpack.c.b16 %v1006, %v1005
        %v1043 = vpack.c.b16 %v1008, %v1007
        %v1044 = vpack.c.b16 %v1010, %v1009
        %v1045 = vpack.c.b16 %v1012, %v1011
        %v1046 = vpack.c.b16 %v1014, %v1013
        %v1047 = vpack.c.b16 %v1016, %v1015
        %v1048 = vpack.c.b16 %v1018, %v1017
        %v1049 = vpack.c.b16 %v1020, %v1019
        %v1050 = vpack.c.b16 %v1022, %v1021
        %v1051 = vpack.c.b16 %v1024, %v1023
        %v1052 = vpack.c.b16 %v1026, %v1025
        %v1053 = vpack.c.b16 %v1028, %v1027
        %v1054 = vpack.c.b16 %v1030, %v1029
        %1079 = vmatprep.subr.bf16.mxu0 0
        %1080 = vmatpush1.bf16.msra.mxu0 %v1031
        %1081 = vmatprep.subr.bf16.mxu0 0
        %1082 = vmatpush1.bf16.msra.mxu0 %v1032
        %1083 = vmatprep.subr.bf16.mxu0 0
        %1084 = vmatpush1.bf16.msra.mxu0 %v1033
        %1085 = vmatprep.subr.bf16.mxu0 0
        %1086 = vmatpush1.bf16.msra.mxu0 %v1034
        %1087 = vmatprep.subr.bf16.mxu0 0
        %1088 = vmatpush1.bf16.msra.mxu0 %v1035
        %1089 = vmatprep.subr.bf16.mxu0 0
        %1090 = vmatpush1.bf16.msra.mxu0 %v1036
        %1091 = vmatprep.subr.bf16.mxu0 0
        %1092 = vmatpush1.bf16.msra.mxu0 %v1037
        %1093 = vmatprep.subr.bf16.mxu0 0
        %1094 = vmatpush1.bf16.msra.mxu0 %v1038
        %1095 = vmatprep.subr.bf16.mxu0 0
        %1096 = vmatpush1.bf16.msra.mxu0 %v1039
        %1097 = vmatprep.subr.bf16.mxu0 0
        %1098 = vmatpush1.bf16.msra.mxu0 %v1040
        %1099 = vmatprep.subr.bf16.mxu0 0
        %1100 = vmatpush1.bf16.msra.mxu0 %v1041
        %1101 = vmatprep.subr.bf16.mxu0 0
        %1102 = vmatpush1.bf16.msra.mxu0 %v1042
        %1103 = vmatprep.subr.bf16.mxu0 0
        %1104 = vmatpush1.bf16.msra.mxu0 %v1043
        %1105 = vmatprep.subr.bf16.mxu0 0
        %1106 = vmatpush1.bf16.msra.mxu0 %v1044
        %1107 = vmatprep.subr.bf16.mxu0 0
        %1108 = vmatpush1.bf16.msra.mxu0 %v1045
        %1109 = vmatprep.subr.bf16.mxu0 0
        %1110 = vmatpush1.bf16.msra.mxu0 %v1046
        %1111 = vmatprep.mubr.bf16.mxu0 %v768
        %1112 = vmatmul.mubr.bf16.gmra.mrb[0].mxu0 %v767
        %v1113 = vpop.f32.mrb[0].mxu0
        %v1114 = vadd.f32 0.0, %v1113
        %v1115 = vpop.f32.mrb[0].mxu0
        %v1116 = vpop.f32.mrb[0].mxu0
        %v1117 = vadd.f32 0.0, %v1116
        %v1118 = vpop.f32.mrb[0].mxu0
        %1119 = vmatprep.mubr.bf16.mxu0 %v771
        %1120 = vmatmul.mubr.bf16.gmra.mrb[0].mxu0 %v770
        %v1121 = vpop.f32.mrb[0].mxu0
        %v1122 = vadd.f32 0.0, %v1121
        %v1123 = vpop.f32.mrb[0].mxu0
        %v1124 = vpop.f32.mrb[0].mxu0
        %v1125 = vadd.f32 0.0, %v1124
        %v1126 = vpop.f32.mrb[0].mxu0
        %1127 = vmatprep.mubr.bf16.mxu0 %v774
        %1128 = vmatmul.mubr.bf16.gmra.mrb[0].mxu0 %v773
        %v1129 = vpop.f32.mrb[0].mxu0
        %v1130 = vadd.f32 0.0, %v1129
        %v1131 = vpop.f32.mrb[0].mxu0
        %v1132 = vpop.f32.mrb[0].mxu0
        %v1133 = vadd.f32 0.0, %v1132
        %v1134 = vpop.f32.mrb[0].mxu0
        %1135 = vmatprep.mubr.bf16.mxu0 %v777
        %1136 = vmatmul.mubr.bf16.gmra.mrb[0].mxu0 %v776
        %v1137 = vpop.f32.mrb[0].mxu0
        %v1138 = vadd.f32 0.0, %v1137
        %v1139 = vpop.f32.mrb[0].mxu0
        %v1140 = vpop.f32.mrb[0].mxu0
        %v1141 = vadd.f32 0.0, %v1140
        %v1142 = vpop.f32.mrb[0].mxu0
        %1143 = vmatprep.mubr.bf16.mxu0 %v780
        %1144 = vmatmul.mubr.bf16.gmra.mrb[0].mxu0 %v779
        %v1145 = vpop.f32.mrb[0].mxu0
        %v1146 = vadd.f32 0.0, %v1145
        %v1147 = vpop.f32.mrb[0].mxu0
        %v1148 = vpop.f32.mrb[0].mxu0
        %v1149 = vadd.f32 0.0, %v1148
        %v1150 = vpop.f32.mrb[0].mxu0
        %1151 = vmatprep.mubr.bf16.mxu0 %v783
        %1152 = vmatmul.mubr.bf16.gmra.mrb[0].mxu0 %v782
        %v1153 = vpop.f32.mrb[0].mxu0
        %v1154 = vadd.f32 0.0, %v1153
        %v1155 = vpop.f32.mrb[0].mxu0
        %v1156 = vpop.f32.mrb[0].mxu0
        %v1157 = vadd.f32 0.0, %v1156
        %v1158 = vpop.f32.mrb[0].mxu0
        %1159 = vmatprep.mubr.bf16.mxu0 %v786
        %1160 = vmatmul.mubr.bf16.gmra.mrb[0].mxu0 %v785
        %v1161 = vpop.f32.mrb[0].mxu0
        %v1162 = vadd.f32 0.0, %v1161
        %v1163 = vpop.f32.mrb[0].mxu0
        %v1164 = vpop.f32.mrb[0].mxu0
        %v1165 = vadd.f32 0.0, %v1164
        %v1166 = vpop.f32.mrb[0].mxu0
        %1167 = vmatprep.mubr.bf16.mxu0 %v789
        %1168 = vmatmul.mubr.bf16.gmra.mrb[0].mxu0 %v788
        %v1169 = vpop.f32.mrb[0].mxu0
        %v1170 = vadd.f32 0.0, %v1169
        %v1171 = vpop.f32.mrb[0].mxu0
        %v1172 = vpop.f32.mrb[0].mxu0
        %v1173 = vadd.f32 0.0, %v1172
        %v1174 = vpop.f32.mrb[0].mxu0
        %1175 = vmatprep.mubr.bf16.mxu0 %v792
        %1176 = vmatmul.mubr.bf16.gmra.mrb[0].mxu0 %v791
        %v1177 = vpop.f32.mrb[0].mxu0
        %v1178 = vadd.f32 0.0, %v1177
        %v1179 = vpop.f32.mrb[0].mxu0
        %v1180 = vpop.f32.mrb[0].mxu0
        %v1181 = vadd.f32 0.0, %v1180
        %v1182 = vpop.f32.mrb[0].mxu0
        %1183 = vmatprep.mubr.bf16.mxu0 %v795
        %1184 = vmatmul.mubr.bf16.gmra.mrb[0].mxu0 %v794
        %v1185 = vpop.f32.mrb[0].mxu0
        %v1186 = vadd.f32 0.0, %v1185
        %v1187 = vpop.f32.mrb[0].mxu0
        %v1188 = vpop.f32.mrb[0].mxu0
        %v1189 = vadd.f32 0.0, %v1188
        %v1190 = vpop.f32.mrb[0].mxu0
        %1191 = vmatprep.mubr.bf16.mxu0 %v798
        %1192 = vmatmul.mubr.bf16.gmra.mrb[0].mxu0 %v797
        %v1193 = vpop.f32.mrb[0].mxu0
        %v1194 = vadd.f32 0.0, %v1193
        %v1195 = vpop.f32.mrb[0].mxu0
        %v1196 = vpop.f32.mrb[0].mxu0
        %v1197 = vadd.f32 0.0, %v1196
        %v1198 = vpop.f32.mrb[0].mxu0
        %1199 = vmatprep.mubr.bf16.mxu0 %v801
        %1200 = vmatmul.mubr.bf16.gmra.mrb[0].mxu0 %v800
        %v1201 = vpop.f32.mrb[0].mxu0
        %v1202 = vadd.f32 0.0, %v1201
        %v1203 = vpop.f32.mrb[0].mxu0
        %v1204 = vpop.f32.mrb[0].mxu0
        %v1205 = vadd.f32 0.0, %v1204
        %v1206 = vpop.f32.mrb[0].mxu0
        %1207 = vmatprep.mubr.bf16.mxu0 %v804
        %1208 = vmatmul.mubr.bf16.gmra.mrb[0].mxu0 %v803
        %v1209 = vpop.f32.mrb[0].mxu0
        %v1210 = vadd.f32 0.0, %v1209
        %v1211 = vpop.f32.mrb[0].mxu0
        %v1212 = vpop.f32.mrb[0].mxu0
        %v1213 = vadd.f32 0.0, %v1212
        %v1214 = vpop.f32.mrb[0].mxu0
        %1215 = vmatprep.mubr.bf16.mxu0 %v807
        %1216 = vmatmul.mubr.bf16.gmra.mrb[0].mxu0 %v806
        %v1217 = vpop.f32.mrb[0].mxu0
        %v1218 = vadd.f32 0.0, %v1217
        %v1219 = vpop.f32.mrb[0].mxu0
        %v1220 = vpop.f32.mrb[0].mxu0
        %v1221 = vadd.f32 0.0, %v1220
        %v1222 = vpop.f32.mrb[0].mxu0
        %1223 = vmatprep.mubr.bf16.mxu0 %v810
        %1224 = vmatmul.mubr.bf16.gmra.mrb[0].mxu0 %v809
        %v1225 = vpop.f32.mrb[0].mxu0
        %v1226 = vadd.f32 0.0, %v1225
        %v1227 = vpop.f32.mrb[0].mxu0
        %v1228 = vpop.f32.mrb[0].mxu0
        %v1229 = vadd.f32 0.0, %v1228
        %v1230 = vpop.f32.mrb[0].mxu0
        %1231 = vmatprep.mubr.bf16.mxu0 %v813
        %1232 = vmatmul.mubr.bf16.gmra.mrb[0].mxu0 %v812
        %v1233 = vpop.f32.mrb[0].mxu0
        %v1234 = vadd.f32 0.0, %v1233
        %v1235 = vpop.f32.mrb[0].mxu0
        %v1236 = vpop.f32.mrb[0].mxu0
        %v1237 = vadd.f32 0.0, %v1236
        %v1238 = vpop.f32.mrb[0].mxu0
        %1239 = vmatprep.mubr.bf16.mxu0 %v816
        %1240 = vmatmul.mubr.bf16.gmra.mrb[0].mxu0 %v815
        %v1241 = vpop.f32.mrb[0].mxu0
        %v1242 = vadd.f32 0.0, %v1241
        %v1243 = vpop.f32.mrb[0].mxu0
        %v1244 = vpop.f32.mrb[0].mxu0
        %v1245 = vadd.f32 0.0, %v1244
        %v1246 = vpop.f32.mrb[0].mxu0
        %1247 = vmatprep.mubr.bf16.mxu0 %v819
        %1248 = vmatmul.mubr.bf16.gmra.mrb[0].mxu0 %v818
        %v1249 = vpop.f32.mrb[0].mxu0
        %v1250 = vadd.f32 0.0, %v1249
        %v1251 = vpop.f32.mrb[0].mxu0
        %v1252 = vpop.f32.mrb[0].mxu0
        %v1253 = vadd.f32 0.0, %v1252
        %v1254 = vpop.f32.mrb[0].mxu0
        %1255 = vmatprep.mubr.bf16.mxu0 %v822
        %1256 = vmatmul.mubr.bf16.gmra.mrb[0].mxu0 %v821
        %v1257 = vpop.f32.mrb[0].mxu0
        %v1258 = vadd.f32 0.0, %v1257
        %v1259 = vpop.f32.mrb[0].mxu0
        %v1260 = vpop.f32.mrb[0].mxu0
        %v1261 = vadd.f32 0.0, %v1260
        %v1262 = vpop.f32.mrb[0].mxu0
        %1263 = vmatprep.mubr.bf16.mxu0 %v825
        %1264 = vmatmul.mubr.bf16.gmra.mrb[0].mxu0 %v824
        %v1265 = vpop.f32.mrb[0].mxu0
        %v1266 = vadd.f32 0.0, %v1265
        %v1267 = vpop.f32.mrb[0].mxu0
        %v1268 = vpop.f32.mrb[0].mxu0
        %v1269 = vadd.f32 0.0, %v1268
        %v1270 = vpop.f32.mrb[0].mxu0
        %1271 = vmatprep.mubr.bf16.mxu0 %v828
        %1272 = vmatmul.mubr.bf16.gmra.mrb[0].mxu0 %v827
        %v1273 = vpop.f32.mrb[0].mxu0
        %v1274 = vadd.f32 0.0, %v1273
        %v1275 = vpop.f32.mrb[0].mxu0
        %v1276 = vpop.f32.mrb[0].mxu0
        %v1277 = vadd.f32 0.0, %v1276
        %v1278 = vpop.f32.mrb[0].mxu0
        %1279 = vmatprep.mubr.bf16.mxu0 %v831
        %1280 = vmatmul.mubr.bf16.gmra.mrb[0].mxu0 %v830
        %v1281 = vpop.f32.mrb[0].mxu0
        %v1282 = vadd.f32 0.0, %v1281
        %v1283 = vpop.f32.mrb[0].mxu0
        %v1284 = vpop.f32.mrb[0].mxu0
        %v1285 = vadd.f32 0.0, %v1284
        %v1286 = vpop.f32.mrb[0].mxu0
        %1287 = vmatprep.mubr.bf16.mxu0 %v834
        %1288 = vmatmul.mubr.bf16.gmra.mrb[0].mxu0 %v833
        %v1289 = vpop.f32.mrb[0].mxu0
        %v1290 = vadd.f32 0.0, %v1289
        %v1291 = vpop.f32.mrb[0].mxu0
        %v1292 = vpop.f32.mrb[0].mxu0
        %v1293 = vadd.f32 0.0, %v1292
        %v1294 = vpop.f32.mrb[0].mxu0
        %1295 = vmatprep.mubr.bf16.mxu0 %v837
        %1296 = vmatmul.mubr.bf16.gmra.mrb[0].mxu0 %v836
        %v1297 = vpop.f32.mrb[0].mxu0
        %v1298 = vadd.f32 0.0, %v1297
        %v1299 = vpop.f32.mrb[0].mxu0
        %v1300 = vpop.f32.mrb[0].mxu0
        %v1301 = vadd.f32 0.0, %v1300
        %v1302 = vpop.f32.mrb[0].mxu0
        %1303 = vdwg.mxu0
        %1304 = vmatprep.subr.bf16.mxu0 0
        %1305 = vmatpush1.bf16.msra.mxu0 %v1047
        %1306 = vmatprep.subr.bf16.mxu0 0
        %1307 = vmatpush1.bf16.msra.mxu0 %v1048
        %1308 = vmatprep.subr.bf16.mxu0 0
        %1309 = vmatpush1.bf16.msra.mxu0 %v1049
        %1310 = vmatprep.subr.bf16.mxu0 0
        %1311 = vmatpush1.bf16.msra.mxu0 %v1050
        %1312 = vmatprep.subr.bf16.mxu0 0
        %1313 = vmatpush1.bf16.msra.mxu0 %v1051
        %1314 = vmatprep.subr.bf16.mxu0 0
        %1315 = vmatpush1.bf16.msra.mxu0 %v1052
        %1316 = vmatprep.subr.bf16.mxu0 0
        %1317 = vmatpush1.bf16.msra.mxu0 %v1053
        %1318 = vmatprep.subr.bf16.mxu0 0
        %1319 = vmatpush1.bf16.msra.mxu0 %v1054
        %1320 = vmatprep.subr.bf16.mxu0 0
        %1321 = vmatpush1.bf16.msra.mxu0 0
        %1322 = vmatprep.subr.bf16.mxu0 0
        %1323 = vmatpush1.bf16.msra.mxu0 0
        %1324 = vmatprep.subr.bf16.mxu0 0
        %1325 = vmatpush1.bf16.msra.mxu0 0
        %1326 = vmatprep.subr.bf16.mxu0 0
        %1327 = vmatpush1.bf16.msra.mxu0 0
        %1328 = vmatprep.subr.bf16.mxu0 0
        %1329 = vmatpush1.bf16.msra.mxu0 0
        %1330 = vmatprep.subr.bf16.mxu0 0
        %1331 = vmatpush1.bf16.msra.mxu0 0
        %1332 = vmatprep.subr.bf16.mxu0 0
        %1333 = vmatpush1.bf16.msra.mxu0 0
        %1334 = vmatprep.subr.bf16.mxu0 0
        %1335 = vmatpush1.bf16.msra.mxu0 0
        %1336 = vmatprep.mubr.bf16.mxu0 0
        %1337 = vmatmul.mubr.bf16.gmra.mrb[0].mxu0 %v769
        %v1338 = vpop.f32.mrb[0].mxu0
        %v1339 = vadd.f32 %v1114, %v1338
        %v1340 = vpop.f32.mrb[0].mxu0
        %v1341 = vpop.f32.mrb[0].mxu0
        %v1342 = vadd.f32 %v1117, %v1341
        %v1343 = vpop.f32.mrb[0].mxu0
        %1344 = vmatprep.mubr.bf16.mxu0 0
        %1345 = vmatmul.mubr.bf16.gmra.mrb[0].mxu0 %v772
        %v1346 = vpop.f32.mrb[0].mxu0
        %v1347 = vadd.f32 %v1122, %v1346
        %v1348 = vpop.f32.mrb[0].mxu0
        %v1349 = vpop.f32.mrb[0].mxu0
        %v1350 = vadd.f32 %v1125, %v1349
        %v1351 = vpop.f32.mrb[0].mxu0
        %1352 = vmatprep.mubr.bf16.mxu0 0
        %1353 = vmatmul.mubr.bf16.gmra.mrb[0].mxu0 %v775
        %v1354 = vpop.f32.mrb[0].mxu0
        %v1355 = vadd.f32 %v1130, %v1354
        %v1356 = vpop.f32.mrb[0].mxu0
        %v1357 = vpop.f32.mrb[0].mxu0
        %v1358 = vadd.f32 %v1133, %v1357
        %v1359 = vpop.f32.mrb[0].mxu0
        %1360 = vmatprep.mubr.bf16.mxu0 0
        %1361 = vmatmul.mubr.bf16.gmra.mrb[0].mxu0 %v778
        %v1362 = vpop.f32.mrb[0].mxu0
        %v1363 = vadd.f32 %v1138, %v1362
        %v1364 = vpop.f32.mrb[0].mxu0
        %v1365 = vpop.f32.mrb[0].mxu0
        %v1366 = vadd.f32 %v1141, %v1365
        %v1367 = vpop.f32.mrb[0].mxu0
        %1368 = vmatprep.mubr.bf16.mxu0 0
        %1369 = vmatmul.mubr.bf16.gmra.mrb[0].mxu0 %v781
        %v1370 = vpop.f32.mrb[0].mxu0
        %v1371 = vadd.f32 %v1146, %v1370
        %v1372 = vpop.f32.mrb[0].mxu0
        %v1373 = vpop.f32.mrb[0].mxu0
        %v1374 = vadd.f32 %v1149, %v1373
        %v1375 = vpop.f32.mrb[0].mxu0
        %1376 = vmatprep.mubr.bf16.mxu0 0
        %1377 = vmatmul.mubr.bf16.gmra.mrb[0].mxu0 %v784
        %v1378 = vpop.f32.mrb[0].mxu0
        %v1379 = vadd.f32 %v1154, %v1378
        %v1380 = vpop.f32.mrb[0].mxu0
        %v1381 = vpop.f32.mrb[0].mxu0
        %v1382 = vadd.f32 %v1157, %v1381
        %v1383 = vpop.f32.mrb[0].mxu0
        %1384 = vmatprep.mubr.bf16.mxu0 0
        %1385 = vmatmul.mubr.bf16.gmra.mrb[0].mxu0 %v787
        %v1386 = vpop.f32.mrb[0].mxu0
        %v1387 = vadd.f32 %v1162, %v1386
        %v1388 = vpop.f32.mrb[0].mxu0
        %v1389 = vpop.f32.mrb[0].mxu0
        %v1390 = vadd.f32 %v1165, %v1389
        %v1391 = vpop.f32.mrb[0].mxu0
        %1392 = vmatprep.mubr.bf16.mxu0 0
        %1393 = vmatmul.mubr.bf16.gmra.mrb[0].mxu0 %v790
        %v1394 = vpop.f32.mrb[0].mxu0
        %v1395 = vadd.f32 %v1170, %v1394
        %v1396 = vpop.f32.mrb[0].mxu0
        %v1397 = vpop.f32.mrb[0].mxu0
        %v1398 = vadd.f32 %v1173, %v1397
        %v1399 = vpop.f32.mrb[0].mxu0
        %1400 = vmatprep.mubr.bf16.mxu0 0
        %1401 = vmatmul.mubr.bf16.gmra.mrb[0].mxu0 %v793
        %v1402 = vpop.f32.mrb[0].mxu0
        %v1403 = vadd.f32 %v1178, %v1402
        %v1404 = vpop.f32.mrb[0].mxu0
        %v1405 = vpop.f32.mrb[0].mxu0
        %v1406 = vadd.f32 %v1181, %v1405
        %v1407 = vpop.f32.mrb[0].mxu0
        %1408 = vmatprep.mubr.bf16.mxu0 0
        %1409 = vmatmul.mubr.bf16.gmra.mrb[0].mxu0 %v796
        %v1410 = vpop.f32.mrb[0].mxu0
        %v1411 = vadd.f32 %v1186, %v1410
        %v1412 = vpop.f32.mrb[0].mxu0
        %v1413 = vpop.f32.mrb[0].mxu0
        %v1414 = vadd.f32 %v1189, %v1413
        %v1415 = vpop.f32.mrb[0].mxu0
        %1416 = vmatprep.mubr.bf16.mxu0 0
        %1417 = vmatmul.mubr.bf16.gmra.mrb[0].mxu0 %v799
        %v1418 = vpop.f32.mrb[0].mxu0
        %v1419 = vadd.f32 %v1194, %v1418
        %v1420 = vpop.f32.mrb[0].mxu0
        %v1421 = vpop.f32.mrb[0].mxu0
        %v1422 = vadd.f32 %v1197, %v1421
        %v1423 = vpop.f32.mrb[0].mxu0
        %1424 = vmatprep.mubr.bf16.mxu0 0
        %1425 = vmatmul.mubr.bf16.gmra.mrb[0].mxu0 %v802
        %v1426 = vpop.f32.mrb[0].mxu0
        %v1427 = vadd.f32 %v1202, %v1426
        %v1428 = vpop.f32.mrb[0].mxu0
        %v1429 = vpop.f32.mrb[0].mxu0
        %v1430 = vadd.f32 %v1205, %v1429
        %v1431 = vpop.f32.mrb[0].mxu0
        %1432 = vmatprep.mubr.bf16.mxu0 0
        %1433 = vmatmul.mubr.bf16.gmra.mrb[0].mxu0 %v805
        %v1434 = vpop.f32.mrb[0].mxu0
        %v1435 = vadd.f32 %v1210, %v1434
        %v1436 = vpop.f32.mrb[0].mxu0
        %v1437 = vpop.f32.mrb[0].mxu0
        %v1438 = vadd.f32 %v1213, %v1437
        %v1439 = vpop.f32.mrb[0].mxu0
        %1440 = vmatprep.mubr.bf16.mxu0 0
        %1441 = vmatmul.mubr.bf16.gmra.mrb[0].mxu0 %v808
        %v1442 = vpop.f32.mrb[0].mxu0
        %v1443 = vadd.f32 %v1218, %v1442
        %v1444 = vpop.f32.mrb[0].mxu0
        %v1445 = vpop.f32.mrb[0].mxu0
        %v1446 = vadd.f32 %v1221, %v1445
        %v1447 = vpop.f32.mrb[0].mxu0
        %1448 = vmatprep.mubr.bf16.mxu0 0
        %1449 = vmatmul.mubr.bf16.gmra.mrb[0].mxu0 %v811
        %v1450 = vpop.f32.mrb[0].mxu0
        %v1451 = vadd.f32 %v1226, %v1450
        %v1452 = vpop.f32.mrb[0].mxu0
        %v1453 = vpop.f32.mrb[0].mxu0
        %v1454 = vadd.f32 %v1229, %v1453
        %v1455 = vpop.f32.mrb[0].mxu0
        %1456 = vmatprep.mubr.bf16.mxu0 0
        %1457 = vmatmul.mubr.bf16.gmra.mrb[0].mxu0 %v814
        %v1458 = vpop.f32.mrb[0].mxu0
        %v1459 = vadd.f32 %v1234, %v1458
        %v1460 = vpop.f32.mrb[0].mxu0
        %v1461 = vpop.f32.mrb[0].mxu0
        %v1462 = vadd.f32 %v1237, %v1461
        %v1463 = vpop.f32.mrb[0].mxu0
        %1464 = vmatprep.mubr.bf16.mxu0 0
        %1465 = vmatmul.mubr.bf16.gmra.mrb[0].mxu0 %v817
        %v1466 = vpop.f32.mrb[0].mxu0
        %v1467 = vadd.f32 %v1242, %v1466
        %v1468 = vpop.f32.mrb[0].mxu0
        %v1469 = vpop.f32.mrb[0].mxu0
        %v1470 = vadd.f32 %v1245, %v1469
        %v1471 = vpop.f32.mrb[0].mxu0
        %1472 = vmatprep.mubr.bf16.mxu0 0
        %1473 = vmatmul.mubr.bf16.gmra.mrb[0].mxu0 %v820
        %v1474 = vpop.f32.mrb[0].mxu0
        %v1475 = vadd.f32 %v1250, %v1474
        %v1476 = vpop.f32.mrb[0].mxu0
        %v1477 = vpop.f32.mrb[0].mxu0
        %v1478 = vadd.f32 %v1253, %v1477
        %v1479 = vpop.f32.mrb[0].mxu0
        %1480 = vmatprep.mubr.bf16.mxu0 0
        %1481 = vmatmul.mubr.bf16.gmra.mrb[0].mxu0 %v823
        %v1482 = vpop.f32.mrb[0].mxu0
        %v1483 = vadd.f32 %v1258, %v1482
        %v1484 = vpop.f32.mrb[0].mxu0
        %v1485 = vpop.f32.mrb[0].mxu0
        %v1486 = vadd.f32 %v1261, %v1485
        %v1487 = vpop.f32.mrb[0].mxu0
        %1488 = vmatprep.mubr.bf16.mxu0 0
        %1489 = vmatmul.mubr.bf16.gmra.mrb[0].mxu0 %v826
        %v1490 = vpop.f32.mrb[0].mxu0
        %v1491 = vadd.f32 %v1266, %v1490
        %v1492 = vpop.f32.mrb[0].mxu0
        %v1493 = vpop.f32.mrb[0].mxu0
        %v1494 = vadd.f32 %v1269, %v1493
        %v1495 = vpop.f32.mrb[0].mxu0
        %1496 = vmatprep.mubr.bf16.mxu0 0
        %1497 = vmatmul.mubr.bf16.gmra.mrb[0].mxu0 %v829
        %v1498 = vpop.f32.mrb[0].mxu0
        %v1499 = vadd.f32 %v1274, %v1498
        %v1500 = vpop.f32.mrb[0].mxu0
        %v1501 = vpop.f32.mrb[0].mxu0
        %v1502 = vadd.f32 %v1277, %v1501
        %v1503 = vpop.f32.mrb[0].mxu0
        %1504 = vmatprep.mubr.bf16.mxu0 0
        %1505 = vmatmul.mubr.bf16.gmra.mrb[0].mxu0 %v832
        %v1506 = vpop.f32.mrb[0].mxu0
        %v1507 = vadd.f32 %v1282, %v1506
        %v1508 = vpop.f32.mrb[0].mxu0
        %v1509 = vpop.f32.mrb[0].mxu0
        %v1510 = vadd.f32 %v1285, %v1509
        %v1511 = vpop.f32.mrb[0].mxu0
        %1512 = vmatprep.mubr.bf16.mxu0 0
        %1513 = vmatmul.mubr.bf16.gmra.mrb[0].mxu0 %v835
        %v1514 = vpop.f32.mrb[0].mxu0
        %v1515 = vadd.f32 %v1290, %v1514
        %v1516 = vpop.f32.mrb[0].mxu0
        %v1517 = vpop.f32.mrb[0].mxu0
        %v1518 = vadd.f32 %v1293, %v1517
        %v1519 = vpop.f32.mrb[0].mxu0
        %1520 = vmatprep.mubr.bf16.mxu0 0
        %1521 = vmatmul.mubr.bf16.gmra.mrb[0].mxu0 %v838
        %v1522 = vpop.f32.mrb[0].mxu0
        %v1523 = vadd.f32 %v1298, %v1522
        %v1524 = vpop.f32.mrb[0].mxu0
        %v1525 = vpop.f32.mrb[0].mxu0
        %v1526 = vadd.f32 %v1301, %v1525
        %v1527 = vpop.f32.mrb[0].mxu0
        %1528 = vdwg.mxu0
        %v1529 = vadd.f32 %v887, %v1339
        %v1530 = vadd.f32 %v888, %v1342
        %v1531 = vadd.f32 %v889, %v1347
        %v1532 = vadd.f32 %v890, %v1350
        %v1533 = vadd.f32 %v891, %v1355
        %v1534 = vadd.f32 %v892, %v1358
        %v1535 = vadd.f32 %v893, %v1363
        %v1536 = vadd.f32 %v894, %v1366
        %v1537 = vadd.f32 %v895, %v1371
        %v1538 = vadd.f32 %v896, %v1374
        %v1539 = vadd.f32 %v897, %v1379
        %v1540 = vadd.f32 %v898, %v1382
        %v1541 = vadd.f32 %v899, %v1387
        %v1542 = vadd.f32 %v900, %v1390
        %v1543 = vadd.f32 %v901, %v1395
        %v1544 = vadd.f32 %v902, %v1398
        %v1545 = vadd.f32 %v903, %v1403
        %v1546 = vadd.f32 %v904, %v1406
        %v1547 = vadd.f32 %v905, %v1411
        %v1548 = vadd.f32 %v906, %v1414
        %v1549 = vadd.f32 %v907, %v1419
        %v1550 = vadd.f32 %v908, %v1422
        %v1551 = vadd.f32 %v909, %v1427
        %v1552 = vadd.f32 %v910, %v1430
        %v1553 = vadd.f32 %v911, %v1435
        %v1554 = vadd.f32 %v912, %v1438
        %v1555 = vadd.f32 %v913, %v1443
        %v1556 = vadd.f32 %v914, %v1446
        %v1557 = vadd.f32 %v915, %v1451
        %v1558 = vadd.f32 %v916, %v1454
        %v1559 = vadd.f32 %v917, %v1459
        %v1560 = vadd.f32 %v918, %v1462
        %v1561 = vadd.f32 %v919, %v1467
        %v1562 = vadd.f32 %v920, %v1470
        %v1563 = vadd.f32 %v921, %v1475
        %v1564 = vadd.f32 %v922, %v1478
        %v1565 = vadd.f32 %v923, %v1483
        %v1566 = vadd.f32 %v924, %v1486
        %v1567 = vadd.f32 %v925, %v1491
        %v1568 = vadd.f32 %v926, %v1494
        %v1569 = vadd.f32 %v927, %v1499
        %v1570 = vadd.f32 %v928, %v1502
        %v1571 = vadd.f32 %v929, %v1507
        %v1572 = vadd.f32 %v930, %v1510
        %v1573 = vadd.f32 %v931, %v1515
        %v1574 = vadd.f32 %v932, %v1518
        %v1575 = vadd.f32 %v933, %v1523
        %v1576 = vadd.f32 %v934, %v1526
        %vm1577 = vcmask 523264
        %1578 = vst.msk [vmem:[#allocation2] sm:$0xff] %vm1577, %v1529
        %1579 = vst.msk [vmem:[#allocation2 + $0x8] sm:$0xff] %vm1577, %v1530
        %1580 = vst.msk [vmem:[#allocation2 + $0x10] sm:$0xff] %vm1577, %v1531
        %1581 = vst.msk [vmem:[#allocation2 + $0x18] sm:$0xff] %vm1577, %v1532
        %1582 = vst.msk [vmem:[#allocation2 + $0x20] sm:$0xff] %vm1577, %v1533
        %1583 = vst.msk [vmem:[#allocation2 + $0x28] sm:$0xff] %vm1577, %v1534
        %1584 = vst.msk [vmem:[#allocation2 + $0x30] sm:$0xff] %vm1577, %v1535
        %1585 = vst.msk [vmem:[#allocation2 + $0x38] sm:$0xff] %vm1577, %v1536
        %1586 = vst.msk [vmem:[#allocation2 + $0x40] sm:$0xff] %vm1577, %v1537
        %1587 = vst.msk [vmem:[#allocation2 + $0x48] sm:$0xff] %vm1577, %v1538
        %1588 = vst.msk [vmem:[#allocation2 + $0x50] sm:$0xff] %vm1577, %v1539
        %1589 = vst.msk [vmem:[#allocation2 + $0x58] sm:$0xff] %vm1577, %v1540
        %1590 = vst.msk [vmem:[#allocation2 + $0x60] sm:$0xff] %vm1577, %v1541
        %1591 = vst.msk [vmem:[#allocation2 + $0x68] sm:$0xff] %vm1577, %v1542
        %1592 = vst.msk [vmem:[#allocation2 + $0x70] sm:$0xff] %vm1577, %v1543
        %1593 = vst.msk [vmem:[#allocation2 + $0x78] sm:$0xff] %vm1577, %v1544
        %1594 = vst.msk [vmem:[#allocation2 + $0x80] sm:$0xff] %vm1577, %v1545
        %1595 = vst.msk [vmem:[#allocation2 + $0x88] sm:$0xff] %vm1577, %v1546
        %1596 = vst.msk [vmem:[#allocation2 + $0x90] sm:$0xff] %vm1577, %v1547
        %1597 = vst.msk [vmem:[#allocation2 + $0x98] sm:$0xff] %vm1577, %v1548
        %1598 = vst.msk [vmem:[#allocation2 + $0xa0] sm:$0xff] %vm1577, %v1549
        %1599 = vst.msk [vmem:[#allocation2 + $0xa8] sm:$0xff] %vm1577, %v1550
        %1600 = vst.msk [vmem:[#allocation2 + $0xb0] sm:$0xff] %vm1577, %v1551
        %1601 = vst.msk [vmem:[#allocation2 + $0xb8] sm:$0xff] %vm1577, %v1552
        %1602 = vst.msk [vmem:[#allocation2 + $0xc0] sm:$0xff] %vm1577, %v1553
        %1603 = vst.msk [vmem:[#allocation2 + $0xc8] sm:$0xff] %vm1577, %v1554
        %1604 = vst.msk [vmem:[#allocation2 + $0xd0] sm:$0xff] %vm1577, %v1555
        %1605 = vst.msk [vmem:[#allocation2 + $0xd8] sm:$0xff] %vm1577, %v1556
        %1606 = vst.msk [vmem:[#allocation2 + $0xe0] sm:$0xff] %vm1577, %v1557
        %1607 = vst.msk [vmem:[#allocation2 + $0xe8] sm:$0xff] %vm1577, %v1558
        %1608 = vst.msk [vmem:[#allocation2 + $0xf0] sm:$0xff] %vm1577, %v1559
        %1609 = vst.msk [vmem:[#allocation2 + $0xf8] sm:$0xff] %vm1577, %v1560
        %1610 = vst.msk [vmem:[#allocation2 + $0x100] sm:$0xff] %vm1577, %v1561
        %1611 = vst.msk [vmem:[#allocation2 + $0x108] sm:$0xff] %vm1577, %v1562
        %1612 = vst.msk [vmem:[#allocation2 + $0x110] sm:$0xff] %vm1577, %v1563
        %1613 = vst.msk [vmem:[#allocation2 + $0x118] sm:$0xff] %vm1577, %v1564
        %1614 = vst.msk [vmem:[#allocation2 + $0x120] sm:$0xff] %vm1577, %v1565
        %1615 = vst.msk [vmem:[#allocation2 + $0x128] sm:$0xff] %vm1577, %v1566
        %1616 = vst.msk [vmem:[#allocation2 + $0x130] sm:$0xff] %vm1577, %v1567
        %1617 = vst.msk [vmem:[#allocation2 + $0x138] sm:$0xff] %vm1577, %v1568
        %1618 = vst.msk [vmem:[#allocation2 + $0x140] sm:$0xff] %vm1577, %v1569
        %1619 = vst.msk [vmem:[#allocation2 + $0x148] sm:$0xff] %vm1577, %v1570
        %1620 = vst.msk [vmem:[#allocation2 + $0x150] sm:$0xff] %vm1577, %v1571
        %1621 = vst.msk [vmem:[#allocation2 + $0x158] sm:$0xff] %vm1577, %v1572
        %1622 = vst.msk [vmem:[#allocation2 + $0x160] sm:$0xff] %vm1577, %v1573
        %1623 = vst.msk [vmem:[#allocation2 + $0x168] sm:$0xff] %vm1577, %v1574
        %1624 = vst.msk [vmem:[#allocation2 + $0x170] sm:$0xff] %vm1577, %v1575
        %1625 = vst.msk [vmem:[#allocation2 + $0x178] sm:$0xff] %vm1577, %v1576
        // Predicated region
        $region114: #{botrgcn_forward.4} parent=100 // pred_check
          %p1626 = pneg %p678
        $region115: #{botrgcn_forward.4} parent=100 // pred_check_branch
          %1628 = sbr.rel (%p1626) target = $region117
        $region116: #{botrgcn_forward.4} parent=100 // pred_region
          %v1629 = vld [vmem:[%s660] sm:$0xf]
          %v1630 = vld [vmem:[%s660 + $0x4] sm:$0xf]
          %v1631 = vld [vmem:[%s660 + $0x8] sm:$0xf]
          %v1632 = vld [vmem:[%s660 + $0xc] sm:$0xf]
          %v1633 = vld [vmem:[%s660 + $0x10] sm:$0xf]
          %v1634 = vld [vmem:[%s660 + $0x14] sm:$0xf]
          %v1635 = vld [vmem:[%s660 + $0x18] sm:$0xf]
          %v1636 = vld [vmem:[%s660 + $0x1c] sm:$0xf]
          %v1637 = vld [vmem:[%s660 + $0x20] sm:$0xf]
          %v1638 = vld [vmem:[%s660 + $0x24] sm:$0xf]
          %v1639 = vld [vmem:[%s660 + $0x28] sm:$0xf]
          %v1640 = vld [vmem:[%s660 + $0x2c] sm:$0xf]
          %v1641 = vld [vmem:[%s660 + $0x30] sm:$0xf]
          %v1642 = vld [vmem:[%s660 + $0x34] sm:$0xf]
          %v1643 = vld [vmem:[%s660 + $0x38] sm:$0xf]
          %v1644 = vld [vmem:[%s660 + $0x3c] sm:$0xf]
          %v1645 = vld [vmem:[%s660 + $0x40] sm:$0xf]
          %v1646 = vld [vmem:[%s660 + $0x44] sm:$0xf]
          %v1647 = vld [vmem:[%s660 + $0x48] sm:$0xf]
          %v1648 = vld [vmem:[%s660 + $0x4c] sm:$0xf]
          %v1649 = vld [vmem:[%s660 + $0x50] sm:$0xf]
          %v1650 = vld [vmem:[%s660 + $0x54] sm:$0xf]
          %v1651 = vld [vmem:[%s660 + $0x58] sm:$0xf]
          %v1652 = vld [vmem:[%s660 + $0x5c] sm:$0xf]
          %v1653 = vld [vmem:[%s4] sm:$0xf]
          %v1654 = vld [vmem:[%s4 + $0x4] sm:$0xf]
          %v1655 = vld [vmem:[%s4 + $0x8] sm:$0xf]
          %v1656 = vld [vmem:[%s4 + $0xc] sm:$0xf]
          %v1657 = vld [vmem:[%s4 + $0x10] sm:$0xf]
          %v1658 = vld [vmem:[%s4 + $0x14] sm:$0xf]
          %v1659 = vld [vmem:[%s4 + $0x18] sm:$0xf]
          %v1660 = vld [vmem:[%s4 + $0x1c] sm:$0xf]
          %v1661 = vld [vmem:[#allocation2] sm:$0xff]
          %v1662 = vld [vmem:[#allocation2 + $0x8] sm:$0xff]
          %v1663 = vld [vmem:[#allocation2 + $0x10] sm:$0xff]
          %v1664 = vld [vmem:[#allocation2 + $0x18] sm:$0xff]
          %v1665 = vld [vmem:[#allocation2 + $0x20] sm:$0xff]
          %v1666 = vld [vmem:[#allocation2 + $0x28] sm:$0xff]
          %v1667 = vld [vmem:[#allocation2 + $0x30] sm:$0xff]
          %v1668 = vld [vmem:[#allocation2 + $0x38] sm:$0xff]
          %v1669 = vld [vmem:[#allocation2 + $0x40] sm:$0xff]
          %v1670 = vld [vmem:[#allocation2 + $0x48] sm:$0xff]
          %v1671 = vld [vmem:[#allocation2 + $0x50] sm:$0xff]
          %v1672 = vld [vmem:[#allocation2 + $0x58] sm:$0xff]
          %v1673 = vld [vmem:[#allocation2 + $0x60] sm:$0xff]
          %v1674 = vld [vmem:[#allocation2 + $0x68] sm:$0xff]
          %v1675 = vld [vmem:[#allocation2 + $0x70] sm:$0xff]
          %v1676 = vld [vmem:[#allocation2 + $0x78] sm:$0xff]
          %v1677 = vld [vmem:[#allocation2 + $0x80] sm:$0xff]
          %v1678 = vld [vmem:[#allocation2 + $0x88] sm:$0xff]
          %v1679 = vld [vmem:[#allocation2 + $0x90] sm:$0xff]
          %v1680 = vld [vmem:[#allocation2 + $0x98] sm:$0xff]
          %v1681 = vld [vmem:[#allocation2 + $0xa0] sm:$0xff]
          %v1682 = vld [vmem:[#allocation2 + $0xa8] sm:$0xff]
          %v1683 = vld [vmem:[#allocation2 + $0xb0] sm:$0xff]
          %v1684 = vld [vmem:[#allocation2 + $0xb8] sm:$0xff]
          %v1685 = vld [vmem:[%s613] sm:$0xff]
          %v1686 = vld [vmem:[%s613 + $0x8] sm:$0xff]
          %v1687 = vld [vmem:[%s613 + $0x10] sm:$0xff]
          %v1688 = vld [vmem:[%s613 + $0x18] sm:$0xff]
          %v1689 = vld [vmem:[%s613 + $0x20] sm:$0xff]
          %v1690 = vld [vmem:[%s613 + $0x28] sm:$0xff]
          %v1691 = vld [vmem:[%s613 + $0x30] sm:$0xff]
          %v1692 = vld [vmem:[%s613 + $0x38] sm:$0xff]
          %v1693 = vld [vmem:[%s613 + $0x40] sm:$0xff]
          %v1694 = vld [vmem:[%s613 + $0x48] sm:$0xff]
          %v1695 = vld [vmem:[%s613 + $0x50] sm:$0xff]
          %v1696 = vld [vmem:[%s613 + $0x58] sm:$0xff]
          %v1697 = vld [vmem:[%s613 + $0x60] sm:$0xff]
          %v1698 = vld [vmem:[%s613 + $0x68] sm:$0xff]
          %v1699 = vld [vmem:[%s613 + $0x70] sm:$0xff]
          %v1700 = vld [vmem:[%s613 + $0x78] sm:$0xff]
          %v1701 = vld [vmem:[%s613 + $0x80] sm:$0xff]
          %v1702 = vld [vmem:[%s613 + $0x88] sm:$0xff]
          %v1703 = vld [vmem:[%s613 + $0x90] sm:$0xff]
          %v1704 = vld [vmem:[%s613 + $0x98] sm:$0xff]
          %v1705 = vld [vmem:[%s613 + $0xa0] sm:$0xff]
          %v1706 = vld [vmem:[%s613 + $0xa8] sm:$0xff]
          %v1707 = vld [vmem:[%s613 + $0xb0] sm:$0xff]
          %v1708 = vld [vmem:[%s613 + $0xb8] sm:$0xff]
          %1710 = vset.pattern.permute.xlu0 0
          %1711 = vperm.xlu0 %1710, %v1685
          %v1712 = vpop.permute.xlu0 %1711
          %1715 = vset.pattern.permute.xlu0 0
          %1716 = vperm.xlu0 %1715, %v1686
          %v1717 = vpop.permute.xlu0 %1716
          %1720 = vset.pattern.permute.xlu0 0
          %1721 = vperm.xlu0 %1720, %v1687
          %v1722 = vpop.permute.xlu0 %1721
          %1725 = vset.pattern.permute.xlu0 0
          %1726 = vperm.xlu0 %1725, %v1688
          %v1727 = vpop.permute.xlu0 %1726
          %1730 = vset.pattern.permute.xlu0 0
          %1731 = vperm.xlu0 %1730, %v1689
          %v1732 = vpop.permute.xlu0 %1731
          %1735 = vset.pattern.permute.xlu0 0
          %1736 = vperm.xlu0 %1735, %v1690
          %v1737 = vpop.permute.xlu0 %1736
          %1740 = vset.pattern.permute.xlu0 0
          %1741 = vperm.xlu0 %1740, %v1691
          %v1742 = vpop.permute.xlu0 %1741
          %1745 = vset.pattern.permute.xlu0 0
          %1746 = vperm.xlu0 %1745, %v1692
          %v1747 = vpop.permute.xlu0 %1746
          %1750 = vset.pattern.permute.xlu0 0
          %1751 = vperm.xlu0 %1750, %v1693
          %v1752 = vpop.permute.xlu0 %1751
          %1755 = vset.pattern.permute.xlu0 0
          %1756 = vperm.xlu0 %1755, %v1694
          %v1757 = vpop.permute.xlu0 %1756
          %1760 = vset.pattern.permute.xlu0 0
          %1761 = vperm.xlu0 %1760, %v1695
          %v1762 = vpop.permute.xlu0 %1761
          %1765 = vset.pattern.permute.xlu0 0
          %1766 = vperm.xlu0 %1765, %v1696
          %v1767 = vpop.permute.xlu0 %1766
          %1770 = vset.pattern.permute.xlu0 0
          %1771 = vperm.xlu0 %1770, %v1697
          %v1772 = vpop.permute.xlu0 %1771
          %1775 = vset.pattern.permute.xlu0 0
          %1776 = vperm.xlu0 %1775, %v1698
          %v1777 = vpop.permute.xlu0 %1776
          %1780 = vset.pattern.permute.xlu0 0
          %1781 = vperm.xlu0 %1780, %v1699
          %v1782 = vpop.permute.xlu0 %1781
          %1785 = vset.pattern.permute.xlu0 0
          %1786 = vperm.xlu0 %1785, %v1700
          %v1787 = vpop.permute.xlu0 %1786
          %1790 = vset.pattern.permute.xlu0 0
          %1791 = vperm.xlu0 %1790, %v1701
          %v1792 = vpop.permute.xlu0 %1791
          %1795 = vset.pattern.permute.xlu0 0
          %1796 = vperm.xlu0 %1795, %v1702
          %v1797 = vpop.permute.xlu0 %1796
          %1800 = vset.pattern.permute.xlu0 0
          %1801 = vperm.xlu0 %1800, %v1703
          %v1802 = vpop.permute.xlu0 %1801
          %1805 = vset.pattern.permute.xlu0 0
          %1806 = vperm.xlu0 %1805, %v1704
          %v1807 = vpop.permute.xlu0 %1806
          %1810 = vset.pattern.permute.xlu0 0
          %1811 = vperm.xlu0 %1810, %v1705
          %v1812 = vpop.permute.xlu0 %1811
          %1815 = vset.pattern.permute.xlu0 0
          %1816 = vperm.xlu0 %1815, %v1706
          %v1817 = vpop.permute.xlu0 %1816
          %1820 = vset.pattern.permute.xlu0 0
          %1821 = vperm.xlu0 %1820, %v1707
          %v1822 = vpop.permute.xlu0 %1821
          %1825 = vset.pattern.permute.xlu0 0
          %1826 = vperm.xlu0 %1825, %v1708
          %v1827 = vpop.permute.xlu0 %1826
          %v1829 = vmul.f32 %v1661, %v1712
          %v1830 = vmul.f32 %v1662, %v1717
          %v1831 = vmul.f32 %v1663, %v1722
          %v1832 = vmul.f32 %v1664, %v1727
          %v1833 = vmul.f32 %v1665, %v1732
          %v1834 = vmul.f32 %v1666, %v1737
          %v1835 = vmul.f32 %v1667, %v1742
          %v1836 = vmul.f32 %v1668, %v1747
          %v1837 = vmul.f32 %v1669, %v1752
          %v1838 = vmul.f32 %v1670, %v1757
          %v1839 = vmul.f32 %v1671, %v1762
          %v1840 = vmul.f32 %v1672, %v1767
          %v1841 = vmul.f32 %v1673, %v1772
          %v1842 = vmul.f32 %v1674, %v1777
          %v1843 = vmul.f32 %v1675, %v1782
          %v1844 = vmul.f32 %v1676, %v1787
          %v1845 = vmul.f32 %v1677, %v1792
          %v1846 = vmul.f32 %v1678, %v1797
          %v1847 = vmul.f32 %v1679, %v1802
          %v1848 = vmul.f32 %v1680, %v1807
          %v1849 = vmul.f32 %v1681, %v1812
          %v1850 = vmul.f32 %v1682, %v1817
          %v1851 = vmul.f32 %v1683, %v1822
          %v1852 = vmul.f32 %v1684, %v1827
          %v1853 = vpack.c.bf16 %v1830, %v1829
          %v1854 = vpack.c.bf16 %v1832, %v1831
          %v1855 = vpack.c.bf16 %v1834, %v1833
          %v1856 = vpack.c.bf16 %v1836, %v1835
          %v1857 = vpack.c.bf16 %v1838, %v1837
          %v1858 = vpack.c.bf16 %v1840, %v1839
          %v1859 = vpack.c.bf16 %v1842, %v1841
          %v1860 = vpack.c.bf16 %v1844, %v1843
          %v1861 = vpack.c.bf16 %v1846, %v1845
          %v1862 = vpack.c.bf16 %v1848, %v1847
          %v1863 = vpack.c.bf16 %v1850, %v1849
          %v1864 = vpack.c.bf16 %v1852, %v1851
          %v1865 = vld [vmem:[%s5] sm:$0xf]
          %v1866 = vld [vmem:[%s5 + $0x4] sm:$0xf]
          %v1867 = vld [vmem:[%s5 + $0x8] sm:$0xf]
          %v1868 = vld [vmem:[%s5 + $0xc] sm:$0xf]
          %v1869 = vld [vmem:[%s5 + $0x10] sm:$0xf]
          %v1870 = vld [vmem:[%s5 + $0x14] sm:$0xf]
          %v1871 = vld [vmem:[%s5 + $0x18] sm:$0xf]
          %v1872 = vld [vmem:[%s5 + $0x1c] sm:$0xf]
          %v1881 = vunpack.c.l.b16 %v1865
          %v1882 = vunpack.c.l.b16 %v1866
          %v1883 = vunpack.c.l.b16 %v1867
          %v1884 = vunpack.c.l.b16 %v1868
          %v1885 = vunpack.c.l.b16 %v1869
          %v1886 = vunpack.c.l.b16 %v1870
          %v1887 = vunpack.c.l.b16 %v1871
          %v1888 = vunpack.c.l.b16 %v1872
          %v1889 = vpack.c.b16 %v1882, %v1881
          %v1890 = vpack.c.b16 %v1884, %v1883
          %v1891 = vpack.c.b16 %v1886, %v1885
          %v1892 = vpack.c.b16 %v1888, %v1887
          %v1898 = vsel %vm1577, %v1853, 0
          %v1901 = vsel %vm1577, %v1854, 0
          %v1904 = vsel %vm1577, %v1855, 0
          %v1907 = vsel %vm1577, %v1856, 0
          %v1910 = vsel %vm1577, %v1857, 0
          %v1913 = vsel %vm1577, %v1858, 0
          %v1916 = vsel %vm1577, %v1859, 0
          %v1919 = vsel %vm1577, %v1860, 0
          %v1922 = vsel %vm1577, %v1861, 0
          %v1925 = vsel %vm1577, %v1862, 0
          %v1928 = vsel %vm1577, %v1863, 0
          %v1931 = vsel %vm1577, %v1864, 0
          %1933 = vmatprep.subr.bf16.mxu0 0
          %1934 = vmatpush1.bf16.msra.mxu0 %v1889
          %1935 = vmatprep.subr.bf16.mxu0 0
          %1936 = vmatpush1.bf16.msra.mxu0 %v1890
          %1937 = vmatprep.subr.bf16.mxu0 0
          %1938 = vmatpush1.bf16.msra.mxu0 %v1891
          %1939 = vmatprep.subr.bf16.mxu0 0
          %1940 = vmatpush1.bf16.msra.mxu0 %v1892
          %1941 = vmatprep.subr.bf16.mxu0 0
          %1942 = vmatpush1.bf16.msra.mxu0 0
          %1943 = vmatprep.subr.bf16.mxu0 0
          %1944 = vmatpush1.bf16.msra.mxu0 0
          %1945 = vmatprep.subr.bf16.mxu0 0
          %1946 = vmatpush1.bf16.msra.mxu0 0
          %1947 = vmatprep.subr.bf16.mxu0 0
          %1948 = vmatpush1.bf16.msra.mxu0 0
          %1949 = vmatprep.subr.bf16.mxu0 0
          %1950 = vmatpush1.bf16.msra.mxu0 0
          %1951 = vmatprep.subr.bf16.mxu0 0
          %1952 = vmatpush1.bf16.msra.mxu0 0
          %1953 = vmatprep.subr.bf16.mxu0 0
          %1954 = vmatpush1.bf16.msra.mxu0 0
          %1955 = vmatprep.subr.bf16.mxu0 0
          %1956 = vmatpush1.bf16.msra.mxu0 0
          %1957 = vmatprep.subr.bf16.mxu0 0
          %1958 = vmatpush1.bf16.msra.mxu0 0
          %1959 = vmatprep.subr.bf16.mxu0 0
          %1960 = vmatpush1.bf16.msra.mxu0 0
          %1961 = vmatprep.subr.bf16.mxu0 0
          %1962 = vmatpush1.bf16.msra.mxu0 0
          %1963 = vmatprep.subr.bf16.mxu0 0
          %1964 = vmatpush1.bf16.msra.mxu0 0
          %1965 = vmatprep.mubr.bf16.mxu0 0
          %1966 = vmatmul.mubr.bf16.gmra.mrb[0].mxu0 %v1898
          %v1967 = vpop.f32.mrb[0].mxu0
          %v1968 = vadd.f32 0.0, %v1967
          %v1969 = vpop.f32.mrb[0].mxu0
          %v1970 = vpop.f32.mrb[0].mxu0
          %v1971 = vadd.f32 0.0, %v1970
          %v1972 = vpop.f32.mrb[0].mxu0
          %1973 = vmatprep.mubr.bf16.mxu0 0
          %1974 = vmatmul.mubr.bf16.gmra.mrb[0].mxu0 %v1901
          %v1975 = vpop.f32.mrb[0].mxu0
          %v1976 = vadd.f32 0.0, %v1975
          %v1977 = vpop.f32.mrb[0].mxu0
          %v1978 = vpop.f32.mrb[0].mxu0
          %v1979 = vadd.f32 0.0, %v1978
          %v1980 = vpop.f32.mrb[0].mxu0
          %1981 = vmatprep.mubr.bf16.mxu0 0
          %1982 = vmatmul.mubr.bf16.gmra.mrb[0].mxu0 %v1904
          %v1983 = vpop.f32.mrb[0].mxu0
          %v1984 = vadd.f32 0.0, %v1983
          %v1985 = vpop.f32.mrb[0].mxu0
          %v1986 = vpop.f32.mrb[0].mxu0
          %v1987 = vadd.f32 0.0, %v1986
          %v1988 = vpop.f32.mrb[0].mxu0
          %1989 = vmatprep.mubr.bf16.mxu0 0
          %1990 = vmatmul.mubr.bf16.gmra.mrb[0].mxu0 %v1907
          %v1991 = vpop.f32.mrb[0].mxu0
          %v1992 = vadd.f32 0.0, %v1991
          %v1993 = vpop.f32.mrb[0].mxu0
          %v1994 = vpop.f32.mrb[0].mxu0
          %v1995 = vadd.f32 0.0, %v1994
          %v1996 = vpop.f32.mrb[0].mxu0
          %1997 = vmatprep.mubr.bf16.mxu0 0
          %1998 = vmatmul.mubr.bf16.gmra.mrb[0].mxu0 %v1910
          %v1999 = vpop.f32.mrb[0].mxu0
          %v2000 = vadd.f32 0.0, %v1999
          %v2001 = vpop.f32.mrb[0].mxu0
          %v2002 = vpop.f32.mrb[0].mxu0
          %v2003 = vadd.f32 0.0, %v2002
          %v2004 = vpop.f32.mrb[0].mxu0
          %2005 = vmatprep.mubr.bf16.mxu0 0
          %2006 = vmatmul.mubr.bf16.gmra.mrb[0].mxu0 %v1913
          %v2007 = vpop.f32.mrb[0].mxu0
          %v2008 = vadd.f32 0.0, %v2007
          %v2009 = vpop.f32.mrb[0].mxu0
          %v2010 = vpop.f32.mrb[0].mxu0
          %v2011 = vadd.f32 0.0, %v2010
          %v2012 = vpop.f32.mrb[0].mxu0
          %2013 = vmatprep.mubr.bf16.mxu0 0
          %2014 = vmatmul.mubr.bf16.gmra.mrb[0].mxu0 %v1916
          %v2015 = vpop.f32.mrb[0].mxu0
          %v2016 = vadd.f32 0.0, %v2015
          %v2017 = vpop.f32.mrb[0].mxu0
          %v2018 = vpop.f32.mrb[0].mxu0
          %v2019 = vadd.f32 0.0, %v2018
          %v2020 = vpop.f32.mrb[0].mxu0
          %2021 = vmatprep.mubr.bf16.mxu0 0
          %2022 = vmatmul.mubr.bf16.gmra.mrb[0].mxu0 %v1919
          %v2023 = vpop.f32.mrb[0].mxu0
          %v2024 = vadd.f32 0.0, %v2023
          %v2025 = vpop.f32.mrb[0].mxu0
          %v2026 = vpop.f32.mrb[0].mxu0
          %v2027 = vadd.f32 0.0, %v2026
          %v2028 = vpop.f32.mrb[0].mxu0
          %2029 = vmatprep.mubr.bf16.mxu0 0
          %2030 = vmatmul.mubr.bf16.gmra.mrb[0].mxu0 %v1922
          %v2031 = vpop.f32.mrb[0].mxu0
          %v2032 = vadd.f32 0.0, %v2031
          %v2033 = vpop.f32.mrb[0].mxu0
          %v2034 = vpop.f32.mrb[0].mxu0
          %v2035 = vadd.f32 0.0, %v2034
          %v2036 = vpop.f32.mrb[0].mxu0
          %2037 = vmatprep.mubr.bf16.mxu0 0
          %2038 = vmatmul.mubr.bf16.gmra.mrb[0].mxu0 %v1925
          %v2039 = vpop.f32.mrb[0].mxu0
          %v2040 = vadd.f32 0.0, %v2039
          %v2041 = vpop.f32.mrb[0].mxu0
          %v2042 = vpop.f32.mrb[0].mxu0
          %v2043 = vadd.f32 0.0, %v2042
          %v2044 = vpop.f32.mrb[0].mxu0
          %2045 = vmatprep.mubr.bf16.mxu0 0
          %2046 = vmatmul.mubr.bf16.gmra.mrb[0].mxu0 %v1928
          %v2047 = vpop.f32.mrb[0].mxu0
          %v2048 = vadd.f32 0.0, %v2047
          %v2049 = vpop.f32.mrb[0].mxu0
          %v2050 = vpop.f32.mrb[0].mxu0
          %v2051 = vadd.f32 0.0, %v2050
          %v2052 = vpop.f32.mrb[0].mxu0
          %2053 = vmatprep.mubr.bf16.mxu0 0
          %2054 = vmatmul.mubr.bf16.gmra.mrb[0].mxu0 %v1931
          %v2055 = vpop.f32.mrb[0].mxu0
          %v2056 = vadd.f32 0.0, %v2055
          %v2057 = vpop.f32.mrb[0].mxu0
          %v2058 = vpop.f32.mrb[0].mxu0
          %v2059 = vadd.f32 0.0, %v2058
          %v2060 = vpop.f32.mrb[0].mxu0
          %2061 = vdwg.mxu0
          %v2086 = vunpack.c.l.b16 %v1629
          %v2087 = vunpack.c.l.b16 %v1630
          %v2088 = vunpack.c.l.b16 %v1631
          %v2089 = vunpack.c.l.b16 %v1632
          %v2090 = vunpack.c.l.b16 %v1633
          %v2091 = vunpack.c.l.b16 %v1634
          %v2092 = vunpack.c.l.b16 %v1635
          %v2093 = vunpack.c.l.b16 %v1636
          %v2094 = vunpack.c.l.b16 %v1637
          %v2095 = vunpack.c.l.b16 %v1638
          %v2096 = vunpack.c.l.b16 %v1639
          %v2097 = vunpack.c.l.b16 %v1640
          %v2098 = vunpack.c.l.b16 %v1641
          %v2099 = vunpack.c.l.b16 %v1642
          %v2100 = vunpack.c.l.b16 %v1643
          %v2101 = vunpack.c.l.b16 %v1644
          %v2102 = vunpack.c.l.b16 %v1645
          %v2103 = vunpack.c.l.b16 %v1646
          %v2104 = vunpack.c.l.b16 %v1647
          %v2105 = vunpack.c.l.b16 %v1648
          %v2106 = vunpack.c.l.b16 %v1649
          %v2107 = vunpack.c.l.b16 %v1650
          %v2108 = vunpack.c.l.b16 %v1651
          %v2109 = vunpack.c.l.b16 %v1652
          %v2110 = vpack.c.b16 %v2087, %v2086
          %v2111 = vpack.c.b16 %v2089, %v2088
          %v2112 = vpack.c.b16 %v2091, %v2090
          %v2113 = vpack.c.b16 %v2093, %v2092
          %v2114 = vpack.c.b16 %v2095, %v2094
          %v2115 = vpack.c.b16 %v2097, %v2096
          %v2116 = vpack.c.b16 %v2099, %v2098
          %v2117 = vpack.c.b16 %v2101, %v2100
          %v2118 = vpack.c.b16 %v2103, %v2102
          %v2119 = vpack.c.b16 %v2105, %v2104
          %v2120 = vpack.c.b16 %v2107, %v2106
          %v2121 = vpack.c.b16 %v2109, %v2108
          %v2130 = vunpack.c.l.b16 %v1653
          %v2131 = vunpack.c.l.b16 %v1654
          %v2132 = vunpack.c.l.b16 %v1655
          %v2133 = vunpack.c.l.b16 %v1656
          %v2134 = vunpack.c.l.b16 %v1657
          %v2135 = vunpack.c.l.b16 %v1658
          %v2136 = vunpack.c.l.b16 %v1659
          %v2137 = vunpack.c.l.b16 %v1660
          %v2138 = vpack.c.b16 %v2131, %v2130
          %v2139 = vpack.c.b16 %v2133, %v2132
          %v2140 = vpack.c.b16 %v2135, %v2134
          %v2141 = vpack.c.b16 %v2137, %v2136
          %v2147 = vsel %vm1577, %v2110, 0
          %v2150 = vsel %vm1577, %v2111, 0
          %v2153 = vsel %vm1577, %v2112, 0
          %v2156 = vsel %vm1577, %v2113, 0
          %v2159 = vsel %vm1577, %v2114, 0
          %v2162 = vsel %vm1577, %v2115, 0
          %v2165 = vsel %vm1577, %v2116, 0
          %v2168 = vsel %vm1577, %v2117, 0
          %v2171 = vsel %vm1577, %v2118, 0
          %v2174 = vsel %vm1577, %v2119, 0
          %v2177 = vsel %vm1577, %v2120, 0
          %v2180 = vsel %vm1577, %v2121, 0
          %2182 = vmatprep.subr.bf16.mxu0 0
          %2183 = vmatpush1.bf16.msra.mxu0 %v2138
          %2184 = vmatprep.subr.bf16.mxu0 0
          %2185 = vmatpush1.bf16.msra.mxu0 %v2139
          %2186 = vmatprep.subr.bf16.mxu0 0
          %2187 = vmatpush1.bf16.msra.mxu0 %v2140
          %2188 = vmatprep.subr.bf16.mxu0 0
          %2189 = vmatpush1.bf16.msra.mxu0 %v2141
          %2190 = vmatprep.subr.bf16.mxu0 0
          %2191 = vmatpush1.bf16.msra.mxu0 0
          %2192 = vmatprep.subr.bf16.mxu0 0
          %2193 = vmatpush1.bf16.msra.mxu0 0
          %2194 = vmatprep.subr.bf16.mxu0 0
          %2195 = vmatpush1.bf16.msra.mxu0 0
          %2196 = vmatprep.subr.bf16.mxu0 0
          %2197 = vmatpush1.bf16.msra.mxu0 0
          %2198 = vmatprep.subr.bf16.mxu0 0
          %2199 = vmatpush1.bf16.msra.mxu0 0
          %2200 = vmatprep.subr.bf16.mxu0 0
          %2201 = vmatpush1.bf16.msra.mxu0 0
          %2202 = vmatprep.subr.bf16.mxu0 0
          %2203 = vmatpush1.bf16.msra.mxu0 0
          %2204 = vmatprep.subr.bf16.mxu0 0
          %2205 = vmatpush1.bf16.msra.mxu0 0
          %2206 = vmatprep.subr.bf16.mxu0 0
          %2207 = vmatpush1.bf16.msra.mxu0 0
          %2208 = vmatprep.subr.bf16.mxu0 0
          %2209 = vmatpush1.bf16.msra.mxu0 0
          %2210 = vmatprep.subr.bf16.mxu0 0
          %2211 = vmatpush1.bf16.msra.mxu0 0
          %2212 = vmatprep.subr.bf16.mxu0 0
          %2213 = vmatpush1.bf16.msra.mxu0 0
          %2214 = vmatprep.mubr.bf16.mxu0 0
          %2215 = vmatmul.mubr.bf16.gmra.mrb[0].mxu0 %v2147
          %v2216 = vpop.f32.mrb[0].mxu0
          %v2217 = vadd.f32 %v1968, %v2216
          %v2218 = vpop.f32.mrb[0].mxu0
          %v2219 = vpop.f32.mrb[0].mxu0
          %v2220 = vadd.f32 %v1971, %v2219
          %v2221 = vpop.f32.mrb[0].mxu0
          %2222 = vmatprep.mubr.bf16.mxu0 0
          %2223 = vmatmul.mubr.bf16.gmra.mrb[0].mxu0 %v2150
          %v2224 = vpop.f32.mrb[0].mxu0
          %v2225 = vadd.f32 %v1976, %v2224
          %v2226 = vpop.f32.mrb[0].mxu0
          %v2227 = vpop.f32.mrb[0].mxu0
          %v2228 = vadd.f32 %v1979, %v2227
          %v2229 = vpop.f32.mrb[0].mxu0
          %2230 = vmatprep.mubr.bf16.mxu0 0
          %2231 = vmatmul.mubr.bf16.gmra.mrb[0].mxu0 %v2153
          %v2232 = vpop.f32.mrb[0].mxu0
          %v2233 = vadd.f32 %v1984, %v2232
          %v2234 = vpop.f32.mrb[0].mxu0
          %v2235 = vpop.f32.mrb[0].mxu0
          %v2236 = vadd.f32 %v1987, %v2235
          %v2237 = vpop.f32.mrb[0].mxu0
          %2238 = vmatprep.mubr.bf16.mxu0 0
          %2239 = vmatmul.mubr.bf16.gmra.mrb[0].mxu0 %v2156
          %v2240 = vpop.f32.mrb[0].mxu0
          %v2241 = vadd.f32 %v1992, %v2240
          %v2242 = vpop.f32.mrb[0].mxu0
          %v2243 = vpop.f32.mrb[0].mxu0
          %v2244 = vadd.f32 %v1995, %v2243
          %v2245 = vpop.f32.mrb[0].mxu0
          %2246 = vmatprep.mubr.bf16.mxu0 0
          %2247 = vmatmul.mubr.bf16.gmra.mrb[0].mxu0 %v2159
          %v2248 = vpop.f32.mrb[0].mxu0
          %v2249 = vadd.f32 %v2000, %v2248
          %v2250 = vpop.f32.mrb[0].mxu0
          %v2251 = vpop.f32.mrb[0].mxu0
          %v2252 = vadd.f32 %v2003, %v2251
          %v2253 = vpop.f32.mrb[0].mxu0
          %2254 = vmatprep.mubr.bf16.mxu0 0
          %2255 = vmatmul.mubr.bf16.gmra.mrb[0].mxu0 %v2162
          %v2256 = vpop.f32.mrb[0].mxu0
          %v2257 = vadd.f32 %v2008, %v2256
          %v2258 = vpop.f32.mrb[0].mxu0
          %v2259 = vpop.f32.mrb[0].mxu0
          %v2260 = vadd.f32 %v2011, %v2259
          %v2261 = vpop.f32.mrb[0].mxu0
          %2262 = vmatprep.mubr.bf16.mxu0 0
          %2263 = vmatmul.mubr.bf16.gmra.mrb[0].mxu0 %v2165
          %v2264 = vpop.f32.mrb[0].mxu0
          %v2265 = vadd.f32 %v2016, %v2264
          %v2266 = vpop.f32.mrb[0].mxu0
          %v2267 = vpop.f32.mrb[0].mxu0
          %v2268 = vadd.f32 %v2019, %v2267
          %v2269 = vpop.f32.mrb[0].mxu0
          %2270 = vmatprep.mubr.bf16.mxu0 0
          %2271 = vmatmul.mubr.bf16.gmra.mrb[0].mxu0 %v2168
          %v2272 = vpop.f32.mrb[0].mxu0
          %v2273 = vadd.f32 %v2024, %v2272
          %v2274 = vpop.f32.mrb[0].mxu0
          %v2275 = vpop.f32.mrb[0].mxu0
          %v2276 = vadd.f32 %v2027, %v2275
          %v2277 = vpop.f32.mrb[0].mxu0
          %2278 = vmatprep.mubr.bf16.mxu0 0
          %2279 = vmatmul.mubr.bf16.gmra.mrb[0].mxu0 %v2171
          %v2280 = vpop.f32.mrb[0].mxu0
          %v2281 = vadd.f32 %v2032, %v2280
          %v2282 = vpop.f32.mrb[0].mxu0
          %v2283 = vpop.f32.mrb[0].mxu0
          %v2284 = vadd.f32 %v2035, %v2283
          %v2285 = vpop.f32.mrb[0].mxu0
          %2286 = vmatprep.mubr.bf16.mxu0 0
          %2287 = vmatmul.mubr.bf16.gmra.mrb[0].mxu0 %v2174
          %v2288 = vpop.f32.mrb[0].mxu0
          %v2289 = vadd.f32 %v2040, %v2288
          %v2290 = vpop.f32.mrb[0].mxu0
          %v2291 = vpop.f32.mrb[0].mxu0
          %v2292 = vadd.f32 %v2043, %v2291
          %v2293 = vpop.f32.mrb[0].mxu0
          %2294 = vmatprep.mubr.bf16.mxu0 0
          %2295 = vmatmul.mubr.bf16.gmra.mrb[0].mxu0 %v2177
          %v2296 = vpop.f32.mrb[0].mxu0
          %v2297 = vadd.f32 %v2048, %v2296
          %v2298 = vpop.f32.mrb[0].mxu0
          %v2299 = vpop.f32.mrb[0].mxu0
          %v2300 = vadd.f32 %v2051, %v2299
          %v2301 = vpop.f32.mrb[0].mxu0
          %2302 = vmatprep.mubr.bf16.mxu0 0
          %2303 = vmatmul.mubr.bf16.gmra.mrb[0].mxu0 %v2180
          %v2304 = vpop.f32.mrb[0].mxu0
          %v2305 = vadd.f32 %v2056, %v2304
          %v2306 = vpop.f32.mrb[0].mxu0
          %v2307 = vpop.f32.mrb[0].mxu0
          %v2308 = vadd.f32 %v2059, %v2307
          %v2309 = vpop.f32.mrb[0].mxu0
          %2310 = vdwg.mxu0
          %v2311 = vld [vmem:[#allocation2 + $0xc0] sm:$0xff]
          %v2312 = vld [vmem:[#allocation2 + $0xc8] sm:$0xff]
          %v2313 = vld [vmem:[#allocation2 + $0xd0] sm:$0xff]
          %v2314 = vld [vmem:[#allocation2 + $0xd8] sm:$0xff]
          %v2315 = vld [vmem:[#allocation2 + $0xe0] sm:$0xff]
          %v2316 = vld [vmem:[#allocation2 + $0xe8] sm:$0xff]
          %v2317 = vld [vmem:[#allocation2 + $0xf0] sm:$0xff]
          %v2318 = vld [vmem:[#allocation2 + $0xf8] sm:$0xff]
          %v2319 = vld [vmem:[#allocation2 + $0x100] sm:$0xff]
          %v2320 = vld [vmem:[#allocation2 + $0x108] sm:$0xff]
          %v2321 = vld [vmem:[#allocation2 + $0x110] sm:$0xff]
          %v2322 = vld [vmem:[#allocation2 + $0x118] sm:$0xff]
          %v2323 = vld [vmem:[#allocation2 + $0x120] sm:$0xff]
          %v2324 = vld [vmem:[#allocation2 + $0x128] sm:$0xff]
          %v2325 = vld [vmem:[#allocation2 + $0x130] sm:$0xff]
          %v2326 = vld [vmem:[#allocation2 + $0x138] sm:$0xff]
          %v2327 = vld [vmem:[#allocation2 + $0x140] sm:$0xff]
          %v2328 = vld [vmem:[#allocation2 + $0x148] sm:$0xff]
          %v2329 = vld [vmem:[#allocation2 + $0x150] sm:$0xff]
          %v2330 = vld [vmem:[#allocation2 + $0x158] sm:$0xff]
          %v2331 = vld [vmem:[#allocation2 + $0x160] sm:$0xff]
          %v2332 = vld [vmem:[#allocation2 + $0x168] sm:$0xff]
          %v2333 = vld [vmem:[#allocation2 + $0x170] sm:$0xff]
          %v2334 = vld [vmem:[#allocation2 + $0x178] sm:$0xff]
          %s2335 = scalar_lea.vmem %s613, 192 [#allocation4]
          %v2336 = vld [vmem:[%s2335] sm:$0xff]
          %v2337 = vld [vmem:[%s2335 + $0x8] sm:$0xff]
          %v2338 = vld [vmem:[%s2335 + $0x10] sm:$0xff]
          %v2339 = vld [vmem:[%s2335 + $0x18] sm:$0xff]
          %v2340 = vld [vmem:[%s2335 + $0x20] sm:$0xff]
          %v2341 = vld [vmem:[%s2335 + $0x28] sm:$0xff]
          %v2342 = vld [vmem:[%s2335 + $0x30] sm:$0xff]
          %v2343 = vld [vmem:[%s2335 + $0x38] sm:$0xff]
          %v2344 = vld [vmem:[%s2335 + $0x40] sm:$0xff]
          %v2345 = vld [vmem:[%s2335 + $0x48] sm:$0xff]
          %v2346 = vld [vmem:[%s2335 + $0x50] sm:$0xff]
          %v2347 = vld [vmem:[%s2335 + $0x58] sm:$0xff]
          %v2348 = vld [vmem:[%s2335 + $0x60] sm:$0xff]
          %v2349 = vld [vmem:[%s2335 + $0x68] sm:$0xff]
          %v2350 = vld [vmem:[%s2335 + $0x70] sm:$0xff]
          %v2351 = vld [vmem:[%s2335 + $0x78] sm:$0xff]
          %v2352 = vld [vmem:[%s2335 + $0x80] sm:$0xff]
          %v2353 = vld [vmem:[%s2335 + $0x88] sm:$0xff]
          %v2354 = vld [vmem:[%s2335 + $0x90] sm:$0xff]
          %v2355 = vld [vmem:[%s2335 + $0x98] sm:$0xff]
          %v2356 = vld [vmem:[%s2335 + $0xa0] sm:$0xff]
          %v2357 = vld [vmem:[%s2335 + $0xa8] sm:$0xff]
          %v2358 = vld [vmem:[%s2335 + $0xb0] sm:$0xff]
          %v2359 = vld [vmem:[%s2335 + $0xb8] sm:$0xff]
          %2361 = vset.pattern.permute.xlu0 0
          %2362 = vperm.xlu0 %2361, %v2336
          %v2363 = vpop.permute.xlu0 %2362
          %2366 = vset.pattern.permute.xlu0 0
          %2367 = vperm.xlu0 %2366, %v2337
          %v2368 = vpop.permute.xlu0 %2367
          %2371 = vset.pattern.permute.xlu0 0
          %2372 = vperm.xlu0 %2371, %v2338
          %v2373 = vpop.permute.xlu0 %2372
          %2376 = vset.pattern.permute.xlu0 0
          %2377 = vperm.xlu0 %2376, %v2339
          %v2378 = vpop.permute.xlu0 %2377
          %2381 = vset.pattern.permute.xlu0 0
          %2382 = vperm.xlu0 %2381, %v2340
          %v2383 = vpop.permute.xlu0 %2382
          %2386 = vset.pattern.permute.xlu0 0
          %2387 = vperm.xlu0 %2386, %v2341
          %v2388 = vpop.permute.xlu0 %2387
          %2391 = vset.pattern.permute.xlu0 0
          %2392 = vperm.xlu0 %2391, %v2342
          %v2393 = vpop.permute.xlu0 %2392
          %2396 = vset.pattern.permute.xlu0 0
          %2397 = vperm.xlu0 %2396, %v2343
          %v2398 = vpop.permute.xlu0 %2397
          %2401 = vset.pattern.permute.xlu0 0
          %2402 = vperm.xlu0 %2401, %v2344
          %v2403 = vpop.permute.xlu0 %2402
          %2406 = vset.pattern.permute.xlu0 0
          %2407 = vperm.xlu0 %2406, %v2345
          %v2408 = vpop.permute.xlu0 %2407
          %2411 = vset.pattern.permute.xlu0 0
          %2412 = vperm.xlu0 %2411, %v2346
          %v2413 = vpop.permute.xlu0 %2412
          %2416 = vset.pattern.permute.xlu0 0
          %2417 = vperm.xlu0 %2416, %v2347
          %v2418 = vpop.permute.xlu0 %2417
          %2421 = vset.pattern.permute.xlu0 0
          %2422 = vperm.xlu0 %2421, %v2348
          %v2423 = vpop.permute.xlu0 %2422
          %2426 = vset.pattern.permute.xlu0 0
          %2427 = vperm.xlu0 %2426, %v2349
          %v2428 = vpop.permute.xlu0 %2427
          %2431 = vset.pattern.permute.xlu0 0
          %2432 = vperm.xlu0 %2431, %v2350
          %v2433 = vpop.permute.xlu0 %2432
          %2436 = vset.pattern.permute.xlu0 0
          %2437 = vperm.xlu0 %2436, %v2351
          %v2438 = vpop.permute.xlu0 %2437
          %2441 = vset.pattern.permute.xlu0 0
          %2442 = vperm.xlu0 %2441, %v2352
          %v2443 = vpop.permute.xlu0 %2442
          %2446 = vset.pattern.permute.xlu0 0
          %2447 = vperm.xlu0 %2446, %v2353
          %v2448 = vpop.permute.xlu0 %2447
          %2451 = vset.pattern.permute.xlu0 0
          %2452 = vperm.xlu0 %2451, %v2354
          %v2453 = vpop.permute.xlu0 %2452
          %2456 = vset.pattern.permute.xlu0 0
          %2457 = vperm.xlu0 %2456, %v2355
          %v2458 = vpop.permute.xlu0 %2457
          %2461 = vset.pattern.permute.xlu0 0
          %2462 = vperm.xlu0 %2461, %v2356
          %v2463 = vpop.permute.xlu0 %2462
          %2466 = vset.pattern.permute.xlu0 0
          %2467 = vperm.xlu0 %2466, %v2357
          %v2468 = vpop.permute.xlu0 %2467
          %2471 = vset.pattern.permute.xlu0 0
          %2472 = vperm.xlu0 %2471, %v2358
          %v2473 = vpop.permute.xlu0 %2472
          %2476 = vset.pattern.permute.xlu0 0
          %2477 = vperm.xlu0 %2476, %v2359
          %v2478 = vpop.permute.xlu0 %2477
          %v2480 = vmul.f32 %v2311, %v2363
          %v2481 = vmul.f32 %v2312, %v2368
          %v2482 = vmul.f32 %v2313, %v2373
          %v2483 = vmul.f32 %v2314, %v2378
          %v2484 = vmul.f32 %v2315, %v2383
          %v2485 = vmul.f32 %v2316, %v2388
          %v2486 = vmul.f32 %v2317, %v2393
          %v2487 = vmul.f32 %v2318, %v2398
          %v2488 = vmul.f32 %v2319, %v2403
          %v2489 = vmul.f32 %v2320, %v2408
          %v2490 = vmul.f32 %v2321, %v2413
          %v2491 = vmul.f32 %v2322, %v2418
          %v2492 = vmul.f32 %v2323, %v2423
          %v2493 = vmul.f32 %v2324, %v2428
          %v2494 = vmul.f32 %v2325, %v2433
          %v2495 = vmul.f32 %v2326, %v2438
          %v2496 = vmul.f32 %v2327, %v2443
          %v2497 = vmul.f32 %v2328, %v2448
          %v2498 = vmul.f32 %v2329, %v2453
          %v2499 = vmul.f32 %v2330, %v2458
          %v2500 = vmul.f32 %v2331, %v2463
          %v2501 = vmul.f32 %v2332, %v2468
          %v2502 = vmul.f32 %v2333, %v2473
          %v2503 = vmul.f32 %v2334, %v2478
          %v2504 = vpack.c.bf16 %v2481, %v2480
          %v2505 = vpack.c.bf16 %v2483, %v2482
          %v2506 = vpack.c.bf16 %v2485, %v2484
          %v2507 = vpack.c.bf16 %v2487, %v2486
          %v2508 = vpack.c.bf16 %v2489, %v2488
          %v2509 = vpack.c.bf16 %v2491, %v2490
          %v2510 = vpack.c.bf16 %v2493, %v2492
          %v2511 = vpack.c.bf16 %v2495, %v2494
          %v2512 = vpack.c.bf16 %v2497, %v2496
          %v2513 = vpack.c.bf16 %v2499, %v2498
          %v2514 = vpack.c.bf16 %v2501, %v2500
          %v2515 = vpack.c.bf16 %v2503, %v2502
          %s2516 = scalar_lea.vmem %s5, 32
          %v2517 = vld [vmem:[%s2516] sm:$0xf]
          %v2518 = vld [vmem:[%s2516 + $0x4] sm:$0xf]
          %v2519 = vld [vmem:[%s2516 + $0x8] sm:$0xf]
          %v2520 = vld [vmem:[%s2516 + $0xc] sm:$0xf]
          %v2521 = vld [vmem:[%s2516 + $0x10] sm:$0xf]
          %v2522 = vld [vmem:[%s2516 + $0x14] sm:$0xf]
          %v2523 = vld [vmem:[%s2516 + $0x18] sm:$0xf]
          %v2524 = vld [vmem:[%s2516 + $0x1c] sm:$0xf]
          %v2533 = vunpack.c.l.b16 %v2517
          %v2534 = vunpack.c.l.b16 %v2518
          %v2535 = vunpack.c.l.b16 %v2519
          %v2536 = vunpack.c.l.b16 %v2520
          %v2537 = vunpack.c.l.b16 %v2521
          %v2538 = vunpack.c.l.b16 %v2522
          %v2539 = vunpack.c.l.b16 %v2523
          %v2540 = vunpack.c.l.b16 %v2524
          %v2541 = vpack.c.b16 %v2534, %v2533
          %v2542 = vpack.c.b16 %v2536, %v2535
          %v2543 = vpack.c.b16 %v2538, %v2537
          %v2544 = vpack.c.b16 %v2540, %v2539
          %v2550 = vsel %vm1577, %v2504, 0
          %v2553 = vsel %vm1577, %v2505, 0
          %v2556 = vsel %vm1577, %v2506, 0
          %v2559 = vsel %vm1577, %v2507, 0
          %v2562 = vsel %vm1577, %v2508, 0
          %v2565 = vsel %vm1577, %v2509, 0
          %v2568 = vsel %vm1577, %v2510, 0
          %v2571 = vsel %vm1577, %v2511, 0
          %v2574 = vsel %vm1577, %v2512, 0
          %v2577 = vsel %vm1577, %v2513, 0
          %v2580 = vsel %vm1577, %v2514, 0
          %v2583 = vsel %vm1577, %v2515, 0
          %2585 = vmatprep.subr.bf16.mxu0 0
          %2586 = vmatpush1.bf16.msra.mxu0 %v2541
          %2587 = vmatprep.subr.bf16.mxu0 0
          %2588 = vmatpush1.bf16.msra.mxu0 %v2542
          %2589 = vmatprep.subr.bf16.mxu0 0
          %2590 = vmatpush1.bf16.msra.mxu0 %v2543
          %2591 = vmatprep.subr.bf16.mxu0 0
          %2592 = vmatpush1.bf16.msra.mxu0 %v2544
          %2593 = vmatprep.subr.bf16.mxu0 0
          %2594 = vmatpush1.bf16.msra.mxu0 0
          %2595 = vmatprep.subr.bf16.mxu0 0
          %2596 = vmatpush1.bf16.msra.mxu0 0
          %2597 = vmatprep.subr.bf16.mxu0 0
          %2598 = vmatpush1.bf16.msra.mxu0 0
          %2599 = vmatprep.subr.bf16.mxu0 0
          %2600 = vmatpush1.bf16.msra.mxu0 0
          %2601 = vmatprep.subr.bf16.mxu0 0
          %2602 = vmatpush1.bf16.msra.mxu0 0
          %2603 = vmatprep.subr.bf16.mxu0 0
          %2604 = vmatpush1.bf16.msra.mxu0 0
          %2605 = vmatprep.subr.bf16.mxu0 0
          %2606 = vmatpush1.bf16.msra.mxu0 0
          %2607 = vmatprep.subr.bf16.mxu0 0
          %2608 = vmatpush1.bf16.msra.mxu0 0
          %2609 = vmatprep.subr.bf16.mxu0 0
          %2610 = vmatpush1.bf16.msra.mxu0 0
          %2611 = vmatprep.subr.bf16.mxu0 0
          %2612 = vmatpush1.bf16.msra.mxu0 0
          %2613 = vmatprep.subr.bf16.mxu0 0
          %2614 = vmatpush1.bf16.msra.mxu0 0
          %2615 = vmatprep.subr.bf16.mxu0 0
          %2616 = vmatpush1.bf16.msra.mxu0 0
          %2617 = vmatprep.mubr.bf16.mxu0 0
          %2618 = vmatmul.mubr.bf16.gmra.mrb[0].mxu0 %v2550
          %v2619 = vpop.f32.mrb[0].mxu0
          %v2620 = vadd.f32 0.0, %v2619
          %v2621 = vpop.f32.mrb[0].mxu0
          %v2622 = vpop.f32.mrb[0].mxu0
          %v2623 = vadd.f32 0.0, %v2622
          %v2624 = vpop.f32.mrb[0].mxu0
          %2625 = vmatprep.mubr.bf16.mxu0 0
          %2626 = vmatmul.mubr.bf16.gmra.mrb[0].mxu0 %v2553
          %v2627 = vpop.f32.mrb[0].mxu0
          %v2628 = vadd.f32 0.0, %v2627
          %v2629 = vpop.f32.mrb[0].mxu0
          %v2630 = vpop.f32.mrb[0].mxu0
          %v2631 = vadd.f32 0.0, %v2630
          %v2632 = vpop.f32.mrb[0].mxu0
          %2633 = vmatprep.mubr.bf16.mxu0 0
          %2634 = vmatmul.mubr.bf16.gmra.mrb[0].mxu0 %v2556
          %v2635 = vpop.f32.mrb[0].mxu0
          %v2636 = vadd.f32 0.0, %v2635
          %v2637 = vpop.f32.mrb[0].mxu0
          %v2638 = vpop.f32.mrb[0].mxu0
          %v2639 = vadd.f32 0.0, %v2638
          %v2640 = vpop.f32.mrb[0].mxu0
          %2641 = vmatprep.mubr.bf16.mxu0 0
          %2642 = vmatmul.mubr.bf16.gmra.mrb[0].mxu0 %v2559
          %v2643 = vpop.f32.mrb[0].mxu0
          %v2644 = vadd.f32 0.0, %v2643
          %v2645 = vpop.f32.mrb[0].mxu0
          %v2646 = vpop.f32.mrb[0].mxu0
          %v2647 = vadd.f32 0.0, %v2646
          %v2648 = vpop.f32.mrb[0].mxu0
          %2649 = vmatprep.mubr.bf16.mxu0 0
          %2650 = vmatmul.mubr.bf16.gmra.mrb[0].mxu0 %v2562
          %v2651 = vpop.f32.mrb[0].mxu0
          %v2652 = vadd.f32 0.0, %v2651
          %v2653 = vpop.f32.mrb[0].mxu0
          %v2654 = vpop.f32.mrb[0].mxu0
          %v2655 = vadd.f32 0.0, %v2654
          %v2656 = vpop.f32.mrb[0].mxu0
          %2657 = vmatprep.mubr.bf16.mxu0 0
          %2658 = vmatmul.mubr.bf16.gmra.mrb[0].mxu0 %v2565
          %v2659 = vpop.f32.mrb[0].mxu0
          %v2660 = vadd.f32 0.0, %v2659
          %v2661 = vpop.f32.mrb[0].mxu0
          %v2662 = vpop.f32.mrb[0].mxu0
          %v2663 = vadd.f32 0.0, %v2662
          %v2664 = vpop.f32.mrb[0].mxu0
          %2665 = vmatprep.mubr.bf16.mxu0 0
          %2666 = vmatmul.mubr.bf16.gmra.mrb[0].mxu0 %v2568
          %v2667 = vpop.f32.mrb[0].mxu0
          %v2668 = vadd.f32 0.0, %v2667
          %v2669 = vpop.f32.mrb[0].mxu0
          %v2670 = vpop.f32.mrb[0].mxu0
          %v2671 = vadd.f32 0.0, %v2670
          %v2672 = vpop.f32.mrb[0].mxu0
          %2673 = vmatprep.mubr.bf16.mxu0 0
          %2674 = vmatmul.mubr.bf16.gmra.mrb[0].mxu0 %v2571
          %v2675 = vpop.f32.mrb[0].mxu0
          %v2676 = vadd.f32 0.0, %v2675
          %v2677 = vpop.f32.mrb[0].mxu0
          %v2678 = vpop.f32.mrb[0].mxu0
          %v2679 = vadd.f32 0.0, %v2678
          %v2680 = vpop.f32.mrb[0].mxu0
          %2681 = vmatprep.mubr.bf16.mxu0 0
          %2682 = vmatmul.mubr.bf16.gmra.mrb[0].mxu0 %v2574
          %v2683 = vpop.f32.mrb[0].mxu0
          %v2684 = vadd.f32 0.0, %v2683
          %v2685 = vpop.f32.mrb[0].mxu0
          %v2686 = vpop.f32.mrb[0].mxu0
          %v2687 = vadd.f32 0.0, %v2686
          %v2688 = vpop.f32.mrb[0].mxu0
          %2689 = vmatprep.mubr.bf16.mxu0 0
          %2690 = vmatmul.mubr.bf16.gmra.mrb[0].mxu0 %v2577
          %v2691 = vpop.f32.mrb[0].mxu0
          %v2692 = vadd.f32 0.0, %v2691
          %v2693 = vpop.f32.mrb[0].mxu0
          %v2694 = vpop.f32.mrb[0].mxu0
          %v2695 = vadd.f32 0.0, %v2694
          %v2696 = vpop.f32.mrb[0].mxu0
          %2697 = vmatprep.mubr.bf16.mxu0 0
          %2698 = vmatmul.mubr.bf16.gmra.mrb[0].mxu0 %v2580
          %v2699 = vpop.f32.mrb[0].mxu0
          %v2700 = vadd.f32 0.0, %v2699
          %v2701 = vpop.f32.mrb[0].mxu0
          %v2702 = vpop.f32.mrb[0].mxu0
          %v2703 = vadd.f32 0.0, %v2702
          %v2704 = vpop.f32.mrb[0].mxu0
          %2705 = vmatprep.mubr.bf16.mxu0 0
          %2706 = vmatmul.mubr.bf16.gmra.mrb[0].mxu0 %v2583
          %v2707 = vpop.f32.mrb[0].mxu0
          %v2708 = vadd.f32 0.0, %v2707
          %v2709 = vpop.f32.mrb[0].mxu0
          %v2710 = vpop.f32.mrb[0].mxu0
          %v2711 = vadd.f32 0.0, %v2710
          %v2712 = vpop.f32.mrb[0].mxu0
          %2713 = vdwg.mxu0
          %v2714 = vadd.f32 %v2217, %v2620
          %v2715 = vadd.f32 %v2220, %v2623
          %v2716 = vadd.f32 %v2225, %v2628
          %v2717 = vadd.f32 %v2228, %v2631
          %v2718 = vadd.f32 %v2233, %v2636
          %v2719 = vadd.f32 %v2236, %v2639
          %v2720 = vadd.f32 %v2241, %v2644
          %v2721 = vadd.f32 %v2244, %v2647
          %v2722 = vadd.f32 %v2249, %v2652
          %v2723 = vadd.f32 %v2252, %v2655
          %v2724 = vadd.f32 %v2257, %v2660
          %v2725 = vadd.f32 %v2260, %v2663
          %v2726 = vadd.f32 %v2265, %v2668
          %v2727 = vadd.f32 %v2268, %v2671
          %v2728 = vadd.f32 %v2273, %v2676
          %v2729 = vadd.f32 %v2276, %v2679
          %v2730 = vadd.f32 %v2281, %v2684
          %v2731 = vadd.f32 %v2284, %v2687
          %v2732 = vadd.f32 %v2289, %v2692
          %v2733 = vadd.f32 %v2292, %v2695
          %v2734 = vadd.f32 %v2297, %v2700
          %v2735 = vadd.f32 %v2300, %v2703
          %v2736 = vadd.f32 %v2305, %v2708
          %v2737 = vadd.f32 %v2308, %v2711
          %v2738 = vld [vmem:[%s6] sm:$0x1]
          %v2740 = vlaneseq
          %v2741 = vshrl.u32 %v2740, 7
          %v2742 = vsub.s32 0, %v2741
          %v2743 = vrot.slane %v2738, %v2742
          %v2745 = vadd.f32 %v2714, %v2743
          %v2746 = vadd.f32 %v2715, %v2743
          %v2747 = vadd.f32 %v2716, %v2743
          %v2748 = vadd.f32 %v2717, %v2743
          %v2749 = vadd.f32 %v2718, %v2743
          %v2750 = vadd.f32 %v2719, %v2743
          %v2751 = vadd.f32 %v2720, %v2743
          %v2752 = vadd.f32 %v2721, %v2743
          %v2753 = vadd.f32 %v2722, %v2743
          %v2754 = vadd.f32 %v2723, %v2743
          %v2755 = vadd.f32 %v2724, %v2743
          %v2756 = vadd.f32 %v2725, %v2743
          %v2757 = vadd.f32 %v2726, %v2743
          %v2758 = vadd.f32 %v2727, %v2743
          %v2759 = vadd.f32 %v2728, %v2743
          %v2760 = vadd.f32 %v2729, %v2743
          %v2761 = vadd.f32 %v2730, %v2743
          %v2762 = vadd.f32 %v2731, %v2743
          %v2763 = vadd.f32 %v2732, %v2743
          %v2764 = vadd.f32 %v2733, %v2743
          %v2765 = vadd.f32 %v2734, %v2743
          %v2766 = vadd.f32 %v2735, %v2743
          %v2767 = vadd.f32 %v2736, %v2743
          %v2768 = vadd.f32 %v2737, %v2743
          %v2769 = vpack.c.bf16 %v2746, %v2745
          %v2770 = vpack.c.bf16 %v2748, %v2747
          %v2771 = vpack.c.bf16 %v2750, %v2749
          %v2772 = vpack.c.bf16 %v2752, %v2751
          %v2773 = vpack.c.bf16 %v2754, %v2753
          %v2774 = vpack.c.bf16 %v2756, %v2755
          %v2775 = vpack.c.bf16 %v2758, %v2757
          %v2776 = vpack.c.bf16 %v2760, %v2759
          %v2777 = vpack.c.bf16 %v2762, %v2761
          %v2778 = vpack.c.bf16 %v2764, %v2763
          %v2779 = vpack.c.bf16 %v2766, %v2765
          %v2780 = vpack.c.bf16 %v2768, %v2767
          %v2793 = vunpack.c.l.b16 %v2769
          %v2794 = vunpack.c.h.b16 %v2769
          %v2795 = vunpack.c.l.b16 %v2770
          %v2796 = vunpack.c.h.b16 %v2770
          %v2797 = vunpack.c.l.b16 %v2771
          %v2798 = vunpack.c.h.b16 %v2771
          %v2799 = vunpack.c.l.b16 %v2772
          %v2800 = vunpack.c.h.b16 %v2772
          %v2801 = vunpack.c.l.b16 %v2773
          %v2802 = vunpack.c.h.b16 %v2773
          %v2803 = vunpack.c.l.b16 %v2774
          %v2804 = vunpack.c.h.b16 %v2774
          %v2805 = vunpack.c.l.b16 %v2775
          %v2806 = vunpack.c.h.b16 %v2775
          %v2807 = vunpack.c.l.b16 %v2776
          %v2808 = vunpack.c.h.b16 %v2776
          %v2809 = vunpack.c.l.b16 %v2777
          %v2810 = vunpack.c.h.b16 %v2777
          %v2811 = vunpack.c.l.b16 %v2778
          %v2812 = vunpack.c.h.b16 %v2778
          %v2813 = vunpack.c.l.b16 %v2779
          %v2814 = vunpack.c.h.b16 %v2779
          %v2815 = vunpack.c.l.b16 %v2780
          %v2816 = vunpack.c.h.b16 %v2780
          %v2817 = vpack.c.b16 %v2793, %v2793
          %v2818 = vpack.c.b16 %v2794, %v2794
          %v2819 = vpack.c.b16 %v2795, %v2795
          %v2820 = vpack.c.b16 %v2796, %v2796
          %v2821 = vpack.c.b16 %v2797, %v2797
          %v2822 = vpack.c.b16 %v2798, %v2798
          %v2823 = vpack.c.b16 %v2799, %v2799
          %v2824 = vpack.c.b16 %v2800, %v2800
          %v2825 = vpack.c.b16 %v2801, %v2801
          %v2826 = vpack.c.b16 %v2802, %v2802
          %v2827 = vpack.c.b16 %v2803, %v2803
          %v2828 = vpack.c.b16 %v2804, %v2804
          %v2829 = vpack.c.b16 %v2805, %v2805
          %v2830 = vpack.c.b16 %v2806, %v2806
          %v2831 = vpack.c.b16 %v2807, %v2807
          %v2832 = vpack.c.b16 %v2808, %v2808
          %v2833 = vpack.c.b16 %v2809, %v2809
          %v2834 = vpack.c.b16 %v2810, %v2810
          %v2835 = vpack.c.b16 %v2811, %v2811
          %v2836 = vpack.c.b16 %v2812, %v2812
          %v2837 = vpack.c.b16 %v2813, %v2813
          %v2838 = vpack.c.b16 %v2814, %v2814
          %v2839 = vpack.c.b16 %v2815, %v2815
          %v2840 = vpack.c.b16 %v2816, %v2816
          %vm2865 = vcmask 519168
          %2866 = vst.msk [vmem:[%s675] sm:$0xf] %vm2865, %v2817
          %2867 = vst.msk [vmem:[%s675 + $0x4] sm:$0xf] %vm2865, %v2818
          %2868 = vst.msk [vmem:[%s675 + $0x8] sm:$0xf] %vm2865, %v2819
          %2869 = vst.msk [vmem:[%s675 + $0xc] sm:$0xf] %vm2865, %v2820
          %2870 = vst.msk [vmem:[%s675 + $0x10] sm:$0xf] %vm2865, %v2821
          %2871 = vst.msk [vmem:[%s675 + $0x14] sm:$0xf] %vm2865, %v2822
          %2872 = vst.msk [vmem:[%s675 + $0x18] sm:$0xf] %vm2865, %v2823
          %2873 = vst.msk [vmem:[%s675 + $0x1c] sm:$0xf] %vm2865, %v2824
          %2874 = vst.msk [vmem:[%s675 + $0x20] sm:$0xf] %vm2865, %v2825
          %2875 = vst.msk [vmem:[%s675 + $0x24] sm:$0xf] %vm2865, %v2826
          %2876 = vst.msk [vmem:[%s675 + $0x28] sm:$0xf] %vm2865, %v2827
          %2877 = vst.msk [vmem:[%s675 + $0x2c] sm:$0xf] %vm2865, %v2828
          %2878 = vst.msk [vmem:[%s675 + $0x30] sm:$0xf] %vm2865, %v2829
          %2879 = vst.msk [vmem:[%s675 + $0x34] sm:$0xf] %vm2865, %v2830
          %2880 = vst.msk [vmem:[%s675 + $0x38] sm:$0xf] %vm2865, %v2831
          %2881 = vst.msk [vmem:[%s675 + $0x3c] sm:$0xf] %vm2865, %v2832
          %2882 = vst.msk [vmem:[%s675 + $0x40] sm:$0xf] %vm2865, %v2833
          %2883 = vst.msk [vmem:[%s675 + $0x44] sm:$0xf] %vm2865, %v2834
          %2884 = vst.msk [vmem:[%s675 + $0x48] sm:$0xf] %vm2865, %v2835
          %2885 = vst.msk [vmem:[%s675 + $0x4c] sm:$0xf] %vm2865, %v2836
          %2886 = vst.msk [vmem:[%s675 + $0x50] sm:$0xf] %vm2865, %v2837
          %2887 = vst.msk [vmem:[%s675 + $0x54] sm:$0xf] %vm2865, %v2838
          %2888 = vst.msk [vmem:[%s675 + $0x58] sm:$0xf] %vm2865, %v2839
          %2889 = vst.msk [vmem:[%s675 + $0x5c] sm:$0xf] %vm2865, %v2840
        $region117: #{botrgcn_forward.4} parent=100 // pred_fallthru
          _
        %s2890 = smul.u32 24, %s22
        %p2891 = scmp.lt.s32.totalorder %s2890, 47
        %s2892 = scalar_select %p2891, %s2890, 47
        %s2893 = smul.addr %s2892, 4
        %s2894 = scalar_lea.vmem %s7, %s2893
        // Predicated region
        $region118: #{botrgcn_forward.4} parent=100 // pred_check
          %p2895 = pneg %p217
        $region119: #{botrgcn_forward.4} parent=100 // pred_check_branch
          %2897 = sbr.rel (%p2895) target = $region121
        $region120: #{botrgcn_forward.4} parent=100 // pred_region
          %s2898 = smul.u32 24, %s22
        $region121: #{botrgcn_forward.4} parent=100 // pred_fallthru
          _
      $region101: #{botrgcn_forward.4} parent=5 // pred_fallthru
        _
      %p2899 = scmp.le.s32.totalorder 2, %s13
      // Predicated region
      $region122: #{botrgcn_forward.4} parent=5 // pred_check
        %p2900 = pneg %p2899
      $region123: #{botrgcn_forward.4} parent=5 // pred_check_branch
        %2902 = sbr.rel (%p2900) target = $region125
      $region124: #{botrgcn_forward.4} parent=5 // pred_region
        %s2903 = ssub.s32 %s13, 2
        // Predicated region
        $region126: #{botrgcn_forward.4} parent=124 // pred_check
          %p2904 = pneg %p223
        $region127: #{botrgcn_forward.4} parent=124 // pred_check_branch
          %2906 = sbr.rel (%p2904) target = $region129
        $region128: #{botrgcn_forward.4} parent=124 // pred_region
          %s2907 = smul.u32 24, %s24
          %p2908 = scmp.lt.s32.totalorder %s2907, 47
          %s2909 = scalar_select %p2908, %s2907, 47
          %s2910 = smul.addr %s2909, 4
          %s2911 = scalar_lea.vmem %s7, %s2910
        $region129: #{botrgcn_forward.4} parent=124 // pred_fallthru
          _
      $region125: #{botrgcn_forward.4} parent=5 // pred_fallthru
        _
    $region6: #{botrgcn_forward.4} parent=1 // loop_footer
      %s17 = sadd.s32 1, %s13
    $region7: #{botrgcn_forward.4} parent=1 // loop_footer_branch
      %12 = sbr.rel target = $region3
    $region8: #{botrgcn_forward.4} parent=1 // loop_exit
      _

// kernel: botrgcn_forward.5
$region0: #{botrgcn_forward.5}
  #allocation0 [shape = 'u32[]', space=smem, size = 0x4, offset = 0x4, fixed_abs, tag = 'smem constant byte address 0x4 - core index']
  #allocation1 [shape = 'u32[144,128]{1,0:T(1,128)}', space=vmem, size = 0x12000, scoped, tag = 'internal scratch']
  #allocation2 [shape = 'f32[384,64]{1,0:T(8,128)}', space=vmem, size = 0x30000, scoped, tag = 'scratch operand']
  %s0 = inlined_call_operand.vmem [shape: bf16[384,64], index: 0, kind: input, shape index: {}, may-alias: {0,1}]
  %s1 = inlined_call_operand.vmem [shape: bf16[384,64], index: 1, kind: input, shape index: {}, may-alias: {0,1}]
  %s2 = inlined_call_operand.vmem [shape: s8[2,384,384], index: 2, kind: input, shape index: {}]
  %s3 = inlined_call_operand.vmem [shape: f32[2,384,1], index: 3, kind: input, shape index: {}]
  %s4 = inlined_call_operand.vmem [shape: bf16[64,64], index: 4, kind: input, shape index: {}]
  %s5 = inlined_call_operand.vmem [shape: bf16[2,64,64], index: 5, kind: input, shape index: {}]
  %s6 = inlined_call_operand.vmem [shape: f32[1,64], index: 6, kind: input, shape index: {}]
  %s7 = inlined_call_operand.vmem [shape: bf16[64,64], index: 7, kind: input, shape index: {}]
  %s8 = inlined_call_operand.vmem [shape: f32[1,64], index: 8, kind: input, shape index: {}]
  %s9 = inlined_call_operand.vmem [shape: bf16[384,64], index: 9, kind: output, shape index: {}]
  %s10 = sld [smem:[#allocation0]]
  $region138: #{botrgcn_forward.5} parent=0
    _
  %s12 = ssub.s32 1, %s10
  %s13 = scalar_select 0, %s12, %s10
  $region1: #{botrgcn_forward.5} parent=0
    #allocation3 [shape = 'u8[294912]{0}', space=vmem, size = 0x48000, scoped, tag = 'input window, operand 2']
    #allocation4 [shape = 'u8[393216]{0}', space=vmem, size = 0x60000, scoped, tag = 'input window, operand 3']
    loop: start=0, step=1, limit=4
    $region2: #{botrgcn_forward.5} parent=1 // loop_pre_header
      _
    $region3: #{botrgcn_forward.5} parent=1 // loop_header
      %s15 = sphi 0, %s19
      %p16 = scmp.ge.s32.totalorder %s15, 4
      %s22 = sphi 0, %s34
      %s23 = sphi 0, %s30
      %s24 = sphi 0, %s22
      %s25 = sphi 0, %s23
      %s26 = sphi 0, %s24
      %s27 = sphi 0, %s25
      %s37 = sphi 0, %s39
      %s40 = sphi 0, %s37
      %s41 = sphi 0, %s40
      %s57 = sphi 0, %s41
      %s63 = sphi 0, %s65
      %s66 = sphi 0, %s63
      %s67 = sphi 0, %s66
      %s83 = sphi 0, %s67
      %s91 = sphi 0, %s93
      %s94 = sphi 0, %s91
      %s95 = sphi 0, %s94
      %s111 = sphi 0, %s95
      %s117 = sphi 0, %s119
      %s120 = sphi 0, %s117
      %s121 = sphi 0, %s120
      %s137 = sphi 0, %s121
      %s141 = sphi 0, %s141
      %s143 = sphi 0, %s141
      %s144 = sphi 0, %s143
      %s158 = sphi 0, %s144
      %s162 = sphi 0, %s162
      %s164 = sphi 0, %s162
      %s165 = sphi 0, %s164
      %s179 = sphi 0, %s165
      %s183 = sphi 0, %s183
      %s185 = sphi 0, %s183
      %s186 = sphi 0, %s185
      %s200 = sphi 0, %s186
      %s204 = sphi 0, %s204
      %s206 = sphi 0, %s204
      %s207 = sphi 0, %s206
      %s221 = sphi 0, %s207
      %s225 = sphi 0, %s225
      %s227 = sphi 0, %s225
      %s228 = sphi 0, %s227
      %s242 = sphi 0, %s228
      %s248 = sphi 0, %s250
      %s251 = sphi 0, %s248
      %s252 = sphi 0, %s251
      %s268 = sphi 0, %s252
    $region4: #{botrgcn_forward.5} parent=1 // loop_header_branch
      %18 = sbr.rel (%p16) target = $region8
    $region5: #{botrgcn_forward.5} parent=1 // loop_body
      %s20 = ssub.s32 %s15, 1
      %s21 = ssub.s32 %s15, 2
      %s28 = sadd.s32 1, %s23
      %p29 = scmp.ge.s32.totalorder %s28, 1
      %s30 = scalar_select %p29, 0, %s28
      %s31 = sadd.s32 1, %s22
      %s32 = scalar_select %p29, %s31, %s22
      %p33 = scmp.ge.s32.totalorder %s32, 2
      %s34 = scalar_select %p33, 0, %s32
      %s35 = ssub.s32 %s22, %s34
      %p36 = scmp.eq.s32.totalorder %s35, 0
      %s38 = sadd.s32 %s37, 1
      %s39 = scalar_select %p36, %s37, %s38
      %p42 = pneg %p36
      %p43 = scmp.eq.s32.totalorder %s15, 1
      %p44 = por %p42, %p43
      %p45 = scmp.ne.s32.totalorder %s37, %s40
      %p46 = scmp.eq.s32.totalorder %s15, 0
      %p47 = por %p45, %p46
      %p48 = scmp.ne.s32.totalorder %s37, %s40
      %p49 = scmp.eq.s32.totalorder %s20, 1
      %p50 = por %p48, %p49
      %p51 = scmp.ne.s32.totalorder %s40, %s41
      %p52 = scmp.eq.s32.totalorder %s20, 0
      %p53 = por %p51, %p52
      %p54 = scmp.ne.s32.totalorder %s40, %s41
      %p55 = scmp.eq.s32.totalorder %s21, 1
      %p56 = por %p54, %p55
      %p58 = scmp.ne.s32.totalorder %s41, %s57
      %p59 = scmp.eq.s32.totalorder %s21, 0
      %p60 = por %p58, %p59
      %s61 = ssub.s32 %s23, %s30
      %p62 = scmp.eq.s32.totalorder %s61, 0
      %s64 = sadd.s32 %s63, 1
      %s65 = scalar_select %p62, %s63, %s64
      %p68 = pneg %p62
      %p69 = scmp.eq.s32.totalorder %s15, 1
      %p70 = por %p68, %p69
      %p71 = scmp.ne.s32.totalorder %s63, %s66
      %p72 = scmp.eq.s32.totalorder %s15, 0
      %p73 = por %p71, %p72
      %p74 = scmp.ne.s32.totalorder %s63, %s66
      %p75 = scmp.eq.s32.totalorder %s20, 1
      %p76 = por %p74, %p75
      %p77 = scmp.ne.s32.totalorder %s66, %s67
      %p78 = scmp.eq.s32.totalorder %s20, 0
      %p79 = por %p77, %p78
      %p80 = scmp.ne.s32.totalorder %s66, %s67
      %p81 = scmp.eq.s32.totalorder %s21, 1
      %p82 = por %p80, %p81
      %p84 = scmp.ne.s32.totalorder %s67, %s83
      %p85 = scmp.eq.s32.totalorder %s21, 0
      %p86 = por %p84, %p85
      %s87 = ssub.s32 %s22, %s34
      %s88 = ssub.s32 %s23, %s30
      %s89 = sor.u32 %s87, %s88
      %p90 = scmp.eq.s32.totalorder %s89, 0
      %s92 = sadd.s32 %s91, 1
      %s93 = scalar_select %p90, %s91, %s92
      %p96 = pneg %p90
      %p97 = scmp.eq.s32.totalorder %s15, 1
      %p98 = por %p96, %p97
      %p99 = scmp.ne.s32.totalorder %s91, %s94
      %p100 = scmp.eq.s32.totalorder %s15, 0
      %p101 = por %p99, %p100
      %p102 = scmp.ne.s32.totalorder %s91, %s94
      %p103 = scmp.eq.s32.totalorder %s20, 1
      %p104 = por %p102, %p103
      %p105 = scmp.ne.s32.totalorder %s94, %s95
      %p106 = scmp.eq.s32.totalorder %s20, 0
      %p107 = por %p105, %p106
      %p108 = scmp.ne.s32.totalorder %s94, %s95
      %p109 = scmp.eq.s32.totalorder %s21, 1
      %p110 = por %p108, %p109
      %p112 = scmp.ne.s32.totalorder %s95, %s111
      %p113 = scmp.eq.s32.totalorder %s21, 0
      %p114 = por %p112, %p113
      %s115 = ssub.s32 %s22, %s34
      %p116 = scmp.eq.s32.totalorder %s115, 0
      %s118 = sadd.s32 %s117, 1
      %s119 = scalar_select %p116, %s117, %s118
      %p122 = pneg %p116
      %p123 = scmp.eq.s32.totalorder %s15, 1
      %p124 = por %p122, %p123
      %p125 = scmp.ne.s32.totalorder %s117, %s120
      %p126 = scmp.eq.s32.totalorder %s15, 0
      %p127 = por %p125, %p126
      %p128 = scmp.ne.s32.totalorder %s117, %s120
      %p129 = scmp.eq.s32.totalorder %s20, 1
      %p130 = por %p128, %p129
      %p131 = scmp.ne.s32.totalorder %s120, %s121
      %p132 = scmp.eq.s32.totalorder %s20, 0
      %p133 = por %p131, %p132
      %p134 = scmp.ne.s32.totalorder %s120, %s121
      %p135 = scmp.eq.s32.totalorder %s21, 1
      %p136 = por %p134, %p135
      %p138 = scmp.ne.s32.totalorder %s121, %s137
      %p139 = scmp.eq.s32.totalorder %s21, 0
      %p140 = por %p138, %p139
      %s142 = sadd.s32 %s141, 1
      %p145 = scmp.eq.s32.totalorder %s15, 1
      %p146 = scmp.ne.s32.totalorder %s141, %s143
      %p147 = scmp.eq.s32.totalorder %s15, 0
      %p148 = por %p146, %p147
      %p149 = scmp.ne.s32.totalorder %s141, %s143
      %p150 = scmp.eq.s32.totalorder %s20, 1
      %p151 = por %p149, %p150
      %p152 = scmp.ne.s32.totalorder %s143, %s144
      %p153 = scmp.eq.s32.totalorder %s20, 0
      %p154 = por %p152, %p153
      %p155 = scmp.ne.s32.totalorder %s143, %s144
      %p156 = scmp.eq.s32.totalorder %s21, 1
      %p157 = por %p155, %p156
      %p159 = scmp.ne.s32.totalorder %s144, %s158
      %p160 = scmp.eq.s32.totalorder %s21, 0
      %p161 = por %p159, %p160
      %s163 = sadd.s32 %s162, 1
      %p166 = scmp.eq.s32.totalorder %s15, 1
      %p167 = scmp.ne.s32.totalorder %s162, %s164
      %p168 = scmp.eq.s32.totalorder %s15, 0
      %p169 = por %p167, %p168
      %p170 = scmp.ne.s32.totalorder %s162, %s164
      %p171 = scmp.eq.s32.totalorder %s20, 1
      %p172 = por %p170, %p171
      %p173 = scmp.ne.s32.totalorder %s164, %s165
      %p174 = scmp.eq.s32.totalorder %s20, 0
      %p175 = por %p173, %p174
      %p176 = scmp.ne.s32.totalorder %s164, %s165
      %p177 = scmp.eq.s32.totalorder %s21, 1
      %p178 = por %p176, %p177
      %p180 = scmp.ne.s32.totalorder %s165, %s179
      %p181 = scmp.eq.s32.totalorder %s21, 0
      %p182 = por %p180, %p181
      %s184 = sadd.s32 %s183, 1
      %p187 = scmp.eq.s32.totalorder %s15, 1
      %p188 = scmp.ne.s32.totalorder %s183, %s185
      %p189 = scmp.eq.s32.totalorder %s15, 0
      %p190 = por %p188, %p189
      %p191 = scmp.ne.s32.totalorder %s183, %s185
      %p192 = scmp.eq.s32.totalorder %s20, 1
      %p193 = por %p191, %p192
      %p194 = scmp.ne.s32.totalorder %s185, %s186
      %p195 = scmp.eq.s32.totalorder %s20, 0
      %p196 = por %p194, %p195
      %p197 = scmp.ne.s32.totalorder %s185, %s186
      %p198 = scmp.eq.s32.totalorder %s21, 1
      %p199 = por %p197, %p198
      %p201 = scmp.ne.s32.totalorder %s186, %s200
      %p202 = scmp.eq.s32.totalorder %s21, 0
      %p203 = por %p201, %p202
      %s205 = sadd.s32 %s204, 1
      %p208 = scmp.eq.s32.totalorder %s15, 1
      %p209 = scmp.ne.s32.totalorder %s204, %s206
      %p210 = scmp.eq.s32.totalorder %s15, 0
      %p211 = por %p209, %p210
      %p212 = scmp.ne.s32.totalorder %s204, %s206
      %p213 = scmp.eq.s32.totalorder %s20, 1
      %p214 = por %p212, %p213
      %p215 = scmp.ne.s32.totalorder %s206, %s207
      %p216 = scmp.eq.s32.totalorder %s20, 0
      %p217 = por %p215, %p216
      %p218 = scmp.ne.s32.totalorder %s206, %s207
      %p219 = scmp.eq.s32.totalorder %s21, 1
      %p220 = por %p218, %p219
      %p222 = scmp.ne.s32.totalorder %s207, %s221
      %p223 = scmp.eq.s32.totalorder %s21, 0
      %p224 = por %p222, %p223
      %s226 = sadd.s32 %s225, 1
      %p229 = scmp.eq.s32.totalorder %s15, 1
      %p230 = scmp.ne.s32.totalorder %s225, %s227
      %p231 = scmp.eq.s32.totalorder %s15, 0
      %p232 = por %p230, %p231
      %p233 = scmp.ne.s32.totalorder %s225, %s227
      %p234 = scmp.eq.s32.totalorder %s20, 1
      %p235 = por %p233, %p234
      %p236 = scmp.ne.s32.totalorder %s227, %s228
      %p237 = scmp.eq.s32.totalorder %s20, 0
      %p238 = por %p236, %p237
      %p239 = scmp.ne.s32.totalorder %s227, %s228
      %p240 = scmp.eq.s32.totalorder %s21, 1
      %p241 = por %p239, %p240
      %p243 = scmp.ne.s32.totalorder %s228, %s242
      %p244 = scmp.eq.s32.totalorder %s21, 0
      %p245 = por %p243, %p244
      %s246 = ssub.s32 %s22, %s34
      %p247 = scmp.eq.s32.totalorder %s246, 0
      %s249 = sadd.s32 %s248, 1
      %s250 = scalar_select %p247, %s248, %s249
      %p253 = pneg %p247
      %p254 = scmp.eq.s32.totalorder %s15, 1
      %p255 = por %p253, %p254
      %p256 = scmp.ne.s32.totalorder %s248, %s251
      %p257 = scmp.eq.s32.totalorder %s15, 0
      %p258 = por %p256, %p257
      %p259 = scmp.ne.s32.totalorder %s248, %s251
      %p260 = scmp.eq.s32.totalorder %s20, 1
      %p261 = por %p259, %p260
      %p262 = scmp.ne.s32.totalorder %s251, %s252
      %p263 = scmp.eq.s32.totalorder %s20, 0
      %p264 = por %p262, %p263
      %p265 = scmp.ne.s32.totalorder %s251, %s252
      %p266 = scmp.eq.s32.totalorder %s21, 1
      %p267 = por %p265, %p266
      %p269 = scmp.ne.s32.totalorder %s252, %s268
      %p270 = scmp.eq.s32.totalorder %s21, 0
      %p271 = por %p269, %p270
      %p272 = scmp.le.s32.totalorder 1, %s15
      %p273 = scmp.lt.s32.totalorder %s15, 3
      %p274 = pnand %p272, %p273
      %p275 = pneg %p274
      // Predicated region
      $region9: #{botrgcn_forward.5} parent=5 // pred_check
        _
      $region10: #{botrgcn_forward.5} parent=5 // pred_check_branch
        %277 = sbr.rel (%p274) target = $region12
      $region11: #{botrgcn_forward.5} parent=5 // pred_region
        %s278 = ssub.s32 %s15, 1
        // Predicated region
        $region13: #{botrgcn_forward.5} parent=11 // pred_check
          %p279 = pneg %p79
        $region14: #{botrgcn_forward.5} parent=11 // pred_check_branch
          %281 = sbr.rel (%p279) target = $region16
        $region15: #{botrgcn_forward.5} parent=11 // pred_region
          %s282 = smul.u32 48, %s25
          %p283 = scmp.lt.s32.totalorder %s282, 47
          %s284 = scalar_select %p283, %s282, 47
          %s285 = smul.addr %s284, 4
          %s286 = scalar_lea.vmem %s1, %s285
          %s287 = smul.u32 48, %s25
        $region16: #{botrgcn_forward.5} parent=11 // pred_fallthru
          _
        // Predicated region
        $region17: #{botrgcn_forward.5} parent=11 // pred_check
          %p288 = pneg %p154
        $region18: #{botrgcn_forward.5} parent=11 // pred_check_branch
          %290 = sbr.rel (%p288) target = $region20
        $region19: #{botrgcn_forward.5} parent=11 // pred_region
          _
        $region20: #{botrgcn_forward.5} parent=11 // pred_fallthru
          _
        // Predicated region
        $region21: #{botrgcn_forward.5} parent=11 // pred_check
          %p291 = pneg %p175
        $region22: #{botrgcn_forward.5} parent=11 // pred_check_branch
          %293 = sbr.rel (%p291) target = $region24
        $region23: #{botrgcn_forward.5} parent=11 // pred_region
          _
        $region24: #{botrgcn_forward.5} parent=11 // pred_fallthru
          _
        // Predicated region
        $region25: #{botrgcn_forward.5} parent=11 // pred_check
          %p294 = pneg %p196
        $region26: #{botrgcn_forward.5} parent=11 // pred_check_branch
          %296 = sbr.rel (%p294) target = $region28
        $region27: #{botrgcn_forward.5} parent=11 // pred_region
          _
        $region28: #{botrgcn_forward.5} parent=11 // pred_fallthru
          _
        // Predicated region
        $region29: #{botrgcn_forward.5} parent=11 // pred_check
          %p297 = pneg %p217
        $region30: #{botrgcn_forward.5} parent=11 // pred_check_branch
          %299 = sbr.rel (%p297) target = $region32
        $region31: #{botrgcn_forward.5} parent=11 // pred_region
          _
        $region32: #{botrgcn_forward.5} parent=11 // pred_fallthru
          _
        // Predicated region
        $region33: #{botrgcn_forward.5} parent=11 // pred_check
          %p300 = pneg %p238
        $region34: #{botrgcn_forward.5} parent=11 // pred_check_branch
          %302 = sbr.rel (%p300) target = $region36
        $region35: #{botrgcn_forward.5} parent=11 // pred_region
          _
        $region36: #{botrgcn_forward.5} parent=11 // pred_fallthru
          _
      $region12: #{botrgcn_forward.5} parent=5 // pred_fallthru
        _
      %p303 = scmp.lt.s32.totalorder %s15, 2
      // Predicated region
      $region37: #{botrgcn_forward.5} parent=5 // pred_check
        %p304 = pneg %p303
      $region38: #{botrgcn_forward.5} parent=5 // pred_check_branch
        %306 = sbr.rel (%p304) target = $region40
      $region39: #{botrgcn_forward.5} parent=5 // pred_region
        // Predicated region
        $region41: #{botrgcn_forward.5} parent=39 // pred_check
          %p307 = pneg %p47
        $region42: #{botrgcn_forward.5} parent=39 // pred_check_branch
          %309 = sbr.rel (%p307) target = $region44
        $region43: #{botrgcn_forward.5} parent=39 // pred_region
          %s310 = smul.u32 24, %s22
          %p311 = scmp.lt.s32.totalorder %s310, 47
          %s312 = scalar_select %p311, %s310, 47
          %s313 = smul.addr %s312, 4
          %s314 = scalar_lea.vmem %s0, %s313
          %s315 = smul.u32 24, %s22
        $region44: #{botrgcn_forward.5} parent=39 // pred_fallthru
          _
        // Predicated region
        $region45: #{botrgcn_forward.5} parent=39 // pred_check
          %p316 = pneg %p101
        $region46: #{botrgcn_forward.5} parent=39 // pred_check_branch
          %318 = sbr.rel (%p316) target = $region48
        $region47: #{botrgcn_forward.5} parent=39 // pred_region
          %s319 = sand.u32 %s91, 1
          %s320 = sand.u32 %s91, 1
          %s321 = smul.addr %s320, 288
          %s322 = scalar_lea.vmem [#allocation3], %s321
          %s323 = smul.u32 6, %s22
          %s324 = smul.u32 3, %s23
          %s325 = smul.addr %s323, 3
          %s326 = sadd.s32 %s324, %s325
          %s327 = smul.addr %s326, 8
          %s328 = scalar_lea.vmem %s2, %s327
          // Predicated region
          $region49: #{botrgcn_forward.5} parent=47 // pred_check
            _
          $region50: #{botrgcn_forward.5} parent=47 // pred_check_branch
            %330 = sbr.rel (0) target = $region52
          $region51: #{botrgcn_forward.5} parent=47 // pred_region
            // Predicated region
            $region53: #{botrgcn_forward.5} parent=51 // pred_check
              _
            $region54: #{botrgcn_forward.5} parent=51 // pred_check_branch
              %332 = sbr.rel (0) target = $region56
            $region55: #{botrgcn_forward.5} parent=51 // pred_region
              loop: start=0, step=1, limit=1
              $region57: #{botrgcn_forward.5} parent=55 // loop_pre_header
                _
              $region58: #{botrgcn_forward.5} parent=55 // loop_header
                %s334 = sphi 0, %s338
                %p335 = scmp.ge.s32.totalorder %s334, 1
                %s339 = sphi %s328, %s328
                %s340 = sphi %s322, %s322
              $region59: #{botrgcn_forward.5} parent=55 // loop_header_branch
                %337 = sbr.rel (%p335) target = $region63
              $region60: #{botrgcn_forward.5} parent=55 // loop_body
                %v341 = vld [vmem:[%s339] sm:$0xff]
                %342 = vst [vmem:[%s340] sm:$0xff] %v341
                %v343 = vld [vmem:[%s339 + $0x8] sm:$0xff]
                %344 = vst [vmem:[%s340 + $0x8] sm:$0xff] %v343
                %v345 = vld [vmem:[%s339 + $0x10] sm:$0xff]
                %346 = vst [vmem:[%s340 + $0x10] sm:$0xff] %v345
                %v347 = vld [vmem:[%s339 + $0x18] sm:$0xff]
                %348 = vst [vmem:[%s340 + $0x18] sm:$0xff] %v347
                %v349 = vld [vmem:[%s339 + $0x20] sm:$0xff]
                %350 = vst [vmem:[%s340 + $0x20] sm:$0xff] %v349
                %v351 = vld [vmem:[%s339 + $0x28] sm:$0xff]
                %352 = vst [vmem:[%s340 + $0x28] sm:$0xff] %v351
                %v353 = vld [vmem:[%s339 + $0x30] sm:$0xff]
                %354 = vst [vmem:[%s340 + $0x30] sm:$0xff] %v353
                %v355 = vld [vmem:[%s339 + $0x38] sm:$0xff]
                %356 = vst [vmem:[%s340 + $0x38] sm:$0xff] %v355
                %v357 = vld [vmem:[%s339 + $0x40] sm:$0xff]
                %358 = vst [vmem:[%s340 + $0x40] sm:$0xff] %v357
                %v359 = vld [vmem:[%s339 + $0x48] sm:$0xff]
                %360 = vst [vmem:[%s340 + $0x48] sm:$0xff] %v359
                %v361 = vld [vmem:[%s339 + $0x50] sm:$0xff]
                %362 = vst [vmem:[%s340 + $0x50] sm:$0xff] %v361
                %v363 = vld [vmem:[%s339 + $0x58] sm:$0xff]
                %364 = vst [vmem:[%s340 + $0x58] sm:$0xff] %v363
                %v365 = vld [vmem:[%s339 + $0x60] sm:$0xff]
                %366 = vst [vmem:[%s340 + $0x60] sm:$0xff] %v365
                %v367 = vld [vmem:[%s339 + $0x68] sm:$0xff]
                %368 = vst [vmem:[%s340 + $0x68] sm:$0xff] %v367
                %v369 = vld [vmem:[%s339 + $0x70] sm:$0xff]
                %370 = vst [vmem:[%s340 + $0x70] sm:$0xff] %v369
                %v371 = vld [vmem:[%s339 + $0x78] sm:$0xff]
                %372 = vst [vmem:[%s340 + $0x78] sm:$0xff] %v371
                %v373 = vld [vmem:[%s339 + $0x80] sm:$0xff]
                %374 = vst [vmem:[%s340 + $0x80] sm:$0xff] %v373
                %v375 = vld [vmem:[%s339 + $0x88] sm:$0xff]
                %376 = vst [vmem:[%s340 + $0x88] sm:$0xff] %v375
                %v377 = vld [vmem:[%s339 + $0x120] sm:$0xff]
                %378 = vst [vmem:[%s340 + $0x90] sm:$0xff] %v377
                %v379 = vld [vmem:[%s339 + $0x128] sm:$0xff]
                %380 = vst [vmem:[%s340 + $0x98] sm:$0xff] %v379
                %v381 = vld [vmem:[%s339 + $0x130] sm:$0xff]
                %382 = vst [vmem:[%s340 + $0xa0] sm:$0xff] %v381
                %v383 = vld [vmem:[%s339 + $0x138] sm:$0xff]
                %384 = vst [vmem:[%s340 + $0xa8] sm:$0xff] %v383
                %v385 = vld [vmem:[%s339 + $0x140] sm:$0xff]
                %386 = vst [vmem:[%s340 + $0xb0] sm:$0xff] %v385
                %v387 = vld [vmem:[%s339 + $0x148] sm:$0xff]
                %388 = vst [vmem:[%s340 + $0xb8] sm:$0xff] %v387
                %v389 = vld [vmem:[%s339 + $0x150] sm:$0xff]
                %390 = vst [vmem:[%s340 + $0xc0] sm:$0xff] %v389
                %v391 = vld [vmem:[%s339 + $0x158] sm:$0xff]
                %392 = vst [vmem:[%s340 + $0xc8] sm:$0xff] %v391
                %v393 = vld [vmem:[%s339 + $0x160] sm:$0xff]
                %394 = vst [vmem:[%s340 + $0xd0] sm:$0xff] %v393
                %v395 = vld [vmem:[%s339 + $0x168] sm:$0xff]
                %396 = vst [vmem:[%s340 + $0xd8] sm:$0xff] %v395
                %v397 = vld [vmem:[%s339 + $0x170] sm:$0xff]
                %398 = vst [vmem:[%s340 + $0xe0] sm:$0xff] %v397
                %v399 = vld [vmem:[%s339 + $0x178] sm:$0xff]
                %400 = vst [vmem:[%s340 + $0xe8] sm:$0xff] %v399
                %v401 = vld [vmem:[%s339 + $0x180] sm:$0xff]
                %402 = vst [vmem:[%s340 + $0xf0] sm:$0xff] %v401
                %v403 = vld [vmem:[%s339 + $0x188] sm:$0xff]
                %404 = vst [vmem:[%s340 + $0xf8] sm:$0xff] %v403
                %v405 = vld [vmem:[%s339 + $0x190] sm:$0xff]
                %406 = vst [vmem:[%s340 + $0x100] sm:$0xff] %v405
                %v407 = vld [vmem:[%s339 + $0x198] sm:$0xff]
                %408 = vst [vmem:[%s340 + $0x108] sm:$0xff] %v407
                %v409 = vld [vmem:[%s339 + $0x1a0] sm:$0xff]
                %410 = vst [vmem:[%s340 + $0x110] sm:$0xff] %v409
                %v411 = vld [vmem:[%s339 + $0x1a8] sm:$0xff]
                %412 = vst [vmem:[%s340 + $0x118] sm:$0xff] %v411
              $region61: #{botrgcn_forward.5} parent=55 // loop_footer
                %s338 = sadd.s32 1, %s334
              $region62: #{botrgcn_forward.5} parent=55 // loop_footer_branch
                %333 = sbr.rel target = $region58
              $region63: #{botrgcn_forward.5} parent=55 // loop_exit
                _
            $region56: #{botrgcn_forward.5} parent=51 // pred_fallthru
              _
            // Predicated region
            $region64: #{botrgcn_forward.5} parent=51 // pred_check
              _
            $region65: #{botrgcn_forward.5} parent=51 // pred_check_branch
              %414 = sbr.rel target = $region67
            $region66: #{botrgcn_forward.5} parent=51 // pred_region
              _
            $region67: #{botrgcn_forward.5} parent=51 // pred_fallthru
              _
          $region52: #{botrgcn_forward.5} parent=47 // pred_fallthru
            _
          %415 = vnop
        $region48: #{botrgcn_forward.5} parent=39 // pred_fallthru
          _
        // Predicated region
        $region68: #{botrgcn_forward.5} parent=39 // pred_check
          %p416 = pneg %p127
        $region69: #{botrgcn_forward.5} parent=39 // pred_check_branch
          %418 = sbr.rel (%p416) target = $region71
        $region70: #{botrgcn_forward.5} parent=39 // pred_region
          %s419 = sand.u32 %s117, 1
          %s420 = sand.u32 %s117, 1
          %s421 = smul.addr %s420, 384
          %s422 = scalar_lea.vmem [#allocation4], %s421
          %s423 = smul.u32 24, %s22
          %s424 = smul.addr %s423, 8
          %s425 = scalar_lea.vmem %s3, %s424
          // Predicated region
          $region72: #{botrgcn_forward.5} parent=70 // pred_check
            _
          $region73: #{botrgcn_forward.5} parent=70 // pred_check_branch
            %427 = sbr.rel (0) target = $region75
          $region74: #{botrgcn_forward.5} parent=70 // pred_region
            // Predicated region
            $region76: #{botrgcn_forward.5} parent=74 // pred_check
              _
            $region77: #{botrgcn_forward.5} parent=74 // pred_check_branch
              %429 = sbr.rel (0) target = $region79
            $region78: #{botrgcn_forward.5} parent=74 // pred_region
              // Predicated region
              $region91: #{botrgcn_forward.5} parent=78 // pred_check
                _
              $region92: #{botrgcn_forward.5} parent=78 // pred_check_branch
                %538 = sbr.rel (0) target = $region94
              $region93: #{botrgcn_forward.5} parent=78 // pred_region
                loop: start=0, step=1, limit=1
                $region95: #{botrgcn_forward.5} parent=93 // loop_pre_header
                  _
                $region96: #{botrgcn_forward.5} parent=93 // loop_header
                  %s540 = sphi 0, %s544
                  %p541 = scmp.ge.s32.totalorder %s540, 1
                  %s545 = sphi %s425, %s425
                  %s546 = sphi %s422, %s422
                $region97: #{botrgcn_forward.5} parent=93 // loop_header_branch
                  %543 = sbr.rel (%p541) target = $region101
                $region98: #{botrgcn_forward.5} parent=93 // loop_body
                  %v547 = vld [vmem:[%s545] sm:$0xff]
                  %548 = vst [vmem:[%s546] sm:$0xff] %v547
                  %v549 = vld [vmem:[%s545 + $0x8] sm:$0xff]
                  %550 = vst [vmem:[%s546 + $0x8] sm:$0xff] %v549
                  %v551 = vld [vmem:[%s545 + $0x10] sm:$0xff]
                  %552 = vst [vmem:[%s546 + $0x10] sm:$0xff] %v551
                  %v553 = vld [vmem:[%s545 + $0x18] sm:$0xff]
                  %554 = vst [vmem:[%s546 + $0x18] sm:$0xff] %v553
                  %v555 = vld [vmem:[%s545 + $0x20] sm:$0xff]
                  %556 = vst [vmem:[%s546 + $0x20] sm:$0xff] %v555
                  %v557 = vld [vmem:[%s545 + $0x28] sm:$0xff]
                  %558 = vst [vmem:[%s546 + $0x28] sm:$0xff] %v557
                  %v559 = vld [vmem:[%s545 + $0x30] sm:$0xff]
                  %560 = vst [vmem:[%s546 + $0x30] sm:$0xff] %v559
                  %v561 = vld [vmem:[%s545 + $0x38] sm:$0xff]
                  %562 = vst [vmem:[%s546 + $0x38] sm:$0xff] %v561
                  %v563 = vld [vmem:[%s545 + $0x40] sm:$0xff]
                  %564 = vst [vmem:[%s546 + $0x40] sm:$0xff] %v563
                  %v565 = vld [vmem:[%s545 + $0x48] sm:$0xff]
                  %566 = vst [vmem:[%s546 + $0x48] sm:$0xff] %v565
                  %v567 = vld [vmem:[%s545 + $0x50] sm:$0xff]
                  %568 = vst [vmem:[%s546 + $0x50] sm:$0xff] %v567
                  %v569 = vld [vmem:[%s545 + $0x58] sm:$0xff]
                  %570 = vst [vmem:[%s546 + $0x58] sm:$0xff] %v569
                  %v571 = vld [vmem:[%s545 + $0x60] sm:$0xff]
                  %572 = vst [vmem:[%s546 + $0x60] sm:$0xff] %v571
                  %v573 = vld [vmem:[%s545 + $0x68] sm:$0xff]
                  %574 = vst [vmem:[%s546 + $0x68] sm:$0xff] %v573
                  %v575 = vld [vmem:[%s545 + $0x70] sm:$0xff]
                  %576 = vst [vmem:[%s546 + $0x70] sm:$0xff] %v575
                  %v577 = vld [vmem:[%s545 + $0x78] sm:$0xff]
                  %578 = vst [vmem:[%s546 + $0x78] sm:$0xff] %v577
                  %v579 = vld [vmem:[%s545 + $0x80] sm:$0xff]
                  %580 = vst [vmem:[%s546 + $0x80] sm:$0xff] %v579
                  %v581 = vld [vmem:[%s545 + $0x88] sm:$0xff]
                  %582 = vst [vmem:[%s546 + $0x88] sm:$0xff] %v581
                  %v583 = vld [vmem:[%s545 + $0x90] sm:$0xff]
                  %584 = vst [vmem:[%s546 + $0x90] sm:$0xff] %v583
                  %v585 = vld [vmem:[%s545 + $0x98] sm:$0xff]
                  %586 = vst [vmem:[%s546 + $0x98] sm:$0xff] %v585
                  %v587 = vld [vmem:[%s545 + $0xa0] sm:$0xff]
                  %588 = vst [vmem:[%s546 + $0xa0] sm:$0xff] %v587
                  %v589 = vld [vmem:[%s545 + $0xa8] sm:$0xff]
                  %590 = vst [vmem:[%s546 + $0xa8] sm:$0xff] %v589
                  %v591 = vld [vmem:[%s545 + $0xb0] sm:$0xff]
                  %592 = vst [vmem:[%s546 + $0xb0] sm:$0xff] %v591
                  %v593 = vld [vmem:[%s545 + $0xb8] sm:$0xff]
                  %594 = vst [vmem:[%s546 + $0xb8] sm:$0xff] %v593
                  %v595 = vld [vmem:[%s545 + $0x180] sm:$0xff]
                  %596 = vst [vmem:[%s546 + $0xc0] sm:$0xff] %v595
                  %v597 = vld [vmem:[%s545 + $0x188] sm:$0xff]
                  %598 = vst [vmem:[%s546 + $0xc8] sm:$0xff] %v597
                  %v599 = vld [vmem:[%s545 + $0x190] sm:$0xff]
                  %600 = vst [vmem:[%s546 + $0xd0] sm:$0xff] %v599
                  %v601 = vld [vmem:[%s545 + $0x198] sm:$0xff]
                  %602 = vst [vmem:[%s546 + $0xd8] sm:$0xff] %v601
                  %v603 = vld [vmem:[%s545 + $0x1a0] sm:$0xff]
                  %604 = vst [vmem:[%s546 + $0xe0] sm:$0xff] %v603
                  %v605 = vld [vmem:[%s545 + $0x1a8] sm:$0xff]
                  %606 = vst [vmem:[%s546 + $0xe8] sm:$0xff] %v605
                  %v607 = vld [vmem:[%s545 + $0x1b0] sm:$0xff]
                  %608 = vst [vmem:[%s546 + $0xf0] sm:$0xff] %v607
                  %v609 = vld [vmem:[%s545 + $0x1b8] sm:$0xff]
                  %610 = vst [vmem:[%s546 + $0xf8] sm:$0xff] %v609
                  %v611 = vld [vmem:[%s545 + $0x1c0] sm:$0xff]
                  %612 = vst [vmem:[%s546 + $0x100] sm:$0xff] %v611
                  %v613 = vld [vmem:[%s545 + $0x1c8] sm:$0xff]
                  %614 = vst [vmem:[%s546 + $0x108] sm:$0xff] %v613
                  %v615 = vld [vmem:[%s545 + $0x1d0] sm:$0xff]
                  %616 = vst [vmem:[%s546 + $0x110] sm:$0xff] %v615
                  %v617 = vld [vmem:[%s545 + $0x1d8] sm:$0xff]
                  %618 = vst [vmem:[%s546 + $0x118] sm:$0xff] %v617
                  %v619 = vld [vmem:[%s545 + $0x1e0] sm:$0xff]
                  %620 = vst [vmem:[%s546 + $0x120] sm:$0xff] %v619
                  %v621 = vld [vmem:[%s545 + $0x1e8] sm:$0xff]
                  %622 = vst [vmem:[%s546 + $0x128] sm:$0xff] %v621
                  %v623 = vld [vmem:[%s545 + $0x1f0] sm:$0xff]
                  %624 = vst [vmem:[%s546 + $0x130] sm:$0xff] %v623
                  %v625 = vld [vmem:[%s545 + $0x1f8] sm:$0xff]
                  %626 = vst [vmem:[%s546 + $0x138] sm:$0xff] %v625
                  %v627 = vld [vmem:[%s545 + $0x200] sm:$0xff]
                  %628 = vst [vmem:[%s546 + $0x140] sm:$0xff] %v627
                  %v629 = vld [vmem:[%s545 + $0x208] sm:$0xff]
                  %630 = vst [vmem:[%s546 + $0x148] sm:$0xff] %v629
                  %v631 = vld [vmem:[%s545 + $0x210] sm:$0xff]
                  %632 = vst [vmem:[%s546 + $0x150] sm:$0xff] %v631
                  %v633 = vld [vmem:[%s545 + $0x218] sm:$0xff]
                  %634 = vst [vmem:[%s546 + $0x158] sm:$0xff] %v633
                  %v635 = vld [vmem:[%s545 + $0x220] sm:$0xff]
                  %636 = vst [vmem:[%s546 + $0x160] sm:$0xff] %v635
                  %v637 = vld [vmem:[%s545 + $0x228] sm:$0xff]
                  %638 = vst [vmem:[%s546 + $0x168] sm:$0xff] %v637
                  %v639 = vld [vmem:[%s545 + $0x230] sm:$0xff]
                  %640 = vst [vmem:[%s546 + $0x170] sm:$0xff] %v639
                  %v641 = vld [vmem:[%s545 + $0x238] sm:$0xff]
                  %642 = vst [vmem:[%s546 + $0x178] sm:$0xff] %v641
                $region99: #{botrgcn_forward.5} parent=93 // loop_footer
                  %s544 = sadd.s32 1, %s540
                $region100: #{botrgcn_forward.5} parent=93 // loop_footer_branch
                  %539 = sbr.rel target = $region96
                $region101: #{botrgcn_forward.5} parent=93 // loop_exit
                  _
              $region94: #{botrgcn_forward.5} parent=78 // pred_fallthru
                _
              // Predicated region
              $region102: #{botrgcn_forward.5} parent=78 // pred_check
                _
              $region103: #{botrgcn_forward.5} parent=78 // pred_check_branch
                %644 = sbr.rel target = $region105
              $region104: #{botrgcn_forward.5} parent=78 // pred_region
                _
              $region105: #{botrgcn_forward.5} parent=78 // pred_fallthru
                _
            $region79: #{botrgcn_forward.5} parent=74 // pred_fallthru
              _
            // Predicated region
            $region80: #{botrgcn_forward.5} parent=74 // pred_check
              _
            $region81: #{botrgcn_forward.5} parent=74 // pred_check_branch
              %431 = sbr.rel target = $region83
            $region82: #{botrgcn_forward.5} parent=74 // pred_region
              loop: start=0, step=1, limit=1
              $region84: #{botrgcn_forward.5} parent=82 // loop_pre_header
                _
              $region85: #{botrgcn_forward.5} parent=82 // loop_header
                %s434 = sphi 0, %s438
                %p435 = scmp.ge.s32.totalorder %s434, 1
                %s439 = sphi %s425, %s425
                %s440 = sphi %s422, %s422
              $region86: #{botrgcn_forward.5} parent=82 // loop_header_branch
                %437 = sbr.rel (%p435) target = $region90
              $region87: #{botrgcn_forward.5} parent=82 // loop_body
                %v441 = vld [vmem:[%s439] sm:$0xff]
                %442 = vst [vmem:[%s440] sm:$0xff] %v441
                %v443 = vld [vmem:[%s439 + $0x8] sm:$0xff]
                %444 = vst [vmem:[%s440 + $0x8] sm:$0xff] %v443
                %v445 = vld [vmem:[%s439 + $0x10] sm:$0xff]
                %446 = vst [vmem:[%s440 + $0x10] sm:$0xff] %v445
                %v447 = vld [vmem:[%s439 + $0x18] sm:$0xff]
                %448 = vst [vmem:[%s440 + $0x18] sm:$0xff] %v447
                %v449 = vld [vmem:[%s439 + $0x20] sm:$0xff]
                %450 = vst [vmem:[%s440 + $0x20] sm:$0xff] %v449
                %v451 = vld [vmem:[%s439 + $0x28] sm:$0xff]
                %452 = vst [vmem:[%s440 + $0x28] sm:$0xff] %v451
                %v453 = vld [vmem:[%s439 + $0x30] sm:$0xff]
                %454 = vst [vmem:[%s440 + $0x30] sm:$0xff] %v453
                %v455 = vld [vmem:[%s439 + $0x38] sm:$0xff]
                %456 = vst [vmem:[%s440 + $0x38] sm:$0xff] %v455
                %v457 = vld [vmem:[%s439 + $0x40] sm:$0xff]
                %458 = vst [vmem:[%s440 + $0x40] sm:$0xff] %v457
                %v459 = vld [vmem:[%s439 + $0x48] sm:$0xff]
                %460 = vst [vmem:[%s440 + $0x48] sm:$0xff] %v459
                %v461 = vld [vmem:[%s439 + $0x50] sm:$0xff]
                %462 = vst [vmem:[%s440 + $0x50] sm:$0xff] %v461
                %v463 = vld [vmem:[%s439 + $0x58] sm:$0xff]
                %464 = vst [vmem:[%s440 + $0x58] sm:$0xff] %v463
                %v465 = vld [vmem:[%s439 + $0x60] sm:$0xff]
                %466 = vst [vmem:[%s440 + $0x60] sm:$0xff] %v465
                %v467 = vld [vmem:[%s439 + $0x68] sm:$0xff]
                %468 = vst [vmem:[%s440 + $0x68] sm:$0xff] %v467
                %v469 = vld [vmem:[%s439 + $0x70] sm:$0xff]
                %470 = vst [vmem:[%s440 + $0x70] sm:$0xff] %v469
                %v471 = vld [vmem:[%s439 + $0x78] sm:$0xff]
                %472 = vst [vmem:[%s440 + $0x78] sm:$0xff] %v471
                %v473 = vld [vmem:[%s439 + $0x80] sm:$0xff]
                %474 = vst [vmem:[%s440 + $0x80] sm:$0xff] %v473
                %v475 = vld [vmem:[%s439 + $0x88] sm:$0xff]
                %476 = vst [vmem:[%s440 + $0x88] sm:$0xff] %v475
                %v477 = vld [vmem:[%s439 + $0x90] sm:$0xff]
                %478 = vst [vmem:[%s440 + $0x90] sm:$0xff] %v477
                %v479 = vld [vmem:[%s439 + $0x98] sm:$0xff]
                %480 = vst [vmem:[%s440 + $0x98] sm:$0xff] %v479
                %v481 = vld [vmem:[%s439 + $0xa0] sm:$0xff]
                %482 = vst [vmem:[%s440 + $0xa0] sm:$0xff] %v481
                %v483 = vld [vmem:[%s439 + $0xa8] sm:$0xff]
                %484 = vst [vmem:[%s440 + $0xa8] sm:$0xff] %v483
                %v485 = vld [vmem:[%s439 + $0xb0] sm:$0xff]
                %486 = vst [vmem:[%s440 + $0xb0] sm:$0xff] %v485
                %v487 = vld [vmem:[%s439 + $0xb8] sm:$0xff]
                %488 = vst [vmem:[%s440 + $0xb8] sm:$0xff] %v487
                %v489 = vld [vmem:[%s439 + $0x180] sm:$0xff]
                %490 = vst [vmem:[%s440 + $0xc0] sm:$0xff] %v489
                %v491 = vld [vmem:[%s439 + $0x188] sm:$0xff]
                %492 = vst [vmem:[%s440 + $0xc8] sm:$0xff] %v491
                %v493 = vld [vmem:[%s439 + $0x190] sm:$0xff]
                %494 = vst [vmem:[%s440 + $0xd0] sm:$0xff] %v493
                %v495 = vld [vmem:[%s439 + $0x198] sm:$0xff]
                %496 = vst [vmem:[%s440 + $0xd8] sm:$0xff] %v495
                %v497 = vld [vmem:[%s439 + $0x1a0] sm:$0xff]
                %498 = vst [vmem:[%s440 + $0xe0] sm:$0xff] %v497
                %v499 = vld [vmem:[%s439 + $0x1a8] sm:$0xff]
                %500 = vst [vmem:[%s440 + $0xe8] sm:$0xff] %v499
                %v501 = vld [vmem:[%s439 + $0x1b0] sm:$0xff]
                %502 = vst [vmem:[%s440 + $0xf0] sm:$0xff] %v501
                %v503 = vld [vmem:[%s439 + $0x1b8] sm:$0xff]
                %504 = vst [vmem:[%s440 + $0xf8] sm:$0xff] %v503
                %v505 = vld [vmem:[%s439 + $0x1c0] sm:$0xff]
                %506 = vst [vmem:[%s440 + $0x100] sm:$0xff] %v505
                %v507 = vld [vmem:[%s439 + $0x1c8] sm:$0xff]
                %508 = vst [vmem:[%s440 + $0x108] sm:$0xff] %v507
                %v509 = vld [vmem:[%s439 + $0x1d0] sm:$0xff]
                %510 = vst [vmem:[%s440 + $0x110] sm:$0xff] %v509
                %v511 = vld [vmem:[%s439 + $0x1d8] sm:$0xff]
                %512 = vst [vmem:[%s440 + $0x118] sm:$0xff] %v511
                %v513 = vld [vmem:[%s439 + $0x1e0] sm:$0xff]
                %514 = vst [vmem:[%s440 + $0x120] sm:$0xff] %v513
                %v515 = vld [vmem:[%s439 + $0x1e8] sm:$0xff]
                %516 = vst [vmem:[%s440 + $0x128] sm:$0xff] %v515
                %v517 = vld [vmem:[%s439 + $0x1f0] sm:$0xff]
                %518 = vst [vmem:[%s440 + $0x130] sm:$0xff] %v517
                %v519 = vld [vmem:[%s439 + $0x1f8] sm:$0xff]
                %520 = vst [vmem:[%s440 + $0x138] sm:$0xff] %v519
                %v521 = vld [vmem:[%s439 + $0x200] sm:$0xff]
                %522 = vst [vmem:[%s440 + $0x140] sm:$0xff] %v521
                %v523 = vld [vmem:[%s439 + $0x208] sm:$0xff]
                %524 = vst [vmem:[%s440 + $0x148] sm:$0xff] %v523
                %v525 = vld [vmem:[%s439 + $0x210] sm:$0xff]
                %526 = vst [vmem:[%s440 + $0x150] sm:$0xff] %v525
                %v527 = vld [vmem:[%s439 + $0x218] sm:$0xff]
                %528 = vst [vmem:[%s440 + $0x158] sm:$0xff] %v527
                %v529 = vld [vmem:[%s439 + $0x220] sm:$0xff]
                %530 = vst [vmem:[%s440 + $0x160] sm:$0xff] %v529
                %v531 = vld [vmem:[%s439 + $0x228] sm:$0xff]
                %532 = vst [vmem:[%s440 + $0x168] sm:$0xff] %v531
                %v533 = vld [vmem:[%s439 + $0x230] sm:$0xff]
                %534 = vst [vmem:[%s440 + $0x170] sm:$0xff] %v533
                %v535 = vld [vmem:[%s439 + $0x238] sm:$0xff]
                %536 = vst [vmem:[%s440 + $0x178] sm:$0xff] %v535
              $region88: #{botrgcn_forward.5} parent=82 // loop_footer
                %s438 = sadd.s32 1, %s434
              $region89: #{botrgcn_forward.5} parent=82 // loop_footer_branch
                %433 = sbr.rel target = $region85
              $region90: #{botrgcn_forward.5} parent=82 // loop_exit
                _
            $region83: #{botrgcn_forward.5} parent=74 // pred_fallthru
              _
          $region75: #{botrgcn_forward.5} parent=70 // pred_fallthru
            _
          %645 = vnop
        $region71: #{botrgcn_forward.5} parent=39 // pred_fallthru
          _
      $region40: #{botrgcn_forward.5} parent=5 // pred_fallthru
        _
      %p646 = scmp.le.s32.totalorder 1, %s15
      %p647 = scmp.lt.s32.totalorder %s15, 3
      %p648 = pnand %p646, %p647
      %p649 = pneg %p648
      // Predicated region
      $region106: #{botrgcn_forward.5} parent=5 // pred_check
        _
      $region107: #{botrgcn_forward.5} parent=5 // pred_check_branch
        %651 = sbr.rel (%p648) target = $region109
      $region108: #{botrgcn_forward.5} parent=5 // pred_region
        %s652 = ssub.s32 %s15, 1
        %s653 = sand.u32 %s94, 1
        %s654 = sand.u32 %s94, 1
        %s655 = smul.addr %s654, 288
        %s656 = scalar_lea.vmem [#allocation3], %s655
        // Predicated region
        $region110: #{botrgcn_forward.5} parent=108 // pred_check
          %p657 = pneg %p107
        $region111: #{botrgcn_forward.5} parent=108 // pred_check_branch
          %659 = sbr.rel (%p657) target = $region113
        $region112: #{botrgcn_forward.5} parent=108 // pred_region
          _
        $region113: #{botrgcn_forward.5} parent=108 // pred_fallthru
          _
        %s660 = sand.u32 %s120, 1
        %s661 = sand.u32 %s120, 1
        %s662 = smul.addr %s661, 384
        %s663 = scalar_lea.vmem [#allocation4], %s662
        // Predicated region
        $region114: #{botrgcn_forward.5} parent=108 // pred_check
          %p664 = pneg %p133
        $region115: #{botrgcn_forward.5} parent=108 // pred_check_branch
          %666 = sbr.rel (%p664) target = $region117
        $region116: #{botrgcn_forward.5} parent=108 // pred_region
          _
        $region117: #{botrgcn_forward.5} parent=108 // pred_fallthru
          _
        %s667 = smul.u32 24, %s24
        %p668 = scmp.lt.s32.totalorder %s667, 47
        %s669 = scalar_select %p668, %s667, 47
        %s670 = smul.addr %s669, 4
        %s671 = scalar_lea.vmem %s0, %s670
        %p672 = pneg %p53
        %p673 = pneg %p50
        %s674 = smul.u32 48, %s25
        %p675 = scmp.lt.s32.totalorder %s674, 47
        %s676 = scalar_select %p675, %s674, 47
        %s677 = smul.addr %s676, 4
        %s678 = scalar_lea.vmem %s1, %s677
        %p679 = pneg %p79
        %p680 = pneg %p76
        %s681 = sand.u32 %s94, 1
        %s682 = sand.u32 %s94, 1
        %s683 = smul.addr %s682, 288
        %s684 = scalar_lea.vmem [#allocation3], %s683
        %p685 = pneg %p107
        %p686 = pneg %p104
        %s687 = sand.u32 %s120, 1
        %s688 = sand.u32 %s120, 1
        %s689 = smul.addr %s688, 384
        %s690 = scalar_lea.vmem [#allocation4], %s689
        %p691 = pneg %p133
        %p692 = pneg %p130
        %p693 = pneg %p154
        %p694 = pneg %p151
        %p695 = pneg %p175
        %p696 = pneg %p172
        %p697 = pneg %p196
        %p698 = pneg %p193
        %p699 = pneg %p217
        %p700 = pneg %p214
        %p701 = pneg %p238
        %p702 = pneg %p235
        %p703 = pneg %p264
        %p704 = pneg %p261
        %s705 = smul.u32 12, %s24
        %p706 = scmp.lt.s32.totalorder %s705, 23
        %s707 = scalar_select %p706, %s705, 23
        %s708 = smul.addr %s707, 8
        %s709 = scalar_lea.vmem %s9, %s708
        %s710 = smul.u32 24, %s24
        %p711 = scmp.lt.s32.totalorder %s710, 47
        %s712 = scalar_select %p711, %s710, 47
        %s713 = smul.addr %s712, 4
        %s714 = scalar_lea.vmem %s0, %s713
        %s715 = smul.u32 24, %s24
        %s716 = smul.u32 48, %s25
        %p717 = scmp.lt.s32.totalorder %s716, 47
        %s718 = scalar_select %p717, %s716, 47
        %s719 = smul.addr %s718, 4
        %s720 = scalar_lea.vmem %s1, %s719
        %s721 = smul.u32 48, %s25
        %s722 = smul.u32 6, %s24
        %s723 = smul.u32 3, %s25
        %s724 = smul.u32 24, %s24
        %s725 = smul.u32 12, %s24
        %p726 = scmp.lt.s32.totalorder %s725, 23
        %s727 = scalar_select %p726, %s725, 23
        %s728 = smul.addr %s727, 8
        %s729 = scalar_lea.vmem %s9, %s728
        %s730 = smul.u32 12, %s24
        %p732 = scmp.eq.s32.totalorder %s25, 0
        // Predicated region
        $region118: #{botrgcn_forward.5} parent=108 // pred_check
          %p733 = pneg %p732
        $region119: #{botrgcn_forward.5} parent=108 // pred_check_branch
          %735 = sbr.rel (%p733) target = $region121
        $region120: #{botrgcn_forward.5} parent=108 // pred_region
          %vm736 = vcmask 523264
          %737 = vst.msk [vmem:[#allocation2] sm:$0xff] %vm736, 0.0
          %738 = vst.msk [vmem:[#allocation2 + $0x8] sm:$0xff] %vm736, 0.0
          %739 = vst.msk [vmem:[#allocation2 + $0x10] sm:$0xff] %vm736, 0.0
          %740 = vst.msk [vmem:[#allocation2 + $0x18] sm:$0xff] %vm736, 0.0
          %741 = vst.msk [vmem:[#allocation2 + $0x20] sm:$0xff] %vm736, 0.0
          %742 = vst.msk [vmem:[#allocation2 + $0x28] sm:$0xff] %vm736, 0.0
          %743 = vst.msk [vmem:[#allocation2 + $0x30] sm:$0xff] %vm736, 0.0
          %744 = vst.msk [vmem:[#allocation2 + $0x38] sm:$0xff] %vm736, 0.0
          %745 = vst.msk [vmem:[#allocation2 + $0x40] sm:$0xff] %vm736, 0.0
          %746 = vst.msk [vmem:[#allocation2 + $0x48] sm:$0xff] %vm736, 0.0
          %747 = vst.msk [vmem:[#allocation2 + $0x50] sm:$0xff] %vm736, 0.0
          %748 = vst.msk [vmem:[#allocation2 + $0x58] sm:$0xff] %vm736, 0.0
          %749 = vst.msk [vmem:[#allocation2 + $0x60] sm:$0xff] %vm736, 0.0
          %750 = vst.msk [vmem:[#allocation2 + $0x68] sm:$0xff] %vm736, 0.0
          %751 = vst.msk [vmem:[#allocation2 + $0x70] sm:$0xff] %vm736, 0.0
          %752 = vst.msk [vmem:[#allocation2 + $0x78] sm:$0xff] %vm736, 0.0
          %753 = vst.msk [vmem:[#allocation2 + $0x80] sm:$0xff] %vm736, 0.0
          %754 = vst.msk [vmem:[#allocation2 + $0x88] sm:$0xff] %vm736, 0.0
          %755 = vst.msk [vmem:[#allocation2 + $0x90] sm:$0xff] %vm736, 0.0
          %756 = vst.msk [vmem:[#allocation2 + $0x98] sm:$0xff] %vm736, 0.0
          %757 = vst.msk [vmem:[#allocation2 + $0xa0] sm:$0xff] %vm736, 0.0
          %758 = vst.msk [vmem:[#allocation2 + $0xa8] sm:$0xff] %vm736, 0.0
          %759 = vst.msk [vmem:[#allocation2 + $0xb0] sm:$0xff] %vm736, 0.0
          %760 = vst.msk [vmem:[#allocation2 + $0xb8] sm:$0xff] %vm736, 0.0
          %761 = vst.msk [vmem:[#allocation2 + $0xc0] sm:$0xff] %vm736, 0.0
          %762 = vst.msk [vmem:[#allocation2 + $0xc8] sm:$0xff] %vm736, 0.0
          %763 = vst.msk [vmem:[#allocation2 + $0xd0] sm:$0xff] %vm736, 0.0
          %764 = vst.msk [vmem:[#allocation2 + $0xd8] sm:$0xff] %vm736, 0.0
          %765 = vst.msk [vmem:[#allocation2 + $0xe0] sm:$0xff] %vm736, 0.0
          %766 = vst.msk [vmem:[#allocation2 + $0xe8] sm:$0xff] %vm736, 0.0
          %767 = vst.msk [vmem:[#allocation2 + $0xf0] sm:$0xff] %vm736, 0.0
          %768 = vst.msk [vmem:[#allocation2 + $0xf8] sm:$0xff] %vm736, 0.0
          %769 = vst.msk [vmem:[#allocation2 + $0x100] sm:$0xff] %vm736, 0.0
          %770 = vst.msk [vmem:[#allocation2 + $0x108] sm:$0xff] %vm736, 0.0
          %771 = vst.msk [vmem:[#allocation2 + $0x110] sm:$0xff] %vm736, 0.0
          %772 = vst.msk [vmem:[#allocation2 + $0x118] sm:$0xff] %vm736, 0.0
          %773 = vst.msk [vmem:[#allocation2 + $0x120] sm:$0xff] %vm736, 0.0
          %774 = vst.msk [vmem:[#allocation2 + $0x128] sm:$0xff] %vm736, 0.0
          %775 = vst.msk [vmem:[#allocation2 + $0x130] sm:$0xff] %vm736, 0.0
          %776 = vst.msk [vmem:[#allocation2 + $0x138] sm:$0xff] %vm736, 0.0
          %777 = vst.msk [vmem:[#allocation2 + $0x140] sm:$0xff] %vm736, 0.0
          %778 = vst.msk [vmem:[#allocation2 + $0x148] sm:$0xff] %vm736, 0.0
          %779 = vst.msk [vmem:[#allocation2 + $0x150] sm:$0xff] %vm736, 0.0
          %780 = vst.msk [vmem:[#allocation2 + $0x158] sm:$0xff] %vm736, 0.0
          %781 = vst.msk [vmem:[#allocation2 + $0x160] sm:$0xff] %vm736, 0.0
          %782 = vst.msk [vmem:[#allocation2 + $0x168] sm:$0xff] %vm736, 0.0
          %783 = vst.msk [vmem:[#allocation2 + $0x170] sm:$0xff] %vm736, 0.0
          %784 = vst.msk [vmem:[#allocation2 + $0x178] sm:$0xff] %vm736, 0.0
        $region121: #{botrgcn_forward.5} parent=108 // pred_fallthru
          _
        %v785 = vld [vmem:[%s656] sm:$0xff]
        %v786 = vld [vmem:[%s656 + $0x8] sm:$0xff]
        %v787 = vld [vmem:[%s656 + $0x10] sm:$0xff]
        %v788 = vld [vmem:[%s656 + $0x18] sm:$0xff]
        %v789 = vld [vmem:[%s656 + $0x20] sm:$0xff]
        %v790 = vld [vmem:[%s656 + $0x28] sm:$0xff]
        %v791 = vld [vmem:[%s656 + $0x30] sm:$0xff]
        %v792 = vld [vmem:[%s656 + $0x38] sm:$0xff]
        %v793 = vld [vmem:[%s656 + $0x40] sm:$0xff]
        %v794 = vld [vmem:[%s656 + $0x48] sm:$0xff]
        %v795 = vld [vmem:[%s656 + $0x50] sm:$0xff]
        %v796 = vld [vmem:[%s656 + $0x58] sm:$0xff]
        %v797 = vld [vmem:[%s656 + $0x60] sm:$0xff]
        %v798 = vld [vmem:[%s656 + $0x68] sm:$0xff]
        %v799 = vld [vmem:[%s656 + $0x70] sm:$0xff]
        %v800 = vld [vmem:[%s656 + $0x78] sm:$0xff]
        %v801 = vld [vmem:[%s656 + $0x80] sm:$0xff]
        %v802 = vld [vmem:[%s656 + $0x88] sm:$0xff]
        %v803 = vld [vmem:[%s656 + $0x90] sm:$0xff]
        %v804 = vld [vmem:[%s656 + $0x98] sm:$0xff]
        %v805 = vld [vmem:[%s656 + $0xa0] sm:$0xff]
        %v806 = vld [vmem:[%s656 + $0xa8] sm:$0xff]
        %v807 = vld [vmem:[%s656 + $0xb0] sm:$0xff]
        %v808 = vld [vmem:[%s656 + $0xb8] sm:$0xff]
        %v809 = vld [vmem:[%s656 + $0xc0] sm:$0xff]
        %v810 = vld [vmem:[%s656 + $0xc8] sm:$0xff]
        %v811 = vld [vmem:[%s656 + $0xd0] sm:$0xff]
        %v812 = vld [vmem:[%s656 + $0xd8] sm:$0xff]
        %v813 = vld [vmem:[%s656 + $0xe0] sm:$0xff]
        %v814 = vld [vmem:[%s656 + $0xe8] sm:$0xff]
        %v815 = vld [vmem:[%s656 + $0xf0] sm:$0xff]
        %v816 = vld [vmem:[%s656 + $0xf8] sm:$0xff]
        %v817 = vld [vmem:[%s656 + $0x100] sm:$0xff]
        %v818 = vld [vmem:[%s656 + $0x108] sm:$0xff]
        %v819 = vld [vmem:[%s656 + $0x110] sm:$0xff]
        %v820 = vld [vmem:[%s656 + $0x118] sm:$0xff]
        %v821 = vunpack.c.l.s8.bf16 %v785
        %v822 = vunpack.c.l.s8.bf16 %v786
        %v823 = vunpack.c.l.s8.bf16 %v787
        %v824 = vunpack.c.h.s8.bf16 %v785
        %v825 = vunpack.c.h.s8.bf16 %v786
        %v826 = vunpack.c.h.s8.bf16 %v787
        %v827 = vunpack.c.l.s8.bf16 %v788
        %v828 = vunpack.c.l.s8.bf16 %v789
        %v829 = vunpack.c.l.s8.bf16 %v790
        %v830 = vunpack.c.h.s8.bf16 %v788
        %v831 = vunpack.c.h.s8.bf16 %v789
        %v832 = vunpack.c.h.s8.bf16 %v790
        %v833 = vunpack.c.l.s8.bf16 %v791
        %v834 = vunpack.c.l.s8.bf16 %v792
        %v835 = vunpack.c.l.s8.bf16 %v793
        %v836 = vunpack.c.h.s8.bf16 %v791
        %v837 = vunpack.c.h.s8.bf16 %v792
        %v838 = vunpack.c.h.s8.bf16 %v793
        %v839 = vunpack.c.l.s8.bf16 %v794
        %v840 = vunpack.c.l.s8.bf16 %v795
        %v841 = vunpack.c.l.s8.bf16 %v796
        %v842 = vunpack.c.h.s8.bf16 %v794
        %v843 = vunpack.c.h.s8.bf16 %v795
        %v844 = vunpack.c.h.s8.bf16 %v796
        %v845 = vunpack.c.l.s8.bf16 %v797
        %v846 = vunpack.c.l.s8.bf16 %v798
        %v847 = vunpack.c.l.s8.bf16 %v799
        %v848 = vunpack.c.h.s8.bf16 %v797
        %v849 = vunpack.c.h.s8.bf16 %v798
        %v850 = vunpack.c.h.s8.bf16 %v799
        %v851 = vunpack.c.l.s8.bf16 %v800
        %v852 = vunpack.c.l.s8.bf16 %v801
        %v853 = vunpack.c.l.s8.bf16 %v802
        %v854 = vunpack.c.h.s8.bf16 %v800
        %v855 = vunpack.c.h.s8.bf16 %v801
        %v856 = vunpack.c.h.s8.bf16 %v802
        %v857 = vunpack.c.l.s8.bf16 %v803
        %v858 = vunpack.c.l.s8.bf16 %v804
        %v859 = vunpack.c.l.s8.bf16 %v805
        %v860 = vunpack.c.h.s8.bf16 %v803
        %v861 = vunpack.c.h.s8.bf16 %v804
        %v862 = vunpack.c.h.s8.bf16 %v805
        %v863 = vunpack.c.l.s8.bf16 %v806
        %v864 = vunpack.c.l.s8.bf16 %v807
        %v865 = vunpack.c.l.s8.bf16 %v808
        %v866 = vunpack.c.h.s8.bf16 %v806
        %v867 = vunpack.c.h.s8.bf16 %v807
        %v868 = vunpack.c.h.s8.bf16 %v808
        %v869 = vunpack.c.l.s8.bf16 %v809
        %v870 = vunpack.c.l.s8.bf16 %v810
        %v871 = vunpack.c.l.s8.bf16 %v811
        %v872 = vunpack.c.h.s8.bf16 %v809
        %v873 = vunpack.c.h.s8.bf16 %v810
        %v874 = vunpack.c.h.s8.bf16 %v811
        %v875 = vunpack.c.l.s8.bf16 %v812
        %v876 = vunpack.c.l.s8.bf16 %v813
        %v877 = vunpack.c.l.s8.bf16 %v814
        %v878 = vunpack.c.h.s8.bf16 %v812
        %v879 = vunpack.c.h.s8.bf16 %v813
        %v880 = vunpack.c.h.s8.bf16 %v814
        %v881 = vunpack.c.l.s8.bf16 %v815
        %v882 = vunpack.c.l.s8.bf16 %v816
        %v883 = vunpack.c.l.s8.bf16 %v817
        %v884 = vunpack.c.h.s8.bf16 %v815
        %v885 = vunpack.c.h.s8.bf16 %v816
        %v886 = vunpack.c.h.s8.bf16 %v817
        %v887 = vunpack.c.l.s8.bf16 %v818
        %v888 = vunpack.c.l.s8.bf16 %v819
        %v889 = vunpack.c.l.s8.bf16 %v820
        %v890 = vunpack.c.h.s8.bf16 %v818
        %v891 = vunpack.c.h.s8.bf16 %v819
        %v892 = vunpack.c.h.s8.bf16 %v820
        %v893 = vld [vmem:[%s720] sm:$0xf]
        %v894 = vld [vmem:[%s720 + $0x4] sm:$0xf]
        %v895 = vld [vmem:[%s720 + $0x8] sm:$0xf]
        %v896 = vld [vmem:[%s720 + $0xc] sm:$0xf]
        %v897 = vld [vmem:[%s720 + $0x10] sm:$0xf]
        %v898 = vld [vmem:[%s720 + $0x14] sm:$0xf]
        %v899 = vld [vmem:[%s720 + $0x18] sm:$0xf]
        %v900 = vld [vmem:[%s720 + $0x1c] sm:$0xf]
        %v901 = vld [vmem:[%s720 + $0x20] sm:$0xf]
        %v902 = vld [vmem:[%s720 + $0x24] sm:$0xf]
        %v903 = vld [vmem:[%s720 + $0x28] sm:$0xf]
        %v904 = vld [vmem:[%s720 + $0x2c] sm:$0xf]
        %v905 = vld [vmem:[%s720 + $0x30] sm:$0xf]
        %v906 = vld [vmem:[%s720 + $0x34] sm:$0xf]
        %v907 = vld [vmem:[%s720 + $0x38] sm:$0xf]
        %v908 = vld [vmem:[%s720 + $0x3c] sm:$0xf]
        %v909 = vld [vmem:[%s720 + $0x40] sm:$0xf]
        %v910 = vld [vmem:[%s720 + $0x44] sm:$0xf]
        %v911 = vld [vmem:[%s720 + $0x48] sm:$0xf]
        %v912 = vld [vmem:[%s720 + $0x4c] sm:$0xf]
        %v913 = vld [vmem:[%s720 + $0x50] sm:$0xf]
        %v914 = vld [vmem:[%s720 + $0x54] sm:$0xf]
        %v915 = vld [vmem:[%s720 + $0x58] sm:$0xf]
        %v916 = vld [vmem:[%s720 + $0x5c] sm:$0xf]
        %v917 = vld [vmem:[%s720 + $0x60] sm:$0xf]
        %v918 = vld [vmem:[%s720 + $0x64] sm:$0xf]
        %v919 = vld [vmem:[%s720 + $0x68] sm:$0xf]
        %v920 = vld [vmem:[%s720 + $0x6c] sm:$0xf]
        %v921 = vld [vmem:[%s720 + $0x70] sm:$0xf]
        %v922 = vld [vmem:[%s720 + $0x74] sm:$0xf]
        %v923 = vld [vmem:[%s720 + $0x78] sm:$0xf]
        %v924 = vld [vmem:[%s720 + $0x7c] sm:$0xf]
        %v925 = vld [vmem:[%s720 + $0x80] sm:$0xf]
        %v926 = vld [vmem:[%s720 + $0x84] sm:$0xf]
        %v927 = vld [vmem:[%s720 + $0x88] sm:$0xf]
        %v928 = vld [vmem:[%s720 + $0x8c] sm:$0xf]
        %v929 = vld [vmem:[%s720 + $0x90] sm:$0xf]
        %v930 = vld [vmem:[%s720 + $0x94] sm:$0xf]
        %v931 = vld [vmem:[%s720 + $0x98] sm:$0xf]
        %v932 = vld [vmem:[%s720 + $0x9c] sm:$0xf]
        %v933 = vld [vmem:[%s720 + $0xa0] sm:$0xf]
        %v934 = vld [vmem:[%s720 + $0xa4] sm:$0xf]
        %v935 = vld [vmem:[%s720 + $0xa8] sm:$0xf]
        %v936 = vld [vmem:[%s720 + $0xac] sm:$0xf]
        %v937 = vld [vmem:[%s720 + $0xb0] sm:$0xf]
        %v938 = vld [vmem:[%s720 + $0xb4] sm:$0xf]
        %v939 = vld [vmem:[%s720 + $0xb8] sm:$0xf]
        %v940 = vld [vmem:[%s720 + $0xbc] sm:$0xf]
        %v941 = vld [vmem:[#allocation2] sm:$0xff]
        %v942 = vld [vmem:[#allocation2 + $0x8] sm:$0xff]
        %v943 = vld [vmem:[#allocation2 + $0x10] sm:$0xff]
        %v944 = vld [vmem:[#allocation2 + $0x18] sm:$0xff]
        %v945 = vld [vmem:[#allocation2 + $0x20] sm:$0xff]
        %v946 = vld [vmem:[#allocation2 + $0x28] sm:$0xff]
        %v947 = vld [vmem:[#allocation2 + $0x30] sm:$0xff]
        %v948 = vld [vmem:[#allocation2 + $0x38] sm:$0xff]
        %v949 = vld [vmem:[#allocation2 + $0x40] sm:$0xff]
        %v950 = vld [vmem:[#allocation2 + $0x48] sm:$0xff]
        %v951 = vld [vmem:[#allocation2 + $0x50] sm:$0xff]
        %v952 = vld [vmem:[#allocation2 + $0x58] sm:$0xff]
        %v953 = vld [vmem:[#allocation2 + $0x60] sm:$0xff]
        %v954 = vld [vmem:[#allocation2 + $0x68] sm:$0xff]
        %v955 = vld [vmem:[#allocation2 + $0x70] sm:$0xff]
        %v956 = vld [vmem:[#allocation2 + $0x78] sm:$0xff]
        %v957 = vld [vmem:[#allocation2 + $0x80] sm:$0xff]
        %v958 = vld [vmem:[#allocation2 + $0x88] sm:$0xff]
        %v959 = vld [vmem:[#allocation2 + $0x90] sm:$0xff]
        %v960 = vld [vmem:[#allocation2 + $0x98] sm:$0xff]
        %v961 = vld [vmem:[#allocation2 + $0xa0] sm:$0xff]
        %v962 = vld [vmem:[#allocation2 + $0xa8] sm:$0xff]
        %v963 = vld [vmem:[#allocation2 + $0xb0] sm:$0xff]
        %v964 = vld [vmem:[#allocation2 + $0xb8] sm:$0xff]
        %v965 = vld [vmem:[#allocation2 + $0xc0] sm:$0xff]
        %v966 = vld [vmem:[#allocation2 + $0xc8] sm:$0xff]
        %v967 = vld [vmem:[#allocation2 + $0xd0] sm:$0xff]
        %v968 = vld [vmem:[#allocation2 + $0xd8] sm:$0xff]
        %v969 = vld [vmem:[#allocation2 + $0xe0] sm:$0xff]
        %v970 = vld [vmem:[#allocation2 + $0xe8] sm:$0xff]
        %v971 = vld [vmem:[#allocation2 + $0xf0] sm:$0xff]
        %v972 = vld [vmem:[#allocation2 + $0xf8] sm:$0xff]
        %v973 = vld [vmem:[#allocation2 + $0x100] sm:$0xff]
        %v974 = vld [vmem:[#allocation2 + $0x108] sm:$0xff]
        %v975 = vld [vmem:[#allocation2 + $0x110] sm:$0xff]
        %v976 = vld [vmem:[#allocation2 + $0x118] sm:$0xff]
        %v977 = vld [vmem:[#allocation2 + $0x120] sm:$0xff]
        %v978 = vld [vmem:[#allocation2 + $0x128] sm:$0xff]
        %v979 = vld [vmem:[#allocation2 + $0x130] sm:$0xff]
        %v980 = vld [vmem:[#allocation2 + $0x138] sm:$0xff]
        %v981 = vld [vmem:[#allocation2 + $0x140] sm:$0xff]
        %v982 = vld [vmem:[#allocation2 + $0x148] sm:$0xff]
        %v983 = vld [vmem:[#allocation2 + $0x150] sm:$0xff]
        %v984 = vld [vmem:[#allocation2 + $0x158] sm:$0xff]
        %v985 = vld [vmem:[#allocation2 + $0x160] sm:$0xff]
        %v986 = vld [vmem:[#allocation2 + $0x168] sm:$0xff]
        %v987 = vld [vmem:[#allocation2 + $0x170] sm:$0xff]
        %v988 = vld [vmem:[#allocation2 + $0x178] sm:$0xff]
        %v1037 = vunpack.c.l.b16 %v893
        %v1038 = vunpack.c.l.b16 %v894
        %v1039 = vunpack.c.l.b16 %v895
        %v1040 = vunpack.c.l.b16 %v896
        %v1041 = vunpack.c.l.b16 %v897
        %v1042 = vunpack.c.l.b16 %v898
        %v1043 = vunpack.c.l.b16 %v899
        %v1044 = vunpack.c.l.b16 %v900
        %v1045 = vunpack.c.l.b16 %v901
        %v1046 = vunpack.c.l.b16 %v902
        %v1047 = vunpack.c.l.b16 %v903
        %v1048 = vunpack.c.l.b16 %v904
        %v1049 = vunpack.c.l.b16 %v905
        %v1050 = vunpack.c.l.b16 %v906
        %v1051 = vunpack.c.l.b16 %v907
        %v1052 = vunpack.c.l.b16 %v908
        %v1053 = vunpack.c.l.b16 %v909
        %v1054 = vunpack.c.l.b16 %v910
        %v1055 = vunpack.c.l.b16 %v911
        %v1056 = vunpack.c.l.b16 %v912
        %v1057 = vunpack.c.l.b16 %v913
        %v1058 = vunpack.c.l.b16 %v914
        %v1059 = vunpack.c.l.b16 %v915
        %v1060 = vunpack.c.l.b16 %v916
        %v1061 = vunpack.c.l.b16 %v917
        %v1062 = vunpack.c.l.b16 %v918
        %v1063 = vunpack.c.l.b16 %v919
        %v1064 = vunpack.c.l.b16 %v920
        %v1065 = vunpack.c.l.b16 %v921
        %v1066 = vunpack.c.l.b16 %v922
        %v1067 = vunpack.c.l.b16 %v923
        %v1068 = vunpack.c.l.b16 %v924
        %v1069 = vunpack.c.l.b16 %v925
        %v1070 = vunpack.c.l.b16 %v926
        %v1071 = vunpack.c.l.b16 %v927
        %v1072 = vunpack.c.l.b16 %v928
        %v1073 = vunpack.c.l.b16 %v929
        %v1074 = vunpack.c.l.b16 %v930
        %v1075 = vunpack.c.l.b16 %v931
        %v1076 = vunpack.c.l.b16 %v932
        %v1077 = vunpack.c.l.b16 %v933
        %v1078 = vunpack.c.l.b16 %v934
        %v1079 = vunpack.c.l.b16 %v935
        %v1080 = vunpack.c.l.b16 %v936
        %v1081 = vunpack.c.l.b16 %v937
        %v1082 = vunpack.c.l.b16 %v938
        %v1083 = vunpack.c.l.b16 %v939
        %v1084 = vunpack.c.l.b16 %v940
        %v1085 = vpack.c.b16 %v1038, %v1037
        %v1086 = vpack.c.b16 %v1040, %v1039
        %v1087 = vpack.c.b16 %v1042, %v1041
        %v1088 = vpack.c.b16 %v1044, %v1043
        %v1089 = vpack.c.b16 %v1046, %v1045
        %v1090 = vpack.c.b16 %v1048, %v1047
        %v1091 = vpack.c.b16 %v1050, %v1049
        %v1092 = vpack.c.b16 %v1052, %v1051
        %v1093 = vpack.c.b16 %v1054, %v1053
        %v1094 = vpack.c.b16 %v1056, %v1055
        %v1095 = vpack.c.b16 %v1058, %v1057
        %v1096 = vpack.c.b16 %v1060, %v1059
        %v1097 = vpack.c.b16 %v1062, %v1061
        %v1098 = vpack.c.b16 %v1064, %v1063
        %v1099 = vpack.c.b16 %v1066, %v1065
        %v1100 = vpack.c.b16 %v1068, %v1067
        %v1101 = vpack.c.b16 %v1070, %v1069
        %v1102 = vpack.c.b16 %v1072, %v1071
        %v1103 = vpack.c.b16 %v1074, %v1073
        %v1104 = vpack.c.b16 %v1076, %v1075
        %v1105 = vpack.c.b16 %v1078, %v1077
        %v1106 = vpack.c.b16 %v1080, %v1079
        %v1107 = vpack.c.b16 %v1082, %v1081
        %v1108 = vpack.c.b16 %v1084, %v1083
        %1133 = vmatprep.subr.bf16.mxu0 0
        %1134 = vmatpush1.bf16.msra.mxu0 %v1085
        %1135 = vmatprep.subr.bf16.mxu0 0
        %1136 = vmatpush1.bf16.msra.mxu0 %v1086
        %1137 = vmatprep.subr.bf16.mxu0 0
        %1138 = vmatpush1.bf16.msra.mxu0 %v1087
        %1139 = vmatprep.subr.bf16.mxu0 0
        %1140 = vmatpush1.bf16.msra.mxu0 %v1088
        %1141 = vmatprep.subr.bf16.mxu0 0
        %1142 = vmatpush1.bf16.msra.mxu0 %v1089
        %1143 = vmatprep.subr.bf16.mxu0 0
        %1144 = vmatpush1.bf16.msra.mxu0 %v1090
        %1145 = vmatprep.subr.bf16.mxu0 0
        %1146 = vmatpush1.bf16.msra.mxu0 %v1091
        %1147 = vmatprep.subr.bf16.mxu0 0
        %1148 = vmatpush1.bf16.msra.mxu0 %v1092
        %1149 = vmatprep.subr.bf16.mxu0 0
        %1150 = vmatpush1.bf16.msra.mxu0 %v1093
        %1151 = vmatprep.subr.bf16.mxu0 0
        %1152 = vmatpush1.bf16.msra.mxu0 %v1094
        %1153 = vmatprep.subr.bf16.mxu0 0
        %1154 = vmatpush1.bf16.msra.mxu0 %v1095
        %1155 = vmatprep.subr.bf16.mxu0 0
        %1156 = vmatpush1.bf16.msra.mxu0 %v1096
        %1157 = vmatprep.subr.bf16.mxu0 0
        %1158 = vmatpush1.bf16.msra.mxu0 %v1097
        %1159 = vmatprep.subr.bf16.mxu0 0
        %1160 = vmatpush1.bf16.msra.mxu0 %v1098
        %1161 = vmatprep.subr.bf16.mxu0 0
        %1162 = vmatpush1.bf16.msra.mxu0 %v1099
        %1163 = vmatprep.subr.bf16.mxu0 0
        %1164 = vmatpush1.bf16.msra.mxu0 %v1100
        %1165 = vmatprep.mubr.bf16.mxu0 %v822
        %1166 = vmatmul.mubr.bf16.gmra.mrb[0].mxu0 %v821
        %v1167 = vpop.f32.mrb[0].mxu0
        %v1168 = vadd.f32 0.0, %v1167
        %v1169 = vpop.f32.mrb[0].mxu0
        %v1170 = vpop.f32.mrb[0].mxu0
        %v1171 = vadd.f32 0.0, %v1170
        %v1172 = vpop.f32.mrb[0].mxu0
        %1173 = vmatprep.mubr.bf16.mxu0 %v825
        %1174 = vmatmul.mubr.bf16.gmra.mrb[0].mxu0 %v824
        %v1175 = vpop.f32.mrb[0].mxu0
        %v1176 = vadd.f32 0.0, %v1175
        %v1177 = vpop.f32.mrb[0].mxu0
        %v1178 = vpop.f32.mrb[0].mxu0
        %v1179 = vadd.f32 0.0, %v1178
        %v1180 = vpop.f32.mrb[0].mxu0
        %1181 = vmatprep.mubr.bf16.mxu0 %v828
        %1182 = vmatmul.mubr.bf16.gmra.mrb[0].mxu0 %v827
        %v1183 = vpop.f32.mrb[0].mxu0
        %v1184 = vadd.f32 0.0, %v1183
        %v1185 = vpop.f32.mrb[0].mxu0
        %v1186 = vpop.f32.mrb[0].mxu0
        %v1187 = vadd.f32 0.0, %v1186
        %v1188 = vpop.f32.mrb[0].mxu0
        %1189 = vmatprep.mubr.bf16.mxu0 %v831
        %1190 = vmatmul.mubr.bf16.gmra.mrb[0].mxu0 %v830
        %v1191 = vpop.f32.mrb[0].mxu0
        %v1192 = vadd.f32 0.0, %v1191
        %v1193 = vpop.f32.mrb[0].mxu0
        %v1194 = vpop.f32.mrb[0].mxu0
        %v1195 = vadd.f32 0.0, %v1194
        %v1196 = vpop.f32.mrb[0].mxu0
        %1197 = vmatprep.mubr.bf16.mxu0 %v834
        %1198 = vmatmul.mubr.bf16.gmra.mrb[0].mxu0 %v833
        %v1199 = vpop.f32.mrb[0].mxu0
        %v1200 = vadd.f32 0.0, %v1199
        %v1201 = vpop.f32.mrb[0].mxu0
        %v1202 = vpop.f32.mrb[0].mxu0
        %v1203 = vadd.f32 0.0, %v1202
        %v1204 = vpop.f32.mrb[0].mxu0
        %1205 = vmatprep.mubr.bf16.mxu0 %v837
        %1206 = vmatmul.mubr.bf16.gmra.mrb[0].mxu0 %v836
        %v1207 = vpop.f32.mrb[0].mxu0
        %v1208 = vadd.f32 0.0, %v1207
        %v1209 = vpop.f32.mrb[0].mxu0
        %v1210 = vpop.f32.mrb[0].mxu0
        %v1211 = vadd.f32 0.0, %v1210
        %v1212 = vpop.f32.mrb[0].mxu0
        %1213 = vmatprep.mubr.bf16.mxu0 %v840
        %1214 = vmatmul.mubr.bf16.gmra.mrb[0].mxu0 %v839
        %v1215 = vpop.f32.mrb[0].mxu0
        %v1216 = vadd.f32 0.0, %v1215
        %v1217 = vpop.f32.mrb[0].mxu0
        %v1218 = vpop.f32.mrb[0].mxu0
        %v1219 = vadd.f32 0.0, %v1218
        %v1220 = vpop.f32.mrb[0].mxu0
        %1221 = vmatprep.mubr.bf16.mxu0 %v843
        %1222 = vmatmul.mubr.bf16.gmra.mrb[0].mxu0 %v842
        %v1223 = vpop.f32.mrb[0].mxu0
        %v1224 = vadd.f32 0.0, %v1223
        %v1225 = vpop.f32.mrb[0].mxu0
        %v1226 = vpop.f32.mrb[0].mxu0
        %v1227 = vadd.f32 0.0, %v1226
        %v1228 = vpop.f32.mrb[0].mxu0
        %1229 = vmatprep.mubr.bf16.mxu0 %v846
        %1230 = vmatmul.mubr.bf16.gmra.mrb[0].mxu0 %v845
        %v1231 = vpop.f32.mrb[0].mxu0
        %v1232 = vadd.f32 0.0, %v1231
        %v1233 = vpop.f32.mrb[0].mxu0
        %v1234 = vpop.f32.mrb[0].mxu0
        %v1235 = vadd.f32 0.0, %v1234
        %v1236 = vpop.f32.mrb[0].mxu0
        %1237 = vmatprep.mubr.bf16.mxu0 %v849
        %1238 = vmatmul.mubr.bf16.gmra.mrb[0].mxu0 %v848
        %v1239 = vpop.f32.mrb[0].mxu0
        %v1240 = vadd.f32 0.0, %v1239
        %v1241 = vpop.f32.mrb[0].mxu0
        %v1242 = vpop.f32.mrb[0].mxu0
        %v1243 = vadd.f32 0.0, %v1242
        %v1244 = vpop.f32.mrb[0].mxu0
        %1245 = vmatprep.mubr.bf16.mxu0 %v852
        %1246 = vmatmul.mubr.bf16.gmra.mrb[0].mxu0 %v851
        %v1247 = vpop.f32.mrb[0].mxu0
        %v1248 = vadd.f32 0.0, %v1247
        %v1249 = vpop.f32.mrb[0].mxu0
        %v1250 = vpop.f32.mrb[0].mxu0
        %v1251 = vadd.f32 0.0, %v1250
        %v1252 = vpop.f32.mrb[0].mxu0
        %1253 = vmatprep.mubr.bf16.mxu0 %v855
        %1254 = vmatmul.mubr.bf16.gmra.mrb[0].mxu0 %v854
        %v1255 = vpop.f32.mrb[0].mxu0
        %v1256 = vadd.f32 0.0, %v1255
        %v1257 = vpop.f32.mrb[0].mxu0
        %v1258 = vpop.f32.mrb[0].mxu0
        %v1259 = vadd.f32 0.0, %v1258
        %v1260 = vpop.f32.mrb[0].mxu0
        %1261 = vmatprep.mubr.bf16.mxu0 %v858
        %1262 = vmatmul.mubr.bf16.gmra.mrb[0].mxu0 %v857
        %v1263 = vpop.f32.mrb[0].mxu0
        %v1264 = vadd.f32 0.0, %v1263
        %v1265 = vpop.f32.mrb[0].mxu0
        %v1266 = vpop.f32.mrb[0].mxu0
        %v1267 = vadd.f32 0.0, %v1266
        %v1268 = vpop.f32.mrb[0].mxu0
        %1269 = vmatprep.mubr.bf16.mxu0 %v861
        %1270 = vmatmul.mubr.bf16.gmra.mrb[0].mxu0 %v860
        %v1271 = vpop.f32.mrb[0].mxu0
        %v1272 = vadd.f32 0.0, %v1271
        %v1273 = vpop.f32.mrb[0].mxu0
        %v1274 = vpop.f32.mrb[0].mxu0
        %v1275 = vadd.f32 0.0, %v1274
        %v1276 = vpop.f32.mrb[0].mxu0
        %1277 = vmatprep.mubr.bf16.mxu0 %v864
        %1278 = vmatmul.mubr.bf16.gmra.mrb[0].mxu0 %v863
        %v1279 = vpop.f32.mrb[0].mxu0
        %v1280 = vadd.f32 0.0, %v1279
        %v1281 = vpop.f32.mrb[0].mxu0
        %v1282 = vpop.f32.mrb[0].mxu0
        %v1283 = vadd.f32 0.0, %v1282
        %v1284 = vpop.f32.mrb[0].mxu0
        %1285 = vmatprep.mubr.bf16.mxu0 %v867
        %1286 = vmatmul.mubr.bf16.gmra.mrb[0].mxu0 %v866
        %v1287 = vpop.f32.mrb[0].mxu0
        %v1288 = vadd.f32 0.0, %v1287
        %v1289 = vpop.f32.mrb[0].mxu0
        %v1290 = vpop.f32.mrb[0].mxu0
        %v1291 = vadd.f32 0.0, %v1290
        %v1292 = vpop.f32.mrb[0].mxu0
        %1293 = vmatprep.mubr.bf16.mxu0 %v870
        %1294 = vmatmul.mubr.bf16.gmra.mrb[0].mxu0 %v869
        %v1295 = vpop.f32.mrb[0].mxu0
        %v1296 = vadd.f32 0.0, %v1295
        %v1297 = vpop.f32.mrb[0].mxu0
        %v1298 = vpop.f32.mrb[0].mxu0
        %v1299 = vadd.f32 0.0, %v1298
        %v1300 = vpop.f32.mrb[0].mxu0
        %1301 = vmatprep.mubr.bf16.mxu0 %v873
        %1302 = vmatmul.mubr.bf16.gmra.mrb[0].mxu0 %v872
        %v1303 = vpop.f32.mrb[0].mxu0
        %v1304 = vadd.f32 0.0, %v1303
        %v1305 = vpop.f32.mrb[0].mxu0
        %v1306 = vpop.f32.mrb[0].mxu0
        %v1307 = vadd.f32 0.0, %v1306
        %v1308 = vpop.f32.mrb[0].mxu0
        %1309 = vmatprep.mubr.bf16.mxu0 %v876
        %1310 = vmatmul.mubr.bf16.gmra.mrb[0].mxu0 %v875
        %v1311 = vpop.f32.mrb[0].mxu0
        %v1312 = vadd.f32 0.0, %v1311
        %v1313 = vpop.f32.mrb[0].mxu0
        %v1314 = vpop.f32.mrb[0].mxu0
        %v1315 = vadd.f32 0.0, %v1314
        %v1316 = vpop.f32.mrb[0].mxu0
        %1317 = vmatprep.mubr.bf16.mxu0 %v879
        %1318 = vmatmul.mubr.bf16.gmra.mrb[0].mxu0 %v878
        %v1319 = vpop.f32.mrb[0].mxu0
        %v1320 = vadd.f32 0.0, %v1319
        %v1321 = vpop.f32.mrb[0].mxu0
        %v1322 = vpop.f32.mrb[0].mxu0
        %v1323 = vadd.f32 0.0, %v1322
        %v1324 = vpop.f32.mrb[0].mxu0
        %1325 = vmatprep.mubr.bf16.mxu0 %v882
        %1326 = vmatmul.mubr.bf16.gmra.mrb[0].mxu0 %v881
        %v1327 = vpop.f32.mrb[0].mxu0
        %v1328 = vadd.f32 0.0, %v1327
        %v1329 = vpop.f32.mrb[0].mxu0
        %v1330 = vpop.f32.mrb[0].mxu0
        %v1331 = vadd.f32 0.0, %v1330
        %v1332 = vpop.f32.mrb[0].mxu0
        %1333 = vmatprep.mubr.bf16.mxu0 %v885
        %1334 = vmatmul.mubr.bf16.gmra.mrb[0].mxu0 %v884
        %v1335 = vpop.f32.mrb[0].mxu0
        %v1336 = vadd.f32 0.0, %v1335
        %v1337 = vpop.f32.mrb[0].mxu0
        %v1338 = vpop.f32.mrb[0].mxu0
        %v1339 = vadd.f32 0.0, %v1338
        %v1340 = vpop.f32.mrb[0].mxu0
        %1341 = vmatprep.mubr.bf16.mxu0 %v888
        %1342 = vmatmul.mubr.bf16.gmra.mrb[0].mxu0 %v887
        %v1343 = vpop.f32.mrb[0].mxu0
        %v1344 = vadd.f32 0.0, %v1343
        %v1345 = vpop.f32.mrb[0].mxu0
        %v1346 = vpop.f32.mrb[0].mxu0
        %v1347 = vadd.f32 0.0, %v1346
        %v1348 = vpop.f32.mrb[0].mxu0
        %1349 = vmatprep.mubr.bf16.mxu0 %v891
        %1350 = vmatmul.mubr.bf16.gmra.mrb[0].mxu0 %v890
        %v1351 = vpop.f32.mrb[0].mxu0
        %v1352 = vadd.f32 0.0, %v1351
        %v1353 = vpop.f32.mrb[0].mxu0
        %v1354 = vpop.f32.mrb[0].mxu0
        %v1355 = vadd.f32 0.0, %v1354
        %v1356 = vpop.f32.mrb[0].mxu0
        %1357 = vdwg.mxu0
        %1358 = vmatprep.subr.bf16.mxu0 0
        %1359 = vmatpush1.bf16.msra.mxu0 %v1101
        %1360 = vmatprep.subr.bf16.mxu0 0
        %1361 = vmatpush1.bf16.msra.mxu0 %v1102
        %1362 = vmatprep.subr.bf16.mxu0 0
        %1363 = vmatpush1.bf16.msra.mxu0 %v1103
        %1364 = vmatprep.subr.bf16.mxu0 0
        %1365 = vmatpush1.bf16.msra.mxu0 %v1104
        %1366 = vmatprep.subr.bf16.mxu0 0
        %1367 = vmatpush1.bf16.msra.mxu0 %v1105
        %1368 = vmatprep.subr.bf16.mxu0 0
        %1369 = vmatpush1.bf16.msra.mxu0 %v1106
        %1370 = vmatprep.subr.bf16.mxu0 0
        %1371 = vmatpush1.bf16.msra.mxu0 %v1107
        %1372 = vmatprep.subr.bf16.mxu0 0
        %1373 = vmatpush1.bf16.msra.mxu0 %v1108
        %1374 = vmatprep.subr.bf16.mxu0 0
        %1375 = vmatpush1.bf16.msra.mxu0 0
        %1376 = vmatprep.subr.bf16.mxu0 0
        %1377 = vmatpush1.bf16.msra.mxu0 0
        %1378 = vmatprep.subr.bf16.mxu0 0
        %1379 = vmatpush1.bf16.msra.mxu0 0
        %1380 = vmatprep.subr.bf16.mxu0 0
        %1381 = vmatpush1.bf16.msra.mxu0 0
        %1382 = vmatprep.subr.bf16.mxu0 0
        %1383 = vmatpush1.bf16.msra.mxu0 0
        %1384 = vmatprep.subr.bf16.mxu0 0
        %1385 = vmatpush1.bf16.msra.mxu0 0
        %1386 = vmatprep.subr.bf16.mxu0 0
        %1387 = vmatpush1.bf16.msra.mxu0 0
        %1388 = vmatprep.subr.bf16.mxu0 0
        %1389 = vmatpush1.bf16.msra.mxu0 0
        %1390 = vmatprep.mubr.bf16.mxu0 0
        %1391 = vmatmul.mubr.bf16.gmra.mrb[0].mxu0 %v823
        %v1392 = vpop.f32.mrb[0].mxu0
        %v1393 = vadd.f32 %v1168, %v1392
        %v1394 = vpop.f32.mrb[0].mxu0
        %v1395 = vpop.f32.mrb[0].mxu0
        %v1396 = vadd.f32 %v1171, %v1395
        %v1397 = vpop.f32.mrb[0].mxu0
        %1398 = vmatprep.mubr.bf16.mxu0 0
        %1399 = vmatmul.mubr.bf16.gmra.mrb[0].mxu0 %v826
        %v1400 = vpop.f32.mrb[0].mxu0
        %v1401 = vadd.f32 %v1176, %v1400
        %v1402 = vpop.f32.mrb[0].mxu0
        %v1403 = vpop.f32.mrb[0].mxu0
        %v1404 = vadd.f32 %v1179, %v1403
        %v1405 = vpop.f32.mrb[0].mxu0
        %1406 = vmatprep.mubr.bf16.mxu0 0
        %1407 = vmatmul.mubr.bf16.gmra.mrb[0].mxu0 %v829
        %v1408 = vpop.f32.mrb[0].mxu0
        %v1409 = vadd.f32 %v1184, %v1408
        %v1410 = vpop.f32.mrb[0].mxu0
        %v1411 = vpop.f32.mrb[0].mxu0
        %v1412 = vadd.f32 %v1187, %v1411
        %v1413 = vpop.f32.mrb[0].mxu0
        %1414 = vmatprep.mubr.bf16.mxu0 0
        %1415 = vmatmul.mubr.bf16.gmra.mrb[0].mxu0 %v832
        %v1416 = vpop.f32.mrb[0].mxu0
        %v1417 = vadd.f32 %v1192, %v1416
        %v1418 = vpop.f32.mrb[0].mxu0
        %v1419 = vpop.f32.mrb[0].mxu0
        %v1420 = vadd.f32 %v1195, %v1419
        %v1421 = vpop.f32.mrb[0].mxu0
        %1422 = vmatprep.mubr.bf16.mxu0 0
        %1423 = vmatmul.mubr.bf16.gmra.mrb[0].mxu0 %v835
        %v1424 = vpop.f32.mrb[0].mxu0
        %v1425 = vadd.f32 %v1200, %v1424
        %v1426 = vpop.f32.mrb[0].mxu0
        %v1427 = vpop.f32.mrb[0].mxu0
        %v1428 = vadd.f32 %v1203, %v1427
        %v1429 = vpop.f32.mrb[0].mxu0
        %1430 = vmatprep.mubr.bf16.mxu0 0
        %1431 = vmatmul.mubr.bf16.gmra.mrb[0].mxu0 %v838
        %v1432 = vpop.f32.mrb[0].mxu0
        %v1433 = vadd.f32 %v1208, %v1432
        %v1434 = vpop.f32.mrb[0].mxu0
        %v1435 = vpop.f32.mrb[0].mxu0
        %v1436 = vadd.f32 %v1211, %v1435
        %v1437 = vpop.f32.mrb[0].mxu0
        %1438 = vmatprep.mubr.bf16.mxu0 0
        %1439 = vmatmul.mubr.bf16.gmra.mrb[0].mxu0 %v841
        %v1440 = vpop.f32.mrb[0].mxu0
        %v1441 = vadd.f32 %v1216, %v1440
        %v1442 = vpop.f32.mrb[0].mxu0
        %v1443 = vpop.f32.mrb[0].mxu0
        %v1444 = vadd.f32 %v1219, %v1443
        %v1445 = vpop.f32.mrb[0].mxu0
        %1446 = vmatprep.mubr.bf16.mxu0 0
        %1447 = vmatmul.mubr.bf16.gmra.mrb[0].mxu0 %v844
        %v1448 = vpop.f32.mrb[0].mxu0
        %v1449 = vadd.f32 %v1224, %v1448
        %v1450 = vpop.f32.mrb[0].mxu0
        %v1451 = vpop.f32.mrb[0].mxu0
        %v1452 = vadd.f32 %v1227, %v1451
        %v1453 = vpop.f32.mrb[0].mxu0
        %1454 = vmatprep.mubr.bf16.mxu0 0
        %1455 = vmatmul.mubr.bf16.gmra.mrb[0].mxu0 %v847
        %v1456 = vpop.f32.mrb[0].mxu0
        %v1457 = vadd.f32 %v1232, %v1456
        %v1458 = vpop.f32.mrb[0].mxu0
        %v1459 = vpop.f32.mrb[0].mxu0
        %v1460 = vadd.f32 %v1235, %v1459
        %v1461 = vpop.f32.mrb[0].mxu0
        %1462 = vmatprep.mubr.bf16.mxu0 0
        %1463 = vmatmul.mubr.bf16.gmra.mrb[0].mxu0 %v850
        %v1464 = vpop.f32.mrb[0].mxu0
        %v1465 = vadd.f32 %v1240, %v1464
        %v1466 = vpop.f32.mrb[0].mxu0
        %v1467 = vpop.f32.mrb[0].mxu0
        %v1468 = vadd.f32 %v1243, %v1467
        %v1469 = vpop.f32.mrb[0].mxu0
        %1470 = vmatprep.mubr.bf16.mxu0 0
        %1471 = vmatmul.mubr.bf16.gmra.mrb[0].mxu0 %v853
        %v1472 = vpop.f32.mrb[0].mxu0
        %v1473 = vadd.f32 %v1248, %v1472
        %v1474 = vpop.f32.mrb[0].mxu0
        %v1475 = vpop.f32.mrb[0].mxu0
        %v1476 = vadd.f32 %v1251, %v1475
        %v1477 = vpop.f32.mrb[0].mxu0
        %1478 = vmatprep.mubr.bf16.mxu0 0
        %1479 = vmatmul.mubr.bf16.gmra.mrb[0].mxu0 %v856
        %v1480 = vpop.f32.mrb[0].mxu0
        %v1481 = vadd.f32 %v1256, %v1480
        %v1482 = vpop.f32.mrb[0].mxu0
        %v1483 = vpop.f32.mrb[0].mxu0
        %v1484 = vadd.f32 %v1259, %v1483
        %v1485 = vpop.f32.mrb[0].mxu0
        %1486 = vmatprep.mubr.bf16.mxu0 0
        %1487 = vmatmul.mubr.bf16.gmra.mrb[0].mxu0 %v859
        %v1488 = vpop.f32.mrb[0].mxu0
        %v1489 = vadd.f32 %v1264, %v1488
        %v1490 = vpop.f32.mrb[0].mxu0
        %v1491 = vpop.f32.mrb[0].mxu0
        %v1492 = vadd.f32 %v1267, %v1491
        %v1493 = vpop.f32.mrb[0].mxu0
        %1494 = vmatprep.mubr.bf16.mxu0 0
        %1495 = vmatmul.mubr.bf16.gmra.mrb[0].mxu0 %v862
        %v1496 = vpop.f32.mrb[0].mxu0
        %v1497 = vadd.f32 %v1272, %v1496
        %v1498 = vpop.f32.mrb[0].mxu0
        %v1499 = vpop.f32.mrb[0].mxu0
        %v1500 = vadd.f32 %v1275, %v1499
        %v1501 = vpop.f32.mrb[0].mxu0
        %1502 = vmatprep.mubr.bf16.mxu0 0
        %1503 = vmatmul.mubr.bf16.gmra.mrb[0].mxu0 %v865
        %v1504 = vpop.f32.mrb[0].mxu0
        %v1505 = vadd.f32 %v1280, %v1504
        %v1506 = vpop.f32.mrb[0].mxu0
        %v1507 = vpop.f32.mrb[0].mxu0
        %v1508 = vadd.f32 %v1283, %v1507
        %v1509 = vpop.f32.mrb[0].mxu0
        %1510 = vmatprep.mubr.bf16.mxu0 0
        %1511 = vmatmul.mubr.bf16.gmra.mrb[0].mxu0 %v868
        %v1512 = vpop.f32.mrb[0].mxu0
        %v1513 = vadd.f32 %v1288, %v1512
        %v1514 = vpop.f32.mrb[0].mxu0
        %v1515 = vpop.f32.mrb[0].mxu0
        %v1516 = vadd.f32 %v1291, %v1515
        %v1517 = vpop.f32.mrb[0].mxu0
        %1518 = vmatprep.mubr.bf16.mxu0 0
        %1519 = vmatmul.mubr.bf16.gmra.mrb[0].mxu0 %v871
        %v1520 = vpop.f32.mrb[0].mxu0
        %v1521 = vadd.f32 %v1296, %v1520
        %v1522 = vpop.f32.mrb[0].mxu0
        %v1523 = vpop.f32.mrb[0].mxu0
        %v1524 = vadd.f32 %v1299, %v1523
        %v1525 = vpop.f32.mrb[0].mxu0
        %1526 = vmatprep.mubr.bf16.mxu0 0
        %1527 = vmatmul.mubr.bf16.gmra.mrb[0].mxu0 %v874
        %v1528 = vpop.f32.mrb[0].mxu0
        %v1529 = vadd.f32 %v1304, %v1528
        %v1530 = vpop.f32.mrb[0].mxu0
        %v1531 = vpop.f32.mrb[0].mxu0
        %v1532 = vadd.f32 %v1307, %v1531
        %v1533 = vpop.f32.mrb[0].mxu0
        %1534 = vmatprep.mubr.bf16.mxu0 0
        %1535 = vmatmul.mubr.bf16.gmra.mrb[0].mxu0 %v877
        %v1536 = vpop.f32.mrb[0].mxu0
        %v1537 = vadd.f32 %v1312, %v1536
        %v1538 = vpop.f32.mrb[0].mxu0
        %v1539 = vpop.f32.mrb[0].mxu0
        %v1540 = vadd.f32 %v1315, %v1539
        %v1541 = vpop.f32.mrb[0].mxu0
        %1542 = vmatprep.mubr.bf16.mxu0 0
        %1543 = vmatmul.mubr.bf16.gmra.mrb[0].mxu0 %v880
        %v1544 = vpop.f32.mrb[0].mxu0
        %v1545 = vadd.f32 %v1320, %v1544
        %v1546 = vpop.f32.mrb[0].mxu0
        %v1547 = vpop.f32.mrb[0].mxu0
        %v1548 = vadd.f32 %v1323, %v1547
        %v1549 = vpop.f32.mrb[0].mxu0
        %1550 = vmatprep.mubr.bf16.mxu0 0
        %1551 = vmatmul.mubr.bf16.gmra.mrb[0].mxu0 %v883
        %v1552 = vpop.f32.mrb[0].mxu0
        %v1553 = vadd.f32 %v1328, %v1552
        %v1554 = vpop.f32.mrb[0].mxu0
        %v1555 = vpop.f32.mrb[0].mxu0
        %v1556 = vadd.f32 %v1331, %v1555
        %v1557 = vpop.f32.mrb[0].mxu0
        %1558 = vmatprep.mubr.bf16.mxu0 0
        %1559 = vmatmul.mubr.bf16.gmra.mrb[0].mxu0 %v886
        %v1560 = vpop.f32.mrb[0].mxu0
        %v1561 = vadd.f32 %v1336, %v1560
        %v1562 = vpop.f32.mrb[0].mxu0
        %v1563 = vpop.f32.mrb[0].mxu0
        %v1564 = vadd.f32 %v1339, %v1563
        %v1565 = vpop.f32.mrb[0].mxu0
        %1566 = vmatprep.mubr.bf16.mxu0 0
        %1567 = vmatmul.mubr.bf16.gmra.mrb[0].mxu0 %v889
        %v1568 = vpop.f32.mrb[0].mxu0
        %v1569 = vadd.f32 %v1344, %v1568
        %v1570 = vpop.f32.mrb[0].mxu0
        %v1571 = vpop.f32.mrb[0].mxu0
        %v1572 = vadd.f32 %v1347, %v1571
        %v1573 = vpop.f32.mrb[0].mxu0
        %1574 = vmatprep.mubr.bf16.mxu0 0
        %1575 = vmatmul.mubr.bf16.gmra.mrb[0].mxu0 %v892
        %v1576 = vpop.f32.mrb[0].mxu0
        %v1577 = vadd.f32 %v1352, %v1576
        %v1578 = vpop.f32.mrb[0].mxu0
        %v1579 = vpop.f32.mrb[0].mxu0
        %v1580 = vadd.f32 %v1355, %v1579
        %v1581 = vpop.f32.mrb[0].mxu0
        %1582 = vdwg.mxu0
        %v1583 = vadd.f32 %v941, %v1393
        %v1584 = vadd.f32 %v942, %v1396
        %v1585 = vadd.f32 %v943, %v1401
        %v1586 = vadd.f32 %v944, %v1404
        %v1587 = vadd.f32 %v945, %v1409
        %v1588 = vadd.f32 %v946, %v1412
        %v1589 = vadd.f32 %v947, %v1417
        %v1590 = vadd.f32 %v948, %v1420
        %v1591 = vadd.f32 %v949, %v1425
        %v1592 = vadd.f32 %v950, %v1428
        %v1593 = vadd.f32 %v951, %v1433
        %v1594 = vadd.f32 %v952, %v1436
        %v1595 = vadd.f32 %v953, %v1441
        %v1596 = vadd.f32 %v954, %v1444
        %v1597 = vadd.f32 %v955, %v1449
        %v1598 = vadd.f32 %v956, %v1452
        %v1599 = vadd.f32 %v957, %v1457
        %v1600 = vadd.f32 %v958, %v1460
        %v1601 = vadd.f32 %v959, %v1465
        %v1602 = vadd.f32 %v960, %v1468
        %v1603 = vadd.f32 %v961, %v1473
        %v1604 = vadd.f32 %v962, %v1476
        %v1605 = vadd.f32 %v963, %v1481
        %v1606 = vadd.f32 %v964, %v1484
        %v1607 = vadd.f32 %v965, %v1489
        %v1608 = vadd.f32 %v966, %v1492
        %v1609 = vadd.f32 %v967, %v1497
        %v1610 = vadd.f32 %v968, %v1500
        %v1611 = vadd.f32 %v969, %v1505
        %v1612 = vadd.f32 %v970, %v1508
        %v1613 = vadd.f32 %v971, %v1513
        %v1614 = vadd.f32 %v972, %v1516
        %v1615 = vadd.f32 %v973, %v1521
        %v1616 = vadd.f32 %v974, %v1524
        %v1617 = vadd.f32 %v975, %v1529
        %v1618 = vadd.f32 %v976, %v1532
        %v1619 = vadd.f32 %v977, %v1537
        %v1620 = vadd.f32 %v978, %v1540
        %v1621 = vadd.f32 %v979, %v1545
        %v1622 = vadd.f32 %v980, %v1548
        %v1623 = vadd.f32 %v981, %v1553
        %v1624 = vadd.f32 %v982, %v1556
        %v1625 = vadd.f32 %v983, %v1561
        %v1626 = vadd.f32 %v984, %v1564
        %v1627 = vadd.f32 %v985, %v1569
        %v1628 = vadd.f32 %v986, %v1572
        %v1629 = vadd.f32 %v987, %v1577
        %v1630 = vadd.f32 %v988, %v1580
        %vm1631 = vcmask 523264
        %1632 = vst.msk [vmem:[#allocation2] sm:$0xff] %vm1631, %v1583
        %1633 = vst.msk [vmem:[#allocation2 + $0x8] sm:$0xff] %vm1631, %v1584
        %1634 = vst.msk [vmem:[#allocation2 + $0x10] sm:$0xff] %vm1631, %v1585
        %1635 = vst.msk [vmem:[#allocation2 + $0x18] sm:$0xff] %vm1631, %v1586
        %1636 = vst.msk [vmem:[#allocation2 + $0x20] sm:$0xff] %vm1631, %v1587
        %1637 = vst.msk [vmem:[#allocation2 + $0x28] sm:$0xff] %vm1631, %v1588
        %1638 = vst.msk [vmem:[#allocation2 + $0x30] sm:$0xff] %vm1631, %v1589
        %1639 = vst.msk [vmem:[#allocation2 + $0x38] sm:$0xff] %vm1631, %v1590
        %1640 = vst.msk [vmem:[#allocation2 + $0x40] sm:$0xff] %vm1631, %v1591
        %1641 = vst.msk [vmem:[#allocation2 + $0x48] sm:$0xff] %vm1631, %v1592
        %1642 = vst.msk [vmem:[#allocation2 + $0x50] sm:$0xff] %vm1631, %v1593
        %1643 = vst.msk [vmem:[#allocation2 + $0x58] sm:$0xff] %vm1631, %v1594
        %1644 = vst.msk [vmem:[#allocation2 + $0x60] sm:$0xff] %vm1631, %v1595
        %1645 = vst.msk [vmem:[#allocation2 + $0x68] sm:$0xff] %vm1631, %v1596
        %1646 = vst.msk [vmem:[#allocation2 + $0x70] sm:$0xff] %vm1631, %v1597
        %1647 = vst.msk [vmem:[#allocation2 + $0x78] sm:$0xff] %vm1631, %v1598
        %1648 = vst.msk [vmem:[#allocation2 + $0x80] sm:$0xff] %vm1631, %v1599
        %1649 = vst.msk [vmem:[#allocation2 + $0x88] sm:$0xff] %vm1631, %v1600
        %1650 = vst.msk [vmem:[#allocation2 + $0x90] sm:$0xff] %vm1631, %v1601
        %1651 = vst.msk [vmem:[#allocation2 + $0x98] sm:$0xff] %vm1631, %v1602
        %1652 = vst.msk [vmem:[#allocation2 + $0xa0] sm:$0xff] %vm1631, %v1603
        %1653 = vst.msk [vmem:[#allocation2 + $0xa8] sm:$0xff] %vm1631, %v1604
        %1654 = vst.msk [vmem:[#allocation2 + $0xb0] sm:$0xff] %vm1631, %v1605
        %1655 = vst.msk [vmem:[#allocation2 + $0xb8] sm:$0xff] %vm1631, %v1606
        %1656 = vst.msk [vmem:[#allocation2 + $0xc0] sm:$0xff] %vm1631, %v1607
        %1657 = vst.msk [vmem:[#allocation2 + $0xc8] sm:$0xff] %vm1631, %v1608
        %1658 = vst.msk [vmem:[#allocation2 + $0xd0] sm:$0xff] %vm1631, %v1609
        %1659 = vst.msk [vmem:[#allocation2 + $0xd8] sm:$0xff] %vm1631, %v1610
        %1660 = vst.msk [vmem:[#allocation2 + $0xe0] sm:$0xff] %vm1631, %v1611
        %1661 = vst.msk [vmem:[#allocation2 + $0xe8] sm:$0xff] %vm1631, %v1612
        %1662 = vst.msk [vmem:[#allocation2 + $0xf0] sm:$0xff] %vm1631, %v1613
        %1663 = vst.msk [vmem:[#allocation2 + $0xf8] sm:$0xff] %vm1631, %v1614
        %1664 = vst.msk [vmem:[#allocation2 + $0x100] sm:$0xff] %vm1631, %v1615
        %1665 = vst.msk [vmem:[#allocation2 + $0x108] sm:$0xff] %vm1631, %v1616
        %1666 = vst.msk [vmem:[#allocation2 + $0x110] sm:$0xff] %vm1631, %v1617
        %1667 = vst.msk [vmem:[#allocation2 + $0x118] sm:$0xff] %vm1631, %v1618
        %1668 = vst.msk [vmem:[#allocation2 + $0x120] sm:$0xff] %vm1631, %v1619
        %1669 = vst.msk [vmem:[#allocation2 + $0x128] sm:$0xff] %vm1631, %v1620
        %1670 = vst.msk [vmem:[#allocation2 + $0x130] sm:$0xff] %vm1631, %v1621
        %1671 = vst.msk [vmem:[#allocation2 + $0x138] sm:$0xff] %vm1631, %v1622
        %1672 = vst.msk [vmem:[#allocation2 + $0x140] sm:$0xff] %vm1631, %v1623
        %1673 = vst.msk [vmem:[#allocation2 + $0x148] sm:$0xff] %vm1631, %v1624
        %1674 = vst.msk [vmem:[#allocation2 + $0x150] sm:$0xff] %vm1631, %v1625
        %1675 = vst.msk [vmem:[#allocation2 + $0x158] sm:$0xff] %vm1631, %v1626
        %1676 = vst.msk [vmem:[#allocation2 + $0x160] sm:$0xff] %vm1631, %v1627
        %1677 = vst.msk [vmem:[#allocation2 + $0x168] sm:$0xff] %vm1631, %v1628
        %1678 = vst.msk [vmem:[#allocation2 + $0x170] sm:$0xff] %vm1631, %v1629
        %1679 = vst.msk [vmem:[#allocation2 + $0x178] sm:$0xff] %vm1631, %v1630
        // Predicated region
        $region122: #{botrgcn_forward.5} parent=108 // pred_check
          %p1680 = pneg %p732
        $region123: #{botrgcn_forward.5} parent=108 // pred_check_branch
          %1682 = sbr.rel (%p1680) target = $region125
        $region124: #{botrgcn_forward.5} parent=108 // pred_region
          %v1683 = vld [vmem:[%s714] sm:$0xf]
          %v1684 = vld [vmem:[%s714 + $0x4] sm:$0xf]
          %v1685 = vld [vmem:[%s714 + $0x8] sm:$0xf]
          %v1686 = vld [vmem:[%s714 + $0xc] sm:$0xf]
          %v1687 = vld [vmem:[%s714 + $0x10] sm:$0xf]
          %v1688 = vld [vmem:[%s714 + $0x14] sm:$0xf]
          %v1689 = vld [vmem:[%s714 + $0x18] sm:$0xf]
          %v1690 = vld [vmem:[%s714 + $0x1c] sm:$0xf]
          %v1691 = vld [vmem:[%s714 + $0x20] sm:$0xf]
          %v1692 = vld [vmem:[%s714 + $0x24] sm:$0xf]
          %v1693 = vld [vmem:[%s714 + $0x28] sm:$0xf]
          %v1694 = vld [vmem:[%s714 + $0x2c] sm:$0xf]
          %v1695 = vld [vmem:[%s714 + $0x30] sm:$0xf]
          %v1696 = vld [vmem:[%s714 + $0x34] sm:$0xf]
          %v1697 = vld [vmem:[%s714 + $0x38] sm:$0xf]
          %v1698 = vld [vmem:[%s714 + $0x3c] sm:$0xf]
          %v1699 = vld [vmem:[%s714 + $0x40] sm:$0xf]
          %v1700 = vld [vmem:[%s714 + $0x44] sm:$0xf]
          %v1701 = vld [vmem:[%s714 + $0x48] sm:$0xf]
          %v1702 = vld [vmem:[%s714 + $0x4c] sm:$0xf]
          %v1703 = vld [vmem:[%s714 + $0x50] sm:$0xf]
          %v1704 = vld [vmem:[%s714 + $0x54] sm:$0xf]
          %v1705 = vld [vmem:[%s714 + $0x58] sm:$0xf]
          %v1706 = vld [vmem:[%s714 + $0x5c] sm:$0xf]
          %v1707 = vld [vmem:[%s4] sm:$0xf]
          %v1708 = vld [vmem:[%s4 + $0x4] sm:$0xf]
          %v1709 = vld [vmem:[%s4 + $0x8] sm:$0xf]
          %v1710 = vld [vmem:[%s4 + $0xc] sm:$0xf]
          %v1711 = vld [vmem:[%s4 + $0x10] sm:$0xf]
          %v1712 = vld [vmem:[%s4 + $0x14] sm:$0xf]
          %v1713 = vld [vmem:[%s4 + $0x18] sm:$0xf]
          %v1714 = vld [vmem:[%s4 + $0x1c] sm:$0xf]
          %v1715 = vld [vmem:[#allocation2] sm:$0xff]
          %v1716 = vld [vmem:[#allocation2 + $0x8] sm:$0xff]
          %v1717 = vld [vmem:[#allocation2 + $0x10] sm:$0xff]
          %v1718 = vld [vmem:[#allocation2 + $0x18] sm:$0xff]
          %v1719 = vld [vmem:[#allocation2 + $0x20] sm:$0xff]
          %v1720 = vld [vmem:[#allocation2 + $0x28] sm:$0xff]
          %v1721 = vld [vmem:[#allocation2 + $0x30] sm:$0xff]
          %v1722 = vld [vmem:[#allocation2 + $0x38] sm:$0xff]
          %v1723 = vld [vmem:[#allocation2 + $0x40] sm:$0xff]
          %v1724 = vld [vmem:[#allocation2 + $0x48] sm:$0xff]
          %v1725 = vld [vmem:[#allocation2 + $0x50] sm:$0xff]
          %v1726 = vld [vmem:[#allocation2 + $0x58] sm:$0xff]
          %v1727 = vld [vmem:[#allocation2 + $0x60] sm:$0xff]
          %v1728 = vld [vmem:[#allocation2 + $0x68] sm:$0xff]
          %v1729 = vld [vmem:[#allocation2 + $0x70] sm:$0xff]
          %v1730 = vld [vmem:[#allocation2 + $0x78] sm:$0xff]
          %v1731 = vld [vmem:[#allocation2 + $0x80] sm:$0xff]
          %v1732 = vld [vmem:[#allocation2 + $0x88] sm:$0xff]
          %v1733 = vld [vmem:[#allocation2 + $0x90] sm:$0xff]
          %v1734 = vld [vmem:[#allocation2 + $0x98] sm:$0xff]
          %v1735 = vld [vmem:[#allocation2 + $0xa0] sm:$0xff]
          %v1736 = vld [vmem:[#allocation2 + $0xa8] sm:$0xff]
          %v1737 = vld [vmem:[#allocation2 + $0xb0] sm:$0xff]
          %v1738 = vld [vmem:[#allocation2 + $0xb8] sm:$0xff]
          %v1739 = vld [vmem:[%s663] sm:$0xff]
          %v1740 = vld [vmem:[%s663 + $0x8] sm:$0xff]
          %v1741 = vld [vmem:[%s663 + $0x10] sm:$0xff]
          %v1742 = vld [vmem:[%s663 + $0x18] sm:$0xff]
          %v1743 = vld [vmem:[%s663 + $0x20] sm:$0xff]
          %v1744 = vld [vmem:[%s663 + $0x28] sm:$0xff]
          %v1745 = vld [vmem:[%s663 + $0x30] sm:$0xff]
          %v1746 = vld [vmem:[%s663 + $0x38] sm:$0xff]
          %v1747 = vld [vmem:[%s663 + $0x40] sm:$0xff]
          %v1748 = vld [vmem:[%s663 + $0x48] sm:$0xff]
          %v1749 = vld [vmem:[%s663 + $0x50] sm:$0xff]
          %v1750 = vld [vmem:[%s663 + $0x58] sm:$0xff]
          %v1751 = vld [vmem:[%s663 + $0x60] sm:$0xff]
          %v1752 = vld [vmem:[%s663 + $0x68] sm:$0xff]
          %v1753 = vld [vmem:[%s663 + $0x70] sm:$0xff]
          %v1754 = vld [vmem:[%s663 + $0x78] sm:$0xff]
          %v1755 = vld [vmem:[%s663 + $0x80] sm:$0xff]
          %v1756 = vld [vmem:[%s663 + $0x88] sm:$0xff]
          %v1757 = vld [vmem:[%s663 + $0x90] sm:$0xff]
          %v1758 = vld [vmem:[%s663 + $0x98] sm:$0xff]
          %v1759 = vld [vmem:[%s663 + $0xa0] sm:$0xff]
          %v1760 = vld [vmem:[%s663 + $0xa8] sm:$0xff]
          %v1761 = vld [vmem:[%s663 + $0xb0] sm:$0xff]
          %v1762 = vld [vmem:[%s663 + $0xb8] sm:$0xff]
          %1764 = vset.pattern.permute.xlu0 0
          %1765 = vperm.xlu0 %1764, %v1739
          %v1766 = vpop.permute.xlu0 %1765
          %1769 = vset.pattern.permute.xlu0 0
          %1770 = vperm.xlu0 %1769, %v1740
          %v1771 = vpop.permute.xlu0 %1770
          %1774 = vset.pattern.permute.xlu0 0
          %1775 = vperm.xlu0 %1774, %v1741
          %v1776 = vpop.permute.xlu0 %1775
          %1779 = vset.pattern.permute.xlu0 0
          %1780 = vperm.xlu0 %1779, %v1742
          %v1781 = vpop.permute.xlu0 %1780
          %1784 = vset.pattern.permute.xlu0 0
          %1785 = vperm.xlu0 %1784, %v1743
          %v1786 = vpop.permute.xlu0 %1785
          %1789 = vset.pattern.permute.xlu0 0
          %1790 = vperm.xlu0 %1789, %v1744
          %v1791 = vpop.permute.xlu0 %1790
          %1794 = vset.pattern.permute.xlu0 0
          %1795 = vperm.xlu0 %1794, %v1745
          %v1796 = vpop.permute.xlu0 %1795
          %1799 = vset.pattern.permute.xlu0 0
          %1800 = vperm.xlu0 %1799, %v1746
          %v1801 = vpop.permute.xlu0 %1800
          %1804 = vset.pattern.permute.xlu0 0
          %1805 = vperm.xlu0 %1804, %v1747
          %v1806 = vpop.permute.xlu0 %1805
          %1809 = vset.pattern.permute.xlu0 0
          %1810 = vperm.xlu0 %1809, %v1748
          %v1811 = vpop.permute.xlu0 %1810
          %1814 = vset.pattern.permute.xlu0 0
          %1815 = vperm.xlu0 %1814, %v1749
          %v1816 = vpop.permute.xlu0 %1815
          %1819 = vset.pattern.permute.xlu0 0
          %1820 = vperm.xlu0 %1819, %v1750
          %v1821 = vpop.permute.xlu0 %1820
          %1824 = vset.pattern.permute.xlu0 0
          %1825 = vperm.xlu0 %1824, %v1751
          %v1826 = vpop.permute.xlu0 %1825
          %1829 = vset.pattern.permute.xlu0 0
          %1830 = vperm.xlu0 %1829, %v1752
          %v1831 = vpop.permute.xlu0 %1830
          %1834 = vset.pattern.permute.xlu0 0
          %1835 = vperm.xlu0 %1834, %v1753
          %v1836 = vpop.permute.xlu0 %1835
          %1839 = vset.pattern.permute.xlu0 0
          %1840 = vperm.xlu0 %1839, %v1754
          %v1841 = vpop.permute.xlu0 %1840
          %1844 = vset.pattern.permute.xlu0 0
          %1845 = vperm.xlu0 %1844, %v1755
          %v1846 = vpop.permute.xlu0 %1845
          %1849 = vset.pattern.permute.xlu0 0
          %1850 = vperm.xlu0 %1849, %v1756
          %v1851 = vpop.permute.xlu0 %1850
          %1854 = vset.pattern.permute.xlu0 0
          %1855 = vperm.xlu0 %1854, %v1757
          %v1856 = vpop.permute.xlu0 %1855
          %1859 = vset.pattern.permute.xlu0 0
          %1860 = vperm.xlu0 %1859, %v1758
          %v1861 = vpop.permute.xlu0 %1860
          %1864 = vset.pattern.permute.xlu0 0
          %1865 = vperm.xlu0 %1864, %v1759
          %v1866 = vpop.permute.xlu0 %1865
          %1869 = vset.pattern.permute.xlu0 0
          %1870 = vperm.xlu0 %1869, %v1760
          %v1871 = vpop.permute.xlu0 %1870
          %1874 = vset.pattern.permute.xlu0 0
          %1875 = vperm.xlu0 %1874, %v1761
          %v1876 = vpop.permute.xlu0 %1875
          %1879 = vset.pattern.permute.xlu0 0
          %1880 = vperm.xlu0 %1879, %v1762
          %v1881 = vpop.permute.xlu0 %1880
          %v1883 = vmul.f32 %v1715, %v1766
          %v1884 = vmul.f32 %v1716, %v1771
          %v1885 = vmul.f32 %v1717, %v1776
          %v1886 = vmul.f32 %v1718, %v1781
          %v1887 = vmul.f32 %v1719, %v1786
          %v1888 = vmul.f32 %v1720, %v1791
          %v1889 = vmul.f32 %v1721, %v1796
          %v1890 = vmul.f32 %v1722, %v1801
          %v1891 = vmul.f32 %v1723, %v1806
          %v1892 = vmul.f32 %v1724, %v1811
          %v1893 = vmul.f32 %v1725, %v1816
          %v1894 = vmul.f32 %v1726, %v1821
          %v1895 = vmul.f32 %v1727, %v1826
          %v1896 = vmul.f32 %v1728, %v1831
          %v1897 = vmul.f32 %v1729, %v1836
          %v1898 = vmul.f32 %v1730, %v1841
          %v1899 = vmul.f32 %v1731, %v1846
          %v1900 = vmul.f32 %v1732, %v1851
          %v1901 = vmul.f32 %v1733, %v1856
          %v1902 = vmul.f32 %v1734, %v1861
          %v1903 = vmul.f32 %v1735, %v1866
          %v1904 = vmul.f32 %v1736, %v1871
          %v1905 = vmul.f32 %v1737, %v1876
          %v1906 = vmul.f32 %v1738, %v1881
          %v1907 = vpack.c.bf16 %v1884, %v1883
          %v1908 = vpack.c.bf16 %v1886, %v1885
          %v1909 = vpack.c.bf16 %v1888, %v1887
          %v1910 = vpack.c.bf16 %v1890, %v1889
          %v1911 = vpack.c.bf16 %v1892, %v1891
          %v1912 = vpack.c.bf16 %v1894, %v1893
          %v1913 = vpack.c.bf16 %v1896, %v1895
          %v1914 = vpack.c.bf16 %v1898, %v1897
          %v1915 = vpack.c.bf16 %v1900, %v1899
          %v1916 = vpack.c.bf16 %v1902, %v1901
          %v1917 = vpack.c.bf16 %v1904, %v1903
          %v1918 = vpack.c.bf16 %v1906, %v1905
          %v1919 = vld [vmem:[%s5] sm:$0xf]
          %v1920 = vld [vmem:[%s5 + $0x4] sm:$0xf]
          %v1921 = vld [vmem:[%s5 + $0x8] sm:$0xf]
          %v1922 = vld [vmem:[%s5 + $0xc] sm:$0xf]
          %v1923 = vld [vmem:[%s5 + $0x10] sm:$0xf]
          %v1924 = vld [vmem:[%s5 + $0x14] sm:$0xf]
          %v1925 = vld [vmem:[%s5 + $0x18] sm:$0xf]
          %v1926 = vld [vmem:[%s5 + $0x1c] sm:$0xf]
          %v1935 = vunpack.c.l.b16 %v1919
          %v1936 = vunpack.c.l.b16 %v1920
          %v1937 = vunpack.c.l.b16 %v1921
          %v1938 = vunpack.c.l.b16 %v1922
          %v1939 = vunpack.c.l.b16 %v1923
          %v1940 = vunpack.c.l.b16 %v1924
          %v1941 = vunpack.c.l.b16 %v1925
          %v1942 = vunpack.c.l.b16 %v1926
          %v1943 = vpack.c.b16 %v1936, %v1935
          %v1944 = vpack.c.b16 %v1938, %v1937
          %v1945 = vpack.c.b16 %v1940, %v1939
          %v1946 = vpack.c.b16 %v1942, %v1941
          %v1952 = vsel %vm1631, %v1907, 0
          %v1955 = vsel %vm1631, %v1908, 0
          %v1958 = vsel %vm1631, %v1909, 0
          %v1961 = vsel %vm1631, %v1910, 0
          %v1964 = vsel %vm1631, %v1911, 0
          %v1967 = vsel %vm1631, %v1912, 0
          %v1970 = vsel %vm1631, %v1913, 0
          %v1973 = vsel %vm1631, %v1914, 0
          %v1976 = vsel %vm1631, %v1915, 0
          %v1979 = vsel %vm1631, %v1916, 0
          %v1982 = vsel %vm1631, %v1917, 0
          %v1985 = vsel %vm1631, %v1918, 0
          %1987 = vmatprep.subr.bf16.mxu0 0
          %1988 = vmatpush1.bf16.msra.mxu0 %v1943
          %1989 = vmatprep.subr.bf16.mxu0 0
          %1990 = vmatpush1.bf16.msra.mxu0 %v1944
          %1991 = vmatprep.subr.bf16.mxu0 0
          %1992 = vmatpush1.bf16.msra.mxu0 %v1945
          %1993 = vmatprep.subr.bf16.mxu0 0
          %1994 = vmatpush1.bf16.msra.mxu0 %v1946
          %1995 = vmatprep.subr.bf16.mxu0 0
          %1996 = vmatpush1.bf16.msra.mxu0 0
          %1997 = vmatprep.subr.bf16.mxu0 0
          %1998 = vmatpush1.bf16.msra.mxu0 0
          %1999 = vmatprep.subr.bf16.mxu0 0
          %2000 = vmatpush1.bf16.msra.mxu0 0
          %2001 = vmatprep.subr.bf16.mxu0 0
          %2002 = vmatpush1.bf16.msra.mxu0 0
          %2003 = vmatprep.subr.bf16.mxu0 0
          %2004 = vmatpush1.bf16.msra.mxu0 0
          %2005 = vmatprep.subr.bf16.mxu0 0
          %2006 = vmatpush1.bf16.msra.mxu0 0
          %2007 = vmatprep.subr.bf16.mxu0 0
          %2008 = vmatpush1.bf16.msra.mxu0 0
          %2009 = vmatprep.subr.bf16.mxu0 0
          %2010 = vmatpush1.bf16.msra.mxu0 0
          %2011 = vmatprep.subr.bf16.mxu0 0
          %2012 = vmatpush1.bf16.msra.mxu0 0
          %2013 = vmatprep.subr.bf16.mxu0 0
          %2014 = vmatpush1.bf16.msra.mxu0 0
          %2015 = vmatprep.subr.bf16.mxu0 0
          %2016 = vmatpush1.bf16.msra.mxu0 0
          %2017 = vmatprep.subr.bf16.mxu0 0
          %2018 = vmatpush1.bf16.msra.mxu0 0
          %2019 = vmatprep.mubr.bf16.mxu0 0
          %2020 = vmatmul.mubr.bf16.gmra.mrb[0].mxu0 %v1952
          %v2021 = vpop.f32.mrb[0].mxu0
          %v2022 = vadd.f32 0.0, %v2021
          %v2023 = vpop.f32.mrb[0].mxu0
          %v2024 = vpop.f32.mrb[0].mxu0
          %v2025 = vadd.f32 0.0, %v2024
          %v2026 = vpop.f32.mrb[0].mxu0
          %2027 = vmatprep.mubr.bf16.mxu0 0
          %2028 = vmatmul.mubr.bf16.gmra.mrb[0].mxu0 %v1955
          %v2029 = vpop.f32.mrb[0].mxu0
          %v2030 = vadd.f32 0.0, %v2029
          %v2031 = vpop.f32.mrb[0].mxu0
          %v2032 = vpop.f32.mrb[0].mxu0
          %v2033 = vadd.f32 0.0, %v2032
          %v2034 = vpop.f32.mrb[0].mxu0
          %2035 = vmatprep.mubr.bf16.mxu0 0
          %2036 = vmatmul.mubr.bf16.gmra.mrb[0].mxu0 %v1958
          %v2037 = vpop.f32.mrb[0].mxu0
          %v2038 = vadd.f32 0.0, %v2037
          %v2039 = vpop.f32.mrb[0].mxu0
          %v2040 = vpop.f32.mrb[0].mxu0
          %v2041 = vadd.f32 0.0, %v2040
          %v2042 = vpop.f32.mrb[0].mxu0
          %2043 = vmatprep.mubr.bf16.mxu0 0
          %2044 = vmatmul.mubr.bf16.gmra.mrb[0].mxu0 %v1961
          %v2045 = vpop.f32.mrb[0].mxu0
          %v2046 = vadd.f32 0.0, %v2045
          %v2047 = vpop.f32.mrb[0].mxu0
          %v2048 = vpop.f32.mrb[0].mxu0
          %v2049 = vadd.f32 0.0, %v2048
          %v2050 = vpop.f32.mrb[0].mxu0
          %2051 = vmatprep.mubr.bf16.mxu0 0
          %2052 = vmatmul.mubr.bf16.gmra.mrb[0].mxu0 %v1964
          %v2053 = vpop.f32.mrb[0].mxu0
          %v2054 = vadd.f32 0.0, %v2053
          %v2055 = vpop.f32.mrb[0].mxu0
          %v2056 = vpop.f32.mrb[0].mxu0
          %v2057 = vadd.f32 0.0, %v2056
          %v2058 = vpop.f32.mrb[0].mxu0
          %2059 = vmatprep.mubr.bf16.mxu0 0
          %2060 = vmatmul.mubr.bf16.gmra.mrb[0].mxu0 %v1967
          %v2061 = vpop.f32.mrb[0].mxu0
          %v2062 = vadd.f32 0.0, %v2061
          %v2063 = vpop.f32.mrb[0].mxu0
          %v2064 = vpop.f32.mrb[0].mxu0
          %v2065 = vadd.f32 0.0, %v2064
          %v2066 = vpop.f32.mrb[0].mxu0
          %2067 = vmatprep.mubr.bf16.mxu0 0
          %2068 = vmatmul.mubr.bf16.gmra.mrb[0].mxu0 %v1970
          %v2069 = vpop.f32.mrb[0].mxu0
          %v2070 = vadd.f32 0.0, %v2069
          %v2071 = vpop.f32.mrb[0].mxu0
          %v2072 = vpop.f32.mrb[0].mxu0
          %v2073 = vadd.f32 0.0, %v2072
          %v2074 = vpop.f32.mrb[0].mxu0
          %2075 = vmatprep.mubr.bf16.mxu0 0
          %2076 = vmatmul.mubr.bf16.gmra.mrb[0].mxu0 %v1973
          %v2077 = vpop.f32.mrb[0].mxu0
          %v2078 = vadd.f32 0.0, %v2077
          %v2079 = vpop.f32.mrb[0].mxu0
          %v2080 = vpop.f32.mrb[0].mxu0
          %v2081 = vadd.f32 0.0, %v2080
          %v2082 = vpop.f32.mrb[0].mxu0
          %2083 = vmatprep.mubr.bf16.mxu0 0
          %2084 = vmatmul.mubr.bf16.gmra.mrb[0].mxu0 %v1976
          %v2085 = vpop.f32.mrb[0].mxu0
          %v2086 = vadd.f32 0.0, %v2085
          %v2087 = vpop.f32.mrb[0].mxu0
          %v2088 = vpop.f32.mrb[0].mxu0
          %v2089 = vadd.f32 0.0, %v2088
          %v2090 = vpop.f32.mrb[0].mxu0
          %2091 = vmatprep.mubr.bf16.mxu0 0
          %2092 = vmatmul.mubr.bf16.gmra.mrb[0].mxu0 %v1979
          %v2093 = vpop.f32.mrb[0].mxu0
          %v2094 = vadd.f32 0.0, %v2093
          %v2095 = vpop.f32.mrb[0].mxu0
          %v2096 = vpop.f32.mrb[0].mxu0
          %v2097 = vadd.f32 0.0, %v2096
          %v2098 = vpop.f32.mrb[0].mxu0
          %2099 = vmatprep.mubr.bf16.mxu0 0
          %2100 = vmatmul.mubr.bf16.gmra.mrb[0].mxu0 %v1982
          %v2101 = vpop.f32.mrb[0].mxu0
          %v2102 = vadd.f32 0.0, %v2101
          %v2103 = vpop.f32.mrb[0].mxu0
          %v2104 = vpop.f32.mrb[0].mxu0
          %v2105 = vadd.f32 0.0, %v2104
          %v2106 = vpop.f32.mrb[0].mxu0
          %2107 = vmatprep.mubr.bf16.mxu0 0
          %2108 = vmatmul.mubr.bf16.gmra.mrb[0].mxu0 %v1985
          %v2109 = vpop.f32.mrb[0].mxu0
          %v2110 = vadd.f32 0.0, %v2109
          %v2111 = vpop.f32.mrb[0].mxu0
          %v2112 = vpop.f32.mrb[0].mxu0
          %v2113 = vadd.f32 0.0, %v2112
          %v2114 = vpop.f32.mrb[0].mxu0
          %2115 = vdwg.mxu0
          %v2140 = vunpack.c.l.b16 %v1683
          %v2141 = vunpack.c.l.b16 %v1684
          %v2142 = vunpack.c.l.b16 %v1685
          %v2143 = vunpack.c.l.b16 %v1686
          %v2144 = vunpack.c.l.b16 %v1687
          %v2145 = vunpack.c.l.b16 %v1688
          %v2146 = vunpack.c.l.b16 %v1689
          %v2147 = vunpack.c.l.b16 %v1690
          %v2148 = vunpack.c.l.b16 %v1691
          %v2149 = vunpack.c.l.b16 %v1692
          %v2150 = vunpack.c.l.b16 %v1693
          %v2151 = vunpack.c.l.b16 %v1694
          %v2152 = vunpack.c.l.b16 %v1695
          %v2153 = vunpack.c.l.b16 %v1696
          %v2154 = vunpack.c.l.b16 %v1697
          %v2155 = vunpack.c.l.b16 %v1698
          %v2156 = vunpack.c.l.b16 %v1699
          %v2157 = vunpack.c.l.b16 %v1700
          %v2158 = vunpack.c.l.b16 %v1701
          %v2159 = vunpack.c.l.b16 %v1702
          %v2160 = vunpack.c.l.b16 %v1703
          %v2161 = vunpack.c.l.b16 %v1704
          %v2162 = vunpack.c.l.b16 %v1705
          %v2163 = vunpack.c.l.b16 %v1706
          %v2164 = vpack.c.b16 %v2141, %v2140
          %v2165 = vpack.c.b16 %v2143, %v2142
          %v2166 = vpack.c.b16 %v2145, %v2144
          %v2167 = vpack.c.b16 %v2147, %v2146
          %v2168 = vpack.c.b16 %v2149, %v2148
          %v2169 = vpack.c.b16 %v2151, %v2150
          %v2170 = vpack.c.b16 %v2153, %v2152
          %v2171 = vpack.c.b16 %v2155, %v2154
          %v2172 = vpack.c.b16 %v2157, %v2156
          %v2173 = vpack.c.b16 %v2159, %v2158
          %v2174 = vpack.c.b16 %v2161, %v2160
          %v2175 = vpack.c.b16 %v2163, %v2162
          %v2184 = vunpack.c.l.b16 %v1707
          %v2185 = vunpack.c.l.b16 %v1708
          %v2186 = vunpack.c.l.b16 %v1709
          %v2187 = vunpack.c.l.b16 %v1710
          %v2188 = vunpack.c.l.b16 %v1711
          %v2189 = vunpack.c.l.b16 %v1712
          %v2190 = vunpack.c.l.b16 %v1713
          %v2191 = vunpack.c.l.b16 %v1714
          %v2192 = vpack.c.b16 %v2185, %v2184
          %v2193 = vpack.c.b16 %v2187, %v2186
          %v2194 = vpack.c.b16 %v2189, %v2188
          %v2195 = vpack.c.b16 %v2191, %v2190
          %v2201 = vsel %vm1631, %v2164, 0
          %v2204 = vsel %vm1631, %v2165, 0
          %v2207 = vsel %vm1631, %v2166, 0
          %v2210 = vsel %vm1631, %v2167, 0
          %v2213 = vsel %vm1631, %v2168, 0
          %v2216 = vsel %vm1631, %v2169, 0
          %v2219 = vsel %vm1631, %v2170, 0
          %v2222 = vsel %vm1631, %v2171, 0
          %v2225 = vsel %vm1631, %v2172, 0
          %v2228 = vsel %vm1631, %v2173, 0
          %v2231 = vsel %vm1631, %v2174, 0
          %v2234 = vsel %vm1631, %v2175, 0
          %2236 = vmatprep.subr.bf16.mxu0 0
          %2237 = vmatpush1.bf16.msra.mxu0 %v2192
          %2238 = vmatprep.subr.bf16.mxu0 0
          %2239 = vmatpush1.bf16.msra.mxu0 %v2193
          %2240 = vmatprep.subr.bf16.mxu0 0
          %2241 = vmatpush1.bf16.msra.mxu0 %v2194
          %2242 = vmatprep.subr.bf16.mxu0 0
          %2243 = vmatpush1.bf16.msra.mxu0 %v2195
          %2244 = vmatprep.subr.bf16.mxu0 0
          %2245 = vmatpush1.bf16.msra.mxu0 0
          %2246 = vmatprep.subr.bf16.mxu0 0
          %2247 = vmatpush1.bf16.msra.mxu0 0
          %2248 = vmatprep.subr.bf16.mxu0 0
          %2249 = vmatpush1.bf16.msra.mxu0 0
          %2250 = vmatprep.subr.bf16.mxu0 0
          %2251 = vmatpush1.bf16.msra.mxu0 0
          %2252 = vmatprep.subr.bf16.mxu0 0
          %2253 = vmatpush1.bf16.msra.mxu0 0
          %2254 = vmatprep.subr.bf16.mxu0 0
          %2255 = vmatpush1.bf16.msra.mxu0 0
          %2256 = vmatprep.subr.bf16.mxu0 0
          %2257 = vmatpush1.bf16.msra.mxu0 0
          %2258 = vmatprep.subr.bf16.mxu0 0
          %2259 = vmatpush1.bf16.msra.mxu0 0
          %2260 = vmatprep.subr.bf16.mxu0 0
          %2261 = vmatpush1.bf16.msra.mxu0 0
          %2262 = vmatprep.subr.bf16.mxu0 0
          %2263 = vmatpush1.bf16.msra.mxu0 0
          %2264 = vmatprep.subr.bf16.mxu0 0
          %2265 = vmatpush1.bf16.msra.mxu0 0
          %2266 = vmatprep.subr.bf16.mxu0 0
          %2267 = vmatpush1.bf16.msra.mxu0 0
          %2268 = vmatprep.mubr.bf16.mxu0 0
          %2269 = vmatmul.mubr.bf16.gmra.mrb[0].mxu0 %v2201
          %v2270 = vpop.f32.mrb[0].mxu0
          %v2271 = vadd.f32 %v2022, %v2270
          %v2272 = vpop.f32.mrb[0].mxu0
          %v2273 = vpop.f32.mrb[0].mxu0
          %v2274 = vadd.f32 %v2025, %v2273
          %v2275 = vpop.f32.mrb[0].mxu0
          %2276 = vmatprep.mubr.bf16.mxu0 0
          %2277 = vmatmul.mubr.bf16.gmra.mrb[0].mxu0 %v2204
          %v2278 = vpop.f32.mrb[0].mxu0
          %v2279 = vadd.f32 %v2030, %v2278
          %v2280 = vpop.f32.mrb[0].mxu0
          %v2281 = vpop.f32.mrb[0].mxu0
          %v2282 = vadd.f32 %v2033, %v2281
          %v2283 = vpop.f32.mrb[0].mxu0
          %2284 = vmatprep.mubr.bf16.mxu0 0
          %2285 = vmatmul.mubr.bf16.gmra.mrb[0].mxu0 %v2207
          %v2286 = vpop.f32.mrb[0].mxu0
          %v2287 = vadd.f32 %v2038, %v2286
          %v2288 = vpop.f32.mrb[0].mxu0
          %v2289 = vpop.f32.mrb[0].mxu0
          %v2290 = vadd.f32 %v2041, %v2289
          %v2291 = vpop.f32.mrb[0].mxu0
          %2292 = vmatprep.mubr.bf16.mxu0 0
          %2293 = vmatmul.mubr.bf16.gmra.mrb[0].mxu0 %v2210
          %v2294 = vpop.f32.mrb[0].mxu0
          %v2295 = vadd.f32 %v2046, %v2294
          %v2296 = vpop.f32.mrb[0].mxu0
          %v2297 = vpop.f32.mrb[0].mxu0
          %v2298 = vadd.f32 %v2049, %v2297
          %v2299 = vpop.f32.mrb[0].mxu0
          %2300 = vmatprep.mubr.bf16.mxu0 0
          %2301 = vmatmul.mubr.bf16.gmra.mrb[0].mxu0 %v2213
          %v2302 = vpop.f32.mrb[0].mxu0
          %v2303 = vadd.f32 %v2054, %v2302
          %v2304 = vpop.f32.mrb[0].mxu0
          %v2305 = vpop.f32.mrb[0].mxu0
          %v2306 = vadd.f32 %v2057, %v2305
          %v2307 = vpop.f32.mrb[0].mxu0
          %2308 = vmatprep.mubr.bf16.mxu0 0
          %2309 = vmatmul.mubr.bf16.gmra.mrb[0].mxu0 %v2216
          %v2310 = vpop.f32.mrb[0].mxu0
          %v2311 = vadd.f32 %v2062, %v2310
          %v2312 = vpop.f32.mrb[0].mxu0
          %v2313 = vpop.f32.mrb[0].mxu0
          %v2314 = vadd.f32 %v2065, %v2313
          %v2315 = vpop.f32.mrb[0].mxu0
          %2316 = vmatprep.mubr.bf16.mxu0 0
          %2317 = vmatmul.mubr.bf16.gmra.mrb[0].mxu0 %v2219
          %v2318 = vpop.f32.mrb[0].mxu0
          %v2319 = vadd.f32 %v2070, %v2318
          %v2320 = vpop.f32.mrb[0].mxu0
          %v2321 = vpop.f32.mrb[0].mxu0
          %v2322 = vadd.f32 %v2073, %v2321
          %v2323 = vpop.f32.mrb[0].mxu0
          %2324 = vmatprep.mubr.bf16.mxu0 0
          %2325 = vmatmul.mubr.bf16.gmra.mrb[0].mxu0 %v2222
          %v2326 = vpop.f32.mrb[0].mxu0
          %v2327 = vadd.f32 %v2078, %v2326
          %v2328 = vpop.f32.mrb[0].mxu0
          %v2329 = vpop.f32.mrb[0].mxu0
          %v2330 = vadd.f32 %v2081, %v2329
          %v2331 = vpop.f32.mrb[0].mxu0
          %2332 = vmatprep.mubr.bf16.mxu0 0
          %2333 = vmatmul.mubr.bf16.gmra.mrb[0].mxu0 %v2225
          %v2334 = vpop.f32.mrb[0].mxu0
          %v2335 = vadd.f32 %v2086, %v2334
          %v2336 = vpop.f32.mrb[0].mxu0
          %v2337 = vpop.f32.mrb[0].mxu0
          %v2338 = vadd.f32 %v2089, %v2337
          %v2339 = vpop.f32.mrb[0].mxu0
          %2340 = vmatprep.mubr.bf16.mxu0 0
          %2341 = vmatmul.mubr.bf16.gmra.mrb[0].mxu0 %v2228
          %v2342 = vpop.f32.mrb[0].mxu0
          %v2343 = vadd.f32 %v2094, %v2342
          %v2344 = vpop.f32.mrb[0].mxu0
          %v2345 = vpop.f32.mrb[0].mxu0
          %v2346 = vadd.f32 %v2097, %v2345
          %v2347 = vpop.f32.mrb[0].mxu0
          %2348 = vmatprep.mubr.bf16.mxu0 0
          %2349 = vmatmul.mubr.bf16.gmra.mrb[0].mxu0 %v2231
          %v2350 = vpop.f32.mrb[0].mxu0
          %v2351 = vadd.f32 %v2102, %v2350
          %v2352 = vpop.f32.mrb[0].mxu0
          %v2353 = vpop.f32.mrb[0].mxu0
          %v2354 = vadd.f32 %v2105, %v2353
          %v2355 = vpop.f32.mrb[0].mxu0
          %2356 = vmatprep.mubr.bf16.mxu0 0
          %2357 = vmatmul.mubr.bf16.gmra.mrb[0].mxu0 %v2234
          %v2358 = vpop.f32.mrb[0].mxu0
          %v2359 = vadd.f32 %v2110, %v2358
          %v2360 = vpop.f32.mrb[0].mxu0
          %v2361 = vpop.f32.mrb[0].mxu0
          %v2362 = vadd.f32 %v2113, %v2361
          %v2363 = vpop.f32.mrb[0].mxu0
          %2364 = vdwg.mxu0
          %v2365 = vld [vmem:[#allocation2 + $0xc0] sm:$0xff]
          %v2366 = vld [vmem:[#allocation2 + $0xc8] sm:$0xff]
          %v2367 = vld [vmem:[#allocation2 + $0xd0] sm:$0xff]
          %v2368 = vld [vmem:[#allocation2 + $0xd8] sm:$0xff]
          %v2369 = vld [vmem:[#allocation2 + $0xe0] sm:$0xff]
          %v2370 = vld [vmem:[#allocation2 + $0xe8] sm:$0xff]
          %v2371 = vld [vmem:[#allocation2 + $0xf0] sm:$0xff]
          %v2372 = vld [vmem:[#allocation2 + $0xf8] sm:$0xff]
          %v2373 = vld [vmem:[#allocation2 + $0x100] sm:$0xff]
          %v2374 = vld [vmem:[#allocation2 + $0x108] sm:$0xff]
          %v2375 = vld [vmem:[#allocation2 + $0x110] sm:$0xff]
          %v2376 = vld [vmem:[#allocation2 + $0x118] sm:$0xff]
          %v2377 = vld [vmem:[#allocation2 + $0x120] sm:$0xff]
          %v2378 = vld [vmem:[#allocation2 + $0x128] sm:$0xff]
          %v2379 = vld [vmem:[#allocation2 + $0x130] sm:$0xff]
          %v2380 = vld [vmem:[#allocation2 + $0x138] sm:$0xff]
          %v2381 = vld [vmem:[#allocation2 + $0x140] sm:$0xff]
          %v2382 = vld [vmem:[#allocation2 + $0x148] sm:$0xff]
          %v2383 = vld [vmem:[#allocation2 + $0x150] sm:$0xff]
          %v2384 = vld [vmem:[#allocation2 + $0x158] sm:$0xff]
          %v2385 = vld [vmem:[#allocation2 + $0x160] sm:$0xff]
          %v2386 = vld [vmem:[#allocation2 + $0x168] sm:$0xff]
          %v2387 = vld [vmem:[#allocation2 + $0x170] sm:$0xff]
          %v2388 = vld [vmem:[#allocation2 + $0x178] sm:$0xff]
          %s2389 = scalar_lea.vmem %s663, 192 [#allocation4]
          %v2390 = vld [vmem:[%s2389] sm:$0xff]
          %v2391 = vld [vmem:[%s2389 + $0x8] sm:$0xff]
          %v2392 = vld [vmem:[%s2389 + $0x10] sm:$0xff]
          %v2393 = vld [vmem:[%s2389 + $0x18] sm:$0xff]
          %v2394 = vld [vmem:[%s2389 + $0x20] sm:$0xff]
          %v2395 = vld [vmem:[%s2389 + $0x28] sm:$0xff]
          %v2396 = vld [vmem:[%s2389 + $0x30] sm:$0xff]
          %v2397 = vld [vmem:[%s2389 + $0x38] sm:$0xff]
          %v2398 = vld [vmem:[%s2389 + $0x40] sm:$0xff]
          %v2399 = vld [vmem:[%s2389 + $0x48] sm:$0xff]
          %v2400 = vld [vmem:[%s2389 + $0x50] sm:$0xff]
          %v2401 = vld [vmem:[%s2389 + $0x58] sm:$0xff]
          %v2402 = vld [vmem:[%s2389 + $0x60] sm:$0xff]
          %v2403 = vld [vmem:[%s2389 + $0x68] sm:$0xff]
          %v2404 = vld [vmem:[%s2389 + $0x70] sm:$0xff]
          %v2405 = vld [vmem:[%s2389 + $0x78] sm:$0xff]
          %v2406 = vld [vmem:[%s2389 + $0x80] sm:$0xff]
          %v2407 = vld [vmem:[%s2389 + $0x88] sm:$0xff]
          %v2408 = vld [vmem:[%s2389 + $0x90] sm:$0xff]
          %v2409 = vld [vmem:[%s2389 + $0x98] sm:$0xff]
          %v2410 = vld [vmem:[%s2389 + $0xa0] sm:$0xff]
          %v2411 = vld [vmem:[%s2389 + $0xa8] sm:$0xff]
          %v2412 = vld [vmem:[%s2389 + $0xb0] sm:$0xff]
          %v2413 = vld [vmem:[%s2389 + $0xb8] sm:$0xff]
          %2415 = vset.pattern.permute.xlu0 0
          %2416 = vperm.xlu0 %2415, %v2390
          %v2417 = vpop.permute.xlu0 %2416
          %2420 = vset.pattern.permute.xlu0 0
          %2421 = vperm.xlu0 %2420, %v2391
          %v2422 = vpop.permute.xlu0 %2421
          %2425 = vset.pattern.permute.xlu0 0
          %2426 = vperm.xlu0 %2425, %v2392
          %v2427 = vpop.permute.xlu0 %2426
          %2430 = vset.pattern.permute.xlu0 0
          %2431 = vperm.xlu0 %2430, %v2393
          %v2432 = vpop.permute.xlu0 %2431
          %2435 = vset.pattern.permute.xlu0 0
          %2436 = vperm.xlu0 %2435, %v2394
          %v2437 = vpop.permute.xlu0 %2436
          %2440 = vset.pattern.permute.xlu0 0
          %2441 = vperm.xlu0 %2440, %v2395
          %v2442 = vpop.permute.xlu0 %2441
          %2445 = vset.pattern.permute.xlu0 0
          %2446 = vperm.xlu0 %2445, %v2396
          %v2447 = vpop.permute.xlu0 %2446
          %2450 = vset.pattern.permute.xlu0 0
          %2451 = vperm.xlu0 %2450, %v2397
          %v2452 = vpop.permute.xlu0 %2451
          %2455 = vset.pattern.permute.xlu0 0
          %2456 = vperm.xlu0 %2455, %v2398
          %v2457 = vpop.permute.xlu0 %2456
          %2460 = vset.pattern.permute.xlu0 0
          %2461 = vperm.xlu0 %2460, %v2399
          %v2462 = vpop.permute.xlu0 %2461
          %2465 = vset.pattern.permute.xlu0 0
          %2466 = vperm.xlu0 %2465, %v2400
          %v2467 = vpop.permute.xlu0 %2466
          %2470 = vset.pattern.permute.xlu0 0
          %2471 = vperm.xlu0 %2470, %v2401
          %v2472 = vpop.permute.xlu0 %2471
          %2475 = vset.pattern.permute.xlu0 0
          %2476 = vperm.xlu0 %2475, %v2402
          %v2477 = vpop.permute.xlu0 %2476
          %2480 = vset.pattern.permute.xlu0 0
          %2481 = vperm.xlu0 %2480, %v2403
          %v2482 = vpop.permute.xlu0 %2481
          %2485 = vset.pattern.permute.xlu0 0
          %2486 = vperm.xlu0 %2485, %v2404
          %v2487 = vpop.permute.xlu0 %2486
          %2490 = vset.pattern.permute.xlu0 0
          %2491 = vperm.xlu0 %2490, %v2405
          %v2492 = vpop.permute.xlu0 %2491
          %2495 = vset.pattern.permute.xlu0 0
          %2496 = vperm.xlu0 %2495, %v2406
          %v2497 = vpop.permute.xlu0 %2496
          %2500 = vset.pattern.permute.xlu0 0
          %2501 = vperm.xlu0 %2500, %v2407
          %v2502 = vpop.permute.xlu0 %2501
          %2505 = vset.pattern.permute.xlu0 0
          %2506 = vperm.xlu0 %2505, %v2408
          %v2507 = vpop.permute.xlu0 %2506
          %2510 = vset.pattern.permute.xlu0 0
          %2511 = vperm.xlu0 %2510, %v2409
          %v2512 = vpop.permute.xlu0 %2511
          %2515 = vset.pattern.permute.xlu0 0
          %2516 = vperm.xlu0 %2515, %v2410
          %v2517 = vpop.permute.xlu0 %2516
          %2520 = vset.pattern.permute.xlu0 0
          %2521 = vperm.xlu0 %2520, %v2411
          %v2522 = vpop.permute.xlu0 %2521
          %2525 = vset.pattern.permute.xlu0 0
          %2526 = vperm.xlu0 %2525, %v2412
          %v2527 = vpop.permute.xlu0 %2526
          %2530 = vset.pattern.permute.xlu0 0
          %2531 = vperm.xlu0 %2530, %v2413
          %v2532 = vpop.permute.xlu0 %2531
          %v2534 = vmul.f32 %v2365, %v2417
          %v2535 = vmul.f32 %v2366, %v2422
          %v2536 = vmul.f32 %v2367, %v2427
          %v2537 = vmul.f32 %v2368, %v2432
          %v2538 = vmul.f32 %v2369, %v2437
          %v2539 = vmul.f32 %v2370, %v2442
          %v2540 = vmul.f32 %v2371, %v2447
          %v2541 = vmul.f32 %v2372, %v2452
          %v2542 = vmul.f32 %v2373, %v2457
          %v2543 = vmul.f32 %v2374, %v2462
          %v2544 = vmul.f32 %v2375, %v2467
          %v2545 = vmul.f32 %v2376, %v2472
          %v2546 = vmul.f32 %v2377, %v2477
          %v2547 = vmul.f32 %v2378, %v2482
          %v2548 = vmul.f32 %v2379, %v2487
          %v2549 = vmul.f32 %v2380, %v2492
          %v2550 = vmul.f32 %v2381, %v2497
          %v2551 = vmul.f32 %v2382, %v2502
          %v2552 = vmul.f32 %v2383, %v2507
          %v2553 = vmul.f32 %v2384, %v2512
          %v2554 = vmul.f32 %v2385, %v2517
          %v2555 = vmul.f32 %v2386, %v2522
          %v2556 = vmul.f32 %v2387, %v2527
          %v2557 = vmul.f32 %v2388, %v2532
          %v2558 = vpack.c.bf16 %v2535, %v2534
          %v2559 = vpack.c.bf16 %v2537, %v2536
          %v2560 = vpack.c.bf16 %v2539, %v2538
          %v2561 = vpack.c.bf16 %v2541, %v2540
          %v2562 = vpack.c.bf16 %v2543, %v2542
          %v2563 = vpack.c.bf16 %v2545, %v2544
          %v2564 = vpack.c.bf16 %v2547, %v2546
          %v2565 = vpack.c.bf16 %v2549, %v2548
          %v2566 = vpack.c.bf16 %v2551, %v2550
          %v2567 = vpack.c.bf16 %v2553, %v2552
          %v2568 = vpack.c.bf16 %v2555, %v2554
          %v2569 = vpack.c.bf16 %v2557, %v2556
          %s2570 = scalar_lea.vmem %s5, 32
          %v2571 = vld [vmem:[%s2570] sm:$0xf]
          %v2572 = vld [vmem:[%s2570 + $0x4] sm:$0xf]
          %v2573 = vld [vmem:[%s2570 + $0x8] sm:$0xf]
          %v2574 = vld [vmem:[%s2570 + $0xc] sm:$0xf]
          %v2575 = vld [vmem:[%s2570 + $0x10] sm:$0xf]
          %v2576 = vld [vmem:[%s2570 + $0x14] sm:$0xf]
          %v2577 = vld [vmem:[%s2570 + $0x18] sm:$0xf]
          %v2578 = vld [vmem:[%s2570 + $0x1c] sm:$0xf]
          %v2587 = vunpack.c.l.b16 %v2571
          %v2588 = vunpack.c.l.b16 %v2572
          %v2589 = vunpack.c.l.b16 %v2573
          %v2590 = vunpack.c.l.b16 %v2574
          %v2591 = vunpack.c.l.b16 %v2575
          %v2592 = vunpack.c.l.b16 %v2576
          %v2593 = vunpack.c.l.b16 %v2577
          %v2594 = vunpack.c.l.b16 %v2578
          %v2595 = vpack.c.b16 %v2588, %v2587
          %v2596 = vpack.c.b16 %v2590, %v2589
          %v2597 = vpack.c.b16 %v2592, %v2591
          %v2598 = vpack.c.b16 %v2594, %v2593
          %v2604 = vsel %vm1631, %v2558, 0
          %v2607 = vsel %vm1631, %v2559, 0
          %v2610 = vsel %vm1631, %v2560, 0
          %v2613 = vsel %vm1631, %v2561, 0
          %v2616 = vsel %vm1631, %v2562, 0
          %v2619 = vsel %vm1631, %v2563, 0
          %v2622 = vsel %vm1631, %v2564, 0
          %v2625 = vsel %vm1631, %v2565, 0
          %v2628 = vsel %vm1631, %v2566, 0
          %v2631 = vsel %vm1631, %v2567, 0
          %v2634 = vsel %vm1631, %v2568, 0
          %v2637 = vsel %vm1631, %v2569, 0
          %2639 = vmatprep.subr.bf16.mxu0 0
          %2640 = vmatpush1.bf16.msra.mxu0 %v2595
          %2641 = vmatprep.subr.bf16.mxu0 0
          %2642 = vmatpush1.bf16.msra.mxu0 %v2596
          %2643 = vmatprep.subr.bf16.mxu0 0
          %2644 = vmatpush1.bf16.msra.mxu0 %v2597
          %2645 = vmatprep.subr.bf16.mxu0 0
          %2646 = vmatpush1.bf16.msra.mxu0 %v2598
          %2647 = vmatprep.subr.bf16.mxu0 0
          %2648 = vmatpush1.bf16.msra.mxu0 0
          %2649 = vmatprep.subr.bf16.mxu0 0
          %2650 = vmatpush1.bf16.msra.mxu0 0
          %2651 = vmatprep.subr.bf16.mxu0 0
          %2652 = vmatpush1.bf16.msra.mxu0 0
          %2653 = vmatprep.subr.bf16.mxu0 0
          %2654 = vmatpush1.bf16.msra.mxu0 0
          %2655 = vmatprep.subr.bf16.mxu0 0
          %2656 = vmatpush1.bf16.msra.mxu0 0
          %2657 = vmatprep.subr.bf16.mxu0 0
          %2658 = vmatpush1.bf16.msra.mxu0 0
          %2659 = vmatprep.subr.bf16.mxu0 0
          %2660 = vmatpush1.bf16.msra.mxu0 0
          %2661 = vmatprep.subr.bf16.mxu0 0
          %2662 = vmatpush1.bf16.msra.mxu0 0
          %2663 = vmatprep.subr.bf16.mxu0 0
          %2664 = vmatpush1.bf16.msra.mxu0 0
          %2665 = vmatprep.subr.bf16.mxu0 0
          %2666 = vmatpush1.bf16.msra.mxu0 0
          %2667 = vmatprep.subr.bf16.mxu0 0
          %2668 = vmatpush1.bf16.msra.mxu0 0
          %2669 = vmatprep.subr.bf16.mxu0 0
          %2670 = vmatpush1.bf16.msra.mxu0 0
          %2671 = vmatprep.mubr.bf16.mxu0 0
          %2672 = vmatmul.mubr.bf16.gmra.mrb[0].mxu0 %v2604
          %v2673 = vpop.f32.mrb[0].mxu0
          %v2674 = vadd.f32 0.0, %v2673
          %v2675 = vpop.f32.mrb[0].mxu0
          %v2676 = vpop.f32.mrb[0].mxu0
          %v2677 = vadd.f32 0.0, %v2676
          %v2678 = vpop.f32.mrb[0].mxu0
          %2679 = vmatprep.mubr.bf16.mxu0 0
          %2680 = vmatmul.mubr.bf16.gmra.mrb[0].mxu0 %v2607
          %v2681 = vpop.f32.mrb[0].mxu0
          %v2682 = vadd.f32 0.0, %v2681
          %v2683 = vpop.f32.mrb[0].mxu0
          %v2684 = vpop.f32.mrb[0].mxu0
          %v2685 = vadd.f32 0.0, %v2684
          %v2686 = vpop.f32.mrb[0].mxu0
          %2687 = vmatprep.mubr.bf16.mxu0 0
          %2688 = vmatmul.mubr.bf16.gmra.mrb[0].mxu0 %v2610
          %v2689 = vpop.f32.mrb[0].mxu0
          %v2690 = vadd.f32 0.0, %v2689
          %v2691 = vpop.f32.mrb[0].mxu0
          %v2692 = vpop.f32.mrb[0].mxu0
          %v2693 = vadd.f32 0.0, %v2692
          %v2694 = vpop.f32.mrb[0].mxu0
          %2695 = vmatprep.mubr.bf16.mxu0 0
          %2696 = vmatmul.mubr.bf16.gmra.mrb[0].mxu0 %v2613
          %v2697 = vpop.f32.mrb[0].mxu0
          %v2698 = vadd.f32 0.0, %v2697
          %v2699 = vpop.f32.mrb[0].mxu0
          %v2700 = vpop.f32.mrb[0].mxu0
          %v2701 = vadd.f32 0.0, %v2700
          %v2702 = vpop.f32.mrb[0].mxu0
          %2703 = vmatprep.mubr.bf16.mxu0 0
          %2704 = vmatmul.mubr.bf16.gmra.mrb[0].mxu0 %v2616
          %v2705 = vpop.f32.mrb[0].mxu0
          %v2706 = vadd.f32 0.0, %v2705
          %v2707 = vpop.f32.mrb[0].mxu0
          %v2708 = vpop.f32.mrb[0].mxu0
          %v2709 = vadd.f32 0.0, %v2708
          %v2710 = vpop.f32.mrb[0].mxu0
          %2711 = vmatprep.mubr.bf16.mxu0 0
          %2712 = vmatmul.mubr.bf16.gmra.mrb[0].mxu0 %v2619
          %v2713 = vpop.f32.mrb[0].mxu0
          %v2714 = vadd.f32 0.0, %v2713
          %v2715 = vpop.f32.mrb[0].mxu0
          %v2716 = vpop.f32.mrb[0].mxu0
          %v2717 = vadd.f32 0.0, %v2716
          %v2718 = vpop.f32.mrb[0].mxu0
          %2719 = vmatprep.mubr.bf16.mxu0 0
          %2720 = vmatmul.mubr.bf16.gmra.mrb[0].mxu0 %v2622
          %v2721 = vpop.f32.mrb[0].mxu0
          %v2722 = vadd.f32 0.0, %v2721
          %v2723 = vpop.f32.mrb[0].mxu0
          %v2724 = vpop.f32.mrb[0].mxu0
          %v2725 = vadd.f32 0.0, %v2724
          %v2726 = vpop.f32.mrb[0].mxu0
          %2727 = vmatprep.mubr.bf16.mxu0 0
          %2728 = vmatmul.mubr.bf16.gmra.mrb[0].mxu0 %v2625
          %v2729 = vpop.f32.mrb[0].mxu0
          %v2730 = vadd.f32 0.0, %v2729
          %v2731 = vpop.f32.mrb[0].mxu0
          %v2732 = vpop.f32.mrb[0].mxu0
          %v2733 = vadd.f32 0.0, %v2732
          %v2734 = vpop.f32.mrb[0].mxu0
          %2735 = vmatprep.mubr.bf16.mxu0 0
          %2736 = vmatmul.mubr.bf16.gmra.mrb[0].mxu0 %v2628
          %v2737 = vpop.f32.mrb[0].mxu0
          %v2738 = vadd.f32 0.0, %v2737
          %v2739 = vpop.f32.mrb[0].mxu0
          %v2740 = vpop.f32.mrb[0].mxu0
          %v2741 = vadd.f32 0.0, %v2740
          %v2742 = vpop.f32.mrb[0].mxu0
          %2743 = vmatprep.mubr.bf16.mxu0 0
          %2744 = vmatmul.mubr.bf16.gmra.mrb[0].mxu0 %v2631
          %v2745 = vpop.f32.mrb[0].mxu0
          %v2746 = vadd.f32 0.0, %v2745
          %v2747 = vpop.f32.mrb[0].mxu0
          %v2748 = vpop.f32.mrb[0].mxu0
          %v2749 = vadd.f32 0.0, %v2748
          %v2750 = vpop.f32.mrb[0].mxu0
          %2751 = vmatprep.mubr.bf16.mxu0 0
          %2752 = vmatmul.mubr.bf16.gmra.mrb[0].mxu0 %v2634
          %v2753 = vpop.f32.mrb[0].mxu0
          %v2754 = vadd.f32 0.0, %v2753
          %v2755 = vpop.f32.mrb[0].mxu0
          %v2756 = vpop.f32.mrb[0].mxu0
          %v2757 = vadd.f32 0.0, %v2756
          %v2758 = vpop.f32.mrb[0].mxu0
          %2759 = vmatprep.mubr.bf16.mxu0 0
          %2760 = vmatmul.mubr.bf16.gmra.mrb[0].mxu0 %v2637
          %v2761 = vpop.f32.mrb[0].mxu0
          %v2762 = vadd.f32 0.0, %v2761
          %v2763 = vpop.f32.mrb[0].mxu0
          %v2764 = vpop.f32.mrb[0].mxu0
          %v2765 = vadd.f32 0.0, %v2764
          %v2766 = vpop.f32.mrb[0].mxu0
          %2767 = vdwg.mxu0
          %v2768 = vadd.f32 %v2271, %v2674
          %v2769 = vadd.f32 %v2274, %v2677
          %v2770 = vadd.f32 %v2279, %v2682
          %v2771 = vadd.f32 %v2282, %v2685
          %v2772 = vadd.f32 %v2287, %v2690
          %v2773 = vadd.f32 %v2290, %v2693
          %v2774 = vadd.f32 %v2295, %v2698
          %v2775 = vadd.f32 %v2298, %v2701
          %v2776 = vadd.f32 %v2303, %v2706
          %v2777 = vadd.f32 %v2306, %v2709
          %v2778 = vadd.f32 %v2311, %v2714
          %v2779 = vadd.f32 %v2314, %v2717
          %v2780 = vadd.f32 %v2319, %v2722
          %v2781 = vadd.f32 %v2322, %v2725
          %v2782 = vadd.f32 %v2327, %v2730
          %v2783 = vadd.f32 %v2330, %v2733
          %v2784 = vadd.f32 %v2335, %v2738
          %v2785 = vadd.f32 %v2338, %v2741
          %v2786 = vadd.f32 %v2343, %v2746
          %v2787 = vadd.f32 %v2346, %v2749
          %v2788 = vadd.f32 %v2351, %v2754
          %v2789 = vadd.f32 %v2354, %v2757
          %v2790 = vadd.f32 %v2359, %v2762
          %v2791 = vadd.f32 %v2362, %v2765
          %v2792 = vld [vmem:[%s6] sm:$0x1]
          %v2794 = vlaneseq
          %v2795 = vshrl.u32 %v2794, 7
          %v2796 = vsub.s32 0, %v2795
          %v2797 = vrot.slane %v2792, %v2796
          %v2799 = vadd.f32 %v2768, %v2797
          %v2800 = vadd.f32 %v2769, %v2797
          %v2801 = vadd.f32 %v2770, %v2797
          %v2802 = vadd.f32 %v2771, %v2797
          %v2803 = vadd.f32 %v2772, %v2797
          %v2804 = vadd.f32 %v2773, %v2797
          %v2805 = vadd.f32 %v2774, %v2797
          %v2806 = vadd.f32 %v2775, %v2797
          %v2807 = vadd.f32 %v2776, %v2797
          %v2808 = vadd.f32 %v2777, %v2797
          %v2809 = vadd.f32 %v2778, %v2797
          %v2810 = vadd.f32 %v2779, %v2797
          %v2811 = vadd.f32 %v2780, %v2797
          %v2812 = vadd.f32 %v2781, %v2797
          %v2813 = vadd.f32 %v2782, %v2797
          %v2814 = vadd.f32 %v2783, %v2797
          %v2815 = vadd.f32 %v2784, %v2797
          %v2816 = vadd.f32 %v2785, %v2797
          %v2817 = vadd.f32 %v2786, %v2797
          %v2818 = vadd.f32 %v2787, %v2797
          %v2819 = vadd.f32 %v2788, %v2797
          %v2820 = vadd.f32 %v2789, %v2797
          %v2821 = vadd.f32 %v2790, %v2797
          %v2822 = vadd.f32 %v2791, %v2797
          %v2823 = vpack.c.bf16 %v2800, %v2799
          %v2824 = vpack.c.bf16 %v2802, %v2801
          %v2825 = vpack.c.bf16 %v2804, %v2803
          %v2826 = vpack.c.bf16 %v2806, %v2805
          %v2827 = vpack.c.bf16 %v2808, %v2807
          %v2828 = vpack.c.bf16 %v2810, %v2809
          %v2829 = vpack.c.bf16 %v2812, %v2811
          %v2830 = vpack.c.bf16 %v2814, %v2813
          %v2831 = vpack.c.bf16 %v2816, %v2815
          %v2832 = vpack.c.bf16 %v2818, %v2817
          %v2833 = vpack.c.bf16 %v2820, %v2819
          %v2834 = vpack.c.bf16 %v2822, %v2821
          %v2835 = vld [vmem:[%s7] sm:$0xf]
          %v2836 = vld [vmem:[%s7 + $0x4] sm:$0xf]
          %v2837 = vld [vmem:[%s7 + $0x8] sm:$0xf]
          %v2838 = vld [vmem:[%s7 + $0xc] sm:$0xf]
          %v2839 = vld [vmem:[%s7 + $0x10] sm:$0xf]
          %v2840 = vld [vmem:[%s7 + $0x14] sm:$0xf]
          %v2841 = vld [vmem:[%s7 + $0x18] sm:$0xf]
          %v2842 = vld [vmem:[%s7 + $0x1c] sm:$0xf]
          %v2843 = vld [vmem:[%s8] sm:$0x1]
          %v2845 = vlaneseq
          %v2846 = vshrl.u32 %v2845, 7
          %v2847 = vsub.s32 0, %v2846
          %v2848 = vrot.slane %v2843, %v2847
          %v2858 = vunpack.c.l.b16 %v2835
          %v2859 = vunpack.c.l.b16 %v2836
          %v2860 = vunpack.c.l.b16 %v2837
          %v2861 = vunpack.c.l.b16 %v2838
          %v2862 = vunpack.c.l.b16 %v2839
          %v2863 = vunpack.c.l.b16 %v2840
          %v2864 = vunpack.c.l.b16 %v2841
          %v2865 = vunpack.c.l.b16 %v2842
          %v2866 = vpack.c.b16 %v2859, %v2858
          %v2867 = vpack.c.b16 %v2861, %v2860
          %v2868 = vpack.c.b16 %v2863, %v2862
          %v2869 = vpack.c.b16 %v2865, %v2864
          %v2875 = vsel %vm1631, %v2823, 0
          %v2878 = vsel %vm1631, %v2824, 0
          %v2881 = vsel %vm1631, %v2825, 0
          %v2884 = vsel %vm1631, %v2826, 0
          %v2887 = vsel %vm1631, %v2827, 0
          %v2890 = vsel %vm1631, %v2828, 0
          %v2893 = vsel %vm1631, %v2829, 0
          %v2896 = vsel %vm1631, %v2830, 0
          %v2899 = vsel %vm1631, %v2831, 0
          %v2902 = vsel %vm1631, %v2832, 0
          %v2905 = vsel %vm1631, %v2833, 0
          %v2908 = vsel %vm1631, %v2834, 0
          %2910 = vmatprep.subr.bf16.mxu0 0
          %2911 = vmatpush1.bf16.msra.mxu0 %v2866
          %2912 = vmatprep.subr.bf16.mxu0 0
          %2913 = vmatpush1.bf16.msra.mxu0 %v2867
          %2914 = vmatprep.subr.bf16.mxu0 0
          %2915 = vmatpush1.bf16.msra.mxu0 %v2868
          %2916 = vmatprep.subr.bf16.mxu0 0
          %2917 = vmatpush1.bf16.msra.mxu0 %v2869
          %2918 = vmatprep.subr.bf16.mxu0 0
          %2919 = vmatpush1.bf16.msra.mxu0 0
          %2920 = vmatprep.subr.bf16.mxu0 0
          %2921 = vmatpush1.bf16.msra.mxu0 0
          %2922 = vmatprep.subr.bf16.mxu0 0
          %2923 = vmatpush1.bf16.msra.mxu0 0
          %2924 = vmatprep.subr.bf16.mxu0 0
          %2925 = vmatpush1.bf16.msra.mxu0 0
          %2926 = vmatprep.subr.bf16.mxu0 0
          %2927 = vmatpush1.bf16.msra.mxu0 0
          %2928 = vmatprep.subr.bf16.mxu0 0
          %2929 = vmatpush1.bf16.msra.mxu0 0
          %2930 = vmatprep.subr.bf16.mxu0 0
          %2931 = vmatpush1.bf16.msra.mxu0 0
          %2932 = vmatprep.subr.bf16.mxu0 0
          %2933 = vmatpush1.bf16.msra.mxu0 0
          %2934 = vmatprep.subr.bf16.mxu0 0
          %2935 = vmatpush1.bf16.msra.mxu0 0
          %2936 = vmatprep.subr.bf16.mxu0 0
          %2937 = vmatpush1.bf16.msra.mxu0 0
          %2938 = vmatprep.subr.bf16.mxu0 0
          %2939 = vmatpush1.bf16.msra.mxu0 0
          %2940 = vmatprep.subr.bf16.mxu0 0
          %2941 = vmatpush1.bf16.msra.mxu0 0
          %2942 = vmatprep.mubr.bf16.mxu0 0
          %2943 = vmatmul.mubr.bf16.gmra.mrb[0].mxu0 %v2875
          %v2944 = vpop.f32.mrb[0].mxu0
          %v2945 = vadd.f32 %v2848, %v2944
          %v2946 = vpop.f32.mrb[0].mxu0
          %v2947 = vpop.f32.mrb[0].mxu0
          %v2948 = vadd.f32 %v2848, %v2947
          %v2949 = vpop.f32.mrb[0].mxu0
          %2950 = vmatprep.mubr.bf16.mxu0 0
          %2951 = vmatmul.mubr.bf16.gmra.mrb[0].mxu0 %v2878
          %v2952 = vpop.f32.mrb[0].mxu0
          %v2953 = vadd.f32 %v2848, %v2952
          %v2954 = vpop.f32.mrb[0].mxu0
          %v2955 = vpop.f32.mrb[0].mxu0
          %v2956 = vadd.f32 %v2848, %v2955
          %v2957 = vpop.f32.mrb[0].mxu0
          %2958 = vmatprep.mubr.bf16.mxu0 0
          %2959 = vmatmul.mubr.bf16.gmra.mrb[0].mxu0 %v2881
          %v2960 = vpop.f32.mrb[0].mxu0
          %v2961 = vadd.f32 %v2848, %v2960
          %v2962 = vpop.f32.mrb[0].mxu0
          %v2963 = vpop.f32.mrb[0].mxu0
          %v2964 = vadd.f32 %v2848, %v2963
          %v2965 = vpop.f32.mrb[0].mxu0
          %2966 = vmatprep.mubr.bf16.mxu0 0
          %2967 = vmatmul.mubr.bf16.gmra.mrb[0].mxu0 %v2884
          %v2968 = vpop.f32.mrb[0].mxu0
          %v2969 = vadd.f32 %v2848, %v2968
          %v2970 = vpop.f32.mrb[0].mxu0
          %v2971 = vpop.f32.mrb[0].mxu0
          %v2972 = vadd.f32 %v2848, %v2971
          %v2973 = vpop.f32.mrb[0].mxu0
          %2974 = vmatprep.mubr.bf16.mxu0 0
          %2975 = vmatmul.mubr.bf16.gmra.mrb[0].mxu0 %v2887
          %v2976 = vpop.f32.mrb[0].mxu0
          %v2977 = vadd.f32 %v2848, %v2976
          %v2978 = vpop.f32.mrb[0].mxu0
          %v2979 = vpop.f32.mrb[0].mxu0
          %v2980 = vadd.f32 %v2848, %v2979
          %v2981 = vpop.f32.mrb[0].mxu0
          %2982 = vmatprep.mubr.bf16.mxu0 0
          %2983 = vmatmul.mubr.bf16.gmra.mrb[0].mxu0 %v2890
          %v2984 = vpop.f32.mrb[0].mxu0
          %v2985 = vadd.f32 %v2848, %v2984
          %v2986 = vpop.f32.mrb[0].mxu0
          %v2987 = vpop.f32.mrb[0].mxu0
          %v2988 = vadd.f32 %v2848, %v2987
          %v2989 = vpop.f32.mrb[0].mxu0
          %2990 = vmatprep.mubr.bf16.mxu0 0
          %2991 = vmatmul.mubr.bf16.gmra.mrb[0].mxu0 %v2893
          %v2992 = vpop.f32.mrb[0].mxu0
          %v2993 = vadd.f32 %v2848, %v2992
          %v2994 = vpop.f32.mrb[0].mxu0
          %v2995 = vpop.f32.mrb[0].mxu0
          %v2996 = vadd.f32 %v2848, %v2995
          %v2997 = vpop.f32.mrb[0].mxu0
          %2998 = vmatprep.mubr.bf16.mxu0 0
          %2999 = vmatmul.mubr.bf16.gmra.mrb[0].mxu0 %v2896
          %v3000 = vpop.f32.mrb[0].mxu0
          %v3001 = vadd.f32 %v2848, %v3000
          %v3002 = vpop.f32.mrb[0].mxu0
          %v3003 = vpop.f32.mrb[0].mxu0
          %v3004 = vadd.f32 %v2848, %v3003
          %v3005 = vpop.f32.mrb[0].mxu0
          %3006 = vmatprep.mubr.bf16.mxu0 0
          %3007 = vmatmul.mubr.bf16.gmra.mrb[0].mxu0 %v2899
          %v3008 = vpop.f32.mrb[0].mxu0
          %v3009 = vadd.f32 %v2848, %v3008
          %v3010 = vpop.f32.mrb[0].mxu0
          %v3011 = vpop.f32.mrb[0].mxu0
          %v3012 = vadd.f32 %v2848, %v3011
          %v3013 = vpop.f32.mrb[0].mxu0
          %3014 = vmatprep.mubr.bf16.mxu0 0
          %3015 = vmatmul.mubr.bf16.gmra.mrb[0].mxu0 %v2902
          %v3016 = vpop.f32.mrb[0].mxu0
          %v3017 = vadd.f32 %v2848, %v3016
          %v3018 = vpop.f32.mrb[0].mxu0
          %v3019 = vpop.f32.mrb[0].mxu0
          %v3020 = vadd.f32 %v2848, %v3019
          %v3021 = vpop.f32.mrb[0].mxu0
          %3022 = vmatprep.mubr.bf16.mxu0 0
          %3023 = vmatmul.mubr.bf16.gmra.mrb[0].mxu0 %v2905
          %v3024 = vpop.f32.mrb[0].mxu0
          %v3025 = vadd.f32 %v2848, %v3024
          %v3026 = vpop.f32.mrb[0].mxu0
          %v3027 = vpop.f32.mrb[0].mxu0
          %v3028 = vadd.f32 %v2848, %v3027
          %v3029 = vpop.f32.mrb[0].mxu0
          %3030 = vmatprep.mubr.bf16.mxu0 0
          %3031 = vmatmul.mubr.bf16.gmra.mrb[0].mxu0 %v2908
          %v3032 = vpop.f32.mrb[0].mxu0
          %v3033 = vadd.f32 %v2848, %v3032
          %v3034 = vpop.f32.mrb[0].mxu0
          %v3035 = vpop.f32.mrb[0].mxu0
          %v3036 = vadd.f32 %v2848, %v3035
          %v3037 = vpop.f32.mrb[0].mxu0
          %3038 = vdwg.mxu0
          %vm3039 = vcmp.gt.f32.partialorder %v2945, 0.0
          %vm3040 = vcmp.gt.f32.partialorder %v2948, 0.0
          %vm3041 = vcmp.gt.f32.partialorder %v2953, 0.0
          %vm3042 = vcmp.gt.f32.partialorder %v2956, 0.0
          %vm3043 = vcmp.gt.f32.partialorder %v2961, 0.0
          %vm3044 = vcmp.gt.f32.partialorder %v2964, 0.0
          %vm3045 = vcmp.gt.f32.partialorder %v2969, 0.0
          %vm3046 = vcmp.gt.f32.partialorder %v2972, 0.0
          %vm3047 = vcmp.gt.f32.partialorder %v2977, 0.0
          %vm3048 = vcmp.gt.f32.partialorder %v2980, 0.0
          %vm3049 = vcmp.gt.f32.partialorder %v2985, 0.0
          %vm3050 = vcmp.gt.f32.partialorder %v2988, 0.0
          %vm3051 = vcmp.gt.f32.partialorder %v2993, 0.0
          %vm3052 = vcmp.gt.f32.partialorder %v2996, 0.0
          %vm3053 = vcmp.gt.f32.partialorder %v3001, 0.0
          %vm3054 = vcmp.gt.f32.partialorder %v3004, 0.0
          %vm3055 = vcmp.gt.f32.partialorder %v3009, 0.0
          %vm3056 = vcmp.gt.f32.partialorder %v3012, 0.0
          %vm3057 = vcmp.gt.f32.partialorder %v3017, 0.0
          %vm3058 = vcmp.gt.f32.partialorder %v3020, 0.0
          %vm3059 = vcmp.gt.f32.partialorder %v3025, 0.0
          %vm3060 = vcmp.gt.f32.partialorder %v3028, 0.0
          %vm3061 = vcmp.gt.f32.partialorder %v3033, 0.0
          %vm3062 = vcmp.gt.f32.partialorder %v3036, 0.0
          %v3063 = vmul.f32 %v2945, 0.01
          %v3064 = vmul.f32 %v2948, 0.01
          %v3065 = vmul.f32 %v2953, 0.01
          %v3066 = vmul.f32 %v2956, 0.01
          %v3067 = vmul.f32 %v2961, 0.01
          %v3068 = vmul.f32 %v2964, 0.01
          %v3069 = vmul.f32 %v2969, 0.01
          %v3070 = vmul.f32 %v2972, 0.01
          %v3071 = vmul.f32 %v2977, 0.01
          %v3072 = vmul.f32 %v2980, 0.01
          %v3073 = vmul.f32 %v2985, 0.01
          %v3074 = vmul.f32 %v2988, 0.01
          %v3075 = vmul.f32 %v2993, 0.01
          %v3076 = vmul.f32 %v2996, 0.01
          %v3077 = vmul.f32 %v3001, 0.01
          %v3078 = vmul.f32 %v3004, 0.01
          %v3079 = vmul.f32 %v3009, 0.01
          %v3080 = vmul.f32 %v3012, 0.01
          %v3081 = vmul.f32 %v3017, 0.01
          %v3082 = vmul.f32 %v3020, 0.01
          %v3083 = vmul.f32 %v3025, 0.01
          %v3084 = vmul.f32 %v3028, 0.01
          %v3085 = vmul.f32 %v3033, 0.01
          %v3086 = vmul.f32 %v3036, 0.01
          %v3087 = vsel %vm3039, %v2945, %v3063
          %v3088 = vsel %vm3040, %v2948, %v3064
          %v3089 = vsel %vm3041, %v2953, %v3065
          %v3090 = vsel %vm3042, %v2956, %v3066
          %v3091 = vsel %vm3043, %v2961, %v3067
          %v3092 = vsel %vm3044, %v2964, %v3068
          %v3093 = vsel %vm3045, %v2969, %v3069
          %v3094 = vsel %vm3046, %v2972, %v3070
          %v3095 = vsel %vm3047, %v2977, %v3071
          %v3096 = vsel %vm3048, %v2980, %v3072
          %v3097 = vsel %vm3049, %v2985, %v3073
          %v3098 = vsel %vm3050, %v2988, %v3074
          %v3099 = vsel %vm3051, %v2993, %v3075
          %v3100 = vsel %vm3052, %v2996, %v3076
          %v3101 = vsel %vm3053, %v3001, %v3077
          %v3102 = vsel %vm3054, %v3004, %v3078
          %v3103 = vsel %vm3055, %v3009, %v3079
          %v3104 = vsel %vm3056, %v3012, %v3080
          %v3105 = vsel %vm3057, %v3017, %v3081
          %v3106 = vsel %vm3058, %v3020, %v3082
          %v3107 = vsel %vm3059, %v3025, %v3083
          %v3108 = vsel %vm3060, %v3028, %v3084
          %v3109 = vsel %vm3061, %v3033, %v3085
          %v3110 = vsel %vm3062, %v3036, %v3086
          %v3111 = vpack.c.bf16 %v3088, %v3087
          %v3112 = vpack.c.bf16 %v3090, %v3089
          %v3113 = vpack.c.bf16 %v3092, %v3091
          %v3114 = vpack.c.bf16 %v3094, %v3093
          %v3115 = vpack.c.bf16 %v3096, %v3095
          %v3116 = vpack.c.bf16 %v3098, %v3097
          %v3117 = vpack.c.bf16 %v3100, %v3099
          %v3118 = vpack.c.bf16 %v3102, %v3101
          %v3119 = vpack.c.bf16 %v3104, %v3103
          %v3120 = vpack.c.bf16 %v3106, %v3105
          %v3121 = vpack.c.bf16 %v3108, %v3107
          %v3122 = vpack.c.bf16 %v3110, %v3109
          %3123 = vst.msk [vmem:[%s729] sm:$0xff] %vm1631, %v3111
          %3124 = vst.msk [vmem:[%s729 + $0x8] sm:$0xff] %vm1631, %v3112
          %3125 = vst.msk [vmem:[%s729 + $0x10] sm:$0xff] %vm1631, %v3113
          %3126 = vst.msk [vmem:[%s729 + $0x18] sm:$0xff] %vm1631, %v3114
          %3127 = vst.msk [vmem:[%s729 + $0x20] sm:$0xff] %vm1631, %v3115
          %3128 = vst.msk [vmem:[%s729 + $0x28] sm:$0xff] %vm1631, %v3116
          %3129 = vst.msk [vmem:[%s729 + $0x30] sm:$0xff] %vm1631, %v3117
          %3130 = vst.msk [vmem:[%s729 + $0x38] sm:$0xff] %vm1631, %v3118
          %3131 = vst.msk [vmem:[%s729 + $0x40] sm:$0xff] %vm1631, %v3119
          %3132 = vst.msk [vmem:[%s729 + $0x48] sm:$0xff] %vm1631, %v3120
          %3133 = vst.msk [vmem:[%s729 + $0x50] sm:$0xff] %vm1631, %v3121
          %3134 = vst.msk [vmem:[%s729 + $0x58] sm:$0xff] %vm1631, %v3122
        $region125: #{botrgcn_forward.5} parent=108 // pred_fallthru
          _
        %s3135 = smul.u32 12, %s24
        %p3136 = scmp.lt.s32.totalorder %s3135, 23
        %s3137 = scalar_select %p3136, %s3135, 23
        %s3138 = smul.addr %s3137, 8
        %s3139 = scalar_lea.vmem %s9, %s3138
        // Predicated region
        $region126: #{botrgcn_forward.5} parent=108 // pred_check
          %p3140 = pneg %p261
        $region127: #{botrgcn_forward.5} parent=108 // pred_check_branch
          %3142 = sbr.rel (%p3140) target = $region129
        $region128: #{botrgcn_forward.5} parent=108 // pred_region
          %s3143 = smul.u32 12, %s24
        $region129: #{botrgcn_forward.5} parent=108 // pred_fallthru
          _
      $region109: #{botrgcn_forward.5} parent=5 // pred_fallthru
        _
      %p3144 = scmp.le.s32.totalorder 2, %s15
      // Predicated region
      $region130: #{botrgcn_forward.5} parent=5 // pred_check
        %p3145 = pneg %p3144
      $region131: #{botrgcn_forward.5} parent=5 // pred_check_branch
        %3147 = sbr.rel (%p3145) target = $region133
      $region132: #{botrgcn_forward.5} parent=5 // pred_region
        %s3148 = ssub.s32 %s15, 2
        // Predicated region
        $region134: #{botrgcn_forward.5} parent=132 // pred_check
          %p3149 = pneg %p267
        $region135: #{botrgcn_forward.5} parent=132 // pred_check_branch
          %3151 = sbr.rel (%p3149) target = $region137
        $region136: #{botrgcn_forward.5} parent=132 // pred_region
          %s3152 = smul.u32 12, %s26
          %p3153 = scmp.lt.s32.totalorder %s3152, 23
          %s3154 = scalar_select %p3153, %s3152, 23
          %s3155 = smul.addr %s3154, 8
          %s3156 = scalar_lea.vmem %s9, %s3155
        $region137: #{botrgcn_forward.5} parent=132 // pred_fallthru
          _
      $region133: #{botrgcn_forward.5} parent=5 // pred_fallthru
        _
    $region6: #{botrgcn_forward.5} parent=1 // loop_footer
      %s19 = sadd.s32 1, %s15
    $region7: #{botrgcn_forward.5} parent=1 // loop_footer_branch
      %14 = sbr.rel target = $region3
    $region8: #{botrgcn_forward.5} parent=1 // loop_exit
      _

</llo_original>
